<compile_context>
chip_gen: v7x
topology: tpu7x:2x2x1
jax: 0.10.0
libtpu: 0.0.40
codegen_flags: <defaults>
</compile_context>

<pallas_src>
import functools

import numpy as np
import jax
import jax.numpy as jnp
from jax.experimental import pallas as pl
from jax.experimental.pallas import tpu as pltpu


_EPS = 1e-5

# Every image is embedded in a 16x16 grid with a 2-pixel zero border on the
# top/left (the original 14x14 lives at padded [2:16, 2:16]).  16 rows/cols
# keep each image sublane-aligned, conv taps that "wrap" a row land in a zero
# pad column of the neighbouring row, and the 2x2 pool windows start on even
# padded coordinates.
_HPAD = 16
_WPAD = 16
# Halo rows above/below the whole (B*HPAD*WPAD)-row activation slab so the 9
# shifted tap reads (offsets in [-(WPAD+1), +(WPAD+1)]) and the pool's shifted
# reads never index out of bounds.
_HALO = 24
assert _HALO >= _WPAD + 2, "halo must cover the largest conv tap offset"
assert _HALO % 8 == 0, "halo must keep interior stores sublane aligned"

# bf16 MXU operands are a cheap ~2x on v5e (f32 accumulation is kept either
# way); left at f32 so the parity check against the f32 XLA reference stays
# tight.
_MM_DTYPE = jnp.float32

_VMEM = pl.BlockSpec(memory_space=pltpu.MemorySpace.VMEM)


# ------------------------------ fused kernel --------------------------------

def _fused_kernel(x_ref, mask_ref, w1_ref, t1_ref, w2_ref, t2_ref,
                  feat_ref, pad2_ref, *, R, C1, C2):
    """conv3x3+BN+ReLU -> conv3x3+BN+ReLU -> 2x2/2 max pool, all in VMEM.

    x_ref    : [2*_HALO + R, C1]  zero-haloed, zero-bordered padded input
    mask_ref : [R, C2]            1.0 on interior pixels, 0.0 on pad border
    w{1,2}   : [9*Cin, C2]        conv weights, rows (ky,kx,cin), BN scale folded
    t{1,2}   : [1, C2]            folded conv bias + BN shift
    feat_ref : [R, C2]            pooled output (valid at even padded h,w >= 2)
    pad2_ref : [2*_HALO + R, C2]  scratch: haloed conv2 input, then h2 for pool
    """

    def conv3x3(src_ref, w_ref, cin):
        acc = jnp.zeros((R, C2), jnp.float32)
        for j in range(9):                        # tap (ky, kx), j = ky*3 + kx
            dy, dx = j // 3 - 1, j % 3 - 1
            off = _HALO + dy * _WPAD + dx
            shifted = src_ref[off:off + R, :].astype(_MM_DTYPE)       # [R, cin]
            acc = acc + jnp.dot(
                shifted, w_ref[j * cin:(j + 1) * cin, :].astype(_MM_DTYPE),
                preferred_element_type=jnp.float32)                   # MXU
        return acc

    # ---- conv1 + (folded) BN + ReLU; one multiply re-zeroes the pad border --
    h1 = jnp.maximum(conv3x3(x_ref, w1_ref, C1) + t1_ref[...], 0.0) * mask_ref[...]

    # ---- conv2 input: zero only the halo rows, aligned interior store -------
    pad2_ref[0:_HALO, :] = jnp.zeros((_HALO, C2), jnp.float32)
    pad2_ref[_HALO + R:2 * _HALO + R, :] = jnp.zeros((_HALO, C2), jnp.float32)
    pad2_ref[_HALO:_HALO + R, :] = h1

    h2 = jnp.maximum(conv3x3(pad2_ref, w2_ref, C2) + t2_ref[...], 0.0)

    # ---- 2x2 / stride-2 max pool --------------------------------------------
    # h1 is dead after the tap loop: reuse pad2's interior so the three
    # shifted neighbours are plain contiguous slices (no strided loads, no
    # concats, no in-kernel transposes).  Rows whose padded (h, w) are not
    # both even and >= 2 hold junk; the wrapper never reads them.
    pad2_ref[_HALO:_HALO + R, :] = h2
    right = pad2_ref[_HALO + 1:_HALO + 1 + R, :]
    down = pad2_ref[_HALO + _WPAD:_HALO + _WPAD + R, :]
    diag = pad2_ref[_HALO + _WPAD + 1:_HALO + _WPAD + 1 + R, :]
    feat_ref[...] = jnp.maximum(jnp.maximum(h2, right), jnp.maximum(down, diag))


# ------------------------------ host-side glue ------------------------------

@jax.jit
def mod_eight_forward(x_nchw, params):
    """Returns (y [B,32,H/2,W/2] NCHW feature map, logits [B,3])."""
    B, C1, H, W = x_nchw.shape
    C2 = 32
    HP, WP = H // 2, W // 2
    R = B * _HPAD * _WPAD

    # NHWC, embed each image at [2:2+H, 2:2+W] of a zero HPADxWPAD grid, then
    # flatten to rows ordered (b, h, w) and add the zero halo rows (all XLA).
    x_nhwc = jnp.transpose(x_nchw, (0, 2, 3, 1)).astype(jnp.float32)
    x_pad = jnp.pad(x_nhwc, ((0, 0), (_HPAD - H, 0), (_WPAD - W, 0), (0, 0)))
    x2d = jnp.pad(x_pad.reshape(R, C1), ((_HALO, _HALO), (0, 0)))

    # interior mask: 1.0 where the pixel is real data, 0.0 on the pad border.
    m = np.zeros((B, _HPAD, _WPAD, C2), np.float32)
    m[:, _HPAD - H:, _WPAD - W:, :] = 1.0
    mask = jnp.asarray(m.reshape(R, C2))

    kern = functools.partial(_fused_kernel, R=R, C1=C1, C2=C2)
    feat = pl.pallas_call(
        kern,
        out_shape=jax.ShapeDtypeStruct((R, C2), jnp.float32),
        in_specs=[_VMEM] * 6,
        out_specs=_VMEM,
        scratch_shapes=[pltpu.VMEM((2 * _HALO + R, C2), jnp.float32)],
        # TODO(synk): for large B, tile the batch with grid=(B//bt,) and
        # dimension_semantics=("parallel",) so both v7x TensorCores share the
        # work and per-core VMEM stays bounded (v7x only has 64 MiB physical).
    )(x2d, mask, params['w1'], params['t1'], params['w2'], params['t2'])

    # Valid pooled cells sit at even padded (h, w) >= 2; the tiny (64 KB)
    # strided slice and NHWC->NCHW transpose are left to XLA.
    pooled = feat.reshape(B, _HPAD, _WPAD, C2)[:, 2::2, 2::2, :]     # [B,7,7,32]
    y = jnp.transpose(pooled, (0, 3, 1, 2))                          # NCHW

    # classifier: one [B,1568]x[1568,3] GEMM, hoisted to XLA (free fusion).
    logits = jnp.dot(y.reshape(B, C2 * HP * WP), params['W'].T,
                     precision=jax.lax.Precision.HIGHEST) + params['b']
    return y, logits


# ------------------------- deterministic parameters -------------------------

def init_params(key):
    ks = jax.random.split(key, 14)

    def conv_block(kw, kb, kg, kbe, km, kv, cin, cout):
        w = 0.1 * jax.random.normal(kw, (cout, cin, 3, 3), jnp.float32)
        b = 0.1 * jax.random.normal(kb, (cout,), jnp.float32)
        gamma = 1.0 + 0.1 * jax.random.normal(kg, (cout,), jnp.float32)
        beta = 0.1 * jax.random.normal(kbe, (cout,), jnp.float32)
        mean = 0.1 * jax.random.normal(km, (cout,), jnp.float32)
        var = jax.random.uniform(kv, (cout,), jnp.float32, 0.5, 1.5)
        s = gamma / jnp.sqrt(var + _EPS)            # eval-mode BN scale
        t = beta + (b - mean) * s                   # folded conv bias + BN shift
        # (cout,cin,kh,kw) -> rows (ky,kx,cin), cols cout, BN scale pre-folded
        w_mat = jnp.transpose(w, (2, 3, 1, 0)).reshape(9 * cin, cout) * s[None, :]
        return (w, b, gamma, beta, mean, var), w_mat, t.reshape(1, cout)

    raw1, w1, t1 = conv_block(*ks[0:6], 16, 32)
    raw2, w2, t2 = conv_block(*ks[6:12], 32, 32)

    WL = 0.1 * jax.random.normal(ks[12], (3, 32 * 7 * 7), jnp.float32)
    bl = 0.1 * jax.random.normal(ks[13], (3,), jnp.float32)

    params = dict(w1=w1, t1=t1, w2=w2, t2=t2, W=WL, b=bl.reshape(1, 3))
    raw = dict(c1=raw1, c2=raw2, W=WL, b=bl)
    return params, raw


# ------------------------------ pure-JAX reference ---------------------------

def reference_forward(x_nchw, raw):
    x = jnp.transpose(x_nchw, (0, 2, 3, 1)).astype(jnp.float32)

    def block(x, w, b, gamma, beta, mean, var):
        y = jax.lax.conv_general_dilated(
            x, jnp.transpose(w, (2, 3, 1, 0)), (1, 1), 'SAME',
            dimension_numbers=('NHWC', 'HWIO', 'NHWC'),
            precision=jax.lax.Precision.HIGHEST) + b
        y = gamma * (y - mean) / jnp.sqrt(var + _EPS) + beta
        return jnp.maximum(y, 0.0)

    h = block(x, *raw['c1'])
    h = block(h, *raw['c2'])
    h = jax.lax.reduce_window(h, -jnp.inf, jax.lax.max,
                              (1, 2, 2, 1), (1, 2, 2, 1), 'VALID')
    y = jnp.transpose(h, (0, 3, 1, 2))                         # NCHW
    feat = y.reshape(x.shape[0], -1)
    out = jnp.dot(feat, raw['W'].T,
                  precision=jax.lax.Precision.HIGHEST) + raw['b']
    return y, out


# ----------------------------------- main ------------------------------------

if __name__ == "__main__":
    key = jax.random.PRNGKey(0)
    pkey, xkey = jax.random.split(key)
    params, raw = init_params(pkey)

    # Input must flatten to 32*7*7 = 1568 after the 2x2 pool -> NCHW [B,16,14,14]
    x = jax.random.normal(xkey, (2, 16, 14, 14), jnp.float32)

    y, out = mod_eight_forward(x, params)
    jax.block_until_ready((y, out))

    y_ref, out_ref = reference_forward(x, raw)
    # tightened from 1e-2 (both paths are true f32 now)
    np.testing.assert_allclose(np.asarray(y), np.asarray(y_ref),
                               rtol=1e-4, atol=1e-4)
    np.testing.assert_allclose(np.asarray(out), np.asarray(out_ref),
                               rtol=1e-4, atol=1e-4)

    print("KERNEL_OK")
</pallas_src>

<mosaic_0001>
module attributes {stable_mosaic.version = 11 : i64} {
  func.func @_fused_kernel(%arg0: memref<560x16xf32, #tpu.memory_space<vmem>>, %arg1: memref<512x32xf32, #tpu.memory_space<vmem>>, %arg2: memref<144x32xf32, #tpu.memory_space<vmem>>, %arg3: memref<1x32xf32, #tpu.memory_space<vmem>>, %arg4: memref<288x32xf32, #tpu.memory_space<vmem>>, %arg5: memref<1x32xf32, #tpu.memory_space<vmem>>, %arg6: memref<512x32xf32, #tpu.memory_space<vmem>>, %arg7: memref<560x32xf32, #tpu.memory_space<vmem>>) attributes {dimension_semantics = [], scalar_prefetch = 0 : i64, scratch_operands = 1 : i64, tpu.core_type = #tpu.core_type<tc>} {
    %cst = arith.constant 0.000000e+00 : f32
    %0 = vector.broadcast %cst : f32 to vector<512x32xf32>
    %c7 = arith.constant 7 : index
    %c0 = arith.constant 0 : index
    %1 = vector.load %arg0[%c7, %c0] : memref<560x16xf32, #tpu.memory_space<vmem>>, vector<512x16xf32>
    %c0_0 = arith.constant 0 : index
    %c0_1 = arith.constant 0 : index
    %2 = vector.load %arg2[%c0_0, %c0_1] : memref<144x32xf32, #tpu.memory_space<vmem>>, vector<16x32xf32>
    %cst_2 = arith.constant dense<0.000000e+00> : vector<512x32xf32>
    %3 = tpu.matmul %1, %2, %cst_2 {dimension_numbers = #tpu.dot_dimension_numbers<[1], [0], [0], [1], [0, 0, 1, 1], [], []>} : vector<512x16xf32>, vector<16x32xf32>, vector<512x32xf32> -> vector<512x32xf32>
    %4 = arith.addf %0, %3 : vector<512x32xf32>
    %c8 = arith.constant 8 : index
    %c0_3 = arith.constant 0 : index
    %5 = vector.load %arg0[%c8, %c0_3] : memref<560x16xf32, #tpu.memory_space<vmem>>, vector<512x16xf32>
    %c16 = arith.constant 16 : index
    %c0_4 = arith.constant 0 : index
    %6 = vector.load %arg2[%c16, %c0_4] : memref<144x32xf32, #tpu.memory_space<vmem>>, vector<16x32xf32>
    %cst_5 = arith.constant dense<0.000000e+00> : vector<512x32xf32>
    %7 = tpu.matmul %5, %6, %cst_5 {dimension_numbers = #tpu.dot_dimension_numbers<[1], [0], [0], [1], [0, 0, 1, 1], [], []>} : vector<512x16xf32>, vector<16x32xf32>, vector<512x32xf32> -> vector<512x32xf32>
    %8 = arith.addf %4, %7 : vector<512x32xf32>
    %c9 = arith.constant 9 : index
    %c0_6 = arith.constant 0 : index
    %9 = vector.load %arg0[%c9, %c0_6] : memref<560x16xf32, #tpu.memory_space<vmem>>, vector<512x16xf32>
    %c32 = arith.constant 32 : index
    %c0_7 = arith.constant 0 : index
    %10 = vector.load %arg2[%c32, %c0_7] : memref<144x32xf32, #tpu.memory_space<vmem>>, vector<16x32xf32>
    %cst_8 = arith.constant dense<0.000000e+00> : vector<512x32xf32>
    %11 = tpu.matmul %9, %10, %cst_8 {dimension_numbers = #tpu.dot_dimension_numbers<[1], [0], [0], [1], [0, 0, 1, 1], [], []>} : vector<512x16xf32>, vector<16x32xf32>, vector<512x32xf32> -> vector<512x32xf32>
    %12 = arith.addf %8, %11 : vector<512x32xf32>
    %c23 = arith.constant 23 : index
    %c0_9 = arith.constant 0 : index
    %13 = vector.load %arg0[%c23, %c0_9] : memref<560x16xf32, #tpu.memory_space<vmem>>, vector<512x16xf32>
    %c48 = arith.constant 48 : index
    %c0_10 = arith.constant 0 : index
    %14 = vector.load %arg2[%c48, %c0_10] : memref<144x32xf32, #tpu.memory_space<vmem>>, vector<16x32xf32>
    %cst_11 = arith.constant dense<0.000000e+00> : vector<512x32xf32>
    %15 = tpu.matmul %13, %14, %cst_11 {dimension_numbers = #tpu.dot_dimension_numbers<[1], [0], [0], [1], [0, 0, 1, 1], [], []>} : vector<512x16xf32>, vector<16x32xf32>, vector<512x32xf32> -> vector<512x32xf32>
    %16 = arith.addf %12, %15 : vector<512x32xf32>
    %c24 = arith.constant 24 : index
    %c0_12 = arith.constant 0 : index
    %17 = vector.load %arg0[%c24, %c0_12] : memref<560x16xf32, #tpu.memory_space<vmem>>, vector<512x16xf32>
    %c64 = arith.constant 64 : index
    %c0_13 = arith.constant 0 : index
    %18 = vector.load %arg2[%c64, %c0_13] : memref<144x32xf32, #tpu.memory_space<vmem>>, vector<16x32xf32>
    %cst_14 = arith.constant dense<0.000000e+00> : vector<512x32xf32>
    %19 = tpu.matmul %17, %18, %cst_14 {dimension_numbers = #tpu.dot_dimension_numbers<[1], [0], [0], [1], [0, 0, 1, 1], [], []>} : vector<512x16xf32>, vector<16x32xf32>, vector<512x32xf32> -> vector<512x32xf32>
    %20 = arith.addf %16, %19 : vector<512x32xf32>
    %c25 = arith.constant 25 : index
    %c0_15 = arith.constant 0 : index
    %21 = vector.load %arg0[%c25, %c0_15] : memref<560x16xf32, #tpu.memory_space<vmem>>, vector<512x16xf32>
    %c80 = arith.constant 80 : index
    %c0_16 = arith.constant 0 : index
    %22 = vector.load %arg2[%c80, %c0_16] : memref<144x32xf32, #tpu.memory_space<vmem>>, vector<16x32xf32>
    %cst_17 = arith.constant dense<0.000000e+00> : vector<512x32xf32>
    %23 = tpu.matmul %21, %22, %cst_17 {dimension_numbers = #tpu.dot_dimension_numbers<[1], [0], [0], [1], [0, 0, 1, 1], [], []>} : vector<512x16xf32>, vector<16x32xf32>, vector<512x32xf32> -> vector<512x32xf32>
    %24 = arith.addf %20, %23 : vector<512x32xf32>
    %c39 = arith.constant 39 : index
    %c0_18 = arith.constant 0 : index
    %25 = vector.load %arg0[%c39, %c0_18] : memref<560x16xf32, #tpu.memory_space<vmem>>, vector<512x16xf32>
    %c96 = arith.constant 96 : index
    %c0_19 = arith.constant 0 : index
    %26 = vector.load %arg2[%c96, %c0_19] : memref<144x32xf32, #tpu.memory_space<vmem>>, vector<16x32xf32>
    %cst_20 = arith.constant dense<0.000000e+00> : vector<512x32xf32>
    %27 = tpu.matmul %25, %26, %cst_20 {dimension_numbers = #tpu.dot_dimension_numbers<[1], [0], [0], [1], [0, 0, 1, 1], [], []>} : vector<512x16xf32>, vector<16x32xf32>, vector<512x32xf32> -> vector<512x32xf32>
    %28 = arith.addf %24, %27 : vector<512x32xf32>
    %c40 = arith.constant 40 : index
    %c0_21 = arith.constant 0 : index
    %29 = vector.load %arg0[%c40, %c0_21] : memref<560x16xf32, #tpu.memory_space<vmem>>, vector<512x16xf32>
    %c112 = arith.constant 112 : index
    %c0_22 = arith.constant 0 : index
    %30 = vector.load %arg2[%c112, %c0_22] : memref<144x32xf32, #tpu.memory_space<vmem>>, vector<16x32xf32>
    %cst_23 = arith.constant dense<0.000000e+00> : vector<512x32xf32>
    %31 = tpu.matmul %29, %30, %cst_23 {dimension_numbers = #tpu.dot_dimension_numbers<[1], [0], [0], [1], [0, 0, 1, 1], [], []>} : vector<512x16xf32>, vector<16x32xf32>, vector<512x32xf32> -> vector<512x32xf32>
    %32 = arith.addf %28, %31 : vector<512x32xf32>
    %c41 = arith.constant 41 : index
    %c0_24 = arith.constant 0 : index
    %33 = vector.load %arg0[%c41, %c0_24] : memref<560x16xf32, #tpu.memory_space<vmem>>, vector<512x16xf32>
    %c128 = arith.constant 128 : index
    %c0_25 = arith.constant 0 : index
    %34 = vector.load %arg2[%c128, %c0_25] : memref<144x32xf32, #tpu.memory_space<vmem>>, vector<16x32xf32>
    %cst_26 = arith.constant dense<0.000000e+00> : vector<512x32xf32>
    %35 = tpu.matmul %33, %34, %cst_26 {dimension_numbers = #tpu.dot_dimension_numbers<[1], [0], [0], [1], [0, 0, 1, 1], [], []>} : vector<512x16xf32>, vector<16x32xf32>, vector<512x32xf32> -> vector<512x32xf32>
    %36 = arith.addf %32, %35 : vector<512x32xf32>
    %c0_27 = arith.constant 0 : index
    %c0_28 = arith.constant 0 : index
    %37 = vector.load %arg3[%c0_27, %c0_28] : memref<1x32xf32, #tpu.memory_space<vmem>>, vector<1x32xf32>
    %38 = vector.broadcast %37 : vector<1x32xf32> to vector<512x32xf32>
    %39 = arith.addf %36, %38 : vector<512x32xf32>
    %cst_29 = arith.constant 0.000000e+00 : f32
    %40 = vector.broadcast %cst_29 : f32 to vector<512x32xf32>
    %41 = arith.maximumf %39, %40 : vector<512x32xf32>
    %c0_30 = arith.constant 0 : index
    %c0_31 = arith.constant 0 : index
    %42 = vector.load %arg1[%c0_30, %c0_31] : memref<512x32xf32, #tpu.memory_space<vmem>>, vector<512x32xf32>
    %43 = arith.mulf %41, %42 : vector<512x32xf32>
    %cst_32 = arith.constant 0.000000e+00 : f32
    %44 = vector.broadcast %cst_32 : f32 to vector<24x32xf32>
    %c0_33 = arith.constant 0 : index
    %c0_34 = arith.constant 0 : index
    %45 = vector.load %arg7[%c0_33, %c0_34] : memref<560x32xf32, #tpu.memory_space<vmem>>, vector<24x32xf32>
    tpu.vector_store %arg7[%c0_33, %c0_34], %44 {strides = array<i32>} : memref<560x32xf32, #tpu.memory_space<vmem>>, vector<24x32xf32>,
    %cst_35 = arith.constant 0.000000e+00 : f32
    %46 = vector.broadcast %cst_35 : f32 to vector<24x32xf32>
    %c536 = arith.constant 536 : index
    %c0_36 = arith.constant 0 : index
    %47 = vector.load %arg7[%c536, %c0_36] : memref<560x32xf32, #tpu.memory_space<vmem>>, vector<24x32xf32>
    tpu.vector_store %arg7[%c536, %c0_36], %46 {strides = array<i32>} : memref<560x32xf32, #tpu.memory_space<vmem>>, vector<24x32xf32>,
    %c24_37 = arith.constant 24 : index
    %c0_38 = arith.constant 0 : index
    %48 = vector.load %arg7[%c24_37, %c0_38] : memref<560x32xf32, #tpu.memory_space<vmem>>, vector<512x32xf32>
    tpu.vector_store %arg7[%c24_37, %c0_38], %43 {strides = array<i32>} : memref<560x32xf32, #tpu.memory_space<vmem>>, vector<512x32xf32>,
    %cst_39 = arith.constant 0.000000e+00 : f32
    %49 = vector.broadcast %cst_39 : f32 to vector<512x32xf32>
    %c7_40 = arith.constant 7 : index
    %c0_41 = arith.constant 0 : index
    %50 = vector.load %arg7[%c7_40, %c0_41] : memref<560x32xf32, #tpu.memory_space<vmem>>, vector<512x32xf32>
    %c0_42 = arith.constant 0 : index
    %c0_43 = arith.constant 0 : index
    %51 = vector.load %arg4[%c0_42, %c0_43] : memref<288x32xf32, #tpu.memory_space<vmem>>, vector<32x32xf32>
    %cst_44 = arith.constant dense<0.000000e+00> : vector<512x32xf32>
    %52 = tpu.matmul %50, %51, %cst_44 {dimension_numbers = #tpu.dot_dimension_numbers<[1], [0], [0], [1], [0, 0, 1, 1], [], []>} : vector<512x32xf32>, vector<32x32xf32>, vector<512x32xf32> -> vector<512x32xf32>
    %53 = arith.addf %49, %52 : vector<512x32xf32>
    %c8_45 = arith.constant 8 : index
    %c0_46 = arith.constant 0 : index
    %54 = vector.load %arg7[%c8_45, %c0_46] : memref<560x32xf32, #tpu.memory_space<vmem>>, vector<512x32xf32>
    %c32_47 = arith.constant 32 : index
    %c0_48 = arith.constant 0 : index
    %55 = vector.load %arg4[%c32_47, %c0_48] : memref<288x32xf32, #tpu.memory_space<vmem>>, vector<32x32xf32>
    %cst_49 = arith.constant dense<0.000000e+00> : vector<512x32xf32>
    %56 = tpu.matmul %54, %55, %cst_49 {dimension_numbers = #tpu.dot_dimension_numbers<[1], [0], [0], [1], [0, 0, 1, 1], [], []>} : vector<512x32xf32>, vector<32x32xf32>, vector<512x32xf32> -> vector<512x32xf32>
    %57 = arith.addf %53, %56 : vector<512x32xf32>
    %c9_50 = arith.constant 9 : index
    %c0_51 = arith.constant 0 : index
    %58 = vector.load %arg7[%c9_50, %c0_51] : memref<560x32xf32, #tpu.memory_space<vmem>>, vector<512x32xf32>
    %c64_52 = arith.constant 64 : index
    %c0_53 = arith.constant 0 : index
    %59 = vector.load %arg4[%c64_52, %c0_53] : memref<288x32xf32, #tpu.memory_space<vmem>>, vector<32x32xf32>
    %cst_54 = arith.constant dense<0.000000e+00> : vector<512x32xf32>
    %60 = tpu.matmul %58, %59, %cst_54 {dimension_numbers = #tpu.dot_dimension_numbers<[1], [0], [0], [1], [0, 0, 1, 1], [], []>} : vector<512x32xf32>, vector<32x32xf32>, vector<512x32xf32> -> vector<512x32xf32>
    %61 = arith.addf %57, %60 : vector<512x32xf32>
    %c23_55 = arith.constant 23 : index
    %c0_56 = arith.constant 0 : index
    %62 = vector.load %arg7[%c23_55, %c0_56] : memref<560x32xf32, #tpu.memory_space<vmem>>, vector<512x32xf32>
    %c96_57 = arith.constant 96 : index
    %c0_58 = arith.constant 0 : index
    %63 = vector.load %arg4[%c96_57, %c0_58] : memref<288x32xf32, #tpu.memory_space<vmem>>, vector<32x32xf32>
    %cst_59 = arith.constant dense<0.000000e+00> : vector<512x32xf32>
    %64 = tpu.matmul %62, %63, %cst_59 {dimension_numbers = #tpu.dot_dimension_numbers<[1], [0], [0], [1], [0, 0, 1, 1], [], []>} : vector<512x32xf32>, vector<32x32xf32>, vector<512x32xf32> -> vector<512x32xf32>
    %65 = arith.addf %61, %64 : vector<512x32xf32>
    %c24_60 = arith.constant 24 : index
    %c0_61 = arith.constant 0 : index
    %66 = vector.load %arg7[%c24_60, %c0_61] : memref<560x32xf32, #tpu.memory_space<vmem>>, vector<512x32xf32>
    %c128_62 = arith.constant 128 : index
    %c0_63 = arith.constant 0 : index
    %67 = vector.load %arg4[%c128_62, %c0_63] : memref<288x32xf32, #tpu.memory_space<vmem>>, vector<32x32xf32>
    %cst_64 = arith.constant dense<0.000000e+00> : vector<512x32xf32>
    %68 = tpu.matmul %66, %67, %cst_64 {dimension_numbers = #tpu.dot_dimension_numbers<[1], [0], [0], [1], [0, 0, 1, 1], [], []>} : vector<512x32xf32>, vector<32x32xf32>, vector<512x32xf32> -> vector<512x32xf32>
    %69 = arith.addf %65, %68 : vector<512x32xf32>
    %c25_65 = arith.constant 25 : index
    %c0_66 = arith.constant 0 : index
    %70 = vector.load %arg7[%c25_65, %c0_66] : memref<560x32xf32, #tpu.memory_space<vmem>>, vector<512x32xf32>
    %c160 = arith.constant 160 : index
    %c0_67 = arith.constant 0 : index
    %71 = vector.load %arg4[%c160, %c0_67] : memref<288x32xf32, #tpu.memory_space<vmem>>, vector<32x32xf32>
    %cst_68 = arith.constant dense<0.000000e+00> : vector<512x32xf32>
    %72 = tpu.matmul %70, %71, %cst_68 {dimension_numbers = #tpu.dot_dimension_numbers<[1], [0], [0], [1], [0, 0, 1, 1], [], []>} : vector<512x32xf32>, vector<32x32xf32>, vector<512x32xf32> -> vector<512x32xf32>
    %73 = arith.addf %69, %72 : vector<512x32xf32>
    %c39_69 = arith.constant 39 : index
    %c0_70 = arith.constant 0 : index
    %74 = vector.load %arg7[%c39_69, %c0_70] : memref<560x32xf32, #tpu.memory_space<vmem>>, vector<512x32xf32>
    %c192 = arith.constant 192 : index
    %c0_71 = arith.constant 0 : index
    %75 = vector.load %arg4[%c192, %c0_71] : memref<288x32xf32, #tpu.memory_space<vmem>>, vector<32x32xf32>
    %cst_72 = arith.constant dense<0.000000e+00> : vector<512x32xf32>
    %76 = tpu.matmul %74, %75, %cst_72 {dimension_numbers = #tpu.dot_dimension_numbers<[1], [0], [0], [1], [0, 0, 1, 1], [], []>} : vector<512x32xf32>, vector<32x32xf32>, vector<512x32xf32> -> vector<512x32xf32>
    %77 = arith.addf %73, %76 : vector<512x32xf32>
    %c40_73 = arith.constant 40 : index
    %c0_74 = arith.constant 0 : index
    %78 = vector.load %arg7[%c40_73, %c0_74] : memref<560x32xf32, #tpu.memory_space<vmem>>, vector<512x32xf32>
    %c224 = arith.constant 224 : index
    %c0_75 = arith.constant 0 : index
    %79 = vector.load %arg4[%c224, %c0_75] : memref<288x32xf32, #tpu.memory_space<vmem>>, vector<32x32xf32>
    %cst_76 = arith.constant dense<0.000000e+00> : vector<512x32xf32>
    %80 = tpu.matmul %78, %79, %cst_76 {dimension_numbers = #tpu.dot_dimension_numbers<[1], [0], [0], [1], [0, 0, 1, 1], [], []>} : vector<512x32xf32>, vector<32x32xf32>, vector<512x32xf32> -> vector<512x32xf32>
    %81 = arith.addf %77, %80 : vector<512x32xf32>
    %c41_77 = arith.constant 41 : index
    %c0_78 = arith.constant 0 : index
    %82 = vector.load %arg7[%c41_77, %c0_78] : memref<560x32xf32, #tpu.memory_space<vmem>>, vector<512x32xf32>
    %c256 = arith.constant 256 : index
    %c0_79 = arith.constant 0 : index
    %83 = vector.load %arg4[%c256, %c0_79] : memref<288x32xf32, #tpu.memory_space<vmem>>, vector<32x32xf32>
    %cst_80 = arith.constant dense<0.000000e+00> : vector<512x32xf32>
    %84 = tpu.matmul %82, %83, %cst_80 {dimension_numbers = #tpu.dot_dimension_numbers<[1], [0], [0], [1], [0, 0, 1, 1], [], []>} : vector<512x32xf32>, vector<32x32xf32>, vector<512x32xf32> -> vector<512x32xf32>
    %85 = arith.addf %81, %84 : vector<512x32xf32>
    %c0_81 = arith.constant 0 : index
    %c0_82 = arith.constant 0 : index
    %86 = vector.load %arg5[%c0_81, %c0_82] : memref<1x32xf32, #tpu.memory_space<vmem>>, vector<1x32xf32>
    %87 = vector.broadcast %86 : vector<1x32xf32> to vector<512x32xf32>
    %88 = arith.addf %85, %87 : vector<512x32xf32>
    %cst_83 = arith.constant 0.000000e+00 : f32
    %89 = vector.broadcast %cst_83 : f32 to vector<512x32xf32>
    %90 = arith.maximumf %88, %89 : vector<512x32xf32>
    %c24_84 = arith.constant 24 : index
    %c0_85 = arith.constant 0 : index
    %91 = vector.load %arg7[%c24_84, %c0_85] : memref<560x32xf32, #tpu.memory_space<vmem>>, vector<512x32xf32>
    tpu.vector_store %arg7[%c24_84, %c0_85], %90 {strides = array<i32>} : memref<560x32xf32, #tpu.memory_space<vmem>>, vector<512x32xf32>,
    %c25_86 = arith.constant 25 : index
    %c0_87 = arith.constant 0 : index
    %92 = vector.load %arg7[%c25_86, %c0_87] : memref<560x32xf32, #tpu.memory_space<vmem>>, vector<512x32xf32>
    %c40_88 = arith.constant 40 : index
    %c0_89 = arith.constant 0 : index
    %93 = vector.load %arg7[%c40_88, %c0_89] : memref<560x32xf32, #tpu.memory_space<vmem>>, vector<512x32xf32>
    %c41_90 = arith.constant 41 : index
    %c0_91 = arith.constant 0 : index
    %94 = vector.load %arg7[%c41_90, %c0_91] : memref<560x32xf32, #tpu.memory_space<vmem>>, vector<512x32xf32>
    %95 = arith.maximumf %90, %92 : vector<512x32xf32>
    %96 = arith.maximumf %93, %94 : vector<512x32xf32>
    %97 = arith.maximumf %95, %96 : vector<512x32xf32>
    %c0_92 = arith.constant 0 : index
    %c0_93 = arith.constant 0 : index
    %98 = vector.load %arg6[%c0_92, %c0_93] : memref<512x32xf32, #tpu.memory_space<vmem>>, vector<512x32xf32>
    tpu.vector_store %arg6[%c0_92, %c0_93], %97 {strides = array<i32>} : memref<512x32xf32, #tpu.memory_space<vmem>>, vector<512x32xf32>,
    return
  }
}

</mosaic_0001>

<llo_original>
// kernel: mod_eight_forward.1
$region0: #{mod_eight_forward.1}
  #allocation0 [shape = 'u32[]', space=smem, size = 0x4, offset = 0x4, fixed_abs, tag = 'smem constant byte address 0x4 - core index']
  #allocation1 [shape = 'u32[144,128]{1,0:T(1,128)}', space=vmem, size = 0x12000, scoped, tag = 'internal scratch']
  #allocation2 [shape = 'f32[560,32]{1,0:T(8,128)}', space=vmem, size = 0x46000, scoped, tag = 'scratch operand']
  %s0 = inlined_call_operand.vmem [shape: f32[560,16], index: 0, kind: input, shape index: {}]
  %s1 = inlined_call_operand.vmem [shape: f32[512,32], index: 1, kind: input, shape index: {}]
  %s2 = inlined_call_operand.vmem [shape: f32[144,32], index: 2, kind: input, shape index: {}]
  %s3 = inlined_call_operand.vmem [shape: f32[1,32], index: 3, kind: input, shape index: {}]
  %s4 = inlined_call_operand.vmem [shape: f32[288,32], index: 4, kind: input, shape index: {}]
  %s5 = inlined_call_operand.vmem [shape: f32[1,32], index: 5, kind: input, shape index: {}]
  %s6 = inlined_call_operand.vmem [shape: f32[512,32], index: 6, kind: output, shape index: {}]
  %s7 = sld [smem:[#allocation0]]
  $region34: #{mod_eight_forward.1} parent=0
    _
  %s9 = ssub.s32 1, %s7
  %s10 = scalar_select 0, %s9, %s7
  // Predicated region
  $region2: #{mod_eight_forward.1} parent=0 // pred_check
    _
  $region3: #{mod_eight_forward.1} parent=0 // pred_check_branch
    %12 = sbr.rel (0) target = $region5
  $region4: #{mod_eight_forward.1} parent=0 // pred_region
    _
  $region5: #{mod_eight_forward.1} parent=0 // pred_fallthru
    _
  // Predicated region
  $region6: #{mod_eight_forward.1} parent=0 // pred_check
    _
  $region7: #{mod_eight_forward.1} parent=0 // pred_check_branch
    %14 = sbr.rel (0) target = $region9
  $region8: #{mod_eight_forward.1} parent=0 // pred_region
    _
  $region9: #{mod_eight_forward.1} parent=0 // pred_fallthru
    _
  // Predicated region
  $region10: #{mod_eight_forward.1} parent=0 // pred_check
    _
  $region11: #{mod_eight_forward.1} parent=0 // pred_check_branch
    %16 = sbr.rel (0) target = $region13
  $region12: #{mod_eight_forward.1} parent=0 // pred_region
    _
  $region13: #{mod_eight_forward.1} parent=0 // pred_fallthru
    _
  // Predicated region
  $region14: #{mod_eight_forward.1} parent=0 // pred_check
    _
  $region15: #{mod_eight_forward.1} parent=0 // pred_check_branch
    %18 = sbr.rel (0) target = $region17
  $region16: #{mod_eight_forward.1} parent=0 // pred_region
    _
  $region17: #{mod_eight_forward.1} parent=0 // pred_fallthru
    _
  // Predicated region
  $region18: #{mod_eight_forward.1} parent=0 // pred_check
    _
  $region19: #{mod_eight_forward.1} parent=0 // pred_check_branch
    %20 = sbr.rel (0) target = $region21
  $region20: #{mod_eight_forward.1} parent=0 // pred_region
    _
  $region21: #{mod_eight_forward.1} parent=0 // pred_fallthru
    _
  // Predicated region
  $region22: #{mod_eight_forward.1} parent=0 // pred_check
    _
  $region23: #{mod_eight_forward.1} parent=0 // pred_check_branch
    %22 = sbr.rel (0) target = $region25
  $region24: #{mod_eight_forward.1} parent=0 // pred_region
    _
  $region25: #{mod_eight_forward.1} parent=0 // pred_fallthru
    _
  %v23 = vld [vmem:[%s0 + $0x7] sm:$0xff]
  %v24 = vld [vmem:[%s0 + $0xf] sm:$0xff]
  %v25 = vld [vmem:[%s0 + $0x17] sm:$0xff]
  %v26 = vld [vmem:[%s0 + $0x1f] sm:$0xff]
  %v27 = vld [vmem:[%s0 + $0x27] sm:$0xff]
  %v28 = vld [vmem:[%s0 + $0x2f] sm:$0xff]
  %v29 = vld [vmem:[%s0 + $0x37] sm:$0xff]
  %v30 = vld [vmem:[%s0 + $0x3f] sm:$0xff]
  %v31 = vld [vmem:[%s0 + $0x47] sm:$0xff]
  %v32 = vld [vmem:[%s0 + $0x4f] sm:$0xff]
  %v33 = vld [vmem:[%s0 + $0x57] sm:$0xff]
  %v34 = vld [vmem:[%s0 + $0x5f] sm:$0xff]
  %v35 = vld [vmem:[%s0 + $0x67] sm:$0xff]
  %v36 = vld [vmem:[%s0 + $0x6f] sm:$0xff]
  %v37 = vld [vmem:[%s0 + $0x77] sm:$0xff]
  %v38 = vld [vmem:[%s0 + $0x7f] sm:$0xff]
  %v39 = vld [vmem:[%s0 + $0x87] sm:$0xff]
  %v40 = vld [vmem:[%s0 + $0x8f] sm:$0xff]
  %v41 = vld [vmem:[%s0 + $0x97] sm:$0xff]
  %v42 = vld [vmem:[%s0 + $0x9f] sm:$0xff]
  %v43 = vld [vmem:[%s0 + $0xa7] sm:$0xff]
  %v44 = vld [vmem:[%s0 + $0xaf] sm:$0xff]
  %v45 = vld [vmem:[%s0 + $0xb7] sm:$0xff]
  %v46 = vld [vmem:[%s0 + $0xbf] sm:$0xff]
  %v47 = vld [vmem:[%s0 + $0xc7] sm:$0xff]
  %v48 = vld [vmem:[%s0 + $0xcf] sm:$0xff]
  %v49 = vld [vmem:[%s0 + $0xd7] sm:$0xff]
  %v50 = vld [vmem:[%s0 + $0xdf] sm:$0xff]
  %v51 = vld [vmem:[%s0 + $0xe7] sm:$0xff]
  %v52 = vld [vmem:[%s0 + $0xef] sm:$0xff]
  %v53 = vld [vmem:[%s0 + $0xf7] sm:$0xff]
  %v54 = vld [vmem:[%s0 + $0xff] sm:$0xff]
  %v55 = vld [vmem:[%s0 + $0x107] sm:$0xff]
  %v56 = vld [vmem:[%s0 + $0x10f] sm:$0xff]
  %v57 = vld [vmem:[%s0 + $0x117] sm:$0xff]
  %v58 = vld [vmem:[%s0 + $0x11f] sm:$0xff]
  %v59 = vld [vmem:[%s0 + $0x127] sm:$0xff]
  %v60 = vld [vmem:[%s0 + $0x12f] sm:$0xff]
  %v61 = vld [vmem:[%s0 + $0x137] sm:$0xff]
  %v62 = vld [vmem:[%s0 + $0x13f] sm:$0xff]
  %v63 = vld [vmem:[%s0 + $0x147] sm:$0xff]
  %v64 = vld [vmem:[%s0 + $0x14f] sm:$0xff]
  %v65 = vld [vmem:[%s0 + $0x157] sm:$0xff]
  %v66 = vld [vmem:[%s0 + $0x15f] sm:$0xff]
  %v67 = vld [vmem:[%s0 + $0x167] sm:$0xff]
  %v68 = vld [vmem:[%s0 + $0x16f] sm:$0xff]
  %v69 = vld [vmem:[%s0 + $0x177] sm:$0xff]
  %v70 = vld [vmem:[%s0 + $0x17f] sm:$0xff]
  %v71 = vld [vmem:[%s0 + $0x187] sm:$0xff]
  %v72 = vld [vmem:[%s0 + $0x18f] sm:$0xff]
  %v73 = vld [vmem:[%s0 + $0x197] sm:$0xff]
  %v74 = vld [vmem:[%s0 + $0x19f] sm:$0xff]
  %v75 = vld [vmem:[%s0 + $0x1a7] sm:$0xff]
  %v76 = vld [vmem:[%s0 + $0x1af] sm:$0xff]
  %v77 = vld [vmem:[%s0 + $0x1b7] sm:$0xff]
  %v78 = vld [vmem:[%s0 + $0x1bf] sm:$0xff]
  %v79 = vld [vmem:[%s0 + $0x1c7] sm:$0xff]
  %v80 = vld [vmem:[%s0 + $0x1cf] sm:$0xff]
  %v81 = vld [vmem:[%s0 + $0x1d7] sm:$0xff]
  %v82 = vld [vmem:[%s0 + $0x1df] sm:$0xff]
  %v83 = vld [vmem:[%s0 + $0x1e7] sm:$0xff]
  %v84 = vld [vmem:[%s0 + $0x1ef] sm:$0xff]
  %v85 = vld [vmem:[%s0 + $0x1f7] sm:$0xff]
  %v86 = vld [vmem:[%s0 + $0x1ff] sm:$0xff]
  %v87 = vld [vmem:[%s2] sm:$0xff]
  %v88 = vld [vmem:[%s2 + $0x8] sm:$0xff]
  %v89 = vld [vmem:[%s0 + $0x8] sm:$0xff]
  %v90 = vld [vmem:[%s0 + $0x10] sm:$0xff]
  %v91 = vld [vmem:[%s0 + $0x18] sm:$0xff]
  %v92 = vld [vmem:[%s0 + $0x20] sm:$0xff]
  %v93 = vld [vmem:[%s0 + $0x28] sm:$0xff]
  %v94 = vld [vmem:[%s0 + $0x30] sm:$0xff]
  %v95 = vld [vmem:[%s0 + $0x38] sm:$0xff]
  %v96 = vld [vmem:[%s0 + $0x40] sm:$0xff]
  %v97 = vld [vmem:[%s0 + $0x48] sm:$0xff]
  %v98 = vld [vmem:[%s0 + $0x50] sm:$0xff]
  %v99 = vld [vmem:[%s0 + $0x58] sm:$0xff]
  %v100 = vld [vmem:[%s0 + $0x60] sm:$0xff]
  %v101 = vld [vmem:[%s0 + $0x68] sm:$0xff]
  %v102 = vld [vmem:[%s0 + $0x70] sm:$0xff]
  %v103 = vld [vmem:[%s0 + $0x78] sm:$0xff]
  %v104 = vld [vmem:[%s0 + $0x80] sm:$0xff]
  %v105 = vld [vmem:[%s0 + $0x88] sm:$0xff]
  %v106 = vld [vmem:[%s0 + $0x90] sm:$0xff]
  %v107 = vld [vmem:[%s0 + $0x98] sm:$0xff]
  %v108 = vld [vmem:[%s0 + $0xa0] sm:$0xff]
  %v109 = vld [vmem:[%s0 + $0xa8] sm:$0xff]
  %v110 = vld [vmem:[%s0 + $0xb0] sm:$0xff]
  %v111 = vld [vmem:[%s0 + $0xb8] sm:$0xff]
  %v112 = vld [vmem:[%s0 + $0xc0] sm:$0xff]
  %v113 = vld [vmem:[%s0 + $0xc8] sm:$0xff]
  %v114 = vld [vmem:[%s0 + $0xd0] sm:$0xff]
  %v115 = vld [vmem:[%s0 + $0xd8] sm:$0xff]
  %v116 = vld [vmem:[%s0 + $0xe0] sm:$0xff]
  %v117 = vld [vmem:[%s0 + $0xe8] sm:$0xff]
  %v118 = vld [vmem:[%s0 + $0xf0] sm:$0xff]
  %v119 = vld [vmem:[%s0 + $0xf8] sm:$0xff]
  %v120 = vld [vmem:[%s0 + $0x100] sm:$0xff]
  %v121 = vld [vmem:[%s0 + $0x108] sm:$0xff]
  %v122 = vld [vmem:[%s0 + $0x110] sm:$0xff]
  %v123 = vld [vmem:[%s0 + $0x118] sm:$0xff]
  %v124 = vld [vmem:[%s0 + $0x120] sm:$0xff]
  %v125 = vld [vmem:[%s0 + $0x128] sm:$0xff]
  %v126 = vld [vmem:[%s0 + $0x130] sm:$0xff]
  %v127 = vld [vmem:[%s0 + $0x138] sm:$0xff]
  %v128 = vld [vmem:[%s0 + $0x140] sm:$0xff]
  %v129 = vld [vmem:[%s0 + $0x148] sm:$0xff]
  %v130 = vld [vmem:[%s0 + $0x150] sm:$0xff]
  %v131 = vld [vmem:[%s0 + $0x158] sm:$0xff]
  %v132 = vld [vmem:[%s0 + $0x160] sm:$0xff]
  %v133 = vld [vmem:[%s0 + $0x168] sm:$0xff]
  %v134 = vld [vmem:[%s0 + $0x170] sm:$0xff]
  %v135 = vld [vmem:[%s0 + $0x178] sm:$0xff]
  %v136 = vld [vmem:[%s0 + $0x180] sm:$0xff]
  %v137 = vld [vmem:[%s0 + $0x188] sm:$0xff]
  %v138 = vld [vmem:[%s0 + $0x190] sm:$0xff]
  %v139 = vld [vmem:[%s0 + $0x198] sm:$0xff]
  %v140 = vld [vmem:[%s0 + $0x1a0] sm:$0xff]
  %v141 = vld [vmem:[%s0 + $0x1a8] sm:$0xff]
  %v142 = vld [vmem:[%s0 + $0x1b0] sm:$0xff]
  %v143 = vld [vmem:[%s0 + $0x1b8] sm:$0xff]
  %v144 = vld [vmem:[%s0 + $0x1c0] sm:$0xff]
  %v145 = vld [vmem:[%s0 + $0x1c8] sm:$0xff]
  %v146 = vld [vmem:[%s0 + $0x1d0] sm:$0xff]
  %v147 = vld [vmem:[%s0 + $0x1d8] sm:$0xff]
  %v148 = vld [vmem:[%s0 + $0x1e0] sm:$0xff]
  %v149 = vld [vmem:[%s0 + $0x1e8] sm:$0xff]
  %v150 = vld [vmem:[%s0 + $0x1f0] sm:$0xff]
  %v151 = vld [vmem:[%s0 + $0x1f8] sm:$0xff]
  %v152 = vld [vmem:[%s0 + $0x200] sm:$0xff]
  %v153 = vld [vmem:[%s2 + $0x10] sm:$0xff]
  %v154 = vld [vmem:[%s2 + $0x18] sm:$0xff]
  %vm155 = vcmask 130048
  %v157 = vsel %vm155, %v89, 0
  %v160 = vsel %vm155, %v90, 0
  %v163 = vsel %vm155, %v91, 0
  %v166 = vsel %vm155, %v92, 0
  %v169 = vsel %vm155, %v93, 0
  %v172 = vsel %vm155, %v94, 0
  %v175 = vsel %vm155, %v95, 0
  %v178 = vsel %vm155, %v96, 0
  %v181 = vsel %vm155, %v97, 0
  %v184 = vsel %vm155, %v98, 0
  %v187 = vsel %vm155, %v99, 0
  %v190 = vsel %vm155, %v100, 0
  %v193 = vsel %vm155, %v101, 0
  %v196 = vsel %vm155, %v102, 0
  %v199 = vsel %vm155, %v103, 0
  %v202 = vsel %vm155, %v104, 0
  %v205 = vsel %vm155, %v105, 0
  %v208 = vsel %vm155, %v106, 0
  %v211 = vsel %vm155, %v107, 0
  %v214 = vsel %vm155, %v108, 0
  %v217 = vsel %vm155, %v109, 0
  %v220 = vsel %vm155, %v110, 0
  %v223 = vsel %vm155, %v111, 0
  %v226 = vsel %vm155, %v112, 0
  %v229 = vsel %vm155, %v113, 0
  %v232 = vsel %vm155, %v114, 0
  %v235 = vsel %vm155, %v115, 0
  %v238 = vsel %vm155, %v116, 0
  %v241 = vsel %vm155, %v117, 0
  %v244 = vsel %vm155, %v118, 0
  %v247 = vsel %vm155, %v119, 0
  %v250 = vsel %vm155, %v120, 0
  %v253 = vsel %vm155, %v121, 0
  %v256 = vsel %vm155, %v122, 0
  %v259 = vsel %vm155, %v123, 0
  %v262 = vsel %vm155, %v124, 0
  %v265 = vsel %vm155, %v125, 0
  %v268 = vsel %vm155, %v126, 0
  %v271 = vsel %vm155, %v127, 0
  %v274 = vsel %vm155, %v128, 0
  %v277 = vsel %vm155, %v129, 0
  %v280 = vsel %vm155, %v130, 0
  %v283 = vsel %vm155, %v131, 0
  %v286 = vsel %vm155, %v132, 0
  %v289 = vsel %vm155, %v133, 0
  %v292 = vsel %vm155, %v134, 0
  %v295 = vsel %vm155, %v135, 0
  %v298 = vsel %vm155, %v136, 0
  %v301 = vsel %vm155, %v137, 0
  %v304 = vsel %vm155, %v138, 0
  %v307 = vsel %vm155, %v139, 0
  %v310 = vsel %vm155, %v140, 0
  %v313 = vsel %vm155, %v141, 0
  %v316 = vsel %vm155, %v142, 0
  %v319 = vsel %vm155, %v143, 0
  %v322 = vsel %vm155, %v144, 0
  %v325 = vsel %vm155, %v145, 0
  %v328 = vsel %vm155, %v146, 0
  %v331 = vsel %vm155, %v147, 0
  %v334 = vsel %vm155, %v148, 0
  %v337 = vsel %vm155, %v149, 0
  %v340 = vsel %vm155, %v150, 0
  %v343 = vsel %vm155, %v151, 0
  %v346 = vsel %vm155, %v152, 0
  %348 = vmatprep.subr.mxu0 0.0
  %349 = vmatpush1.msra.mxu0 %v153
  %350 = vmatprep.subr.mxu0 0.0
  %351 = vmatpush1.msra.mxu0 %v154
  %352 = vmatprep.subr.mxu0 0.0
  %353 = vmatpush1.msra.mxu0 0.0
  %354 = vmatprep.subr.mxu0 0.0
  %355 = vmatpush1.msra.mxu0 0.0
  %356 = vmatprep.subr.mxu0 0.0
  %357 = vmatpush1.msra.mxu0 0.0
  %358 = vmatprep.subr.mxu0 0.0
  %359 = vmatpush1.msra.mxu0 0.0
  %360 = vmatprep.subr.mxu0 0.0
  %361 = vmatpush1.msra.mxu0 0.0
  %362 = vmatprep.subr.mxu0 0.0
  %363 = vmatpush1.msra.mxu0 0.0
  %364 = vmatprep.subr.mxu0 0.0
  %365 = vmatpush1.msra.mxu0 0.0
  %366 = vmatprep.subr.mxu0 0.0
  %367 = vmatpush1.msra.mxu0 0.0
  %368 = vmatprep.subr.mxu0 0.0
  %369 = vmatpush1.msra.mxu0 0.0
  %370 = vmatprep.subr.mxu0 0.0
  %371 = vmatpush1.msra.mxu0 0.0
  %372 = vmatprep.subr.mxu0 0.0
  %373 = vmatpush1.msra.mxu0 0.0
  %374 = vmatprep.subr.mxu0 0.0
  %375 = vmatpush1.msra.mxu0 0.0
  %376 = vmatprep.subr.mxu0 0.0
  %377 = vmatpush1.msra.mxu0 0.0
  %378 = vmatprep.subr.mxu0 0.0
  %379 = vmatpush1.msra.mxu0 0.0
  %380 = vmatprep.subr.mxu0 0.0
  %381 = vmatpush1.msra.mxu0 0.0
  %382 = vmatprep.subr.mxu0 0.0
  %383 = vmatpush1.msra.mxu0 0.0
  %384 = vmatprep.subr.mxu0 0.0
  %385 = vmatpush1.msra.mxu0 0.0
  %386 = vmatprep.subr.mxu0 0.0
  %387 = vmatpush1.msra.mxu0 0.0
  %388 = vmatprep.subr.mxu0 0.0
  %389 = vmatpush1.msra.mxu0 0.0
  %390 = vmatprep.subr.mxu0 0.0
  %391 = vmatpush1.msra.mxu0 0.0
  %392 = vmatprep.subr.mxu0 0.0
  %393 = vmatpush1.msra.mxu0 0.0
  %394 = vmatprep.subr.mxu0 0.0
  %395 = vmatpush1.msra.mxu0 0.0
  %396 = vmatprep.subr.mxu0 0.0
  %397 = vmatpush1.msra.mxu0 0.0
  %398 = vmatprep.subr.mxu0 0.0
  %399 = vmatpush1.msra.mxu0 0.0
  %400 = vmatprep.subr.mxu0 0.0
  %401 = vmatpush1.msra.mxu0 0.0
  %402 = vmatprep.subr.mxu0 0.0
  %403 = vmatpush1.msra.mxu0 0.0
  %404 = vmatprep.subr.mxu0 0.0
  %405 = vmatpush1.msra.mxu0 0.0
  %406 = vmatprep.subr.mxu0 0.0
  %407 = vmatpush1.msra.mxu0 0.0
  %408 = vmatprep.subr.mxu0 0.0
  %409 = vmatpush1.msra.mxu0 0.0
  %410 = vmatprep.subr.mxu0 0.0
  %411 = vmatpush1.msra.mxu0 0.0
  %412 = vmatprep.mubr.f32.mxu0 0.0
  %413 = vmatmul.mubr.f32.gmra.mrb[0].mxu0 %v157
  %v414 = vpop.f32.mrb[0].mxu0
  %v415 = vadd.f32 0.0, %v414
  %v416 = vpop.f32.mrb[0].mxu0
  %417 = vmatprep.mubr.f32.mxu0 0.0
  %418 = vmatmul.mubr.f32.gmra.mrb[0].mxu0 %v160
  %v419 = vpop.f32.mrb[0].mxu0
  %v420 = vadd.f32 0.0, %v419
  %v421 = vpop.f32.mrb[0].mxu0
  %422 = vmatprep.mubr.f32.mxu0 0.0
  %423 = vmatmul.mubr.f32.gmra.mrb[0].mxu0 %v163
  %v424 = vpop.f32.mrb[0].mxu0
  %v425 = vadd.f32 0.0, %v424
  %v426 = vpop.f32.mrb[0].mxu0
  %427 = vmatprep.mubr.f32.mxu0 0.0
  %428 = vmatmul.mubr.f32.gmra.mrb[0].mxu0 %v166
  %v429 = vpop.f32.mrb[0].mxu0
  %v430 = vadd.f32 0.0, %v429
  %v431 = vpop.f32.mrb[0].mxu0
  %432 = vmatprep.mubr.f32.mxu0 0.0
  %433 = vmatmul.mubr.f32.gmra.mrb[0].mxu0 %v169
  %v434 = vpop.f32.mrb[0].mxu0
  %v435 = vadd.f32 0.0, %v434
  %v436 = vpop.f32.mrb[0].mxu0
  %437 = vmatprep.mubr.f32.mxu0 0.0
  %438 = vmatmul.mubr.f32.gmra.mrb[0].mxu0 %v172
  %v439 = vpop.f32.mrb[0].mxu0
  %v440 = vadd.f32 0.0, %v439
  %v441 = vpop.f32.mrb[0].mxu0
  %442 = vmatprep.mubr.f32.mxu0 0.0
  %443 = vmatmul.mubr.f32.gmra.mrb[0].mxu0 %v175
  %v444 = vpop.f32.mrb[0].mxu0
  %v445 = vadd.f32 0.0, %v444
  %v446 = vpop.f32.mrb[0].mxu0
  %447 = vmatprep.mubr.f32.mxu0 0.0
  %448 = vmatmul.mubr.f32.gmra.mrb[0].mxu0 %v178
  %v449 = vpop.f32.mrb[0].mxu0
  %v450 = vadd.f32 0.0, %v449
  %v451 = vpop.f32.mrb[0].mxu0
  %452 = vmatprep.mubr.f32.mxu0 0.0
  %453 = vmatmul.mubr.f32.gmra.mrb[0].mxu0 %v181
  %v454 = vpop.f32.mrb[0].mxu0
  %v455 = vadd.f32 0.0, %v454
  %v456 = vpop.f32.mrb[0].mxu0
  %457 = vmatprep.mubr.f32.mxu0 0.0
  %458 = vmatmul.mubr.f32.gmra.mrb[0].mxu0 %v184
  %v459 = vpop.f32.mrb[0].mxu0
  %v460 = vadd.f32 0.0, %v459
  %v461 = vpop.f32.mrb[0].mxu0
  %462 = vmatprep.mubr.f32.mxu0 0.0
  %463 = vmatmul.mubr.f32.gmra.mrb[0].mxu0 %v187
  %v464 = vpop.f32.mrb[0].mxu0
  %v465 = vadd.f32 0.0, %v464
  %v466 = vpop.f32.mrb[0].mxu0
  %467 = vmatprep.mubr.f32.mxu0 0.0
  %468 = vmatmul.mubr.f32.gmra.mrb[0].mxu0 %v190
  %v469 = vpop.f32.mrb[0].mxu0
  %v470 = vadd.f32 0.0, %v469
  %v471 = vpop.f32.mrb[0].mxu0
  %472 = vmatprep.mubr.f32.mxu0 0.0
  %473 = vmatmul.mubr.f32.gmra.mrb[0].mxu0 %v193
  %v474 = vpop.f32.mrb[0].mxu0
  %v475 = vadd.f32 0.0, %v474
  %v476 = vpop.f32.mrb[0].mxu0
  %477 = vmatprep.mubr.f32.mxu0 0.0
  %478 = vmatmul.mubr.f32.gmra.mrb[0].mxu0 %v196
  %v479 = vpop.f32.mrb[0].mxu0
  %v480 = vadd.f32 0.0, %v479
  %v481 = vpop.f32.mrb[0].mxu0
  %482 = vmatprep.mubr.f32.mxu0 0.0
  %483 = vmatmul.mubr.f32.gmra.mrb[0].mxu0 %v199
  %v484 = vpop.f32.mrb[0].mxu0
  %v485 = vadd.f32 0.0, %v484
  %v486 = vpop.f32.mrb[0].mxu0
  %487 = vmatprep.mubr.f32.mxu0 0.0
  %488 = vmatmul.mubr.f32.gmra.mrb[0].mxu0 %v202
  %v489 = vpop.f32.mrb[0].mxu0
  %v490 = vadd.f32 0.0, %v489
  %v491 = vpop.f32.mrb[0].mxu0
  %492 = vmatprep.mubr.f32.mxu0 0.0
  %493 = vmatmul.mubr.f32.gmra.mrb[0].mxu0 %v205
  %v494 = vpop.f32.mrb[0].mxu0
  %v495 = vadd.f32 0.0, %v494
  %v496 = vpop.f32.mrb[0].mxu0
  %497 = vmatprep.mubr.f32.mxu0 0.0
  %498 = vmatmul.mubr.f32.gmra.mrb[0].mxu0 %v208
  %v499 = vpop.f32.mrb[0].mxu0
  %v500 = vadd.f32 0.0, %v499
  %v501 = vpop.f32.mrb[0].mxu0
  %502 = vmatprep.mubr.f32.mxu0 0.0
  %503 = vmatmul.mubr.f32.gmra.mrb[0].mxu0 %v211
  %v504 = vpop.f32.mrb[0].mxu0
  %v505 = vadd.f32 0.0, %v504
  %v506 = vpop.f32.mrb[0].mxu0
  %507 = vmatprep.mubr.f32.mxu0 0.0
  %508 = vmatmul.mubr.f32.gmra.mrb[0].mxu0 %v214
  %v509 = vpop.f32.mrb[0].mxu0
  %v510 = vadd.f32 0.0, %v509
  %v511 = vpop.f32.mrb[0].mxu0
  %512 = vmatprep.mubr.f32.mxu0 0.0
  %513 = vmatmul.mubr.f32.gmra.mrb[0].mxu0 %v217
  %v514 = vpop.f32.mrb[0].mxu0
  %v515 = vadd.f32 0.0, %v514
  %v516 = vpop.f32.mrb[0].mxu0
  %517 = vmatprep.mubr.f32.mxu0 0.0
  %518 = vmatmul.mubr.f32.gmra.mrb[0].mxu0 %v220
  %v519 = vpop.f32.mrb[0].mxu0
  %v520 = vadd.f32 0.0, %v519
  %v521 = vpop.f32.mrb[0].mxu0
  %522 = vmatprep.mubr.f32.mxu0 0.0
  %523 = vmatmul.mubr.f32.gmra.mrb[0].mxu0 %v223
  %v524 = vpop.f32.mrb[0].mxu0
  %v525 = vadd.f32 0.0, %v524
  %v526 = vpop.f32.mrb[0].mxu0
  %527 = vmatprep.mubr.f32.mxu0 0.0
  %528 = vmatmul.mubr.f32.gmra.mrb[0].mxu0 %v226
  %v529 = vpop.f32.mrb[0].mxu0
  %v530 = vadd.f32 0.0, %v529
  %v531 = vpop.f32.mrb[0].mxu0
  %532 = vmatprep.mubr.f32.mxu0 0.0
  %533 = vmatmul.mubr.f32.gmra.mrb[0].mxu0 %v229
  %v534 = vpop.f32.mrb[0].mxu0
  %v535 = vadd.f32 0.0, %v534
  %v536 = vpop.f32.mrb[0].mxu0
  %537 = vmatprep.mubr.f32.mxu0 0.0
  %538 = vmatmul.mubr.f32.gmra.mrb[0].mxu0 %v232
  %v539 = vpop.f32.mrb[0].mxu0
  %v540 = vadd.f32 0.0, %v539
  %v541 = vpop.f32.mrb[0].mxu0
  %542 = vmatprep.mubr.f32.mxu0 0.0
  %543 = vmatmul.mubr.f32.gmra.mrb[0].mxu0 %v235
  %v544 = vpop.f32.mrb[0].mxu0
  %v545 = vadd.f32 0.0, %v544
  %v546 = vpop.f32.mrb[0].mxu0
  %547 = vmatprep.mubr.f32.mxu0 0.0
  %548 = vmatmul.mubr.f32.gmra.mrb[0].mxu0 %v238
  %v549 = vpop.f32.mrb[0].mxu0
  %v550 = vadd.f32 0.0, %v549
  %v551 = vpop.f32.mrb[0].mxu0
  %552 = vmatprep.mubr.f32.mxu0 0.0
  %553 = vmatmul.mubr.f32.gmra.mrb[0].mxu0 %v241
  %v554 = vpop.f32.mrb[0].mxu0
  %v555 = vadd.f32 0.0, %v554
  %v556 = vpop.f32.mrb[0].mxu0
  %557 = vmatprep.mubr.f32.mxu0 0.0
  %558 = vmatmul.mubr.f32.gmra.mrb[0].mxu0 %v244
  %v559 = vpop.f32.mrb[0].mxu0
  %v560 = vadd.f32 0.0, %v559
  %v561 = vpop.f32.mrb[0].mxu0
  %562 = vmatprep.mubr.f32.mxu0 0.0
  %563 = vmatmul.mubr.f32.gmra.mrb[0].mxu0 %v247
  %v564 = vpop.f32.mrb[0].mxu0
  %v565 = vadd.f32 0.0, %v564
  %v566 = vpop.f32.mrb[0].mxu0
  %567 = vmatprep.mubr.f32.mxu0 0.0
  %568 = vmatmul.mubr.f32.gmra.mrb[0].mxu0 %v250
  %v569 = vpop.f32.mrb[0].mxu0
  %v570 = vadd.f32 0.0, %v569
  %v571 = vpop.f32.mrb[0].mxu0
  %572 = vmatprep.mubr.f32.mxu0 0.0
  %573 = vmatmul.mubr.f32.gmra.mrb[0].mxu0 %v253
  %v574 = vpop.f32.mrb[0].mxu0
  %v575 = vadd.f32 0.0, %v574
  %v576 = vpop.f32.mrb[0].mxu0
  %577 = vmatprep.mubr.f32.mxu0 0.0
  %578 = vmatmul.mubr.f32.gmra.mrb[0].mxu0 %v256
  %v579 = vpop.f32.mrb[0].mxu0
  %v580 = vadd.f32 0.0, %v579
  %v581 = vpop.f32.mrb[0].mxu0
  %582 = vmatprep.mubr.f32.mxu0 0.0
  %583 = vmatmul.mubr.f32.gmra.mrb[0].mxu0 %v259
  %v584 = vpop.f32.mrb[0].mxu0
  %v585 = vadd.f32 0.0, %v584
  %v586 = vpop.f32.mrb[0].mxu0
  %587 = vmatprep.mubr.f32.mxu0 0.0
  %588 = vmatmul.mubr.f32.gmra.mrb[0].mxu0 %v262
  %v589 = vpop.f32.mrb[0].mxu0
  %v590 = vadd.f32 0.0, %v589
  %v591 = vpop.f32.mrb[0].mxu0
  %592 = vmatprep.mubr.f32.mxu0 0.0
  %593 = vmatmul.mubr.f32.gmra.mrb[0].mxu0 %v265
  %v594 = vpop.f32.mrb[0].mxu0
  %v595 = vadd.f32 0.0, %v594
  %v596 = vpop.f32.mrb[0].mxu0
  %597 = vmatprep.mubr.f32.mxu0 0.0
  %598 = vmatmul.mubr.f32.gmra.mrb[0].mxu0 %v268
  %v599 = vpop.f32.mrb[0].mxu0
  %v600 = vadd.f32 0.0, %v599
  %v601 = vpop.f32.mrb[0].mxu0
  %602 = vmatprep.mubr.f32.mxu0 0.0
  %603 = vmatmul.mubr.f32.gmra.mrb[0].mxu0 %v271
  %v604 = vpop.f32.mrb[0].mxu0
  %v605 = vadd.f32 0.0, %v604
  %v606 = vpop.f32.mrb[0].mxu0
  %607 = vmatprep.mubr.f32.mxu0 0.0
  %608 = vmatmul.mubr.f32.gmra.mrb[0].mxu0 %v274
  %v609 = vpop.f32.mrb[0].mxu0
  %v610 = vadd.f32 0.0, %v609
  %v611 = vpop.f32.mrb[0].mxu0
  %612 = vmatprep.mubr.f32.mxu0 0.0
  %613 = vmatmul.mubr.f32.gmra.mrb[0].mxu0 %v277
  %v614 = vpop.f32.mrb[0].mxu0
  %v615 = vadd.f32 0.0, %v614
  %v616 = vpop.f32.mrb[0].mxu0
  %617 = vmatprep.mubr.f32.mxu0 0.0
  %618 = vmatmul.mubr.f32.gmra.mrb[0].mxu0 %v280
  %v619 = vpop.f32.mrb[0].mxu0
  %v620 = vadd.f32 0.0, %v619
  %v621 = vpop.f32.mrb[0].mxu0
  %622 = vmatprep.mubr.f32.mxu0 0.0
  %623 = vmatmul.mubr.f32.gmra.mrb[0].mxu0 %v283
  %v624 = vpop.f32.mrb[0].mxu0
  %v625 = vadd.f32 0.0, %v624
  %v626 = vpop.f32.mrb[0].mxu0
  %627 = vmatprep.mubr.f32.mxu0 0.0
  %628 = vmatmul.mubr.f32.gmra.mrb[0].mxu0 %v286
  %v629 = vpop.f32.mrb[0].mxu0
  %v630 = vadd.f32 0.0, %v629
  %v631 = vpop.f32.mrb[0].mxu0
  %632 = vmatprep.mubr.f32.mxu0 0.0
  %633 = vmatmul.mubr.f32.gmra.mrb[0].mxu0 %v289
  %v634 = vpop.f32.mrb[0].mxu0
  %v635 = vadd.f32 0.0, %v634
  %v636 = vpop.f32.mrb[0].mxu0
  %637 = vmatprep.mubr.f32.mxu0 0.0
  %638 = vmatmul.mubr.f32.gmra.mrb[0].mxu0 %v292
  %v639 = vpop.f32.mrb[0].mxu0
  %v640 = vadd.f32 0.0, %v639
  %v641 = vpop.f32.mrb[0].mxu0
  %642 = vmatprep.mubr.f32.mxu0 0.0
  %643 = vmatmul.mubr.f32.gmra.mrb[0].mxu0 %v295
  %v644 = vpop.f32.mrb[0].mxu0
  %v645 = vadd.f32 0.0, %v644
  %v646 = vpop.f32.mrb[0].mxu0
  %647 = vmatprep.mubr.f32.mxu0 0.0
  %648 = vmatmul.mubr.f32.gmra.mrb[0].mxu0 %v298
  %v649 = vpop.f32.mrb[0].mxu0
  %v650 = vadd.f32 0.0, %v649
  %v651 = vpop.f32.mrb[0].mxu0
  %652 = vmatprep.mubr.f32.mxu0 0.0
  %653 = vmatmul.mubr.f32.gmra.mrb[0].mxu0 %v301
  %v654 = vpop.f32.mrb[0].mxu0
  %v655 = vadd.f32 0.0, %v654
  %v656 = vpop.f32.mrb[0].mxu0
  %657 = vmatprep.mubr.f32.mxu0 0.0
  %658 = vmatmul.mubr.f32.gmra.mrb[0].mxu0 %v304
  %v659 = vpop.f32.mrb[0].mxu0
  %v660 = vadd.f32 0.0, %v659
  %v661 = vpop.f32.mrb[0].mxu0
  %662 = vmatprep.mubr.f32.mxu0 0.0
  %663 = vmatmul.mubr.f32.gmra.mrb[0].mxu0 %v307
  %v664 = vpop.f32.mrb[0].mxu0
  %v665 = vadd.f32 0.0, %v664
  %v666 = vpop.f32.mrb[0].mxu0
  %667 = vmatprep.mubr.f32.mxu0 0.0
  %668 = vmatmul.mubr.f32.gmra.mrb[0].mxu0 %v310
  %v669 = vpop.f32.mrb[0].mxu0
  %v670 = vadd.f32 0.0, %v669
  %v671 = vpop.f32.mrb[0].mxu0
  %672 = vmatprep.mubr.f32.mxu0 0.0
  %673 = vmatmul.mubr.f32.gmra.mrb[0].mxu0 %v313
  %v674 = vpop.f32.mrb[0].mxu0
  %v675 = vadd.f32 0.0, %v674
  %v676 = vpop.f32.mrb[0].mxu0
  %677 = vmatprep.mubr.f32.mxu0 0.0
  %678 = vmatmul.mubr.f32.gmra.mrb[0].mxu0 %v316
  %v679 = vpop.f32.mrb[0].mxu0
  %v680 = vadd.f32 0.0, %v679
  %v681 = vpop.f32.mrb[0].mxu0
  %682 = vmatprep.mubr.f32.mxu0 0.0
  %683 = vmatmul.mubr.f32.gmra.mrb[0].mxu0 %v319
  %v684 = vpop.f32.mrb[0].mxu0
  %v685 = vadd.f32 0.0, %v684
  %v686 = vpop.f32.mrb[0].mxu0
  %687 = vmatprep.mubr.f32.mxu0 0.0
  %688 = vmatmul.mubr.f32.gmra.mrb[0].mxu0 %v322
  %v689 = vpop.f32.mrb[0].mxu0
  %v690 = vadd.f32 0.0, %v689
  %v691 = vpop.f32.mrb[0].mxu0
  %692 = vmatprep.mubr.f32.mxu0 0.0
  %693 = vmatmul.mubr.f32.gmra.mrb[0].mxu0 %v325
  %v694 = vpop.f32.mrb[0].mxu0
  %v695 = vadd.f32 0.0, %v694
  %v696 = vpop.f32.mrb[0].mxu0
  %697 = vmatprep.mubr.f32.mxu0 0.0
  %698 = vmatmul.mubr.f32.gmra.mrb[0].mxu0 %v328
  %v699 = vpop.f32.mrb[0].mxu0
  %v700 = vadd.f32 0.0, %v699
  %v701 = vpop.f32.mrb[0].mxu0
  %702 = vmatprep.mubr.f32.mxu0 0.0
  %703 = vmatmul.mubr.f32.gmra.mrb[0].mxu0 %v331
  %v704 = vpop.f32.mrb[0].mxu0
  %v705 = vadd.f32 0.0, %v704
  %v706 = vpop.f32.mrb[0].mxu0
  %707 = vmatprep.mubr.f32.mxu0 0.0
  %708 = vmatmul.mubr.f32.gmra.mrb[0].mxu0 %v334
  %v709 = vpop.f32.mrb[0].mxu0
  %v710 = vadd.f32 0.0, %v709
  %v711 = vpop.f32.mrb[0].mxu0
  %712 = vmatprep.mubr.f32.mxu0 0.0
  %713 = vmatmul.mubr.f32.gmra.mrb[0].mxu0 %v337
  %v714 = vpop.f32.mrb[0].mxu0
  %v715 = vadd.f32 0.0, %v714
  %v716 = vpop.f32.mrb[0].mxu0
  %717 = vmatprep.mubr.f32.mxu0 0.0
  %718 = vmatmul.mubr.f32.gmra.mrb[0].mxu0 %v340
  %v719 = vpop.f32.mrb[0].mxu0
  %v720 = vadd.f32 0.0, %v719
  %v721 = vpop.f32.mrb[0].mxu0
  %722 = vmatprep.mubr.f32.mxu0 0.0
  %723 = vmatmul.mubr.f32.gmra.mrb[0].mxu0 %v343
  %v724 = vpop.f32.mrb[0].mxu0
  %v725 = vadd.f32 0.0, %v724
  %v726 = vpop.f32.mrb[0].mxu0
  %727 = vmatprep.mubr.f32.mxu0 0.0
  %728 = vmatmul.mubr.f32.gmra.mrb[0].mxu0 %v346
  %v729 = vpop.f32.mrb[0].mxu0
  %v730 = vadd.f32 0.0, %v729
  %v731 = vpop.f32.mrb[0].mxu0
  %732 = vdwg.mxu0
  %v734 = vsel %vm155, %v23, 0
  %v737 = vsel %vm155, %v24, 0
  %v740 = vsel %vm155, %v25, 0
  %v743 = vsel %vm155, %v26, 0
  %v746 = vsel %vm155, %v27, 0
  %v749 = vsel %vm155, %v28, 0
  %v752 = vsel %vm155, %v29, 0
  %v755 = vsel %vm155, %v30, 0
  %v758 = vsel %vm155, %v31, 0
  %v761 = vsel %vm155, %v32, 0
  %v764 = vsel %vm155, %v33, 0
  %v767 = vsel %vm155, %v34, 0
  %v770 = vsel %vm155, %v35, 0
  %v773 = vsel %vm155, %v36, 0
  %v776 = vsel %vm155, %v37, 0
  %v779 = vsel %vm155, %v38, 0
  %v782 = vsel %vm155, %v39, 0
  %v785 = vsel %vm155, %v40, 0
  %v788 = vsel %vm155, %v41, 0
  %v791 = vsel %vm155, %v42, 0
  %v794 = vsel %vm155, %v43, 0
  %v797 = vsel %vm155, %v44, 0
  %v800 = vsel %vm155, %v45, 0
  %v803 = vsel %vm155, %v46, 0
  %v806 = vsel %vm155, %v47, 0
  %v809 = vsel %vm155, %v48, 0
  %v812 = vsel %vm155, %v49, 0
  %v815 = vsel %vm155, %v50, 0
  %v818 = vsel %vm155, %v51, 0
  %v821 = vsel %vm155, %v52, 0
  %v824 = vsel %vm155, %v53, 0
  %v827 = vsel %vm155, %v54, 0
  %v830 = vsel %vm155, %v55, 0
  %v833 = vsel %vm155, %v56, 0
  %v836 = vsel %vm155, %v57, 0
  %v839 = vsel %vm155, %v58, 0
  %v842 = vsel %vm155, %v59, 0
  %v845 = vsel %vm155, %v60, 0
  %v848 = vsel %vm155, %v61, 0
  %v851 = vsel %vm155, %v62, 0
  %v854 = vsel %vm155, %v63, 0
  %v857 = vsel %vm155, %v64, 0
  %v860 = vsel %vm155, %v65, 0
  %v863 = vsel %vm155, %v66, 0
  %v866 = vsel %vm155, %v67, 0
  %v869 = vsel %vm155, %v68, 0
  %v872 = vsel %vm155, %v69, 0
  %v875 = vsel %vm155, %v70, 0
  %v878 = vsel %vm155, %v71, 0
  %v881 = vsel %vm155, %v72, 0
  %v884 = vsel %vm155, %v73, 0
  %v887 = vsel %vm155, %v74, 0
  %v890 = vsel %vm155, %v75, 0
  %v893 = vsel %vm155, %v76, 0
  %v896 = vsel %vm155, %v77, 0
  %v899 = vsel %vm155, %v78, 0
  %v902 = vsel %vm155, %v79, 0
  %v905 = vsel %vm155, %v80, 0
  %v908 = vsel %vm155, %v81, 0
  %v911 = vsel %vm155, %v82, 0
  %v914 = vsel %vm155, %v83, 0
  %v917 = vsel %vm155, %v84, 0
  %v920 = vsel %vm155, %v85, 0
  %v923 = vsel %vm155, %v86, 0
  %925 = vmatprep.subr.mxu0 0.0
  %926 = vmatpush1.msra.mxu0 %v87
  %927 = vmatprep.subr.mxu0 0.0
  %928 = vmatpush1.msra.mxu0 %v88
  %929 = vmatprep.subr.mxu0 0.0
  %930 = vmatpush1.msra.mxu0 0.0
  %931 = vmatprep.subr.mxu0 0.0
  %932 = vmatpush1.msra.mxu0 0.0
  %933 = vmatprep.subr.mxu0 0.0
  %934 = vmatpush1.msra.mxu0 0.0
  %935 = vmatprep.subr.mxu0 0.0
  %936 = vmatpush1.msra.mxu0 0.0
  %937 = vmatprep.subr.mxu0 0.0
  %938 = vmatpush1.msra.mxu0 0.0
  %939 = vmatprep.subr.mxu0 0.0
  %940 = vmatpush1.msra.mxu0 0.0
  %941 = vmatprep.subr.mxu0 0.0
  %942 = vmatpush1.msra.mxu0 0.0
  %943 = vmatprep.subr.mxu0 0.0
  %944 = vmatpush1.msra.mxu0 0.0
  %945 = vmatprep.subr.mxu0 0.0
  %946 = vmatpush1.msra.mxu0 0.0
  %947 = vmatprep.subr.mxu0 0.0
  %948 = vmatpush1.msra.mxu0 0.0
  %949 = vmatprep.subr.mxu0 0.0
  %950 = vmatpush1.msra.mxu0 0.0
  %951 = vmatprep.subr.mxu0 0.0
  %952 = vmatpush1.msra.mxu0 0.0
  %953 = vmatprep.subr.mxu0 0.0
  %954 = vmatpush1.msra.mxu0 0.0
  %955 = vmatprep.subr.mxu0 0.0
  %956 = vmatpush1.msra.mxu0 0.0
  %957 = vmatprep.subr.mxu0 0.0
  %958 = vmatpush1.msra.mxu0 0.0
  %959 = vmatprep.subr.mxu0 0.0
  %960 = vmatpush1.msra.mxu0 0.0
  %961 = vmatprep.subr.mxu0 0.0
  %962 = vmatpush1.msra.mxu0 0.0
  %963 = vmatprep.subr.mxu0 0.0
  %964 = vmatpush1.msra.mxu0 0.0
  %965 = vmatprep.subr.mxu0 0.0
  %966 = vmatpush1.msra.mxu0 0.0
  %967 = vmatprep.subr.mxu0 0.0
  %968 = vmatpush1.msra.mxu0 0.0
  %969 = vmatprep.subr.mxu0 0.0
  %970 = vmatpush1.msra.mxu0 0.0
  %971 = vmatprep.subr.mxu0 0.0
  %972 = vmatpush1.msra.mxu0 0.0
  %973 = vmatprep.subr.mxu0 0.0
  %974 = vmatpush1.msra.mxu0 0.0
  %975 = vmatprep.subr.mxu0 0.0
  %976 = vmatpush1.msra.mxu0 0.0
  %977 = vmatprep.subr.mxu0 0.0
  %978 = vmatpush1.msra.mxu0 0.0
  %979 = vmatprep.subr.mxu0 0.0
  %980 = vmatpush1.msra.mxu0 0.0
  %981 = vmatprep.subr.mxu0 0.0
  %982 = vmatpush1.msra.mxu0 0.0
  %983 = vmatprep.subr.mxu0 0.0
  %984 = vmatpush1.msra.mxu0 0.0
  %985 = vmatprep.subr.mxu0 0.0
  %986 = vmatpush1.msra.mxu0 0.0
  %987 = vmatprep.subr.mxu0 0.0
  %988 = vmatpush1.msra.mxu0 0.0
  %989 = vmatprep.mubr.f32.mxu0 0.0
  %990 = vmatmul.mubr.f32.gmra.mrb[0].mxu0 %v734
  %v991 = vpop.f32.mrb[0].mxu0
  %v992 = vadd.f32 %v415, %v991
  %v993 = vpop.f32.mrb[0].mxu0
  %994 = vmatprep.mubr.f32.mxu0 0.0
  %995 = vmatmul.mubr.f32.gmra.mrb[0].mxu0 %v737
  %v996 = vpop.f32.mrb[0].mxu0
  %v997 = vadd.f32 %v420, %v996
  %v998 = vpop.f32.mrb[0].mxu0
  %999 = vmatprep.mubr.f32.mxu0 0.0
  %1000 = vmatmul.mubr.f32.gmra.mrb[0].mxu0 %v740
  %v1001 = vpop.f32.mrb[0].mxu0
  %v1002 = vadd.f32 %v425, %v1001
  %v1003 = vpop.f32.mrb[0].mxu0
  %1004 = vmatprep.mubr.f32.mxu0 0.0
  %1005 = vmatmul.mubr.f32.gmra.mrb[0].mxu0 %v743
  %v1006 = vpop.f32.mrb[0].mxu0
  %v1007 = vadd.f32 %v430, %v1006
  %v1008 = vpop.f32.mrb[0].mxu0
  %1009 = vmatprep.mubr.f32.mxu0 0.0
  %1010 = vmatmul.mubr.f32.gmra.mrb[0].mxu0 %v746
  %v1011 = vpop.f32.mrb[0].mxu0
  %v1012 = vadd.f32 %v435, %v1011
  %v1013 = vpop.f32.mrb[0].mxu0
  %1014 = vmatprep.mubr.f32.mxu0 0.0
  %1015 = vmatmul.mubr.f32.gmra.mrb[0].mxu0 %v749
  %v1016 = vpop.f32.mrb[0].mxu0
  %v1017 = vadd.f32 %v440, %v1016
  %v1018 = vpop.f32.mrb[0].mxu0
  %1019 = vmatprep.mubr.f32.mxu0 0.0
  %1020 = vmatmul.mubr.f32.gmra.mrb[0].mxu0 %v752
  %v1021 = vpop.f32.mrb[0].mxu0
  %v1022 = vadd.f32 %v445, %v1021
  %v1023 = vpop.f32.mrb[0].mxu0
  %1024 = vmatprep.mubr.f32.mxu0 0.0
  %1025 = vmatmul.mubr.f32.gmra.mrb[0].mxu0 %v755
  %v1026 = vpop.f32.mrb[0].mxu0
  %v1027 = vadd.f32 %v450, %v1026
  %v1028 = vpop.f32.mrb[0].mxu0
  %1029 = vmatprep.mubr.f32.mxu0 0.0
  %1030 = vmatmul.mubr.f32.gmra.mrb[0].mxu0 %v758
  %v1031 = vpop.f32.mrb[0].mxu0
  %v1032 = vadd.f32 %v455, %v1031
  %v1033 = vpop.f32.mrb[0].mxu0
  %1034 = vmatprep.mubr.f32.mxu0 0.0
  %1035 = vmatmul.mubr.f32.gmra.mrb[0].mxu0 %v761
  %v1036 = vpop.f32.mrb[0].mxu0
  %v1037 = vadd.f32 %v460, %v1036
  %v1038 = vpop.f32.mrb[0].mxu0
  %1039 = vmatprep.mubr.f32.mxu0 0.0
  %1040 = vmatmul.mubr.f32.gmra.mrb[0].mxu0 %v764
  %v1041 = vpop.f32.mrb[0].mxu0
  %v1042 = vadd.f32 %v465, %v1041
  %v1043 = vpop.f32.mrb[0].mxu0
  %1044 = vmatprep.mubr.f32.mxu0 0.0
  %1045 = vmatmul.mubr.f32.gmra.mrb[0].mxu0 %v767
  %v1046 = vpop.f32.mrb[0].mxu0
  %v1047 = vadd.f32 %v470, %v1046
  %v1048 = vpop.f32.mrb[0].mxu0
  %1049 = vmatprep.mubr.f32.mxu0 0.0
  %1050 = vmatmul.mubr.f32.gmra.mrb[0].mxu0 %v770
  %v1051 = vpop.f32.mrb[0].mxu0
  %v1052 = vadd.f32 %v475, %v1051
  %v1053 = vpop.f32.mrb[0].mxu0
  %1054 = vmatprep.mubr.f32.mxu0 0.0
  %1055 = vmatmul.mubr.f32.gmra.mrb[0].mxu0 %v773
  %v1056 = vpop.f32.mrb[0].mxu0
  %v1057 = vadd.f32 %v480, %v1056
  %v1058 = vpop.f32.mrb[0].mxu0
  %1059 = vmatprep.mubr.f32.mxu0 0.0
  %1060 = vmatmul.mubr.f32.gmra.mrb[0].mxu0 %v776
  %v1061 = vpop.f32.mrb[0].mxu0
  %v1062 = vadd.f32 %v485, %v1061
  %v1063 = vpop.f32.mrb[0].mxu0
  %1064 = vmatprep.mubr.f32.mxu0 0.0
  %1065 = vmatmul.mubr.f32.gmra.mrb[0].mxu0 %v779
  %v1066 = vpop.f32.mrb[0].mxu0
  %v1067 = vadd.f32 %v490, %v1066
  %v1068 = vpop.f32.mrb[0].mxu0
  %1069 = vmatprep.mubr.f32.mxu0 0.0
  %1070 = vmatmul.mubr.f32.gmra.mrb[0].mxu0 %v782
  %v1071 = vpop.f32.mrb[0].mxu0
  %v1072 = vadd.f32 %v495, %v1071
  %v1073 = vpop.f32.mrb[0].mxu0
  %1074 = vmatprep.mubr.f32.mxu0 0.0
  %1075 = vmatmul.mubr.f32.gmra.mrb[0].mxu0 %v785
  %v1076 = vpop.f32.mrb[0].mxu0
  %v1077 = vadd.f32 %v500, %v1076
  %v1078 = vpop.f32.mrb[0].mxu0
  %1079 = vmatprep.mubr.f32.mxu0 0.0
  %1080 = vmatmul.mubr.f32.gmra.mrb[0].mxu0 %v788
  %v1081 = vpop.f32.mrb[0].mxu0
  %v1082 = vadd.f32 %v505, %v1081
  %v1083 = vpop.f32.mrb[0].mxu0
  %1084 = vmatprep.mubr.f32.mxu0 0.0
  %1085 = vmatmul.mubr.f32.gmra.mrb[0].mxu0 %v791
  %v1086 = vpop.f32.mrb[0].mxu0
  %v1087 = vadd.f32 %v510, %v1086
  %v1088 = vpop.f32.mrb[0].mxu0
  %1089 = vmatprep.mubr.f32.mxu0 0.0
  %1090 = vmatmul.mubr.f32.gmra.mrb[0].mxu0 %v794
  %v1091 = vpop.f32.mrb[0].mxu0
  %v1092 = vadd.f32 %v515, %v1091
  %v1093 = vpop.f32.mrb[0].mxu0
  %1094 = vmatprep.mubr.f32.mxu0 0.0
  %1095 = vmatmul.mubr.f32.gmra.mrb[0].mxu0 %v797
  %v1096 = vpop.f32.mrb[0].mxu0
  %v1097 = vadd.f32 %v520, %v1096
  %v1098 = vpop.f32.mrb[0].mxu0
  %1099 = vmatprep.mubr.f32.mxu0 0.0
  %1100 = vmatmul.mubr.f32.gmra.mrb[0].mxu0 %v800
  %v1101 = vpop.f32.mrb[0].mxu0
  %v1102 = vadd.f32 %v525, %v1101
  %v1103 = vpop.f32.mrb[0].mxu0
  %1104 = vmatprep.mubr.f32.mxu0 0.0
  %1105 = vmatmul.mubr.f32.gmra.mrb[0].mxu0 %v803
  %v1106 = vpop.f32.mrb[0].mxu0
  %v1107 = vadd.f32 %v530, %v1106
  %v1108 = vpop.f32.mrb[0].mxu0
  %1109 = vmatprep.mubr.f32.mxu0 0.0
  %1110 = vmatmul.mubr.f32.gmra.mrb[0].mxu0 %v806
  %v1111 = vpop.f32.mrb[0].mxu0
  %v1112 = vadd.f32 %v535, %v1111
  %v1113 = vpop.f32.mrb[0].mxu0
  %1114 = vmatprep.mubr.f32.mxu0 0.0
  %1115 = vmatmul.mubr.f32.gmra.mrb[0].mxu0 %v809
  %v1116 = vpop.f32.mrb[0].mxu0
  %v1117 = vadd.f32 %v540, %v1116
  %v1118 = vpop.f32.mrb[0].mxu0
  %1119 = vmatprep.mubr.f32.mxu0 0.0
  %1120 = vmatmul.mubr.f32.gmra.mrb[0].mxu0 %v812
  %v1121 = vpop.f32.mrb[0].mxu0
  %v1122 = vadd.f32 %v545, %v1121
  %v1123 = vpop.f32.mrb[0].mxu0
  %1124 = vmatprep.mubr.f32.mxu0 0.0
  %1125 = vmatmul.mubr.f32.gmra.mrb[0].mxu0 %v815
  %v1126 = vpop.f32.mrb[0].mxu0
  %v1127 = vadd.f32 %v550, %v1126
  %v1128 = vpop.f32.mrb[0].mxu0
  %1129 = vmatprep.mubr.f32.mxu0 0.0
  %1130 = vmatmul.mubr.f32.gmra.mrb[0].mxu0 %v818
  %v1131 = vpop.f32.mrb[0].mxu0
  %v1132 = vadd.f32 %v555, %v1131
  %v1133 = vpop.f32.mrb[0].mxu0
  %1134 = vmatprep.mubr.f32.mxu0 0.0
  %1135 = vmatmul.mubr.f32.gmra.mrb[0].mxu0 %v821
  %v1136 = vpop.f32.mrb[0].mxu0
  %v1137 = vadd.f32 %v560, %v1136
  %v1138 = vpop.f32.mrb[0].mxu0
  %1139 = vmatprep.mubr.f32.mxu0 0.0
  %1140 = vmatmul.mubr.f32.gmra.mrb[0].mxu0 %v824
  %v1141 = vpop.f32.mrb[0].mxu0
  %v1142 = vadd.f32 %v565, %v1141
  %v1143 = vpop.f32.mrb[0].mxu0
  %1144 = vmatprep.mubr.f32.mxu0 0.0
  %1145 = vmatmul.mubr.f32.gmra.mrb[0].mxu0 %v827
  %v1146 = vpop.f32.mrb[0].mxu0
  %v1147 = vadd.f32 %v570, %v1146
  %v1148 = vpop.f32.mrb[0].mxu0
  %1149 = vmatprep.mubr.f32.mxu0 0.0
  %1150 = vmatmul.mubr.f32.gmra.mrb[0].mxu0 %v830
  %v1151 = vpop.f32.mrb[0].mxu0
  %v1152 = vadd.f32 %v575, %v1151
  %v1153 = vpop.f32.mrb[0].mxu0
  %1154 = vmatprep.mubr.f32.mxu0 0.0
  %1155 = vmatmul.mubr.f32.gmra.mrb[0].mxu0 %v833
  %v1156 = vpop.f32.mrb[0].mxu0
  %v1157 = vadd.f32 %v580, %v1156
  %v1158 = vpop.f32.mrb[0].mxu0
  %1159 = vmatprep.mubr.f32.mxu0 0.0
  %1160 = vmatmul.mubr.f32.gmra.mrb[0].mxu0 %v836
  %v1161 = vpop.f32.mrb[0].mxu0
  %v1162 = vadd.f32 %v585, %v1161
  %v1163 = vpop.f32.mrb[0].mxu0
  %1164 = vmatprep.mubr.f32.mxu0 0.0
  %1165 = vmatmul.mubr.f32.gmra.mrb[0].mxu0 %v839
  %v1166 = vpop.f32.mrb[0].mxu0
  %v1167 = vadd.f32 %v590, %v1166
  %v1168 = vpop.f32.mrb[0].mxu0
  %1169 = vmatprep.mubr.f32.mxu0 0.0
  %1170 = vmatmul.mubr.f32.gmra.mrb[0].mxu0 %v842
  %v1171 = vpop.f32.mrb[0].mxu0
  %v1172 = vadd.f32 %v595, %v1171
  %v1173 = vpop.f32.mrb[0].mxu0
  %1174 = vmatprep.mubr.f32.mxu0 0.0
  %1175 = vmatmul.mubr.f32.gmra.mrb[0].mxu0 %v845
  %v1176 = vpop.f32.mrb[0].mxu0
  %v1177 = vadd.f32 %v600, %v1176
  %v1178 = vpop.f32.mrb[0].mxu0
  %1179 = vmatprep.mubr.f32.mxu0 0.0
  %1180 = vmatmul.mubr.f32.gmra.mrb[0].mxu0 %v848
  %v1181 = vpop.f32.mrb[0].mxu0
  %v1182 = vadd.f32 %v605, %v1181
  %v1183 = vpop.f32.mrb[0].mxu0
  %1184 = vmatprep.mubr.f32.mxu0 0.0
  %1185 = vmatmul.mubr.f32.gmra.mrb[0].mxu0 %v851
  %v1186 = vpop.f32.mrb[0].mxu0
  %v1187 = vadd.f32 %v610, %v1186
  %v1188 = vpop.f32.mrb[0].mxu0
  %1189 = vmatprep.mubr.f32.mxu0 0.0
  %1190 = vmatmul.mubr.f32.gmra.mrb[0].mxu0 %v854
  %v1191 = vpop.f32.mrb[0].mxu0
  %v1192 = vadd.f32 %v615, %v1191
  %v1193 = vpop.f32.mrb[0].mxu0
  %1194 = vmatprep.mubr.f32.mxu0 0.0
  %1195 = vmatmul.mubr.f32.gmra.mrb[0].mxu0 %v857
  %v1196 = vpop.f32.mrb[0].mxu0
  %v1197 = vadd.f32 %v620, %v1196
  %v1198 = vpop.f32.mrb[0].mxu0
  %1199 = vmatprep.mubr.f32.mxu0 0.0
  %1200 = vmatmul.mubr.f32.gmra.mrb[0].mxu0 %v860
  %v1201 = vpop.f32.mrb[0].mxu0
  %v1202 = vadd.f32 %v625, %v1201
  %v1203 = vpop.f32.mrb[0].mxu0
  %1204 = vmatprep.mubr.f32.mxu0 0.0
  %1205 = vmatmul.mubr.f32.gmra.mrb[0].mxu0 %v863
  %v1206 = vpop.f32.mrb[0].mxu0
  %v1207 = vadd.f32 %v630, %v1206
  %v1208 = vpop.f32.mrb[0].mxu0
  %1209 = vmatprep.mubr.f32.mxu0 0.0
  %1210 = vmatmul.mubr.f32.gmra.mrb[0].mxu0 %v866
  %v1211 = vpop.f32.mrb[0].mxu0
  %v1212 = vadd.f32 %v635, %v1211
  %v1213 = vpop.f32.mrb[0].mxu0
  %1214 = vmatprep.mubr.f32.mxu0 0.0
  %1215 = vmatmul.mubr.f32.gmra.mrb[0].mxu0 %v869
  %v1216 = vpop.f32.mrb[0].mxu0
  %v1217 = vadd.f32 %v640, %v1216
  %v1218 = vpop.f32.mrb[0].mxu0
  %1219 = vmatprep.mubr.f32.mxu0 0.0
  %1220 = vmatmul.mubr.f32.gmra.mrb[0].mxu0 %v872
  %v1221 = vpop.f32.mrb[0].mxu0
  %v1222 = vadd.f32 %v645, %v1221
  %v1223 = vpop.f32.mrb[0].mxu0
  %1224 = vmatprep.mubr.f32.mxu0 0.0
  %1225 = vmatmul.mubr.f32.gmra.mrb[0].mxu0 %v875
  %v1226 = vpop.f32.mrb[0].mxu0
  %v1227 = vadd.f32 %v650, %v1226
  %v1228 = vpop.f32.mrb[0].mxu0
  %1229 = vmatprep.mubr.f32.mxu0 0.0
  %1230 = vmatmul.mubr.f32.gmra.mrb[0].mxu0 %v878
  %v1231 = vpop.f32.mrb[0].mxu0
  %v1232 = vadd.f32 %v655, %v1231
  %v1233 = vpop.f32.mrb[0].mxu0
  %1234 = vmatprep.mubr.f32.mxu0 0.0
  %1235 = vmatmul.mubr.f32.gmra.mrb[0].mxu0 %v881
  %v1236 = vpop.f32.mrb[0].mxu0
  %v1237 = vadd.f32 %v660, %v1236
  %v1238 = vpop.f32.mrb[0].mxu0
  %1239 = vmatprep.mubr.f32.mxu0 0.0
  %1240 = vmatmul.mubr.f32.gmra.mrb[0].mxu0 %v884
  %v1241 = vpop.f32.mrb[0].mxu0
  %v1242 = vadd.f32 %v665, %v1241
  %v1243 = vpop.f32.mrb[0].mxu0
  %1244 = vmatprep.mubr.f32.mxu0 0.0
  %1245 = vmatmul.mubr.f32.gmra.mrb[0].mxu0 %v887
  %v1246 = vpop.f32.mrb[0].mxu0
  %v1247 = vadd.f32 %v670, %v1246
  %v1248 = vpop.f32.mrb[0].mxu0
  %1249 = vmatprep.mubr.f32.mxu0 0.0
  %1250 = vmatmul.mubr.f32.gmra.mrb[0].mxu0 %v890
  %v1251 = vpop.f32.mrb[0].mxu0
  %v1252 = vadd.f32 %v675, %v1251
  %v1253 = vpop.f32.mrb[0].mxu0
  %1254 = vmatprep.mubr.f32.mxu0 0.0
  %1255 = vmatmul.mubr.f32.gmra.mrb[0].mxu0 %v893
  %v1256 = vpop.f32.mrb[0].mxu0
  %v1257 = vadd.f32 %v680, %v1256
  %v1258 = vpop.f32.mrb[0].mxu0
  %1259 = vmatprep.mubr.f32.mxu0 0.0
  %1260 = vmatmul.mubr.f32.gmra.mrb[0].mxu0 %v896
  %v1261 = vpop.f32.mrb[0].mxu0
  %v1262 = vadd.f32 %v685, %v1261
  %v1263 = vpop.f32.mrb[0].mxu0
  %1264 = vmatprep.mubr.f32.mxu0 0.0
  %1265 = vmatmul.mubr.f32.gmra.mrb[0].mxu0 %v899
  %v1266 = vpop.f32.mrb[0].mxu0
  %v1267 = vadd.f32 %v690, %v1266
  %v1268 = vpop.f32.mrb[0].mxu0
  %1269 = vmatprep.mubr.f32.mxu0 0.0
  %1270 = vmatmul.mubr.f32.gmra.mrb[0].mxu0 %v902
  %v1271 = vpop.f32.mrb[0].mxu0
  %v1272 = vadd.f32 %v695, %v1271
  %v1273 = vpop.f32.mrb[0].mxu0
  %1274 = vmatprep.mubr.f32.mxu0 0.0
  %1275 = vmatmul.mubr.f32.gmra.mrb[0].mxu0 %v905
  %v1276 = vpop.f32.mrb[0].mxu0
  %v1277 = vadd.f32 %v700, %v1276
  %v1278 = vpop.f32.mrb[0].mxu0
  %1279 = vmatprep.mubr.f32.mxu0 0.0
  %1280 = vmatmul.mubr.f32.gmra.mrb[0].mxu0 %v908
  %v1281 = vpop.f32.mrb[0].mxu0
  %v1282 = vadd.f32 %v705, %v1281
  %v1283 = vpop.f32.mrb[0].mxu0
  %1284 = vmatprep.mubr.f32.mxu0 0.0
  %1285 = vmatmul.mubr.f32.gmra.mrb[0].mxu0 %v911
  %v1286 = vpop.f32.mrb[0].mxu0
  %v1287 = vadd.f32 %v710, %v1286
  %v1288 = vpop.f32.mrb[0].mxu0
  %1289 = vmatprep.mubr.f32.mxu0 0.0
  %1290 = vmatmul.mubr.f32.gmra.mrb[0].mxu0 %v914
  %v1291 = vpop.f32.mrb[0].mxu0
  %v1292 = vadd.f32 %v715, %v1291
  %v1293 = vpop.f32.mrb[0].mxu0
  %1294 = vmatprep.mubr.f32.mxu0 0.0
  %1295 = vmatmul.mubr.f32.gmra.mrb[0].mxu0 %v917
  %v1296 = vpop.f32.mrb[0].mxu0
  %v1297 = vadd.f32 %v720, %v1296
  %v1298 = vpop.f32.mrb[0].mxu0
  %1299 = vmatprep.mubr.f32.mxu0 0.0
  %1300 = vmatmul.mubr.f32.gmra.mrb[0].mxu0 %v920
  %v1301 = vpop.f32.mrb[0].mxu0
  %v1302 = vadd.f32 %v725, %v1301
  %v1303 = vpop.f32.mrb[0].mxu0
  %1304 = vmatprep.mubr.f32.mxu0 0.0
  %1305 = vmatmul.mubr.f32.gmra.mrb[0].mxu0 %v923
  %v1306 = vpop.f32.mrb[0].mxu0
  %v1307 = vadd.f32 %v730, %v1306
  %v1308 = vpop.f32.mrb[0].mxu0
  %1309 = vdwg.mxu0
  %v1310 = vld [vmem:[%s0 + $0x9] sm:$0xff]
  %v1311 = vld [vmem:[%s0 + $0x11] sm:$0xff]
  %v1312 = vld [vmem:[%s0 + $0x19] sm:$0xff]
  %v1313 = vld [vmem:[%s0 + $0x21] sm:$0xff]
  %v1314 = vld [vmem:[%s0 + $0x29] sm:$0xff]
  %v1315 = vld [vmem:[%s0 + $0x31] sm:$0xff]
  %v1316 = vld [vmem:[%s0 + $0x39] sm:$0xff]
  %v1317 = vld [vmem:[%s0 + $0x41] sm:$0xff]
  %v1318 = vld [vmem:[%s0 + $0x49] sm:$0xff]
  %v1319 = vld [vmem:[%s0 + $0x51] sm:$0xff]
  %v1320 = vld [vmem:[%s0 + $0x59] sm:$0xff]
  %v1321 = vld [vmem:[%s0 + $0x61] sm:$0xff]
  %v1322 = vld [vmem:[%s0 + $0x69] sm:$0xff]
  %v1323 = vld [vmem:[%s0 + $0x71] sm:$0xff]
  %v1324 = vld [vmem:[%s0 + $0x79] sm:$0xff]
  %v1325 = vld [vmem:[%s0 + $0x81] sm:$0xff]
  %v1326 = vld [vmem:[%s0 + $0x89] sm:$0xff]
  %v1327 = vld [vmem:[%s0 + $0x91] sm:$0xff]
  %v1328 = vld [vmem:[%s0 + $0x99] sm:$0xff]
  %v1329 = vld [vmem:[%s0 + $0xa1] sm:$0xff]
  %v1330 = vld [vmem:[%s0 + $0xa9] sm:$0xff]
  %v1331 = vld [vmem:[%s0 + $0xb1] sm:$0xff]
  %v1332 = vld [vmem:[%s0 + $0xb9] sm:$0xff]
  %v1333 = vld [vmem:[%s0 + $0xc1] sm:$0xff]
  %v1334 = vld [vmem:[%s0 + $0xc9] sm:$0xff]
  %v1335 = vld [vmem:[%s0 + $0xd1] sm:$0xff]
  %v1336 = vld [vmem:[%s0 + $0xd9] sm:$0xff]
  %v1337 = vld [vmem:[%s0 + $0xe1] sm:$0xff]
  %v1338 = vld [vmem:[%s0 + $0xe9] sm:$0xff]
  %v1339 = vld [vmem:[%s0 + $0xf1] sm:$0xff]
  %v1340 = vld [vmem:[%s0 + $0xf9] sm:$0xff]
  %v1341 = vld [vmem:[%s0 + $0x101] sm:$0xff]
  %v1342 = vld [vmem:[%s0 + $0x109] sm:$0xff]
  %v1343 = vld [vmem:[%s0 + $0x111] sm:$0xff]
  %v1344 = vld [vmem:[%s0 + $0x119] sm:$0xff]
  %v1345 = vld [vmem:[%s0 + $0x121] sm:$0xff]
  %v1346 = vld [vmem:[%s0 + $0x129] sm:$0xff]
  %v1347 = vld [vmem:[%s0 + $0x131] sm:$0xff]
  %v1348 = vld [vmem:[%s0 + $0x139] sm:$0xff]
  %v1349 = vld [vmem:[%s0 + $0x141] sm:$0xff]
  %v1350 = vld [vmem:[%s0 + $0x149] sm:$0xff]
  %v1351 = vld [vmem:[%s0 + $0x151] sm:$0xff]
  %v1352 = vld [vmem:[%s0 + $0x159] sm:$0xff]
  %v1353 = vld [vmem:[%s0 + $0x161] sm:$0xff]
  %v1354 = vld [vmem:[%s0 + $0x169] sm:$0xff]
  %v1355 = vld [vmem:[%s0 + $0x171] sm:$0xff]
  %v1356 = vld [vmem:[%s0 + $0x179] sm:$0xff]
  %v1357 = vld [vmem:[%s0 + $0x181] sm:$0xff]
  %v1358 = vld [vmem:[%s0 + $0x189] sm:$0xff]
  %v1359 = vld [vmem:[%s0 + $0x191] sm:$0xff]
  %v1360 = vld [vmem:[%s0 + $0x199] sm:$0xff]
  %v1361 = vld [vmem:[%s0 + $0x1a1] sm:$0xff]
  %v1362 = vld [vmem:[%s0 + $0x1a9] sm:$0xff]
  %v1363 = vld [vmem:[%s0 + $0x1b1] sm:$0xff]
  %v1364 = vld [vmem:[%s0 + $0x1b9] sm:$0xff]
  %v1365 = vld [vmem:[%s0 + $0x1c1] sm:$0xff]
  %v1366 = vld [vmem:[%s0 + $0x1c9] sm:$0xff]
  %v1367 = vld [vmem:[%s0 + $0x1d1] sm:$0xff]
  %v1368 = vld [vmem:[%s0 + $0x1d9] sm:$0xff]
  %v1369 = vld [vmem:[%s0 + $0x1e1] sm:$0xff]
  %v1370 = vld [vmem:[%s0 + $0x1e9] sm:$0xff]
  %v1371 = vld [vmem:[%s0 + $0x1f1] sm:$0xff]
  %v1372 = vld [vmem:[%s0 + $0x1f9] sm:$0xff]
  %v1373 = vld [vmem:[%s0 + $0x201] sm:$0xff]
  %v1374 = vld [vmem:[%s2 + $0x20] sm:$0xff]
  %v1375 = vld [vmem:[%s2 + $0x28] sm:$0xff]
  %v1377 = vsel %vm155, %v1310, 0
  %v1380 = vsel %vm155, %v1311, 0
  %v1383 = vsel %vm155, %v1312, 0
  %v1386 = vsel %vm155, %v1313, 0
  %v1389 = vsel %vm155, %v1314, 0
  %v1392 = vsel %vm155, %v1315, 0
  %v1395 = vsel %vm155, %v1316, 0
  %v1398 = vsel %vm155, %v1317, 0
  %v1401 = vsel %vm155, %v1318, 0
  %v1404 = vsel %vm155, %v1319, 0
  %v1407 = vsel %vm155, %v1320, 0
  %v1410 = vsel %vm155, %v1321, 0
  %v1413 = vsel %vm155, %v1322, 0
  %v1416 = vsel %vm155, %v1323, 0
  %v1419 = vsel %vm155, %v1324, 0
  %v1422 = vsel %vm155, %v1325, 0
  %v1425 = vsel %vm155, %v1326, 0
  %v1428 = vsel %vm155, %v1327, 0
  %v1431 = vsel %vm155, %v1328, 0
  %v1434 = vsel %vm155, %v1329, 0
  %v1437 = vsel %vm155, %v1330, 0
  %v1440 = vsel %vm155, %v1331, 0
  %v1443 = vsel %vm155, %v1332, 0
  %v1446 = vsel %vm155, %v1333, 0
  %v1449 = vsel %vm155, %v1334, 0
  %v1452 = vsel %vm155, %v1335, 0
  %v1455 = vsel %vm155, %v1336, 0
  %v1458 = vsel %vm155, %v1337, 0
  %v1461 = vsel %vm155, %v1338, 0
  %v1464 = vsel %vm155, %v1339, 0
  %v1467 = vsel %vm155, %v1340, 0
  %v1470 = vsel %vm155, %v1341, 0
  %v1473 = vsel %vm155, %v1342, 0
  %v1476 = vsel %vm155, %v1343, 0
  %v1479 = vsel %vm155, %v1344, 0
  %v1482 = vsel %vm155, %v1345, 0
  %v1485 = vsel %vm155, %v1346, 0
  %v1488 = vsel %vm155, %v1347, 0
  %v1491 = vsel %vm155, %v1348, 0
  %v1494 = vsel %vm155, %v1349, 0
  %v1497 = vsel %vm155, %v1350, 0
  %v1500 = vsel %vm155, %v1351, 0
  %v1503 = vsel %vm155, %v1352, 0
  %v1506 = vsel %vm155, %v1353, 0
  %v1509 = vsel %vm155, %v1354, 0
  %v1512 = vsel %vm155, %v1355, 0
  %v1515 = vsel %vm155, %v1356, 0
  %v1518 = vsel %vm155, %v1357, 0
  %v1521 = vsel %vm155, %v1358, 0
  %v1524 = vsel %vm155, %v1359, 0
  %v1527 = vsel %vm155, %v1360, 0
  %v1530 = vsel %vm155, %v1361, 0
  %v1533 = vsel %vm155, %v1362, 0
  %v1536 = vsel %vm155, %v1363, 0
  %v1539 = vsel %vm155, %v1364, 0
  %v1542 = vsel %vm155, %v1365, 0
  %v1545 = vsel %vm155, %v1366, 0
  %v1548 = vsel %vm155, %v1367, 0
  %v1551 = vsel %vm155, %v1368, 0
  %v1554 = vsel %vm155, %v1369, 0
  %v1557 = vsel %vm155, %v1370, 0
  %v1560 = vsel %vm155, %v1371, 0
  %v1563 = vsel %vm155, %v1372, 0
  %v1566 = vsel %vm155, %v1373, 0
  %1568 = vmatprep.subr.mxu0 0.0
  %1569 = vmatpush1.msra.mxu0 %v1374
  %1570 = vmatprep.subr.mxu0 0.0
  %1571 = vmatpush1.msra.mxu0 %v1375
  %1572 = vmatprep.subr.mxu0 0.0
  %1573 = vmatpush1.msra.mxu0 0.0
  %1574 = vmatprep.subr.mxu0 0.0
  %1575 = vmatpush1.msra.mxu0 0.0
  %1576 = vmatprep.subr.mxu0 0.0
  %1577 = vmatpush1.msra.mxu0 0.0
  %1578 = vmatprep.subr.mxu0 0.0
  %1579 = vmatpush1.msra.mxu0 0.0
  %1580 = vmatprep.subr.mxu0 0.0
  %1581 = vmatpush1.msra.mxu0 0.0
  %1582 = vmatprep.subr.mxu0 0.0
  %1583 = vmatpush1.msra.mxu0 0.0
  %1584 = vmatprep.subr.mxu0 0.0
  %1585 = vmatpush1.msra.mxu0 0.0
  %1586 = vmatprep.subr.mxu0 0.0
  %1587 = vmatpush1.msra.mxu0 0.0
  %1588 = vmatprep.subr.mxu0 0.0
  %1589 = vmatpush1.msra.mxu0 0.0
  %1590 = vmatprep.subr.mxu0 0.0
  %1591 = vmatpush1.msra.mxu0 0.0
  %1592 = vmatprep.subr.mxu0 0.0
  %1593 = vmatpush1.msra.mxu0 0.0
  %1594 = vmatprep.subr.mxu0 0.0
  %1595 = vmatpush1.msra.mxu0 0.0
  %1596 = vmatprep.subr.mxu0 0.0
  %1597 = vmatpush1.msra.mxu0 0.0
  %1598 = vmatprep.subr.mxu0 0.0
  %1599 = vmatpush1.msra.mxu0 0.0
  %1600 = vmatprep.subr.mxu0 0.0
  %1601 = vmatpush1.msra.mxu0 0.0
  %1602 = vmatprep.subr.mxu0 0.0
  %1603 = vmatpush1.msra.mxu0 0.0
  %1604 = vmatprep.subr.mxu0 0.0
  %1605 = vmatpush1.msra.mxu0 0.0
  %1606 = vmatprep.subr.mxu0 0.0
  %1607 = vmatpush1.msra.mxu0 0.0
  %1608 = vmatprep.subr.mxu0 0.0
  %1609 = vmatpush1.msra.mxu0 0.0
  %1610 = vmatprep.subr.mxu0 0.0
  %1611 = vmatpush1.msra.mxu0 0.0
  %1612 = vmatprep.subr.mxu0 0.0
  %1613 = vmatpush1.msra.mxu0 0.0
  %1614 = vmatprep.subr.mxu0 0.0
  %1615 = vmatpush1.msra.mxu0 0.0
  %1616 = vmatprep.subr.mxu0 0.0
  %1617 = vmatpush1.msra.mxu0 0.0
  %1618 = vmatprep.subr.mxu0 0.0
  %1619 = vmatpush1.msra.mxu0 0.0
  %1620 = vmatprep.subr.mxu0 0.0
  %1621 = vmatpush1.msra.mxu0 0.0
  %1622 = vmatprep.subr.mxu0 0.0
  %1623 = vmatpush1.msra.mxu0 0.0
  %1624 = vmatprep.subr.mxu0 0.0
  %1625 = vmatpush1.msra.mxu0 0.0
  %1626 = vmatprep.subr.mxu0 0.0
  %1627 = vmatpush1.msra.mxu0 0.0
  %1628 = vmatprep.subr.mxu0 0.0
  %1629 = vmatpush1.msra.mxu0 0.0
  %1630 = vmatprep.subr.mxu0 0.0
  %1631 = vmatpush1.msra.mxu0 0.0
  %1632 = vmatprep.mubr.f32.mxu0 0.0
  %1633 = vmatmul.mubr.f32.gmra.mrb[0].mxu0 %v1377
  %v1634 = vpop.f32.mrb[0].mxu0
  %v1635 = vadd.f32 0.0, %v1634
  %v1636 = vpop.f32.mrb[0].mxu0
  %1637 = vmatprep.mubr.f32.mxu0 0.0
  %1638 = vmatmul.mubr.f32.gmra.mrb[0].mxu0 %v1380
  %v1639 = vpop.f32.mrb[0].mxu0
  %v1640 = vadd.f32 0.0, %v1639
  %v1641 = vpop.f32.mrb[0].mxu0
  %1642 = vmatprep.mubr.f32.mxu0 0.0
  %1643 = vmatmul.mubr.f32.gmra.mrb[0].mxu0 %v1383
  %v1644 = vpop.f32.mrb[0].mxu0
  %v1645 = vadd.f32 0.0, %v1644
  %v1646 = vpop.f32.mrb[0].mxu0
  %1647 = vmatprep.mubr.f32.mxu0 0.0
  %1648 = vmatmul.mubr.f32.gmra.mrb[0].mxu0 %v1386
  %v1649 = vpop.f32.mrb[0].mxu0
  %v1650 = vadd.f32 0.0, %v1649
  %v1651 = vpop.f32.mrb[0].mxu0
  %1652 = vmatprep.mubr.f32.mxu0 0.0
  %1653 = vmatmul.mubr.f32.gmra.mrb[0].mxu0 %v1389
  %v1654 = vpop.f32.mrb[0].mxu0
  %v1655 = vadd.f32 0.0, %v1654
  %v1656 = vpop.f32.mrb[0].mxu0
  %1657 = vmatprep.mubr.f32.mxu0 0.0
  %1658 = vmatmul.mubr.f32.gmra.mrb[0].mxu0 %v1392
  %v1659 = vpop.f32.mrb[0].mxu0
  %v1660 = vadd.f32 0.0, %v1659
  %v1661 = vpop.f32.mrb[0].mxu0
  %1662 = vmatprep.mubr.f32.mxu0 0.0
  %1663 = vmatmul.mubr.f32.gmra.mrb[0].mxu0 %v1395
  %v1664 = vpop.f32.mrb[0].mxu0
  %v1665 = vadd.f32 0.0, %v1664
  %v1666 = vpop.f32.mrb[0].mxu0
  %1667 = vmatprep.mubr.f32.mxu0 0.0
  %1668 = vmatmul.mubr.f32.gmra.mrb[0].mxu0 %v1398
  %v1669 = vpop.f32.mrb[0].mxu0
  %v1670 = vadd.f32 0.0, %v1669
  %v1671 = vpop.f32.mrb[0].mxu0
  %1672 = vmatprep.mubr.f32.mxu0 0.0
  %1673 = vmatmul.mubr.f32.gmra.mrb[0].mxu0 %v1401
  %v1674 = vpop.f32.mrb[0].mxu0
  %v1675 = vadd.f32 0.0, %v1674
  %v1676 = vpop.f32.mrb[0].mxu0
  %1677 = vmatprep.mubr.f32.mxu0 0.0
  %1678 = vmatmul.mubr.f32.gmra.mrb[0].mxu0 %v1404
  %v1679 = vpop.f32.mrb[0].mxu0
  %v1680 = vadd.f32 0.0, %v1679
  %v1681 = vpop.f32.mrb[0].mxu0
  %1682 = vmatprep.mubr.f32.mxu0 0.0
  %1683 = vmatmul.mubr.f32.gmra.mrb[0].mxu0 %v1407
  %v1684 = vpop.f32.mrb[0].mxu0
  %v1685 = vadd.f32 0.0, %v1684
  %v1686 = vpop.f32.mrb[0].mxu0
  %1687 = vmatprep.mubr.f32.mxu0 0.0
  %1688 = vmatmul.mubr.f32.gmra.mrb[0].mxu0 %v1410
  %v1689 = vpop.f32.mrb[0].mxu0
  %v1690 = vadd.f32 0.0, %v1689
  %v1691 = vpop.f32.mrb[0].mxu0
  %1692 = vmatprep.mubr.f32.mxu0 0.0
  %1693 = vmatmul.mubr.f32.gmra.mrb[0].mxu0 %v1413
  %v1694 = vpop.f32.mrb[0].mxu0
  %v1695 = vadd.f32 0.0, %v1694
  %v1696 = vpop.f32.mrb[0].mxu0
  %1697 = vmatprep.mubr.f32.mxu0 0.0
  %1698 = vmatmul.mubr.f32.gmra.mrb[0].mxu0 %v1416
  %v1699 = vpop.f32.mrb[0].mxu0
  %v1700 = vadd.f32 0.0, %v1699
  %v1701 = vpop.f32.mrb[0].mxu0
  %1702 = vmatprep.mubr.f32.mxu0 0.0
  %1703 = vmatmul.mubr.f32.gmra.mrb[0].mxu0 %v1419
  %v1704 = vpop.f32.mrb[0].mxu0
  %v1705 = vadd.f32 0.0, %v1704
  %v1706 = vpop.f32.mrb[0].mxu0
  %1707 = vmatprep.mubr.f32.mxu0 0.0
  %1708 = vmatmul.mubr.f32.gmra.mrb[0].mxu0 %v1422
  %v1709 = vpop.f32.mrb[0].mxu0
  %v1710 = vadd.f32 0.0, %v1709
  %v1711 = vpop.f32.mrb[0].mxu0
  %1712 = vmatprep.mubr.f32.mxu0 0.0
  %1713 = vmatmul.mubr.f32.gmra.mrb[0].mxu0 %v1425
  %v1714 = vpop.f32.mrb[0].mxu0
  %v1715 = vadd.f32 0.0, %v1714
  %v1716 = vpop.f32.mrb[0].mxu0
  %1717 = vmatprep.mubr.f32.mxu0 0.0
  %1718 = vmatmul.mubr.f32.gmra.mrb[0].mxu0 %v1428
  %v1719 = vpop.f32.mrb[0].mxu0
  %v1720 = vadd.f32 0.0, %v1719
  %v1721 = vpop.f32.mrb[0].mxu0
  %1722 = vmatprep.mubr.f32.mxu0 0.0
  %1723 = vmatmul.mubr.f32.gmra.mrb[0].mxu0 %v1431
  %v1724 = vpop.f32.mrb[0].mxu0
  %v1725 = vadd.f32 0.0, %v1724
  %v1726 = vpop.f32.mrb[0].mxu0
  %1727 = vmatprep.mubr.f32.mxu0 0.0
  %1728 = vmatmul.mubr.f32.gmra.mrb[0].mxu0 %v1434
  %v1729 = vpop.f32.mrb[0].mxu0
  %v1730 = vadd.f32 0.0, %v1729
  %v1731 = vpop.f32.mrb[0].mxu0
  %1732 = vmatprep.mubr.f32.mxu0 0.0
  %1733 = vmatmul.mubr.f32.gmra.mrb[0].mxu0 %v1437
  %v1734 = vpop.f32.mrb[0].mxu0
  %v1735 = vadd.f32 0.0, %v1734
  %v1736 = vpop.f32.mrb[0].mxu0
  %1737 = vmatprep.mubr.f32.mxu0 0.0
  %1738 = vmatmul.mubr.f32.gmra.mrb[0].mxu0 %v1440
  %v1739 = vpop.f32.mrb[0].mxu0
  %v1740 = vadd.f32 0.0, %v1739
  %v1741 = vpop.f32.mrb[0].mxu0
  %1742 = vmatprep.mubr.f32.mxu0 0.0
  %1743 = vmatmul.mubr.f32.gmra.mrb[0].mxu0 %v1443
  %v1744 = vpop.f32.mrb[0].mxu0
  %v1745 = vadd.f32 0.0, %v1744
  %v1746 = vpop.f32.mrb[0].mxu0
  %1747 = vmatprep.mubr.f32.mxu0 0.0
  %1748 = vmatmul.mubr.f32.gmra.mrb[0].mxu0 %v1446
  %v1749 = vpop.f32.mrb[0].mxu0
  %v1750 = vadd.f32 0.0, %v1749
  %v1751 = vpop.f32.mrb[0].mxu0
  %1752 = vmatprep.mubr.f32.mxu0 0.0
  %1753 = vmatmul.mubr.f32.gmra.mrb[0].mxu0 %v1449
  %v1754 = vpop.f32.mrb[0].mxu0
  %v1755 = vadd.f32 0.0, %v1754
  %v1756 = vpop.f32.mrb[0].mxu0
  %1757 = vmatprep.mubr.f32.mxu0 0.0
  %1758 = vmatmul.mubr.f32.gmra.mrb[0].mxu0 %v1452
  %v1759 = vpop.f32.mrb[0].mxu0
  %v1760 = vadd.f32 0.0, %v1759
  %v1761 = vpop.f32.mrb[0].mxu0
  %1762 = vmatprep.mubr.f32.mxu0 0.0
  %1763 = vmatmul.mubr.f32.gmra.mrb[0].mxu0 %v1455
  %v1764 = vpop.f32.mrb[0].mxu0
  %v1765 = vadd.f32 0.0, %v1764
  %v1766 = vpop.f32.mrb[0].mxu0
  %1767 = vmatprep.mubr.f32.mxu0 0.0
  %1768 = vmatmul.mubr.f32.gmra.mrb[0].mxu0 %v1458
  %v1769 = vpop.f32.mrb[0].mxu0
  %v1770 = vadd.f32 0.0, %v1769
  %v1771 = vpop.f32.mrb[0].mxu0
  %1772 = vmatprep.mubr.f32.mxu0 0.0
  %1773 = vmatmul.mubr.f32.gmra.mrb[0].mxu0 %v1461
  %v1774 = vpop.f32.mrb[0].mxu0
  %v1775 = vadd.f32 0.0, %v1774
  %v1776 = vpop.f32.mrb[0].mxu0
  %1777 = vmatprep.mubr.f32.mxu0 0.0
  %1778 = vmatmul.mubr.f32.gmra.mrb[0].mxu0 %v1464
  %v1779 = vpop.f32.mrb[0].mxu0
  %v1780 = vadd.f32 0.0, %v1779
  %v1781 = vpop.f32.mrb[0].mxu0
  %1782 = vmatprep.mubr.f32.mxu0 0.0
  %1783 = vmatmul.mubr.f32.gmra.mrb[0].mxu0 %v1467
  %v1784 = vpop.f32.mrb[0].mxu0
  %v1785 = vadd.f32 0.0, %v1784
  %v1786 = vpop.f32.mrb[0].mxu0
  %1787 = vmatprep.mubr.f32.mxu0 0.0
  %1788 = vmatmul.mubr.f32.gmra.mrb[0].mxu0 %v1470
  %v1789 = vpop.f32.mrb[0].mxu0
  %v1790 = vadd.f32 0.0, %v1789
  %v1791 = vpop.f32.mrb[0].mxu0
  %1792 = vmatprep.mubr.f32.mxu0 0.0
  %1793 = vmatmul.mubr.f32.gmra.mrb[0].mxu0 %v1473
  %v1794 = vpop.f32.mrb[0].mxu0
  %v1795 = vadd.f32 0.0, %v1794
  %v1796 = vpop.f32.mrb[0].mxu0
  %1797 = vmatprep.mubr.f32.mxu0 0.0
  %1798 = vmatmul.mubr.f32.gmra.mrb[0].mxu0 %v1476
  %v1799 = vpop.f32.mrb[0].mxu0
  %v1800 = vadd.f32 0.0, %v1799
  %v1801 = vpop.f32.mrb[0].mxu0
  %1802 = vmatprep.mubr.f32.mxu0 0.0
  %1803 = vmatmul.mubr.f32.gmra.mrb[0].mxu0 %v1479
  %v1804 = vpop.f32.mrb[0].mxu0
  %v1805 = vadd.f32 0.0, %v1804
  %v1806 = vpop.f32.mrb[0].mxu0
  %1807 = vmatprep.mubr.f32.mxu0 0.0
  %1808 = vmatmul.mubr.f32.gmra.mrb[0].mxu0 %v1482
  %v1809 = vpop.f32.mrb[0].mxu0
  %v1810 = vadd.f32 0.0, %v1809
  %v1811 = vpop.f32.mrb[0].mxu0
  %1812 = vmatprep.mubr.f32.mxu0 0.0
  %1813 = vmatmul.mubr.f32.gmra.mrb[0].mxu0 %v1485
  %v1814 = vpop.f32.mrb[0].mxu0
  %v1815 = vadd.f32 0.0, %v1814
  %v1816 = vpop.f32.mrb[0].mxu0
  %1817 = vmatprep.mubr.f32.mxu0 0.0
  %1818 = vmatmul.mubr.f32.gmra.mrb[0].mxu0 %v1488
  %v1819 = vpop.f32.mrb[0].mxu0
  %v1820 = vadd.f32 0.0, %v1819
  %v1821 = vpop.f32.mrb[0].mxu0
  %1822 = vmatprep.mubr.f32.mxu0 0.0
  %1823 = vmatmul.mubr.f32.gmra.mrb[0].mxu0 %v1491
  %v1824 = vpop.f32.mrb[0].mxu0
  %v1825 = vadd.f32 0.0, %v1824
  %v1826 = vpop.f32.mrb[0].mxu0
  %1827 = vmatprep.mubr.f32.mxu0 0.0
  %1828 = vmatmul.mubr.f32.gmra.mrb[0].mxu0 %v1494
  %v1829 = vpop.f32.mrb[0].mxu0
  %v1830 = vadd.f32 0.0, %v1829
  %v1831 = vpop.f32.mrb[0].mxu0
  %1832 = vmatprep.mubr.f32.mxu0 0.0
  %1833 = vmatmul.mubr.f32.gmra.mrb[0].mxu0 %v1497
  %v1834 = vpop.f32.mrb[0].mxu0
  %v1835 = vadd.f32 0.0, %v1834
  %v1836 = vpop.f32.mrb[0].mxu0
  %1837 = vmatprep.mubr.f32.mxu0 0.0
  %1838 = vmatmul.mubr.f32.gmra.mrb[0].mxu0 %v1500
  %v1839 = vpop.f32.mrb[0].mxu0
  %v1840 = vadd.f32 0.0, %v1839
  %v1841 = vpop.f32.mrb[0].mxu0
  %1842 = vmatprep.mubr.f32.mxu0 0.0
  %1843 = vmatmul.mubr.f32.gmra.mrb[0].mxu0 %v1503
  %v1844 = vpop.f32.mrb[0].mxu0
  %v1845 = vadd.f32 0.0, %v1844
  %v1846 = vpop.f32.mrb[0].mxu0
  %1847 = vmatprep.mubr.f32.mxu0 0.0
  %1848 = vmatmul.mubr.f32.gmra.mrb[0].mxu0 %v1506
  %v1849 = vpop.f32.mrb[0].mxu0
  %v1850 = vadd.f32 0.0, %v1849
  %v1851 = vpop.f32.mrb[0].mxu0
  %1852 = vmatprep.mubr.f32.mxu0 0.0
  %1853 = vmatmul.mubr.f32.gmra.mrb[0].mxu0 %v1509
  %v1854 = vpop.f32.mrb[0].mxu0
  %v1855 = vadd.f32 0.0, %v1854
  %v1856 = vpop.f32.mrb[0].mxu0
  %1857 = vmatprep.mubr.f32.mxu0 0.0
  %1858 = vmatmul.mubr.f32.gmra.mrb[0].mxu0 %v1512
  %v1859 = vpop.f32.mrb[0].mxu0
  %v1860 = vadd.f32 0.0, %v1859
  %v1861 = vpop.f32.mrb[0].mxu0
  %1862 = vmatprep.mubr.f32.mxu0 0.0
  %1863 = vmatmul.mubr.f32.gmra.mrb[0].mxu0 %v1515
  %v1864 = vpop.f32.mrb[0].mxu0
  %v1865 = vadd.f32 0.0, %v1864
  %v1866 = vpop.f32.mrb[0].mxu0
  %1867 = vmatprep.mubr.f32.mxu0 0.0
  %1868 = vmatmul.mubr.f32.gmra.mrb[0].mxu0 %v1518
  %v1869 = vpop.f32.mrb[0].mxu0
  %v1870 = vadd.f32 0.0, %v1869
  %v1871 = vpop.f32.mrb[0].mxu0
  %1872 = vmatprep.mubr.f32.mxu0 0.0
  %1873 = vmatmul.mubr.f32.gmra.mrb[0].mxu0 %v1521
  %v1874 = vpop.f32.mrb[0].mxu0
  %v1875 = vadd.f32 0.0, %v1874
  %v1876 = vpop.f32.mrb[0].mxu0
  %1877 = vmatprep.mubr.f32.mxu0 0.0
  %1878 = vmatmul.mubr.f32.gmra.mrb[0].mxu0 %v1524
  %v1879 = vpop.f32.mrb[0].mxu0
  %v1880 = vadd.f32 0.0, %v1879
  %v1881 = vpop.f32.mrb[0].mxu0
  %1882 = vmatprep.mubr.f32.mxu0 0.0
  %1883 = vmatmul.mubr.f32.gmra.mrb[0].mxu0 %v1527
  %v1884 = vpop.f32.mrb[0].mxu0
  %v1885 = vadd.f32 0.0, %v1884
  %v1886 = vpop.f32.mrb[0].mxu0
  %1887 = vmatprep.mubr.f32.mxu0 0.0
  %1888 = vmatmul.mubr.f32.gmra.mrb[0].mxu0 %v1530
  %v1889 = vpop.f32.mrb[0].mxu0
  %v1890 = vadd.f32 0.0, %v1889
  %v1891 = vpop.f32.mrb[0].mxu0
  %1892 = vmatprep.mubr.f32.mxu0 0.0
  %1893 = vmatmul.mubr.f32.gmra.mrb[0].mxu0 %v1533
  %v1894 = vpop.f32.mrb[0].mxu0
  %v1895 = vadd.f32 0.0, %v1894
  %v1896 = vpop.f32.mrb[0].mxu0
  %1897 = vmatprep.mubr.f32.mxu0 0.0
  %1898 = vmatmul.mubr.f32.gmra.mrb[0].mxu0 %v1536
  %v1899 = vpop.f32.mrb[0].mxu0
  %v1900 = vadd.f32 0.0, %v1899
  %v1901 = vpop.f32.mrb[0].mxu0
  %1902 = vmatprep.mubr.f32.mxu0 0.0
  %1903 = vmatmul.mubr.f32.gmra.mrb[0].mxu0 %v1539
  %v1904 = vpop.f32.mrb[0].mxu0
  %v1905 = vadd.f32 0.0, %v1904
  %v1906 = vpop.f32.mrb[0].mxu0
  %1907 = vmatprep.mubr.f32.mxu0 0.0
  %1908 = vmatmul.mubr.f32.gmra.mrb[0].mxu0 %v1542
  %v1909 = vpop.f32.mrb[0].mxu0
  %v1910 = vadd.f32 0.0, %v1909
  %v1911 = vpop.f32.mrb[0].mxu0
  %1912 = vmatprep.mubr.f32.mxu0 0.0
  %1913 = vmatmul.mubr.f32.gmra.mrb[0].mxu0 %v1545
  %v1914 = vpop.f32.mrb[0].mxu0
  %v1915 = vadd.f32 0.0, %v1914
  %v1916 = vpop.f32.mrb[0].mxu0
  %1917 = vmatprep.mubr.f32.mxu0 0.0
  %1918 = vmatmul.mubr.f32.gmra.mrb[0].mxu0 %v1548
  %v1919 = vpop.f32.mrb[0].mxu0
  %v1920 = vadd.f32 0.0, %v1919
  %v1921 = vpop.f32.mrb[0].mxu0
  %1922 = vmatprep.mubr.f32.mxu0 0.0
  %1923 = vmatmul.mubr.f32.gmra.mrb[0].mxu0 %v1551
  %v1924 = vpop.f32.mrb[0].mxu0
  %v1925 = vadd.f32 0.0, %v1924
  %v1926 = vpop.f32.mrb[0].mxu0
  %1927 = vmatprep.mubr.f32.mxu0 0.0
  %1928 = vmatmul.mubr.f32.gmra.mrb[0].mxu0 %v1554
  %v1929 = vpop.f32.mrb[0].mxu0
  %v1930 = vadd.f32 0.0, %v1929
  %v1931 = vpop.f32.mrb[0].mxu0
  %1932 = vmatprep.mubr.f32.mxu0 0.0
  %1933 = vmatmul.mubr.f32.gmra.mrb[0].mxu0 %v1557
  %v1934 = vpop.f32.mrb[0].mxu0
  %v1935 = vadd.f32 0.0, %v1934
  %v1936 = vpop.f32.mrb[0].mxu0
  %1937 = vmatprep.mubr.f32.mxu0 0.0
  %1938 = vmatmul.mubr.f32.gmra.mrb[0].mxu0 %v1560
  %v1939 = vpop.f32.mrb[0].mxu0
  %v1940 = vadd.f32 0.0, %v1939
  %v1941 = vpop.f32.mrb[0].mxu0
  %1942 = vmatprep.mubr.f32.mxu0 0.0
  %1943 = vmatmul.mubr.f32.gmra.mrb[0].mxu0 %v1563
  %v1944 = vpop.f32.mrb[0].mxu0
  %v1945 = vadd.f32 0.0, %v1944
  %v1946 = vpop.f32.mrb[0].mxu0
  %1947 = vmatprep.mubr.f32.mxu0 0.0
  %1948 = vmatmul.mubr.f32.gmra.mrb[0].mxu0 %v1566
  %v1949 = vpop.f32.mrb[0].mxu0
  %v1950 = vadd.f32 0.0, %v1949
  %v1951 = vpop.f32.mrb[0].mxu0
  %1952 = vdwg.mxu0
  %v1953 = vadd.f32 %v992, %v1635
  %v1954 = vadd.f32 %v997, %v1640
  %v1955 = vadd.f32 %v1002, %v1645
  %v1956 = vadd.f32 %v1007, %v1650
  %v1957 = vadd.f32 %v1012, %v1655
  %v1958 = vadd.f32 %v1017, %v1660
  %v1959 = vadd.f32 %v1022, %v1665
  %v1960 = vadd.f32 %v1027, %v1670
  %v1961 = vadd.f32 %v1032, %v1675
  %v1962 = vadd.f32 %v1037, %v1680
  %v1963 = vadd.f32 %v1042, %v1685
  %v1964 = vadd.f32 %v1047, %v1690
  %v1965 = vadd.f32 %v1052, %v1695
  %v1966 = vadd.f32 %v1057, %v1700
  %v1967 = vadd.f32 %v1062, %v1705
  %v1968 = vadd.f32 %v1067, %v1710
  %v1969 = vadd.f32 %v1072, %v1715
  %v1970 = vadd.f32 %v1077, %v1720
  %v1971 = vadd.f32 %v1082, %v1725
  %v1972 = vadd.f32 %v1087, %v1730
  %v1973 = vadd.f32 %v1092, %v1735
  %v1974 = vadd.f32 %v1097, %v1740
  %v1975 = vadd.f32 %v1102, %v1745
  %v1976 = vadd.f32 %v1107, %v1750
  %v1977 = vadd.f32 %v1112, %v1755
  %v1978 = vadd.f32 %v1117, %v1760
  %v1979 = vadd.f32 %v1122, %v1765
  %v1980 = vadd.f32 %v1127, %v1770
  %v1981 = vadd.f32 %v1132, %v1775
  %v1982 = vadd.f32 %v1137, %v1780
  %v1983 = vadd.f32 %v1142, %v1785
  %v1984 = vadd.f32 %v1147, %v1790
  %v1985 = vadd.f32 %v1152, %v1795
  %v1986 = vadd.f32 %v1157, %v1800
  %v1987 = vadd.f32 %v1162, %v1805
  %v1988 = vadd.f32 %v1167, %v1810
  %v1989 = vadd.f32 %v1172, %v1815
  %v1990 = vadd.f32 %v1177, %v1820
  %v1991 = vadd.f32 %v1182, %v1825
  %v1992 = vadd.f32 %v1187, %v1830
  %v1993 = vadd.f32 %v1192, %v1835
  %v1994 = vadd.f32 %v1197, %v1840
  %v1995 = vadd.f32 %v1202, %v1845
  %v1996 = vadd.f32 %v1207, %v1850
  %v1997 = vadd.f32 %v1212, %v1855
  %v1998 = vadd.f32 %v1217, %v1860
  %v1999 = vadd.f32 %v1222, %v1865
  %v2000 = vadd.f32 %v1227, %v1870
  %v2001 = vadd.f32 %v1232, %v1875
  %v2002 = vadd.f32 %v1237, %v1880
  %v2003 = vadd.f32 %v1242, %v1885
  %v2004 = vadd.f32 %v1247, %v1890
  %v2005 = vadd.f32 %v1252, %v1895
  %v2006 = vadd.f32 %v1257, %v1900
  %v2007 = vadd.f32 %v1262, %v1905
  %v2008 = vadd.f32 %v1267, %v1910
  %v2009 = vadd.f32 %v1272, %v1915
  %v2010 = vadd.f32 %v1277, %v1920
  %v2011 = vadd.f32 %v1282, %v1925
  %v2012 = vadd.f32 %v1287, %v1930
  %v2013 = vadd.f32 %v1292, %v1935
  %v2014 = vadd.f32 %v1297, %v1940
  %v2015 = vadd.f32 %v1302, %v1945
  %v2016 = vadd.f32 %v1307, %v1950
  %v2017 = vld [vmem:[%s0 + $0x17] sm:$0xff]
  %v2018 = vld [vmem:[%s0 + $0x1f] sm:$0xff]
  %v2019 = vld [vmem:[%s0 + $0x27] sm:$0xff]
  %v2020 = vld [vmem:[%s0 + $0x2f] sm:$0xff]
  %v2021 = vld [vmem:[%s0 + $0x37] sm:$0xff]
  %v2022 = vld [vmem:[%s0 + $0x3f] sm:$0xff]
  %v2023 = vld [vmem:[%s0 + $0x47] sm:$0xff]
  %v2024 = vld [vmem:[%s0 + $0x4f] sm:$0xff]
  %v2025 = vld [vmem:[%s0 + $0x57] sm:$0xff]
  %v2026 = vld [vmem:[%s0 + $0x5f] sm:$0xff]
  %v2027 = vld [vmem:[%s0 + $0x67] sm:$0xff]
  %v2028 = vld [vmem:[%s0 + $0x6f] sm:$0xff]
  %v2029 = vld [vmem:[%s0 + $0x77] sm:$0xff]
  %v2030 = vld [vmem:[%s0 + $0x7f] sm:$0xff]
  %v2031 = vld [vmem:[%s0 + $0x87] sm:$0xff]
  %v2032 = vld [vmem:[%s0 + $0x8f] sm:$0xff]
  %v2033 = vld [vmem:[%s0 + $0x97] sm:$0xff]
  %v2034 = vld [vmem:[%s0 + $0x9f] sm:$0xff]
  %v2035 = vld [vmem:[%s0 + $0xa7] sm:$0xff]
  %v2036 = vld [vmem:[%s0 + $0xaf] sm:$0xff]
  %v2037 = vld [vmem:[%s0 + $0xb7] sm:$0xff]
  %v2038 = vld [vmem:[%s0 + $0xbf] sm:$0xff]
  %v2039 = vld [vmem:[%s0 + $0xc7] sm:$0xff]
  %v2040 = vld [vmem:[%s0 + $0xcf] sm:$0xff]
  %v2041 = vld [vmem:[%s0 + $0xd7] sm:$0xff]
  %v2042 = vld [vmem:[%s0 + $0xdf] sm:$0xff]
  %v2043 = vld [vmem:[%s0 + $0xe7] sm:$0xff]
  %v2044 = vld [vmem:[%s0 + $0xef] sm:$0xff]
  %v2045 = vld [vmem:[%s0 + $0xf7] sm:$0xff]
  %v2046 = vld [vmem:[%s0 + $0xff] sm:$0xff]
  %v2047 = vld [vmem:[%s0 + $0x107] sm:$0xff]
  %v2048 = vld [vmem:[%s0 + $0x10f] sm:$0xff]
  %v2049 = vld [vmem:[%s0 + $0x117] sm:$0xff]
  %v2050 = vld [vmem:[%s0 + $0x11f] sm:$0xff]
  %v2051 = vld [vmem:[%s0 + $0x127] sm:$0xff]
  %v2052 = vld [vmem:[%s0 + $0x12f] sm:$0xff]
  %v2053 = vld [vmem:[%s0 + $0x137] sm:$0xff]
  %v2054 = vld [vmem:[%s0 + $0x13f] sm:$0xff]
  %v2055 = vld [vmem:[%s0 + $0x147] sm:$0xff]
  %v2056 = vld [vmem:[%s0 + $0x14f] sm:$0xff]
  %v2057 = vld [vmem:[%s0 + $0x157] sm:$0xff]
  %v2058 = vld [vmem:[%s0 + $0x15f] sm:$0xff]
  %v2059 = vld [vmem:[%s0 + $0x167] sm:$0xff]
  %v2060 = vld [vmem:[%s0 + $0x16f] sm:$0xff]
  %v2061 = vld [vmem:[%s0 + $0x177] sm:$0xff]
  %v2062 = vld [vmem:[%s0 + $0x17f] sm:$0xff]
  %v2063 = vld [vmem:[%s0 + $0x187] sm:$0xff]
  %v2064 = vld [vmem:[%s0 + $0x18f] sm:$0xff]
  %v2065 = vld [vmem:[%s0 + $0x197] sm:$0xff]
  %v2066 = vld [vmem:[%s0 + $0x19f] sm:$0xff]
  %v2067 = vld [vmem:[%s0 + $0x1a7] sm:$0xff]
  %v2068 = vld [vmem:[%s0 + $0x1af] sm:$0xff]
  %v2069 = vld [vmem:[%s0 + $0x1b7] sm:$0xff]
  %v2070 = vld [vmem:[%s0 + $0x1bf] sm:$0xff]
  %v2071 = vld [vmem:[%s0 + $0x1c7] sm:$0xff]
  %v2072 = vld [vmem:[%s0 + $0x1cf] sm:$0xff]
  %v2073 = vld [vmem:[%s0 + $0x1d7] sm:$0xff]
  %v2074 = vld [vmem:[%s0 + $0x1df] sm:$0xff]
  %v2075 = vld [vmem:[%s0 + $0x1e7] sm:$0xff]
  %v2076 = vld [vmem:[%s0 + $0x1ef] sm:$0xff]
  %v2077 = vld [vmem:[%s0 + $0x1f7] sm:$0xff]
  %v2078 = vld [vmem:[%s0 + $0x1ff] sm:$0xff]
  %v2079 = vld [vmem:[%s0 + $0x207] sm:$0xff]
  %v2080 = vld [vmem:[%s0 + $0x20f] sm:$0xff]
  %v2081 = vld [vmem:[%s2 + $0x30] sm:$0xff]
  %v2082 = vld [vmem:[%s2 + $0x38] sm:$0xff]
  %v2084 = vsel %vm155, %v2017, 0
  %v2087 = vsel %vm155, %v2018, 0
  %v2090 = vsel %vm155, %v2019, 0
  %v2093 = vsel %vm155, %v2020, 0
  %v2096 = vsel %vm155, %v2021, 0
  %v2099 = vsel %vm155, %v2022, 0
  %v2102 = vsel %vm155, %v2023, 0
  %v2105 = vsel %vm155, %v2024, 0
  %v2108 = vsel %vm155, %v2025, 0
  %v2111 = vsel %vm155, %v2026, 0
  %v2114 = vsel %vm155, %v2027, 0
  %v2117 = vsel %vm155, %v2028, 0
  %v2120 = vsel %vm155, %v2029, 0
  %v2123 = vsel %vm155, %v2030, 0
  %v2126 = vsel %vm155, %v2031, 0
  %v2129 = vsel %vm155, %v2032, 0
  %v2132 = vsel %vm155, %v2033, 0
  %v2135 = vsel %vm155, %v2034, 0
  %v2138 = vsel %vm155, %v2035, 0
  %v2141 = vsel %vm155, %v2036, 0
  %v2144 = vsel %vm155, %v2037, 0
  %v2147 = vsel %vm155, %v2038, 0
  %v2150 = vsel %vm155, %v2039, 0
  %v2153 = vsel %vm155, %v2040, 0
  %v2156 = vsel %vm155, %v2041, 0
  %v2159 = vsel %vm155, %v2042, 0
  %v2162 = vsel %vm155, %v2043, 0
  %v2165 = vsel %vm155, %v2044, 0
  %v2168 = vsel %vm155, %v2045, 0
  %v2171 = vsel %vm155, %v2046, 0
  %v2174 = vsel %vm155, %v2047, 0
  %v2177 = vsel %vm155, %v2048, 0
  %v2180 = vsel %vm155, %v2049, 0
  %v2183 = vsel %vm155, %v2050, 0
  %v2186 = vsel %vm155, %v2051, 0
  %v2189 = vsel %vm155, %v2052, 0
  %v2192 = vsel %vm155, %v2053, 0
  %v2195 = vsel %vm155, %v2054, 0
  %v2198 = vsel %vm155, %v2055, 0
  %v2201 = vsel %vm155, %v2056, 0
  %v2204 = vsel %vm155, %v2057, 0
  %v2207 = vsel %vm155, %v2058, 0
  %v2210 = vsel %vm155, %v2059, 0
  %v2213 = vsel %vm155, %v2060, 0
  %v2216 = vsel %vm155, %v2061, 0
  %v2219 = vsel %vm155, %v2062, 0
  %v2222 = vsel %vm155, %v2063, 0
  %v2225 = vsel %vm155, %v2064, 0
  %v2228 = vsel %vm155, %v2065, 0
  %v2231 = vsel %vm155, %v2066, 0
  %v2234 = vsel %vm155, %v2067, 0
  %v2237 = vsel %vm155, %v2068, 0
  %v2240 = vsel %vm155, %v2069, 0
  %v2243 = vsel %vm155, %v2070, 0
  %v2246 = vsel %vm155, %v2071, 0
  %v2249 = vsel %vm155, %v2072, 0
  %v2252 = vsel %vm155, %v2073, 0
  %v2255 = vsel %vm155, %v2074, 0
  %v2258 = vsel %vm155, %v2075, 0
  %v2261 = vsel %vm155, %v2076, 0
  %v2264 = vsel %vm155, %v2077, 0
  %v2267 = vsel %vm155, %v2078, 0
  %v2270 = vsel %vm155, %v2079, 0
  %v2273 = vsel %vm155, %v2080, 0
  %2275 = vmatprep.subr.mxu0 0.0
  %2276 = vmatpush1.msra.mxu0 %v2081
  %2277 = vmatprep.subr.mxu0 0.0
  %2278 = vmatpush1.msra.mxu0 %v2082
  %2279 = vmatprep.subr.mxu0 0.0
  %2280 = vmatpush1.msra.mxu0 0.0
  %2281 = vmatprep.subr.mxu0 0.0
  %2282 = vmatpush1.msra.mxu0 0.0
  %2283 = vmatprep.subr.mxu0 0.0
  %2284 = vmatpush1.msra.mxu0 0.0
  %2285 = vmatprep.subr.mxu0 0.0
  %2286 = vmatpush1.msra.mxu0 0.0
  %2287 = vmatprep.subr.mxu0 0.0
  %2288 = vmatpush1.msra.mxu0 0.0
  %2289 = vmatprep.subr.mxu0 0.0
  %2290 = vmatpush1.msra.mxu0 0.0
  %2291 = vmatprep.subr.mxu0 0.0
  %2292 = vmatpush1.msra.mxu0 0.0
  %2293 = vmatprep.subr.mxu0 0.0
  %2294 = vmatpush1.msra.mxu0 0.0
  %2295 = vmatprep.subr.mxu0 0.0
  %2296 = vmatpush1.msra.mxu0 0.0
  %2297 = vmatprep.subr.mxu0 0.0
  %2298 = vmatpush1.msra.mxu0 0.0
  %2299 = vmatprep.subr.mxu0 0.0
  %2300 = vmatpush1.msra.mxu0 0.0
  %2301 = vmatprep.subr.mxu0 0.0
  %2302 = vmatpush1.msra.mxu0 0.0
  %2303 = vmatprep.subr.mxu0 0.0
  %2304 = vmatpush1.msra.mxu0 0.0
  %2305 = vmatprep.subr.mxu0 0.0
  %2306 = vmatpush1.msra.mxu0 0.0
  %2307 = vmatprep.subr.mxu0 0.0
  %2308 = vmatpush1.msra.mxu0 0.0
  %2309 = vmatprep.subr.mxu0 0.0
  %2310 = vmatpush1.msra.mxu0 0.0
  %2311 = vmatprep.subr.mxu0 0.0
  %2312 = vmatpush1.msra.mxu0 0.0
  %2313 = vmatprep.subr.mxu0 0.0
  %2314 = vmatpush1.msra.mxu0 0.0
  %2315 = vmatprep.subr.mxu0 0.0
  %2316 = vmatpush1.msra.mxu0 0.0
  %2317 = vmatprep.subr.mxu0 0.0
  %2318 = vmatpush1.msra.mxu0 0.0
  %2319 = vmatprep.subr.mxu0 0.0
  %2320 = vmatpush1.msra.mxu0 0.0
  %2321 = vmatprep.subr.mxu0 0.0
  %2322 = vmatpush1.msra.mxu0 0.0
  %2323 = vmatprep.subr.mxu0 0.0
  %2324 = vmatpush1.msra.mxu0 0.0
  %2325 = vmatprep.subr.mxu0 0.0
  %2326 = vmatpush1.msra.mxu0 0.0
  %2327 = vmatprep.subr.mxu0 0.0
  %2328 = vmatpush1.msra.mxu0 0.0
  %2329 = vmatprep.subr.mxu0 0.0
  %2330 = vmatpush1.msra.mxu0 0.0
  %2331 = vmatprep.subr.mxu0 0.0
  %2332 = vmatpush1.msra.mxu0 0.0
  %2333 = vmatprep.subr.mxu0 0.0
  %2334 = vmatpush1.msra.mxu0 0.0
  %2335 = vmatprep.subr.mxu0 0.0
  %2336 = vmatpush1.msra.mxu0 0.0
  %2337 = vmatprep.subr.mxu0 0.0
  %2338 = vmatpush1.msra.mxu0 0.0
  %2339 = vmatprep.mubr.f32.mxu0 0.0
  %2340 = vmatmul.mubr.f32.gmra.mrb[0].mxu0 %v2084
  %v2341 = vpop.f32.mrb[0].mxu0
  %v2342 = vadd.f32 0.0, %v2341
  %v2343 = vpop.f32.mrb[0].mxu0
  %2344 = vmatprep.mubr.f32.mxu0 0.0
  %2345 = vmatmul.mubr.f32.gmra.mrb[0].mxu0 %v2087
  %v2346 = vpop.f32.mrb[0].mxu0
  %v2347 = vadd.f32 0.0, %v2346
  %v2348 = vpop.f32.mrb[0].mxu0
  %2349 = vmatprep.mubr.f32.mxu0 0.0
  %2350 = vmatmul.mubr.f32.gmra.mrb[0].mxu0 %v2090
  %v2351 = vpop.f32.mrb[0].mxu0
  %v2352 = vadd.f32 0.0, %v2351
  %v2353 = vpop.f32.mrb[0].mxu0
  %2354 = vmatprep.mubr.f32.mxu0 0.0
  %2355 = vmatmul.mubr.f32.gmra.mrb[0].mxu0 %v2093
  %v2356 = vpop.f32.mrb[0].mxu0
  %v2357 = vadd.f32 0.0, %v2356
  %v2358 = vpop.f32.mrb[0].mxu0
  %2359 = vmatprep.mubr.f32.mxu0 0.0
  %2360 = vmatmul.mubr.f32.gmra.mrb[0].mxu0 %v2096
  %v2361 = vpop.f32.mrb[0].mxu0
  %v2362 = vadd.f32 0.0, %v2361
  %v2363 = vpop.f32.mrb[0].mxu0
  %2364 = vmatprep.mubr.f32.mxu0 0.0
  %2365 = vmatmul.mubr.f32.gmra.mrb[0].mxu0 %v2099
  %v2366 = vpop.f32.mrb[0].mxu0
  %v2367 = vadd.f32 0.0, %v2366
  %v2368 = vpop.f32.mrb[0].mxu0
  %2369 = vmatprep.mubr.f32.mxu0 0.0
  %2370 = vmatmul.mubr.f32.gmra.mrb[0].mxu0 %v2102
  %v2371 = vpop.f32.mrb[0].mxu0
  %v2372 = vadd.f32 0.0, %v2371
  %v2373 = vpop.f32.mrb[0].mxu0
  %2374 = vmatprep.mubr.f32.mxu0 0.0
  %2375 = vmatmul.mubr.f32.gmra.mrb[0].mxu0 %v2105
  %v2376 = vpop.f32.mrb[0].mxu0
  %v2377 = vadd.f32 0.0, %v2376
  %v2378 = vpop.f32.mrb[0].mxu0
  %2379 = vmatprep.mubr.f32.mxu0 0.0
  %2380 = vmatmul.mubr.f32.gmra.mrb[0].mxu0 %v2108
  %v2381 = vpop.f32.mrb[0].mxu0
  %v2382 = vadd.f32 0.0, %v2381
  %v2383 = vpop.f32.mrb[0].mxu0
  %2384 = vmatprep.mubr.f32.mxu0 0.0
  %2385 = vmatmul.mubr.f32.gmra.mrb[0].mxu0 %v2111
  %v2386 = vpop.f32.mrb[0].mxu0
  %v2387 = vadd.f32 0.0, %v2386
  %v2388 = vpop.f32.mrb[0].mxu0
  %2389 = vmatprep.mubr.f32.mxu0 0.0
  %2390 = vmatmul.mubr.f32.gmra.mrb[0].mxu0 %v2114
  %v2391 = vpop.f32.mrb[0].mxu0
  %v2392 = vadd.f32 0.0, %v2391
  %v2393 = vpop.f32.mrb[0].mxu0
  %2394 = vmatprep.mubr.f32.mxu0 0.0
  %2395 = vmatmul.mubr.f32.gmra.mrb[0].mxu0 %v2117
  %v2396 = vpop.f32.mrb[0].mxu0
  %v2397 = vadd.f32 0.0, %v2396
  %v2398 = vpop.f32.mrb[0].mxu0
  %2399 = vmatprep.mubr.f32.mxu0 0.0
  %2400 = vmatmul.mubr.f32.gmra.mrb[0].mxu0 %v2120
  %v2401 = vpop.f32.mrb[0].mxu0
  %v2402 = vadd.f32 0.0, %v2401
  %v2403 = vpop.f32.mrb[0].mxu0
  %2404 = vmatprep.mubr.f32.mxu0 0.0
  %2405 = vmatmul.mubr.f32.gmra.mrb[0].mxu0 %v2123
  %v2406 = vpop.f32.mrb[0].mxu0
  %v2407 = vadd.f32 0.0, %v2406
  %v2408 = vpop.f32.mrb[0].mxu0
  %2409 = vmatprep.mubr.f32.mxu0 0.0
  %2410 = vmatmul.mubr.f32.gmra.mrb[0].mxu0 %v2126
  %v2411 = vpop.f32.mrb[0].mxu0
  %v2412 = vadd.f32 0.0, %v2411
  %v2413 = vpop.f32.mrb[0].mxu0
  %2414 = vmatprep.mubr.f32.mxu0 0.0
  %2415 = vmatmul.mubr.f32.gmra.mrb[0].mxu0 %v2129
  %v2416 = vpop.f32.mrb[0].mxu0
  %v2417 = vadd.f32 0.0, %v2416
  %v2418 = vpop.f32.mrb[0].mxu0
  %2419 = vmatprep.mubr.f32.mxu0 0.0
  %2420 = vmatmul.mubr.f32.gmra.mrb[0].mxu0 %v2132
  %v2421 = vpop.f32.mrb[0].mxu0
  %v2422 = vadd.f32 0.0, %v2421
  %v2423 = vpop.f32.mrb[0].mxu0
  %2424 = vmatprep.mubr.f32.mxu0 0.0
  %2425 = vmatmul.mubr.f32.gmra.mrb[0].mxu0 %v2135
  %v2426 = vpop.f32.mrb[0].mxu0
  %v2427 = vadd.f32 0.0, %v2426
  %v2428 = vpop.f32.mrb[0].mxu0
  %2429 = vmatprep.mubr.f32.mxu0 0.0
  %2430 = vmatmul.mubr.f32.gmra.mrb[0].mxu0 %v2138
  %v2431 = vpop.f32.mrb[0].mxu0
  %v2432 = vadd.f32 0.0, %v2431
  %v2433 = vpop.f32.mrb[0].mxu0
  %2434 = vmatprep.mubr.f32.mxu0 0.0
  %2435 = vmatmul.mubr.f32.gmra.mrb[0].mxu0 %v2141
  %v2436 = vpop.f32.mrb[0].mxu0
  %v2437 = vadd.f32 0.0, %v2436
  %v2438 = vpop.f32.mrb[0].mxu0
  %2439 = vmatprep.mubr.f32.mxu0 0.0
  %2440 = vmatmul.mubr.f32.gmra.mrb[0].mxu0 %v2144
  %v2441 = vpop.f32.mrb[0].mxu0
  %v2442 = vadd.f32 0.0, %v2441
  %v2443 = vpop.f32.mrb[0].mxu0
  %2444 = vmatprep.mubr.f32.mxu0 0.0
  %2445 = vmatmul.mubr.f32.gmra.mrb[0].mxu0 %v2147
  %v2446 = vpop.f32.mrb[0].mxu0
  %v2447 = vadd.f32 0.0, %v2446
  %v2448 = vpop.f32.mrb[0].mxu0
  %2449 = vmatprep.mubr.f32.mxu0 0.0
  %2450 = vmatmul.mubr.f32.gmra.mrb[0].mxu0 %v2150
  %v2451 = vpop.f32.mrb[0].mxu0
  %v2452 = vadd.f32 0.0, %v2451
  %v2453 = vpop.f32.mrb[0].mxu0
  %2454 = vmatprep.mubr.f32.mxu0 0.0
  %2455 = vmatmul.mubr.f32.gmra.mrb[0].mxu0 %v2153
  %v2456 = vpop.f32.mrb[0].mxu0
  %v2457 = vadd.f32 0.0, %v2456
  %v2458 = vpop.f32.mrb[0].mxu0
  %2459 = vmatprep.mubr.f32.mxu0 0.0
  %2460 = vmatmul.mubr.f32.gmra.mrb[0].mxu0 %v2156
  %v2461 = vpop.f32.mrb[0].mxu0
  %v2462 = vadd.f32 0.0, %v2461
  %v2463 = vpop.f32.mrb[0].mxu0
  %2464 = vmatprep.mubr.f32.mxu0 0.0
  %2465 = vmatmul.mubr.f32.gmra.mrb[0].mxu0 %v2159
  %v2466 = vpop.f32.mrb[0].mxu0
  %v2467 = vadd.f32 0.0, %v2466
  %v2468 = vpop.f32.mrb[0].mxu0
  %2469 = vmatprep.mubr.f32.mxu0 0.0
  %2470 = vmatmul.mubr.f32.gmra.mrb[0].mxu0 %v2162
  %v2471 = vpop.f32.mrb[0].mxu0
  %v2472 = vadd.f32 0.0, %v2471
  %v2473 = vpop.f32.mrb[0].mxu0
  %2474 = vmatprep.mubr.f32.mxu0 0.0
  %2475 = vmatmul.mubr.f32.gmra.mrb[0].mxu0 %v2165
  %v2476 = vpop.f32.mrb[0].mxu0
  %v2477 = vadd.f32 0.0, %v2476
  %v2478 = vpop.f32.mrb[0].mxu0
  %2479 = vmatprep.mubr.f32.mxu0 0.0
  %2480 = vmatmul.mubr.f32.gmra.mrb[0].mxu0 %v2168
  %v2481 = vpop.f32.mrb[0].mxu0
  %v2482 = vadd.f32 0.0, %v2481
  %v2483 = vpop.f32.mrb[0].mxu0
  %2484 = vmatprep.mubr.f32.mxu0 0.0
  %2485 = vmatmul.mubr.f32.gmra.mrb[0].mxu0 %v2171
  %v2486 = vpop.f32.mrb[0].mxu0
  %v2487 = vadd.f32 0.0, %v2486
  %v2488 = vpop.f32.mrb[0].mxu0
  %2489 = vmatprep.mubr.f32.mxu0 0.0
  %2490 = vmatmul.mubr.f32.gmra.mrb[0].mxu0 %v2174
  %v2491 = vpop.f32.mrb[0].mxu0
  %v2492 = vadd.f32 0.0, %v2491
  %v2493 = vpop.f32.mrb[0].mxu0
  %2494 = vmatprep.mubr.f32.mxu0 0.0
  %2495 = vmatmul.mubr.f32.gmra.mrb[0].mxu0 %v2177
  %v2496 = vpop.f32.mrb[0].mxu0
  %v2497 = vadd.f32 0.0, %v2496
  %v2498 = vpop.f32.mrb[0].mxu0
  %2499 = vmatprep.mubr.f32.mxu0 0.0
  %2500 = vmatmul.mubr.f32.gmra.mrb[0].mxu0 %v2180
  %v2501 = vpop.f32.mrb[0].mxu0
  %v2502 = vadd.f32 0.0, %v2501
  %v2503 = vpop.f32.mrb[0].mxu0
  %2504 = vmatprep.mubr.f32.mxu0 0.0
  %2505 = vmatmul.mubr.f32.gmra.mrb[0].mxu0 %v2183
  %v2506 = vpop.f32.mrb[0].mxu0
  %v2507 = vadd.f32 0.0, %v2506
  %v2508 = vpop.f32.mrb[0].mxu0
  %2509 = vmatprep.mubr.f32.mxu0 0.0
  %2510 = vmatmul.mubr.f32.gmra.mrb[0].mxu0 %v2186
  %v2511 = vpop.f32.mrb[0].mxu0
  %v2512 = vadd.f32 0.0, %v2511
  %v2513 = vpop.f32.mrb[0].mxu0
  %2514 = vmatprep.mubr.f32.mxu0 0.0
  %2515 = vmatmul.mubr.f32.gmra.mrb[0].mxu0 %v2189
  %v2516 = vpop.f32.mrb[0].mxu0
  %v2517 = vadd.f32 0.0, %v2516
  %v2518 = vpop.f32.mrb[0].mxu0
  %2519 = vmatprep.mubr.f32.mxu0 0.0
  %2520 = vmatmul.mubr.f32.gmra.mrb[0].mxu0 %v2192
  %v2521 = vpop.f32.mrb[0].mxu0
  %v2522 = vadd.f32 0.0, %v2521
  %v2523 = vpop.f32.mrb[0].mxu0
  %2524 = vmatprep.mubr.f32.mxu0 0.0
  %2525 = vmatmul.mubr.f32.gmra.mrb[0].mxu0 %v2195
  %v2526 = vpop.f32.mrb[0].mxu0
  %v2527 = vadd.f32 0.0, %v2526
  %v2528 = vpop.f32.mrb[0].mxu0
  %2529 = vmatprep.mubr.f32.mxu0 0.0
  %2530 = vmatmul.mubr.f32.gmra.mrb[0].mxu0 %v2198
  %v2531 = vpop.f32.mrb[0].mxu0
  %v2532 = vadd.f32 0.0, %v2531
  %v2533 = vpop.f32.mrb[0].mxu0
  %2534 = vmatprep.mubr.f32.mxu0 0.0
  %2535 = vmatmul.mubr.f32.gmra.mrb[0].mxu0 %v2201
  %v2536 = vpop.f32.mrb[0].mxu0
  %v2537 = vadd.f32 0.0, %v2536
  %v2538 = vpop.f32.mrb[0].mxu0
  %2539 = vmatprep.mubr.f32.mxu0 0.0
  %2540 = vmatmul.mubr.f32.gmra.mrb[0].mxu0 %v2204
  %v2541 = vpop.f32.mrb[0].mxu0
  %v2542 = vadd.f32 0.0, %v2541
  %v2543 = vpop.f32.mrb[0].mxu0
  %2544 = vmatprep.mubr.f32.mxu0 0.0
  %2545 = vmatmul.mubr.f32.gmra.mrb[0].mxu0 %v2207
  %v2546 = vpop.f32.mrb[0].mxu0
  %v2547 = vadd.f32 0.0, %v2546
  %v2548 = vpop.f32.mrb[0].mxu0
  %2549 = vmatprep.mubr.f32.mxu0 0.0
  %2550 = vmatmul.mubr.f32.gmra.mrb[0].mxu0 %v2210
  %v2551 = vpop.f32.mrb[0].mxu0
  %v2552 = vadd.f32 0.0, %v2551
  %v2553 = vpop.f32.mrb[0].mxu0
  %2554 = vmatprep.mubr.f32.mxu0 0.0
  %2555 = vmatmul.mubr.f32.gmra.mrb[0].mxu0 %v2213
  %v2556 = vpop.f32.mrb[0].mxu0
  %v2557 = vadd.f32 0.0, %v2556
  %v2558 = vpop.f32.mrb[0].mxu0
  %2559 = vmatprep.mubr.f32.mxu0 0.0
  %2560 = vmatmul.mubr.f32.gmra.mrb[0].mxu0 %v2216
  %v2561 = vpop.f32.mrb[0].mxu0
  %v2562 = vadd.f32 0.0, %v2561
  %v2563 = vpop.f32.mrb[0].mxu0
  %2564 = vmatprep.mubr.f32.mxu0 0.0
  %2565 = vmatmul.mubr.f32.gmra.mrb[0].mxu0 %v2219
  %v2566 = vpop.f32.mrb[0].mxu0
  %v2567 = vadd.f32 0.0, %v2566
  %v2568 = vpop.f32.mrb[0].mxu0
  %2569 = vmatprep.mubr.f32.mxu0 0.0
  %2570 = vmatmul.mubr.f32.gmra.mrb[0].mxu0 %v2222
  %v2571 = vpop.f32.mrb[0].mxu0
  %v2572 = vadd.f32 0.0, %v2571
  %v2573 = vpop.f32.mrb[0].mxu0
  %2574 = vmatprep.mubr.f32.mxu0 0.0
  %2575 = vmatmul.mubr.f32.gmra.mrb[0].mxu0 %v2225
  %v2576 = vpop.f32.mrb[0].mxu0
  %v2577 = vadd.f32 0.0, %v2576
  %v2578 = vpop.f32.mrb[0].mxu0
  %2579 = vmatprep.mubr.f32.mxu0 0.0
  %2580 = vmatmul.mubr.f32.gmra.mrb[0].mxu0 %v2228
  %v2581 = vpop.f32.mrb[0].mxu0
  %v2582 = vadd.f32 0.0, %v2581
  %v2583 = vpop.f32.mrb[0].mxu0
  %2584 = vmatprep.mubr.f32.mxu0 0.0
  %2585 = vmatmul.mubr.f32.gmra.mrb[0].mxu0 %v2231
  %v2586 = vpop.f32.mrb[0].mxu0
  %v2587 = vadd.f32 0.0, %v2586
  %v2588 = vpop.f32.mrb[0].mxu0
  %2589 = vmatprep.mubr.f32.mxu0 0.0
  %2590 = vmatmul.mubr.f32.gmra.mrb[0].mxu0 %v2234
  %v2591 = vpop.f32.mrb[0].mxu0
  %v2592 = vadd.f32 0.0, %v2591
  %v2593 = vpop.f32.mrb[0].mxu0
  %2594 = vmatprep.mubr.f32.mxu0 0.0
  %2595 = vmatmul.mubr.f32.gmra.mrb[0].mxu0 %v2237
  %v2596 = vpop.f32.mrb[0].mxu0
  %v2597 = vadd.f32 0.0, %v2596
  %v2598 = vpop.f32.mrb[0].mxu0
  %2599 = vmatprep.mubr.f32.mxu0 0.0
  %2600 = vmatmul.mubr.f32.gmra.mrb[0].mxu0 %v2240
  %v2601 = vpop.f32.mrb[0].mxu0
  %v2602 = vadd.f32 0.0, %v2601
  %v2603 = vpop.f32.mrb[0].mxu0
  %2604 = vmatprep.mubr.f32.mxu0 0.0
  %2605 = vmatmul.mubr.f32.gmra.mrb[0].mxu0 %v2243
  %v2606 = vpop.f32.mrb[0].mxu0
  %v2607 = vadd.f32 0.0, %v2606
  %v2608 = vpop.f32.mrb[0].mxu0
  %2609 = vmatprep.mubr.f32.mxu0 0.0
  %2610 = vmatmul.mubr.f32.gmra.mrb[0].mxu0 %v2246
  %v2611 = vpop.f32.mrb[0].mxu0
  %v2612 = vadd.f32 0.0, %v2611
  %v2613 = vpop.f32.mrb[0].mxu0
  %2614 = vmatprep.mubr.f32.mxu0 0.0
  %2615 = vmatmul.mubr.f32.gmra.mrb[0].mxu0 %v2249
  %v2616 = vpop.f32.mrb[0].mxu0
  %v2617 = vadd.f32 0.0, %v2616
  %v2618 = vpop.f32.mrb[0].mxu0
  %2619 = vmatprep.mubr.f32.mxu0 0.0
  %2620 = vmatmul.mubr.f32.gmra.mrb[0].mxu0 %v2252
  %v2621 = vpop.f32.mrb[0].mxu0
  %v2622 = vadd.f32 0.0, %v2621
  %v2623 = vpop.f32.mrb[0].mxu0
  %2624 = vmatprep.mubr.f32.mxu0 0.0
  %2625 = vmatmul.mubr.f32.gmra.mrb[0].mxu0 %v2255
  %v2626 = vpop.f32.mrb[0].mxu0
  %v2627 = vadd.f32 0.0, %v2626
  %v2628 = vpop.f32.mrb[0].mxu0
  %2629 = vmatprep.mubr.f32.mxu0 0.0
  %2630 = vmatmul.mubr.f32.gmra.mrb[0].mxu0 %v2258
  %v2631 = vpop.f32.mrb[0].mxu0
  %v2632 = vadd.f32 0.0, %v2631
  %v2633 = vpop.f32.mrb[0].mxu0
  %2634 = vmatprep.mubr.f32.mxu0 0.0
  %2635 = vmatmul.mubr.f32.gmra.mrb[0].mxu0 %v2261
  %v2636 = vpop.f32.mrb[0].mxu0
  %v2637 = vadd.f32 0.0, %v2636
  %v2638 = vpop.f32.mrb[0].mxu0
  %2639 = vmatprep.mubr.f32.mxu0 0.0
  %2640 = vmatmul.mubr.f32.gmra.mrb[0].mxu0 %v2264
  %v2641 = vpop.f32.mrb[0].mxu0
  %v2642 = vadd.f32 0.0, %v2641
  %v2643 = vpop.f32.mrb[0].mxu0
  %2644 = vmatprep.mubr.f32.mxu0 0.0
  %2645 = vmatmul.mubr.f32.gmra.mrb[0].mxu0 %v2267
  %v2646 = vpop.f32.mrb[0].mxu0
  %v2647 = vadd.f32 0.0, %v2646
  %v2648 = vpop.f32.mrb[0].mxu0
  %2649 = vmatprep.mubr.f32.mxu0 0.0
  %2650 = vmatmul.mubr.f32.gmra.mrb[0].mxu0 %v2270
  %v2651 = vpop.f32.mrb[0].mxu0
  %v2652 = vadd.f32 0.0, %v2651
  %v2653 = vpop.f32.mrb[0].mxu0
  %2654 = vmatprep.mubr.f32.mxu0 0.0
  %2655 = vmatmul.mubr.f32.gmra.mrb[0].mxu0 %v2273
  %v2656 = vpop.f32.mrb[0].mxu0
  %v2657 = vadd.f32 0.0, %v2656
  %v2658 = vpop.f32.mrb[0].mxu0
  %2659 = vdwg.mxu0
  %v2660 = vadd.f32 %v1953, %v2342
  %v2661 = vadd.f32 %v1954, %v2347
  %v2662 = vadd.f32 %v1955, %v2352
  %v2663 = vadd.f32 %v1956, %v2357
  %v2664 = vadd.f32 %v1957, %v2362
  %v2665 = vadd.f32 %v1958, %v2367
  %v2666 = vadd.f32 %v1959, %v2372
  %v2667 = vadd.f32 %v1960, %v2377
  %v2668 = vadd.f32 %v1961, %v2382
  %v2669 = vadd.f32 %v1962, %v2387
  %v2670 = vadd.f32 %v1963, %v2392
  %v2671 = vadd.f32 %v1964, %v2397
  %v2672 = vadd.f32 %v1965, %v2402
  %v2673 = vadd.f32 %v1966, %v2407
  %v2674 = vadd.f32 %v1967, %v2412
  %v2675 = vadd.f32 %v1968, %v2417
  %v2676 = vadd.f32 %v1969, %v2422
  %v2677 = vadd.f32 %v1970, %v2427
  %v2678 = vadd.f32 %v1971, %v2432
  %v2679 = vadd.f32 %v1972, %v2437
  %v2680 = vadd.f32 %v1973, %v2442
  %v2681 = vadd.f32 %v1974, %v2447
  %v2682 = vadd.f32 %v1975, %v2452
  %v2683 = vadd.f32 %v1976, %v2457
  %v2684 = vadd.f32 %v1977, %v2462
  %v2685 = vadd.f32 %v1978, %v2467
  %v2686 = vadd.f32 %v1979, %v2472
  %v2687 = vadd.f32 %v1980, %v2477
  %v2688 = vadd.f32 %v1981, %v2482
  %v2689 = vadd.f32 %v1982, %v2487
  %v2690 = vadd.f32 %v1983, %v2492
  %v2691 = vadd.f32 %v1984, %v2497
  %v2692 = vadd.f32 %v1985, %v2502
  %v2693 = vadd.f32 %v1986, %v2507
  %v2694 = vadd.f32 %v1987, %v2512
  %v2695 = vadd.f32 %v1988, %v2517
  %v2696 = vadd.f32 %v1989, %v2522
  %v2697 = vadd.f32 %v1990, %v2527
  %v2698 = vadd.f32 %v1991, %v2532
  %v2699 = vadd.f32 %v1992, %v2537
  %v2700 = vadd.f32 %v1993, %v2542
  %v2701 = vadd.f32 %v1994, %v2547
  %v2702 = vadd.f32 %v1995, %v2552
  %v2703 = vadd.f32 %v1996, %v2557
  %v2704 = vadd.f32 %v1997, %v2562
  %v2705 = vadd.f32 %v1998, %v2567
  %v2706 = vadd.f32 %v1999, %v2572
  %v2707 = vadd.f32 %v2000, %v2577
  %v2708 = vadd.f32 %v2001, %v2582
  %v2709 = vadd.f32 %v2002, %v2587
  %v2710 = vadd.f32 %v2003, %v2592
  %v2711 = vadd.f32 %v2004, %v2597
  %v2712 = vadd.f32 %v2005, %v2602
  %v2713 = vadd.f32 %v2006, %v2607
  %v2714 = vadd.f32 %v2007, %v2612
  %v2715 = vadd.f32 %v2008, %v2617
  %v2716 = vadd.f32 %v2009, %v2622
  %v2717 = vadd.f32 %v2010, %v2627
  %v2718 = vadd.f32 %v2011, %v2632
  %v2719 = vadd.f32 %v2012, %v2637
  %v2720 = vadd.f32 %v2013, %v2642
  %v2721 = vadd.f32 %v2014, %v2647
  %v2722 = vadd.f32 %v2015, %v2652
  %v2723 = vadd.f32 %v2016, %v2657
  %v2724 = vld [vmem:[%s0 + $0x18] sm:$0xff]
  %v2725 = vld [vmem:[%s0 + $0x20] sm:$0xff]
  %v2726 = vld [vmem:[%s0 + $0x28] sm:$0xff]
  %v2727 = vld [vmem:[%s0 + $0x30] sm:$0xff]
  %v2728 = vld [vmem:[%s0 + $0x38] sm:$0xff]
  %v2729 = vld [vmem:[%s0 + $0x40] sm:$0xff]
  %v2730 = vld [vmem:[%s0 + $0x48] sm:$0xff]
  %v2731 = vld [vmem:[%s0 + $0x50] sm:$0xff]
  %v2732 = vld [vmem:[%s0 + $0x58] sm:$0xff]
  %v2733 = vld [vmem:[%s0 + $0x60] sm:$0xff]
  %v2734 = vld [vmem:[%s0 + $0x68] sm:$0xff]
  %v2735 = vld [vmem:[%s0 + $0x70] sm:$0xff]
  %v2736 = vld [vmem:[%s0 + $0x78] sm:$0xff]
  %v2737 = vld [vmem:[%s0 + $0x80] sm:$0xff]
  %v2738 = vld [vmem:[%s0 + $0x88] sm:$0xff]
  %v2739 = vld [vmem:[%s0 + $0x90] sm:$0xff]
  %v2740 = vld [vmem:[%s0 + $0x98] sm:$0xff]
  %v2741 = vld [vmem:[%s0 + $0xa0] sm:$0xff]
  %v2742 = vld [vmem:[%s0 + $0xa8] sm:$0xff]
  %v2743 = vld [vmem:[%s0 + $0xb0] sm:$0xff]
  %v2744 = vld [vmem:[%s0 + $0xb8] sm:$0xff]
  %v2745 = vld [vmem:[%s0 + $0xc0] sm:$0xff]
  %v2746 = vld [vmem:[%s0 + $0xc8] sm:$0xff]
  %v2747 = vld [vmem:[%s0 + $0xd0] sm:$0xff]
  %v2748 = vld [vmem:[%s0 + $0xd8] sm:$0xff]
  %v2749 = vld [vmem:[%s0 + $0xe0] sm:$0xff]
  %v2750 = vld [vmem:[%s0 + $0xe8] sm:$0xff]
  %v2751 = vld [vmem:[%s0 + $0xf0] sm:$0xff]
  %v2752 = vld [vmem:[%s0 + $0xf8] sm:$0xff]
  %v2753 = vld [vmem:[%s0 + $0x100] sm:$0xff]
  %v2754 = vld [vmem:[%s0 + $0x108] sm:$0xff]
  %v2755 = vld [vmem:[%s0 + $0x110] sm:$0xff]
  %v2756 = vld [vmem:[%s0 + $0x118] sm:$0xff]
  %v2757 = vld [vmem:[%s0 + $0x120] sm:$0xff]
  %v2758 = vld [vmem:[%s0 + $0x128] sm:$0xff]
  %v2759 = vld [vmem:[%s0 + $0x130] sm:$0xff]
  %v2760 = vld [vmem:[%s0 + $0x138] sm:$0xff]
  %v2761 = vld [vmem:[%s0 + $0x140] sm:$0xff]
  %v2762 = vld [vmem:[%s0 + $0x148] sm:$0xff]
  %v2763 = vld [vmem:[%s0 + $0x150] sm:$0xff]
  %v2764 = vld [vmem:[%s0 + $0x158] sm:$0xff]
  %v2765 = vld [vmem:[%s0 + $0x160] sm:$0xff]
  %v2766 = vld [vmem:[%s0 + $0x168] sm:$0xff]
  %v2767 = vld [vmem:[%s0 + $0x170] sm:$0xff]
  %v2768 = vld [vmem:[%s0 + $0x178] sm:$0xff]
  %v2769 = vld [vmem:[%s0 + $0x180] sm:$0xff]
  %v2770 = vld [vmem:[%s0 + $0x188] sm:$0xff]
  %v2771 = vld [vmem:[%s0 + $0x190] sm:$0xff]
  %v2772 = vld [vmem:[%s0 + $0x198] sm:$0xff]
  %v2773 = vld [vmem:[%s0 + $0x1a0] sm:$0xff]
  %v2774 = vld [vmem:[%s0 + $0x1a8] sm:$0xff]
  %v2775 = vld [vmem:[%s0 + $0x1b0] sm:$0xff]
  %v2776 = vld [vmem:[%s0 + $0x1b8] sm:$0xff]
  %v2777 = vld [vmem:[%s0 + $0x1c0] sm:$0xff]
  %v2778 = vld [vmem:[%s0 + $0x1c8] sm:$0xff]
  %v2779 = vld [vmem:[%s0 + $0x1d0] sm:$0xff]
  %v2780 = vld [vmem:[%s0 + $0x1d8] sm:$0xff]
  %v2781 = vld [vmem:[%s0 + $0x1e0] sm:$0xff]
  %v2782 = vld [vmem:[%s0 + $0x1e8] sm:$0xff]
  %v2783 = vld [vmem:[%s0 + $0x1f0] sm:$0xff]
  %v2784 = vld [vmem:[%s0 + $0x1f8] sm:$0xff]
  %v2785 = vld [vmem:[%s0 + $0x200] sm:$0xff]
  %v2786 = vld [vmem:[%s0 + $0x208] sm:$0xff]
  %v2787 = vld [vmem:[%s0 + $0x210] sm:$0xff]
  %v2788 = vld [vmem:[%s2 + $0x40] sm:$0xff]
  %v2789 = vld [vmem:[%s2 + $0x48] sm:$0xff]
  %v2791 = vsel %vm155, %v2724, 0
  %v2794 = vsel %vm155, %v2725, 0
  %v2797 = vsel %vm155, %v2726, 0
  %v2800 = vsel %vm155, %v2727, 0
  %v2803 = vsel %vm155, %v2728, 0
  %v2806 = vsel %vm155, %v2729, 0
  %v2809 = vsel %vm155, %v2730, 0
  %v2812 = vsel %vm155, %v2731, 0
  %v2815 = vsel %vm155, %v2732, 0
  %v2818 = vsel %vm155, %v2733, 0
  %v2821 = vsel %vm155, %v2734, 0
  %v2824 = vsel %vm155, %v2735, 0
  %v2827 = vsel %vm155, %v2736, 0
  %v2830 = vsel %vm155, %v2737, 0
  %v2833 = vsel %vm155, %v2738, 0
  %v2836 = vsel %vm155, %v2739, 0
  %v2839 = vsel %vm155, %v2740, 0
  %v2842 = vsel %vm155, %v2741, 0
  %v2845 = vsel %vm155, %v2742, 0
  %v2848 = vsel %vm155, %v2743, 0
  %v2851 = vsel %vm155, %v2744, 0
  %v2854 = vsel %vm155, %v2745, 0
  %v2857 = vsel %vm155, %v2746, 0
  %v2860 = vsel %vm155, %v2747, 0
  %v2863 = vsel %vm155, %v2748, 0
  %v2866 = vsel %vm155, %v2749, 0
  %v2869 = vsel %vm155, %v2750, 0
  %v2872 = vsel %vm155, %v2751, 0
  %v2875 = vsel %vm155, %v2752, 0
  %v2878 = vsel %vm155, %v2753, 0
  %v2881 = vsel %vm155, %v2754, 0
  %v2884 = vsel %vm155, %v2755, 0
  %v2887 = vsel %vm155, %v2756, 0
  %v2890 = vsel %vm155, %v2757, 0
  %v2893 = vsel %vm155, %v2758, 0
  %v2896 = vsel %vm155, %v2759, 0
  %v2899 = vsel %vm155, %v2760, 0
  %v2902 = vsel %vm155, %v2761, 0
  %v2905 = vsel %vm155, %v2762, 0
  %v2908 = vsel %vm155, %v2763, 0
  %v2911 = vsel %vm155, %v2764, 0
  %v2914 = vsel %vm155, %v2765, 0
  %v2917 = vsel %vm155, %v2766, 0
  %v2920 = vsel %vm155, %v2767, 0
  %v2923 = vsel %vm155, %v2768, 0
  %v2926 = vsel %vm155, %v2769, 0
  %v2929 = vsel %vm155, %v2770, 0
  %v2932 = vsel %vm155, %v2771, 0
  %v2935 = vsel %vm155, %v2772, 0
  %v2938 = vsel %vm155, %v2773, 0
  %v2941 = vsel %vm155, %v2774, 0
  %v2944 = vsel %vm155, %v2775, 0
  %v2947 = vsel %vm155, %v2776, 0
  %v2950 = vsel %vm155, %v2777, 0
  %v2953 = vsel %vm155, %v2778, 0
  %v2956 = vsel %vm155, %v2779, 0
  %v2959 = vsel %vm155, %v2780, 0
  %v2962 = vsel %vm155, %v2781, 0
  %v2965 = vsel %vm155, %v2782, 0
  %v2968 = vsel %vm155, %v2783, 0
  %v2971 = vsel %vm155, %v2784, 0
  %v2974 = vsel %vm155, %v2785, 0
  %v2977 = vsel %vm155, %v2786, 0
  %v2980 = vsel %vm155, %v2787, 0
  %2982 = vmatprep.subr.mxu0 0.0
  %2983 = vmatpush1.msra.mxu0 %v2788
  %2984 = vmatprep.subr.mxu0 0.0
  %2985 = vmatpush1.msra.mxu0 %v2789
  %2986 = vmatprep.subr.mxu0 0.0
  %2987 = vmatpush1.msra.mxu0 0.0
  %2988 = vmatprep.subr.mxu0 0.0
  %2989 = vmatpush1.msra.mxu0 0.0
  %2990 = vmatprep.subr.mxu0 0.0
  %2991 = vmatpush1.msra.mxu0 0.0
  %2992 = vmatprep.subr.mxu0 0.0
  %2993 = vmatpush1.msra.mxu0 0.0
  %2994 = vmatprep.subr.mxu0 0.0
  %2995 = vmatpush1.msra.mxu0 0.0
  %2996 = vmatprep.subr.mxu0 0.0
  %2997 = vmatpush1.msra.mxu0 0.0
  %2998 = vmatprep.subr.mxu0 0.0
  %2999 = vmatpush1.msra.mxu0 0.0
  %3000 = vmatprep.subr.mxu0 0.0
  %3001 = vmatpush1.msra.mxu0 0.0
  %3002 = vmatprep.subr.mxu0 0.0
  %3003 = vmatpush1.msra.mxu0 0.0
  %3004 = vmatprep.subr.mxu0 0.0
  %3005 = vmatpush1.msra.mxu0 0.0
  %3006 = vmatprep.subr.mxu0 0.0
  %3007 = vmatpush1.msra.mxu0 0.0
  %3008 = vmatprep.subr.mxu0 0.0
  %3009 = vmatpush1.msra.mxu0 0.0
  %3010 = vmatprep.subr.mxu0 0.0
  %3011 = vmatpush1.msra.mxu0 0.0
  %3012 = vmatprep.subr.mxu0 0.0
  %3013 = vmatpush1.msra.mxu0 0.0
  %3014 = vmatprep.subr.mxu0 0.0
  %3015 = vmatpush1.msra.mxu0 0.0
  %3016 = vmatprep.subr.mxu0 0.0
  %3017 = vmatpush1.msra.mxu0 0.0
  %3018 = vmatprep.subr.mxu0 0.0
  %3019 = vmatpush1.msra.mxu0 0.0
  %3020 = vmatprep.subr.mxu0 0.0
  %3021 = vmatpush1.msra.mxu0 0.0
  %3022 = vmatprep.subr.mxu0 0.0
  %3023 = vmatpush1.msra.mxu0 0.0
  %3024 = vmatprep.subr.mxu0 0.0
  %3025 = vmatpush1.msra.mxu0 0.0
  %3026 = vmatprep.subr.mxu0 0.0
  %3027 = vmatpush1.msra.mxu0 0.0
  %3028 = vmatprep.subr.mxu0 0.0
  %3029 = vmatpush1.msra.mxu0 0.0
  %3030 = vmatprep.subr.mxu0 0.0
  %3031 = vmatpush1.msra.mxu0 0.0
  %3032 = vmatprep.subr.mxu0 0.0
  %3033 = vmatpush1.msra.mxu0 0.0
  %3034 = vmatprep.subr.mxu0 0.0
  %3035 = vmatpush1.msra.mxu0 0.0
  %3036 = vmatprep.subr.mxu0 0.0
  %3037 = vmatpush1.msra.mxu0 0.0
  %3038 = vmatprep.subr.mxu0 0.0
  %3039 = vmatpush1.msra.mxu0 0.0
  %3040 = vmatprep.subr.mxu0 0.0
  %3041 = vmatpush1.msra.mxu0 0.0
  %3042 = vmatprep.subr.mxu0 0.0
  %3043 = vmatpush1.msra.mxu0 0.0
  %3044 = vmatprep.subr.mxu0 0.0
  %3045 = vmatpush1.msra.mxu0 0.0
  %3046 = vmatprep.mubr.f32.mxu0 0.0
  %3047 = vmatmul.mubr.f32.gmra.mrb[0].mxu0 %v2791
  %v3048 = vpop.f32.mrb[0].mxu0
  %v3049 = vadd.f32 0.0, %v3048
  %v3050 = vpop.f32.mrb[0].mxu0
  %3051 = vmatprep.mubr.f32.mxu0 0.0
  %3052 = vmatmul.mubr.f32.gmra.mrb[0].mxu0 %v2794
  %v3053 = vpop.f32.mrb[0].mxu0
  %v3054 = vadd.f32 0.0, %v3053
  %v3055 = vpop.f32.mrb[0].mxu0
  %3056 = vmatprep.mubr.f32.mxu0 0.0
  %3057 = vmatmul.mubr.f32.gmra.mrb[0].mxu0 %v2797
  %v3058 = vpop.f32.mrb[0].mxu0
  %v3059 = vadd.f32 0.0, %v3058
  %v3060 = vpop.f32.mrb[0].mxu0
  %3061 = vmatprep.mubr.f32.mxu0 0.0
  %3062 = vmatmul.mubr.f32.gmra.mrb[0].mxu0 %v2800
  %v3063 = vpop.f32.mrb[0].mxu0
  %v3064 = vadd.f32 0.0, %v3063
  %v3065 = vpop.f32.mrb[0].mxu0
  %3066 = vmatprep.mubr.f32.mxu0 0.0
  %3067 = vmatmul.mubr.f32.gmra.mrb[0].mxu0 %v2803
  %v3068 = vpop.f32.mrb[0].mxu0
  %v3069 = vadd.f32 0.0, %v3068
  %v3070 = vpop.f32.mrb[0].mxu0
  %3071 = vmatprep.mubr.f32.mxu0 0.0
  %3072 = vmatmul.mubr.f32.gmra.mrb[0].mxu0 %v2806
  %v3073 = vpop.f32.mrb[0].mxu0
  %v3074 = vadd.f32 0.0, %v3073
  %v3075 = vpop.f32.mrb[0].mxu0
  %3076 = vmatprep.mubr.f32.mxu0 0.0
  %3077 = vmatmul.mubr.f32.gmra.mrb[0].mxu0 %v2809
  %v3078 = vpop.f32.mrb[0].mxu0
  %v3079 = vadd.f32 0.0, %v3078
  %v3080 = vpop.f32.mrb[0].mxu0
  %3081 = vmatprep.mubr.f32.mxu0 0.0
  %3082 = vmatmul.mubr.f32.gmra.mrb[0].mxu0 %v2812
  %v3083 = vpop.f32.mrb[0].mxu0
  %v3084 = vadd.f32 0.0, %v3083
  %v3085 = vpop.f32.mrb[0].mxu0
  %3086 = vmatprep.mubr.f32.mxu0 0.0
  %3087 = vmatmul.mubr.f32.gmra.mrb[0].mxu0 %v2815
  %v3088 = vpop.f32.mrb[0].mxu0
  %v3089 = vadd.f32 0.0, %v3088
  %v3090 = vpop.f32.mrb[0].mxu0
  %3091 = vmatprep.mubr.f32.mxu0 0.0
  %3092 = vmatmul.mubr.f32.gmra.mrb[0].mxu0 %v2818
  %v3093 = vpop.f32.mrb[0].mxu0
  %v3094 = vadd.f32 0.0, %v3093
  %v3095 = vpop.f32.mrb[0].mxu0
  %3096 = vmatprep.mubr.f32.mxu0 0.0
  %3097 = vmatmul.mubr.f32.gmra.mrb[0].mxu0 %v2821
  %v3098 = vpop.f32.mrb[0].mxu0
  %v3099 = vadd.f32 0.0, %v3098
  %v3100 = vpop.f32.mrb[0].mxu0
  %3101 = vmatprep.mubr.f32.mxu0 0.0
  %3102 = vmatmul.mubr.f32.gmra.mrb[0].mxu0 %v2824
  %v3103 = vpop.f32.mrb[0].mxu0
  %v3104 = vadd.f32 0.0, %v3103
  %v3105 = vpop.f32.mrb[0].mxu0
  %3106 = vmatprep.mubr.f32.mxu0 0.0
  %3107 = vmatmul.mubr.f32.gmra.mrb[0].mxu0 %v2827
  %v3108 = vpop.f32.mrb[0].mxu0
  %v3109 = vadd.f32 0.0, %v3108
  %v3110 = vpop.f32.mrb[0].mxu0
  %3111 = vmatprep.mubr.f32.mxu0 0.0
  %3112 = vmatmul.mubr.f32.gmra.mrb[0].mxu0 %v2830
  %v3113 = vpop.f32.mrb[0].mxu0
  %v3114 = vadd.f32 0.0, %v3113
  %v3115 = vpop.f32.mrb[0].mxu0
  %3116 = vmatprep.mubr.f32.mxu0 0.0
  %3117 = vmatmul.mubr.f32.gmra.mrb[0].mxu0 %v2833
  %v3118 = vpop.f32.mrb[0].mxu0
  %v3119 = vadd.f32 0.0, %v3118
  %v3120 = vpop.f32.mrb[0].mxu0
  %3121 = vmatprep.mubr.f32.mxu0 0.0
  %3122 = vmatmul.mubr.f32.gmra.mrb[0].mxu0 %v2836
  %v3123 = vpop.f32.mrb[0].mxu0
  %v3124 = vadd.f32 0.0, %v3123
  %v3125 = vpop.f32.mrb[0].mxu0
  %3126 = vmatprep.mubr.f32.mxu0 0.0
  %3127 = vmatmul.mubr.f32.gmra.mrb[0].mxu0 %v2839
  %v3128 = vpop.f32.mrb[0].mxu0
  %v3129 = vadd.f32 0.0, %v3128
  %v3130 = vpop.f32.mrb[0].mxu0
  %3131 = vmatprep.mubr.f32.mxu0 0.0
  %3132 = vmatmul.mubr.f32.gmra.mrb[0].mxu0 %v2842
  %v3133 = vpop.f32.mrb[0].mxu0
  %v3134 = vadd.f32 0.0, %v3133
  %v3135 = vpop.f32.mrb[0].mxu0
  %3136 = vmatprep.mubr.f32.mxu0 0.0
  %3137 = vmatmul.mubr.f32.gmra.mrb[0].mxu0 %v2845
  %v3138 = vpop.f32.mrb[0].mxu0
  %v3139 = vadd.f32 0.0, %v3138
  %v3140 = vpop.f32.mrb[0].mxu0
  %3141 = vmatprep.mubr.f32.mxu0 0.0
  %3142 = vmatmul.mubr.f32.gmra.mrb[0].mxu0 %v2848
  %v3143 = vpop.f32.mrb[0].mxu0
  %v3144 = vadd.f32 0.0, %v3143
  %v3145 = vpop.f32.mrb[0].mxu0
  %3146 = vmatprep.mubr.f32.mxu0 0.0
  %3147 = vmatmul.mubr.f32.gmra.mrb[0].mxu0 %v2851
  %v3148 = vpop.f32.mrb[0].mxu0
  %v3149 = vadd.f32 0.0, %v3148
  %v3150 = vpop.f32.mrb[0].mxu0
  %3151 = vmatprep.mubr.f32.mxu0 0.0
  %3152 = vmatmul.mubr.f32.gmra.mrb[0].mxu0 %v2854
  %v3153 = vpop.f32.mrb[0].mxu0
  %v3154 = vadd.f32 0.0, %v3153
  %v3155 = vpop.f32.mrb[0].mxu0
  %3156 = vmatprep.mubr.f32.mxu0 0.0
  %3157 = vmatmul.mubr.f32.gmra.mrb[0].mxu0 %v2857
  %v3158 = vpop.f32.mrb[0].mxu0
  %v3159 = vadd.f32 0.0, %v3158
  %v3160 = vpop.f32.mrb[0].mxu0
  %3161 = vmatprep.mubr.f32.mxu0 0.0
  %3162 = vmatmul.mubr.f32.gmra.mrb[0].mxu0 %v2860
  %v3163 = vpop.f32.mrb[0].mxu0
  %v3164 = vadd.f32 0.0, %v3163
  %v3165 = vpop.f32.mrb[0].mxu0
  %3166 = vmatprep.mubr.f32.mxu0 0.0
  %3167 = vmatmul.mubr.f32.gmra.mrb[0].mxu0 %v2863
  %v3168 = vpop.f32.mrb[0].mxu0
  %v3169 = vadd.f32 0.0, %v3168
  %v3170 = vpop.f32.mrb[0].mxu0
  %3171 = vmatprep.mubr.f32.mxu0 0.0
  %3172 = vmatmul.mubr.f32.gmra.mrb[0].mxu0 %v2866
  %v3173 = vpop.f32.mrb[0].mxu0
  %v3174 = vadd.f32 0.0, %v3173
  %v3175 = vpop.f32.mrb[0].mxu0
  %3176 = vmatprep.mubr.f32.mxu0 0.0
  %3177 = vmatmul.mubr.f32.gmra.mrb[0].mxu0 %v2869
  %v3178 = vpop.f32.mrb[0].mxu0
  %v3179 = vadd.f32 0.0, %v3178
  %v3180 = vpop.f32.mrb[0].mxu0
  %3181 = vmatprep.mubr.f32.mxu0 0.0
  %3182 = vmatmul.mubr.f32.gmra.mrb[0].mxu0 %v2872
  %v3183 = vpop.f32.mrb[0].mxu0
  %v3184 = vadd.f32 0.0, %v3183
  %v3185 = vpop.f32.mrb[0].mxu0
  %3186 = vmatprep.mubr.f32.mxu0 0.0
  %3187 = vmatmul.mubr.f32.gmra.mrb[0].mxu0 %v2875
  %v3188 = vpop.f32.mrb[0].mxu0
  %v3189 = vadd.f32 0.0, %v3188
  %v3190 = vpop.f32.mrb[0].mxu0
  %3191 = vmatprep.mubr.f32.mxu0 0.0
  %3192 = vmatmul.mubr.f32.gmra.mrb[0].mxu0 %v2878
  %v3193 = vpop.f32.mrb[0].mxu0
  %v3194 = vadd.f32 0.0, %v3193
  %v3195 = vpop.f32.mrb[0].mxu0
  %3196 = vmatprep.mubr.f32.mxu0 0.0
  %3197 = vmatmul.mubr.f32.gmra.mrb[0].mxu0 %v2881
  %v3198 = vpop.f32.mrb[0].mxu0
  %v3199 = vadd.f32 0.0, %v3198
  %v3200 = vpop.f32.mrb[0].mxu0
  %3201 = vmatprep.mubr.f32.mxu0 0.0
  %3202 = vmatmul.mubr.f32.gmra.mrb[0].mxu0 %v2884
  %v3203 = vpop.f32.mrb[0].mxu0
  %v3204 = vadd.f32 0.0, %v3203
  %v3205 = vpop.f32.mrb[0].mxu0
  %3206 = vmatprep.mubr.f32.mxu0 0.0
  %3207 = vmatmul.mubr.f32.gmra.mrb[0].mxu0 %v2887
  %v3208 = vpop.f32.mrb[0].mxu0
  %v3209 = vadd.f32 0.0, %v3208
  %v3210 = vpop.f32.mrb[0].mxu0
  %3211 = vmatprep.mubr.f32.mxu0 0.0
  %3212 = vmatmul.mubr.f32.gmra.mrb[0].mxu0 %v2890
  %v3213 = vpop.f32.mrb[0].mxu0
  %v3214 = vadd.f32 0.0, %v3213
  %v3215 = vpop.f32.mrb[0].mxu0
  %3216 = vmatprep.mubr.f32.mxu0 0.0
  %3217 = vmatmul.mubr.f32.gmra.mrb[0].mxu0 %v2893
  %v3218 = vpop.f32.mrb[0].mxu0
  %v3219 = vadd.f32 0.0, %v3218
  %v3220 = vpop.f32.mrb[0].mxu0
  %3221 = vmatprep.mubr.f32.mxu0 0.0
  %3222 = vmatmul.mubr.f32.gmra.mrb[0].mxu0 %v2896
  %v3223 = vpop.f32.mrb[0].mxu0
  %v3224 = vadd.f32 0.0, %v3223
  %v3225 = vpop.f32.mrb[0].mxu0
  %3226 = vmatprep.mubr.f32.mxu0 0.0
  %3227 = vmatmul.mubr.f32.gmra.mrb[0].mxu0 %v2899
  %v3228 = vpop.f32.mrb[0].mxu0
  %v3229 = vadd.f32 0.0, %v3228
  %v3230 = vpop.f32.mrb[0].mxu0
  %3231 = vmatprep.mubr.f32.mxu0 0.0
  %3232 = vmatmul.mubr.f32.gmra.mrb[0].mxu0 %v2902
  %v3233 = vpop.f32.mrb[0].mxu0
  %v3234 = vadd.f32 0.0, %v3233
  %v3235 = vpop.f32.mrb[0].mxu0
  %3236 = vmatprep.mubr.f32.mxu0 0.0
  %3237 = vmatmul.mubr.f32.gmra.mrb[0].mxu0 %v2905
  %v3238 = vpop.f32.mrb[0].mxu0
  %v3239 = vadd.f32 0.0, %v3238
  %v3240 = vpop.f32.mrb[0].mxu0
  %3241 = vmatprep.mubr.f32.mxu0 0.0
  %3242 = vmatmul.mubr.f32.gmra.mrb[0].mxu0 %v2908
  %v3243 = vpop.f32.mrb[0].mxu0
  %v3244 = vadd.f32 0.0, %v3243
  %v3245 = vpop.f32.mrb[0].mxu0
  %3246 = vmatprep.mubr.f32.mxu0 0.0
  %3247 = vmatmul.mubr.f32.gmra.mrb[0].mxu0 %v2911
  %v3248 = vpop.f32.mrb[0].mxu0
  %v3249 = vadd.f32 0.0, %v3248
  %v3250 = vpop.f32.mrb[0].mxu0
  %3251 = vmatprep.mubr.f32.mxu0 0.0
  %3252 = vmatmul.mubr.f32.gmra.mrb[0].mxu0 %v2914
  %v3253 = vpop.f32.mrb[0].mxu0
  %v3254 = vadd.f32 0.0, %v3253
  %v3255 = vpop.f32.mrb[0].mxu0
  %3256 = vmatprep.mubr.f32.mxu0 0.0
  %3257 = vmatmul.mubr.f32.gmra.mrb[0].mxu0 %v2917
  %v3258 = vpop.f32.mrb[0].mxu0
  %v3259 = vadd.f32 0.0, %v3258
  %v3260 = vpop.f32.mrb[0].mxu0
  %3261 = vmatprep.mubr.f32.mxu0 0.0
  %3262 = vmatmul.mubr.f32.gmra.mrb[0].mxu0 %v2920
  %v3263 = vpop.f32.mrb[0].mxu0
  %v3264 = vadd.f32 0.0, %v3263
  %v3265 = vpop.f32.mrb[0].mxu0
  %3266 = vmatprep.mubr.f32.mxu0 0.0
  %3267 = vmatmul.mubr.f32.gmra.mrb[0].mxu0 %v2923
  %v3268 = vpop.f32.mrb[0].mxu0
  %v3269 = vadd.f32 0.0, %v3268
  %v3270 = vpop.f32.mrb[0].mxu0
  %3271 = vmatprep.mubr.f32.mxu0 0.0
  %3272 = vmatmul.mubr.f32.gmra.mrb[0].mxu0 %v2926
  %v3273 = vpop.f32.mrb[0].mxu0
  %v3274 = vadd.f32 0.0, %v3273
  %v3275 = vpop.f32.mrb[0].mxu0
  %3276 = vmatprep.mubr.f32.mxu0 0.0
  %3277 = vmatmul.mubr.f32.gmra.mrb[0].mxu0 %v2929
  %v3278 = vpop.f32.mrb[0].mxu0
  %v3279 = vadd.f32 0.0, %v3278
  %v3280 = vpop.f32.mrb[0].mxu0
  %3281 = vmatprep.mubr.f32.mxu0 0.0
  %3282 = vmatmul.mubr.f32.gmra.mrb[0].mxu0 %v2932
  %v3283 = vpop.f32.mrb[0].mxu0
  %v3284 = vadd.f32 0.0, %v3283
  %v3285 = vpop.f32.mrb[0].mxu0
  %3286 = vmatprep.mubr.f32.mxu0 0.0
  %3287 = vmatmul.mubr.f32.gmra.mrb[0].mxu0 %v2935
  %v3288 = vpop.f32.mrb[0].mxu0
  %v3289 = vadd.f32 0.0, %v3288
  %v3290 = vpop.f32.mrb[0].mxu0
  %3291 = vmatprep.mubr.f32.mxu0 0.0
  %3292 = vmatmul.mubr.f32.gmra.mrb[0].mxu0 %v2938
  %v3293 = vpop.f32.mrb[0].mxu0
  %v3294 = vadd.f32 0.0, %v3293
  %v3295 = vpop.f32.mrb[0].mxu0
  %3296 = vmatprep.mubr.f32.mxu0 0.0
  %3297 = vmatmul.mubr.f32.gmra.mrb[0].mxu0 %v2941
  %v3298 = vpop.f32.mrb[0].mxu0
  %v3299 = vadd.f32 0.0, %v3298
  %v3300 = vpop.f32.mrb[0].mxu0
  %3301 = vmatprep.mubr.f32.mxu0 0.0
  %3302 = vmatmul.mubr.f32.gmra.mrb[0].mxu0 %v2944
  %v3303 = vpop.f32.mrb[0].mxu0
  %v3304 = vadd.f32 0.0, %v3303
  %v3305 = vpop.f32.mrb[0].mxu0
  %3306 = vmatprep.mubr.f32.mxu0 0.0
  %3307 = vmatmul.mubr.f32.gmra.mrb[0].mxu0 %v2947
  %v3308 = vpop.f32.mrb[0].mxu0
  %v3309 = vadd.f32 0.0, %v3308
  %v3310 = vpop.f32.mrb[0].mxu0
  %3311 = vmatprep.mubr.f32.mxu0 0.0
  %3312 = vmatmul.mubr.f32.gmra.mrb[0].mxu0 %v2950
  %v3313 = vpop.f32.mrb[0].mxu0
  %v3314 = vadd.f32 0.0, %v3313
  %v3315 = vpop.f32.mrb[0].mxu0
  %3316 = vmatprep.mubr.f32.mxu0 0.0
  %3317 = vmatmul.mubr.f32.gmra.mrb[0].mxu0 %v2953
  %v3318 = vpop.f32.mrb[0].mxu0
  %v3319 = vadd.f32 0.0, %v3318
  %v3320 = vpop.f32.mrb[0].mxu0
  %3321 = vmatprep.mubr.f32.mxu0 0.0
  %3322 = vmatmul.mubr.f32.gmra.mrb[0].mxu0 %v2956
  %v3323 = vpop.f32.mrb[0].mxu0
  %v3324 = vadd.f32 0.0, %v3323
  %v3325 = vpop.f32.mrb[0].mxu0
  %3326 = vmatprep.mubr.f32.mxu0 0.0
  %3327 = vmatmul.mubr.f32.gmra.mrb[0].mxu0 %v2959
  %v3328 = vpop.f32.mrb[0].mxu0
  %v3329 = vadd.f32 0.0, %v3328
  %v3330 = vpop.f32.mrb[0].mxu0
  %3331 = vmatprep.mubr.f32.mxu0 0.0
  %3332 = vmatmul.mubr.f32.gmra.mrb[0].mxu0 %v2962
  %v3333 = vpop.f32.mrb[0].mxu0
  %v3334 = vadd.f32 0.0, %v3333
  %v3335 = vpop.f32.mrb[0].mxu0
  %3336 = vmatprep.mubr.f32.mxu0 0.0
  %3337 = vmatmul.mubr.f32.gmra.mrb[0].mxu0 %v2965
  %v3338 = vpop.f32.mrb[0].mxu0
  %v3339 = vadd.f32 0.0, %v3338
  %v3340 = vpop.f32.mrb[0].mxu0
  %3341 = vmatprep.mubr.f32.mxu0 0.0
  %3342 = vmatmul.mubr.f32.gmra.mrb[0].mxu0 %v2968
  %v3343 = vpop.f32.mrb[0].mxu0
  %v3344 = vadd.f32 0.0, %v3343
  %v3345 = vpop.f32.mrb[0].mxu0
  %3346 = vmatprep.mubr.f32.mxu0 0.0
  %3347 = vmatmul.mubr.f32.gmra.mrb[0].mxu0 %v2971
  %v3348 = vpop.f32.mrb[0].mxu0
  %v3349 = vadd.f32 0.0, %v3348
  %v3350 = vpop.f32.mrb[0].mxu0
  %3351 = vmatprep.mubr.f32.mxu0 0.0
  %3352 = vmatmul.mubr.f32.gmra.mrb[0].mxu0 %v2974
  %v3353 = vpop.f32.mrb[0].mxu0
  %v3354 = vadd.f32 0.0, %v3353
  %v3355 = vpop.f32.mrb[0].mxu0
  %3356 = vmatprep.mubr.f32.mxu0 0.0
  %3357 = vmatmul.mubr.f32.gmra.mrb[0].mxu0 %v2977
  %v3358 = vpop.f32.mrb[0].mxu0
  %v3359 = vadd.f32 0.0, %v3358
  %v3360 = vpop.f32.mrb[0].mxu0
  %3361 = vmatprep.mubr.f32.mxu0 0.0
  %3362 = vmatmul.mubr.f32.gmra.mrb[0].mxu0 %v2980
  %v3363 = vpop.f32.mrb[0].mxu0
  %v3364 = vadd.f32 0.0, %v3363
  %v3365 = vpop.f32.mrb[0].mxu0
  %3366 = vdwg.mxu0
  %v3367 = vadd.f32 %v2660, %v3049
  %v3368 = vadd.f32 %v2661, %v3054
  %v3369 = vadd.f32 %v2662, %v3059
  %v3370 = vadd.f32 %v2663, %v3064
  %v3371 = vadd.f32 %v2664, %v3069
  %v3372 = vadd.f32 %v2665, %v3074
  %v3373 = vadd.f32 %v2666, %v3079
  %v3374 = vadd.f32 %v2667, %v3084
  %v3375 = vadd.f32 %v2668, %v3089
  %v3376 = vadd.f32 %v2669, %v3094
  %v3377 = vadd.f32 %v2670, %v3099
  %v3378 = vadd.f32 %v2671, %v3104
  %v3379 = vadd.f32 %v2672, %v3109
  %v3380 = vadd.f32 %v2673, %v3114
  %v3381 = vadd.f32 %v2674, %v3119
  %v3382 = vadd.f32 %v2675, %v3124
  %v3383 = vadd.f32 %v2676, %v3129
  %v3384 = vadd.f32 %v2677, %v3134
  %v3385 = vadd.f32 %v2678, %v3139
  %v3386 = vadd.f32 %v2679, %v3144
  %v3387 = vadd.f32 %v2680, %v3149
  %v3388 = vadd.f32 %v2681, %v3154
  %v3389 = vadd.f32 %v2682, %v3159
  %v3390 = vadd.f32 %v2683, %v3164
  %v3391 = vadd.f32 %v2684, %v3169
  %v3392 = vadd.f32 %v2685, %v3174
  %v3393 = vadd.f32 %v2686, %v3179
  %v3394 = vadd.f32 %v2687, %v3184
  %v3395 = vadd.f32 %v2688, %v3189
  %v3396 = vadd.f32 %v2689, %v3194
  %v3397 = vadd.f32 %v2690, %v3199
  %v3398 = vadd.f32 %v2691, %v3204
  %v3399 = vadd.f32 %v2692, %v3209
  %v3400 = vadd.f32 %v2693, %v3214
  %v3401 = vadd.f32 %v2694, %v3219
  %v3402 = vadd.f32 %v2695, %v3224
  %v3403 = vadd.f32 %v2696, %v3229
  %v3404 = vadd.f32 %v2697, %v3234
  %v3405 = vadd.f32 %v2698, %v3239
  %v3406 = vadd.f32 %v2699, %v3244
  %v3407 = vadd.f32 %v2700, %v3249
  %v3408 = vadd.f32 %v2701, %v3254
  %v3409 = vadd.f32 %v2702, %v3259
  %v3410 = vadd.f32 %v2703, %v3264
  %v3411 = vadd.f32 %v2704, %v3269
  %v3412 = vadd.f32 %v2705, %v3274
  %v3413 = vadd.f32 %v2706, %v3279
  %v3414 = vadd.f32 %v2707, %v3284
  %v3415 = vadd.f32 %v2708, %v3289
  %v3416 = vadd.f32 %v2709, %v3294
  %v3417 = vadd.f32 %v2710, %v3299
  %v3418 = vadd.f32 %v2711, %v3304
  %v3419 = vadd.f32 %v2712, %v3309
  %v3420 = vadd.f32 %v2713, %v3314
  %v3421 = vadd.f32 %v2714, %v3319
  %v3422 = vadd.f32 %v2715, %v3324
  %v3423 = vadd.f32 %v2716, %v3329
  %v3424 = vadd.f32 %v2717, %v3334
  %v3425 = vadd.f32 %v2718, %v3339
  %v3426 = vadd.f32 %v2719, %v3344
  %v3427 = vadd.f32 %v2720, %v3349
  %v3428 = vadd.f32 %v2721, %v3354
  %v3429 = vadd.f32 %v2722, %v3359
  %v3430 = vadd.f32 %v2723, %v3364
  %v3431 = vld [vmem:[%s0 + $0x19] sm:$0xff]
  %v3432 = vld [vmem:[%s0 + $0x21] sm:$0xff]
  %v3433 = vld [vmem:[%s0 + $0x29] sm:$0xff]
  %v3434 = vld [vmem:[%s0 + $0x31] sm:$0xff]
  %v3435 = vld [vmem:[%s0 + $0x39] sm:$0xff]
  %v3436 = vld [vmem:[%s0 + $0x41] sm:$0xff]
  %v3437 = vld [vmem:[%s0 + $0x49] sm:$0xff]
  %v3438 = vld [vmem:[%s0 + $0x51] sm:$0xff]
  %v3439 = vld [vmem:[%s0 + $0x59] sm:$0xff]
  %v3440 = vld [vmem:[%s0 + $0x61] sm:$0xff]
  %v3441 = vld [vmem:[%s0 + $0x69] sm:$0xff]
  %v3442 = vld [vmem:[%s0 + $0x71] sm:$0xff]
  %v3443 = vld [vmem:[%s0 + $0x79] sm:$0xff]
  %v3444 = vld [vmem:[%s0 + $0x81] sm:$0xff]
  %v3445 = vld [vmem:[%s0 + $0x89] sm:$0xff]
  %v3446 = vld [vmem:[%s0 + $0x91] sm:$0xff]
  %v3447 = vld [vmem:[%s0 + $0x99] sm:$0xff]
  %v3448 = vld [vmem:[%s0 + $0xa1] sm:$0xff]
  %v3449 = vld [vmem:[%s0 + $0xa9] sm:$0xff]
  %v3450 = vld [vmem:[%s0 + $0xb1] sm:$0xff]
  %v3451 = vld [vmem:[%s0 + $0xb9] sm:$0xff]
  %v3452 = vld [vmem:[%s0 + $0xc1] sm:$0xff]
  %v3453 = vld [vmem:[%s0 + $0xc9] sm:$0xff]
  %v3454 = vld [vmem:[%s0 + $0xd1] sm:$0xff]
  %v3455 = vld [vmem:[%s0 + $0xd9] sm:$0xff]
  %v3456 = vld [vmem:[%s0 + $0xe1] sm:$0xff]
  %v3457 = vld [vmem:[%s0 + $0xe9] sm:$0xff]
  %v3458 = vld [vmem:[%s0 + $0xf1] sm:$0xff]
  %v3459 = vld [vmem:[%s0 + $0xf9] sm:$0xff]
  %v3460 = vld [vmem:[%s0 + $0x101] sm:$0xff]
  %v3461 = vld [vmem:[%s0 + $0x109] sm:$0xff]
  %v3462 = vld [vmem:[%s0 + $0x111] sm:$0xff]
  %v3463 = vld [vmem:[%s0 + $0x119] sm:$0xff]
  %v3464 = vld [vmem:[%s0 + $0x121] sm:$0xff]
  %v3465 = vld [vmem:[%s0 + $0x129] sm:$0xff]
  %v3466 = vld [vmem:[%s0 + $0x131] sm:$0xff]
  %v3467 = vld [vmem:[%s0 + $0x139] sm:$0xff]
  %v3468 = vld [vmem:[%s0 + $0x141] sm:$0xff]
  %v3469 = vld [vmem:[%s0 + $0x149] sm:$0xff]
  %v3470 = vld [vmem:[%s0 + $0x151] sm:$0xff]
  %v3471 = vld [vmem:[%s0 + $0x159] sm:$0xff]
  %v3472 = vld [vmem:[%s0 + $0x161] sm:$0xff]
  %v3473 = vld [vmem:[%s0 + $0x169] sm:$0xff]
  %v3474 = vld [vmem:[%s0 + $0x171] sm:$0xff]
  %v3475 = vld [vmem:[%s0 + $0x179] sm:$0xff]
  %v3476 = vld [vmem:[%s0 + $0x181] sm:$0xff]
  %v3477 = vld [vmem:[%s0 + $0x189] sm:$0xff]
  %v3478 = vld [vmem:[%s0 + $0x191] sm:$0xff]
  %v3479 = vld [vmem:[%s0 + $0x199] sm:$0xff]
  %v3480 = vld [vmem:[%s0 + $0x1a1] sm:$0xff]
  %v3481 = vld [vmem:[%s0 + $0x1a9] sm:$0xff]
  %v3482 = vld [vmem:[%s0 + $0x1b1] sm:$0xff]
  %v3483 = vld [vmem:[%s0 + $0x1b9] sm:$0xff]
  %v3484 = vld [vmem:[%s0 + $0x1c1] sm:$0xff]
  %v3485 = vld [vmem:[%s0 + $0x1c9] sm:$0xff]
  %v3486 = vld [vmem:[%s0 + $0x1d1] sm:$0xff]
  %v3487 = vld [vmem:[%s0 + $0x1d9] sm:$0xff]
  %v3488 = vld [vmem:[%s0 + $0x1e1] sm:$0xff]
  %v3489 = vld [vmem:[%s0 + $0x1e9] sm:$0xff]
  %v3490 = vld [vmem:[%s0 + $0x1f1] sm:$0xff]
  %v3491 = vld [vmem:[%s0 + $0x1f9] sm:$0xff]
  %v3492 = vld [vmem:[%s0 + $0x201] sm:$0xff]
  %v3493 = vld [vmem:[%s0 + $0x209] sm:$0xff]
  %v3494 = vld [vmem:[%s0 + $0x211] sm:$0xff]
  %v3495 = vld [vmem:[%s2 + $0x50] sm:$0xff]
  %v3496 = vld [vmem:[%s2 + $0x58] sm:$0xff]
  %v3498 = vsel %vm155, %v3431, 0
  %v3501 = vsel %vm155, %v3432, 0
  %v3504 = vsel %vm155, %v3433, 0
  %v3507 = vsel %vm155, %v3434, 0
  %v3510 = vsel %vm155, %v3435, 0
  %v3513 = vsel %vm155, %v3436, 0
  %v3516 = vsel %vm155, %v3437, 0
  %v3519 = vsel %vm155, %v3438, 0
  %v3522 = vsel %vm155, %v3439, 0
  %v3525 = vsel %vm155, %v3440, 0
  %v3528 = vsel %vm155, %v3441, 0
  %v3531 = vsel %vm155, %v3442, 0
  %v3534 = vsel %vm155, %v3443, 0
  %v3537 = vsel %vm155, %v3444, 0
  %v3540 = vsel %vm155, %v3445, 0
  %v3543 = vsel %vm155, %v3446, 0
  %v3546 = vsel %vm155, %v3447, 0
  %v3549 = vsel %vm155, %v3448, 0
  %v3552 = vsel %vm155, %v3449, 0
  %v3555 = vsel %vm155, %v3450, 0
  %v3558 = vsel %vm155, %v3451, 0
  %v3561 = vsel %vm155, %v3452, 0
  %v3564 = vsel %vm155, %v3453, 0
  %v3567 = vsel %vm155, %v3454, 0
  %v3570 = vsel %vm155, %v3455, 0
  %v3573 = vsel %vm155, %v3456, 0
  %v3576 = vsel %vm155, %v3457, 0
  %v3579 = vsel %vm155, %v3458, 0
  %v3582 = vsel %vm155, %v3459, 0
  %v3585 = vsel %vm155, %v3460, 0
  %v3588 = vsel %vm155, %v3461, 0
  %v3591 = vsel %vm155, %v3462, 0
  %v3594 = vsel %vm155, %v3463, 0
  %v3597 = vsel %vm155, %v3464, 0
  %v3600 = vsel %vm155, %v3465, 0
  %v3603 = vsel %vm155, %v3466, 0
  %v3606 = vsel %vm155, %v3467, 0
  %v3609 = vsel %vm155, %v3468, 0
  %v3612 = vsel %vm155, %v3469, 0
  %v3615 = vsel %vm155, %v3470, 0
  %v3618 = vsel %vm155, %v3471, 0
  %v3621 = vsel %vm155, %v3472, 0
  %v3624 = vsel %vm155, %v3473, 0
  %v3627 = vsel %vm155, %v3474, 0
  %v3630 = vsel %vm155, %v3475, 0
  %v3633 = vsel %vm155, %v3476, 0
  %v3636 = vsel %vm155, %v3477, 0
  %v3639 = vsel %vm155, %v3478, 0
  %v3642 = vsel %vm155, %v3479, 0
  %v3645 = vsel %vm155, %v3480, 0
  %v3648 = vsel %vm155, %v3481, 0
  %v3651 = vsel %vm155, %v3482, 0
  %v3654 = vsel %vm155, %v3483, 0
  %v3657 = vsel %vm155, %v3484, 0
  %v3660 = vsel %vm155, %v3485, 0
  %v3663 = vsel %vm155, %v3486, 0
  %v3666 = vsel %vm155, %v3487, 0
  %v3669 = vsel %vm155, %v3488, 0
  %v3672 = vsel %vm155, %v3489, 0
  %v3675 = vsel %vm155, %v3490, 0
  %v3678 = vsel %vm155, %v3491, 0
  %v3681 = vsel %vm155, %v3492, 0
  %v3684 = vsel %vm155, %v3493, 0
  %v3687 = vsel %vm155, %v3494, 0
  %3689 = vmatprep.subr.mxu0 0.0
  %3690 = vmatpush1.msra.mxu0 %v3495
  %3691 = vmatprep.subr.mxu0 0.0
  %3692 = vmatpush1.msra.mxu0 %v3496
  %3693 = vmatprep.subr.mxu0 0.0
  %3694 = vmatpush1.msra.mxu0 0.0
  %3695 = vmatprep.subr.mxu0 0.0
  %3696 = vmatpush1.msra.mxu0 0.0
  %3697 = vmatprep.subr.mxu0 0.0
  %3698 = vmatpush1.msra.mxu0 0.0
  %3699 = vmatprep.subr.mxu0 0.0
  %3700 = vmatpush1.msra.mxu0 0.0
  %3701 = vmatprep.subr.mxu0 0.0
  %3702 = vmatpush1.msra.mxu0 0.0
  %3703 = vmatprep.subr.mxu0 0.0
  %3704 = vmatpush1.msra.mxu0 0.0
  %3705 = vmatprep.subr.mxu0 0.0
  %3706 = vmatpush1.msra.mxu0 0.0
  %3707 = vmatprep.subr.mxu0 0.0
  %3708 = vmatpush1.msra.mxu0 0.0
  %3709 = vmatprep.subr.mxu0 0.0
  %3710 = vmatpush1.msra.mxu0 0.0
  %3711 = vmatprep.subr.mxu0 0.0
  %3712 = vmatpush1.msra.mxu0 0.0
  %3713 = vmatprep.subr.mxu0 0.0
  %3714 = vmatpush1.msra.mxu0 0.0
  %3715 = vmatprep.subr.mxu0 0.0
  %3716 = vmatpush1.msra.mxu0 0.0
  %3717 = vmatprep.subr.mxu0 0.0
  %3718 = vmatpush1.msra.mxu0 0.0
  %3719 = vmatprep.subr.mxu0 0.0
  %3720 = vmatpush1.msra.mxu0 0.0
  %3721 = vmatprep.subr.mxu0 0.0
  %3722 = vmatpush1.msra.mxu0 0.0
  %3723 = vmatprep.subr.mxu0 0.0
  %3724 = vmatpush1.msra.mxu0 0.0
  %3725 = vmatprep.subr.mxu0 0.0
  %3726 = vmatpush1.msra.mxu0 0.0
  %3727 = vmatprep.subr.mxu0 0.0
  %3728 = vmatpush1.msra.mxu0 0.0
  %3729 = vmatprep.subr.mxu0 0.0
  %3730 = vmatpush1.msra.mxu0 0.0
  %3731 = vmatprep.subr.mxu0 0.0
  %3732 = vmatpush1.msra.mxu0 0.0
  %3733 = vmatprep.subr.mxu0 0.0
  %3734 = vmatpush1.msra.mxu0 0.0
  %3735 = vmatprep.subr.mxu0 0.0
  %3736 = vmatpush1.msra.mxu0 0.0
  %3737 = vmatprep.subr.mxu0 0.0
  %3738 = vmatpush1.msra.mxu0 0.0
  %3739 = vmatprep.subr.mxu0 0.0
  %3740 = vmatpush1.msra.mxu0 0.0
  %3741 = vmatprep.subr.mxu0 0.0
  %3742 = vmatpush1.msra.mxu0 0.0
  %3743 = vmatprep.subr.mxu0 0.0
  %3744 = vmatpush1.msra.mxu0 0.0
  %3745 = vmatprep.subr.mxu0 0.0
  %3746 = vmatpush1.msra.mxu0 0.0
  %3747 = vmatprep.subr.mxu0 0.0
  %3748 = vmatpush1.msra.mxu0 0.0
  %3749 = vmatprep.subr.mxu0 0.0
  %3750 = vmatpush1.msra.mxu0 0.0
  %3751 = vmatprep.subr.mxu0 0.0
  %3752 = vmatpush1.msra.mxu0 0.0
  %3753 = vmatprep.mubr.f32.mxu0 0.0
  %3754 = vmatmul.mubr.f32.gmra.mrb[0].mxu0 %v3498
  %v3755 = vpop.f32.mrb[0].mxu0
  %v3756 = vadd.f32 0.0, %v3755
  %v3757 = vpop.f32.mrb[0].mxu0
  %3758 = vmatprep.mubr.f32.mxu0 0.0
  %3759 = vmatmul.mubr.f32.gmra.mrb[0].mxu0 %v3501
  %v3760 = vpop.f32.mrb[0].mxu0
  %v3761 = vadd.f32 0.0, %v3760
  %v3762 = vpop.f32.mrb[0].mxu0
  %3763 = vmatprep.mubr.f32.mxu0 0.0
  %3764 = vmatmul.mubr.f32.gmra.mrb[0].mxu0 %v3504
  %v3765 = vpop.f32.mrb[0].mxu0
  %v3766 = vadd.f32 0.0, %v3765
  %v3767 = vpop.f32.mrb[0].mxu0
  %3768 = vmatprep.mubr.f32.mxu0 0.0
  %3769 = vmatmul.mubr.f32.gmra.mrb[0].mxu0 %v3507
  %v3770 = vpop.f32.mrb[0].mxu0
  %v3771 = vadd.f32 0.0, %v3770
  %v3772 = vpop.f32.mrb[0].mxu0
  %3773 = vmatprep.mubr.f32.mxu0 0.0
  %3774 = vmatmul.mubr.f32.gmra.mrb[0].mxu0 %v3510
  %v3775 = vpop.f32.mrb[0].mxu0
  %v3776 = vadd.f32 0.0, %v3775
  %v3777 = vpop.f32.mrb[0].mxu0
  %3778 = vmatprep.mubr.f32.mxu0 0.0
  %3779 = vmatmul.mubr.f32.gmra.mrb[0].mxu0 %v3513
  %v3780 = vpop.f32.mrb[0].mxu0
  %v3781 = vadd.f32 0.0, %v3780
  %v3782 = vpop.f32.mrb[0].mxu0
  %3783 = vmatprep.mubr.f32.mxu0 0.0
  %3784 = vmatmul.mubr.f32.gmra.mrb[0].mxu0 %v3516
  %v3785 = vpop.f32.mrb[0].mxu0
  %v3786 = vadd.f32 0.0, %v3785
  %v3787 = vpop.f32.mrb[0].mxu0
  %3788 = vmatprep.mubr.f32.mxu0 0.0
  %3789 = vmatmul.mubr.f32.gmra.mrb[0].mxu0 %v3519
  %v3790 = vpop.f32.mrb[0].mxu0
  %v3791 = vadd.f32 0.0, %v3790
  %v3792 = vpop.f32.mrb[0].mxu0
  %3793 = vmatprep.mubr.f32.mxu0 0.0
  %3794 = vmatmul.mubr.f32.gmra.mrb[0].mxu0 %v3522
  %v3795 = vpop.f32.mrb[0].mxu0
  %v3796 = vadd.f32 0.0, %v3795
  %v3797 = vpop.f32.mrb[0].mxu0
  %3798 = vmatprep.mubr.f32.mxu0 0.0
  %3799 = vmatmul.mubr.f32.gmra.mrb[0].mxu0 %v3525
  %v3800 = vpop.f32.mrb[0].mxu0
  %v3801 = vadd.f32 0.0, %v3800
  %v3802 = vpop.f32.mrb[0].mxu0
  %3803 = vmatprep.mubr.f32.mxu0 0.0
  %3804 = vmatmul.mubr.f32.gmra.mrb[0].mxu0 %v3528
  %v3805 = vpop.f32.mrb[0].mxu0
  %v3806 = vadd.f32 0.0, %v3805
  %v3807 = vpop.f32.mrb[0].mxu0
  %3808 = vmatprep.mubr.f32.mxu0 0.0
  %3809 = vmatmul.mubr.f32.gmra.mrb[0].mxu0 %v3531
  %v3810 = vpop.f32.mrb[0].mxu0
  %v3811 = vadd.f32 0.0, %v3810
  %v3812 = vpop.f32.mrb[0].mxu0
  %3813 = vmatprep.mubr.f32.mxu0 0.0
  %3814 = vmatmul.mubr.f32.gmra.mrb[0].mxu0 %v3534
  %v3815 = vpop.f32.mrb[0].mxu0
  %v3816 = vadd.f32 0.0, %v3815
  %v3817 = vpop.f32.mrb[0].mxu0
  %3818 = vmatprep.mubr.f32.mxu0 0.0
  %3819 = vmatmul.mubr.f32.gmra.mrb[0].mxu0 %v3537
  %v3820 = vpop.f32.mrb[0].mxu0
  %v3821 = vadd.f32 0.0, %v3820
  %v3822 = vpop.f32.mrb[0].mxu0
  %3823 = vmatprep.mubr.f32.mxu0 0.0
  %3824 = vmatmul.mubr.f32.gmra.mrb[0].mxu0 %v3540
  %v3825 = vpop.f32.mrb[0].mxu0
  %v3826 = vadd.f32 0.0, %v3825
  %v3827 = vpop.f32.mrb[0].mxu0
  %3828 = vmatprep.mubr.f32.mxu0 0.0
  %3829 = vmatmul.mubr.f32.gmra.mrb[0].mxu0 %v3543
  %v3830 = vpop.f32.mrb[0].mxu0
  %v3831 = vadd.f32 0.0, %v3830
  %v3832 = vpop.f32.mrb[0].mxu0
  %3833 = vmatprep.mubr.f32.mxu0 0.0
  %3834 = vmatmul.mubr.f32.gmra.mrb[0].mxu0 %v3546
  %v3835 = vpop.f32.mrb[0].mxu0
  %v3836 = vadd.f32 0.0, %v3835
  %v3837 = vpop.f32.mrb[0].mxu0
  %3838 = vmatprep.mubr.f32.mxu0 0.0
  %3839 = vmatmul.mubr.f32.gmra.mrb[0].mxu0 %v3549
  %v3840 = vpop.f32.mrb[0].mxu0
  %v3841 = vadd.f32 0.0, %v3840
  %v3842 = vpop.f32.mrb[0].mxu0
  %3843 = vmatprep.mubr.f32.mxu0 0.0
  %3844 = vmatmul.mubr.f32.gmra.mrb[0].mxu0 %v3552
  %v3845 = vpop.f32.mrb[0].mxu0
  %v3846 = vadd.f32 0.0, %v3845
  %v3847 = vpop.f32.mrb[0].mxu0
  %3848 = vmatprep.mubr.f32.mxu0 0.0
  %3849 = vmatmul.mubr.f32.gmra.mrb[0].mxu0 %v3555
  %v3850 = vpop.f32.mrb[0].mxu0
  %v3851 = vadd.f32 0.0, %v3850
  %v3852 = vpop.f32.mrb[0].mxu0
  %3853 = vmatprep.mubr.f32.mxu0 0.0
  %3854 = vmatmul.mubr.f32.gmra.mrb[0].mxu0 %v3558
  %v3855 = vpop.f32.mrb[0].mxu0
  %v3856 = vadd.f32 0.0, %v3855
  %v3857 = vpop.f32.mrb[0].mxu0
  %3858 = vmatprep.mubr.f32.mxu0 0.0
  %3859 = vmatmul.mubr.f32.gmra.mrb[0].mxu0 %v3561
  %v3860 = vpop.f32.mrb[0].mxu0
  %v3861 = vadd.f32 0.0, %v3860
  %v3862 = vpop.f32.mrb[0].mxu0
  %3863 = vmatprep.mubr.f32.mxu0 0.0
  %3864 = vmatmul.mubr.f32.gmra.mrb[0].mxu0 %v3564
  %v3865 = vpop.f32.mrb[0].mxu0
  %v3866 = vadd.f32 0.0, %v3865
  %v3867 = vpop.f32.mrb[0].mxu0
  %3868 = vmatprep.mubr.f32.mxu0 0.0
  %3869 = vmatmul.mubr.f32.gmra.mrb[0].mxu0 %v3567
  %v3870 = vpop.f32.mrb[0].mxu0
  %v3871 = vadd.f32 0.0, %v3870
  %v3872 = vpop.f32.mrb[0].mxu0
  %3873 = vmatprep.mubr.f32.mxu0 0.0
  %3874 = vmatmul.mubr.f32.gmra.mrb[0].mxu0 %v3570
  %v3875 = vpop.f32.mrb[0].mxu0
  %v3876 = vadd.f32 0.0, %v3875
  %v3877 = vpop.f32.mrb[0].mxu0
  %3878 = vmatprep.mubr.f32.mxu0 0.0
  %3879 = vmatmul.mubr.f32.gmra.mrb[0].mxu0 %v3573
  %v3880 = vpop.f32.mrb[0].mxu0
  %v3881 = vadd.f32 0.0, %v3880
  %v3882 = vpop.f32.mrb[0].mxu0
  %3883 = vmatprep.mubr.f32.mxu0 0.0
  %3884 = vmatmul.mubr.f32.gmra.mrb[0].mxu0 %v3576
  %v3885 = vpop.f32.mrb[0].mxu0
  %v3886 = vadd.f32 0.0, %v3885
  %v3887 = vpop.f32.mrb[0].mxu0
  %3888 = vmatprep.mubr.f32.mxu0 0.0
  %3889 = vmatmul.mubr.f32.gmra.mrb[0].mxu0 %v3579
  %v3890 = vpop.f32.mrb[0].mxu0
  %v3891 = vadd.f32 0.0, %v3890
  %v3892 = vpop.f32.mrb[0].mxu0
  %3893 = vmatprep.mubr.f32.mxu0 0.0
  %3894 = vmatmul.mubr.f32.gmra.mrb[0].mxu0 %v3582
  %v3895 = vpop.f32.mrb[0].mxu0
  %v3896 = vadd.f32 0.0, %v3895
  %v3897 = vpop.f32.mrb[0].mxu0
  %3898 = vmatprep.mubr.f32.mxu0 0.0
  %3899 = vmatmul.mubr.f32.gmra.mrb[0].mxu0 %v3585
  %v3900 = vpop.f32.mrb[0].mxu0
  %v3901 = vadd.f32 0.0, %v3900
  %v3902 = vpop.f32.mrb[0].mxu0
  %3903 = vmatprep.mubr.f32.mxu0 0.0
  %3904 = vmatmul.mubr.f32.gmra.mrb[0].mxu0 %v3588
  %v3905 = vpop.f32.mrb[0].mxu0
  %v3906 = vadd.f32 0.0, %v3905
  %v3907 = vpop.f32.mrb[0].mxu0
  %3908 = vmatprep.mubr.f32.mxu0 0.0
  %3909 = vmatmul.mubr.f32.gmra.mrb[0].mxu0 %v3591
  %v3910 = vpop.f32.mrb[0].mxu0
  %v3911 = vadd.f32 0.0, %v3910
  %v3912 = vpop.f32.mrb[0].mxu0
  %3913 = vmatprep.mubr.f32.mxu0 0.0
  %3914 = vmatmul.mubr.f32.gmra.mrb[0].mxu0 %v3594
  %v3915 = vpop.f32.mrb[0].mxu0
  %v3916 = vadd.f32 0.0, %v3915
  %v3917 = vpop.f32.mrb[0].mxu0
  %3918 = vmatprep.mubr.f32.mxu0 0.0
  %3919 = vmatmul.mubr.f32.gmra.mrb[0].mxu0 %v3597
  %v3920 = vpop.f32.mrb[0].mxu0
  %v3921 = vadd.f32 0.0, %v3920
  %v3922 = vpop.f32.mrb[0].mxu0
  %3923 = vmatprep.mubr.f32.mxu0 0.0
  %3924 = vmatmul.mubr.f32.gmra.mrb[0].mxu0 %v3600
  %v3925 = vpop.f32.mrb[0].mxu0
  %v3926 = vadd.f32 0.0, %v3925
  %v3927 = vpop.f32.mrb[0].mxu0
  %3928 = vmatprep.mubr.f32.mxu0 0.0
  %3929 = vmatmul.mubr.f32.gmra.mrb[0].mxu0 %v3603
  %v3930 = vpop.f32.mrb[0].mxu0
  %v3931 = vadd.f32 0.0, %v3930
  %v3932 = vpop.f32.mrb[0].mxu0
  %3933 = vmatprep.mubr.f32.mxu0 0.0
  %3934 = vmatmul.mubr.f32.gmra.mrb[0].mxu0 %v3606
  %v3935 = vpop.f32.mrb[0].mxu0
  %v3936 = vadd.f32 0.0, %v3935
  %v3937 = vpop.f32.mrb[0].mxu0
  %3938 = vmatprep.mubr.f32.mxu0 0.0
  %3939 = vmatmul.mubr.f32.gmra.mrb[0].mxu0 %v3609
  %v3940 = vpop.f32.mrb[0].mxu0
  %v3941 = vadd.f32 0.0, %v3940
  %v3942 = vpop.f32.mrb[0].mxu0
  %3943 = vmatprep.mubr.f32.mxu0 0.0
  %3944 = vmatmul.mubr.f32.gmra.mrb[0].mxu0 %v3612
  %v3945 = vpop.f32.mrb[0].mxu0
  %v3946 = vadd.f32 0.0, %v3945
  %v3947 = vpop.f32.mrb[0].mxu0
  %3948 = vmatprep.mubr.f32.mxu0 0.0
  %3949 = vmatmul.mubr.f32.gmra.mrb[0].mxu0 %v3615
  %v3950 = vpop.f32.mrb[0].mxu0
  %v3951 = vadd.f32 0.0, %v3950
  %v3952 = vpop.f32.mrb[0].mxu0
  %3953 = vmatprep.mubr.f32.mxu0 0.0
  %3954 = vmatmul.mubr.f32.gmra.mrb[0].mxu0 %v3618
  %v3955 = vpop.f32.mrb[0].mxu0
  %v3956 = vadd.f32 0.0, %v3955
  %v3957 = vpop.f32.mrb[0].mxu0
  %3958 = vmatprep.mubr.f32.mxu0 0.0
  %3959 = vmatmul.mubr.f32.gmra.mrb[0].mxu0 %v3621
  %v3960 = vpop.f32.mrb[0].mxu0
  %v3961 = vadd.f32 0.0, %v3960
  %v3962 = vpop.f32.mrb[0].mxu0
  %3963 = vmatprep.mubr.f32.mxu0 0.0
  %3964 = vmatmul.mubr.f32.gmra.mrb[0].mxu0 %v3624
  %v3965 = vpop.f32.mrb[0].mxu0
  %v3966 = vadd.f32 0.0, %v3965
  %v3967 = vpop.f32.mrb[0].mxu0
  %3968 = vmatprep.mubr.f32.mxu0 0.0
  %3969 = vmatmul.mubr.f32.gmra.mrb[0].mxu0 %v3627
  %v3970 = vpop.f32.mrb[0].mxu0
  %v3971 = vadd.f32 0.0, %v3970
  %v3972 = vpop.f32.mrb[0].mxu0
  %3973 = vmatprep.mubr.f32.mxu0 0.0
  %3974 = vmatmul.mubr.f32.gmra.mrb[0].mxu0 %v3630
  %v3975 = vpop.f32.mrb[0].mxu0
  %v3976 = vadd.f32 0.0, %v3975
  %v3977 = vpop.f32.mrb[0].mxu0
  %3978 = vmatprep.mubr.f32.mxu0 0.0
  %3979 = vmatmul.mubr.f32.gmra.mrb[0].mxu0 %v3633
  %v3980 = vpop.f32.mrb[0].mxu0
  %v3981 = vadd.f32 0.0, %v3980
  %v3982 = vpop.f32.mrb[0].mxu0
  %3983 = vmatprep.mubr.f32.mxu0 0.0
  %3984 = vmatmul.mubr.f32.gmra.mrb[0].mxu0 %v3636
  %v3985 = vpop.f32.mrb[0].mxu0
  %v3986 = vadd.f32 0.0, %v3985
  %v3987 = vpop.f32.mrb[0].mxu0
  %3988 = vmatprep.mubr.f32.mxu0 0.0
  %3989 = vmatmul.mubr.f32.gmra.mrb[0].mxu0 %v3639
  %v3990 = vpop.f32.mrb[0].mxu0
  %v3991 = vadd.f32 0.0, %v3990
  %v3992 = vpop.f32.mrb[0].mxu0
  %3993 = vmatprep.mubr.f32.mxu0 0.0
  %3994 = vmatmul.mubr.f32.gmra.mrb[0].mxu0 %v3642
  %v3995 = vpop.f32.mrb[0].mxu0
  %v3996 = vadd.f32 0.0, %v3995
  %v3997 = vpop.f32.mrb[0].mxu0
  %3998 = vmatprep.mubr.f32.mxu0 0.0
  %3999 = vmatmul.mubr.f32.gmra.mrb[0].mxu0 %v3645
  %v4000 = vpop.f32.mrb[0].mxu0
  %v4001 = vadd.f32 0.0, %v4000
  %v4002 = vpop.f32.mrb[0].mxu0
  %4003 = vmatprep.mubr.f32.mxu0 0.0
  %4004 = vmatmul.mubr.f32.gmra.mrb[0].mxu0 %v3648
  %v4005 = vpop.f32.mrb[0].mxu0
  %v4006 = vadd.f32 0.0, %v4005
  %v4007 = vpop.f32.mrb[0].mxu0
  %4008 = vmatprep.mubr.f32.mxu0 0.0
  %4009 = vmatmul.mubr.f32.gmra.mrb[0].mxu0 %v3651
  %v4010 = vpop.f32.mrb[0].mxu0
  %v4011 = vadd.f32 0.0, %v4010
  %v4012 = vpop.f32.mrb[0].mxu0
  %4013 = vmatprep.mubr.f32.mxu0 0.0
  %4014 = vmatmul.mubr.f32.gmra.mrb[0].mxu0 %v3654
  %v4015 = vpop.f32.mrb[0].mxu0
  %v4016 = vadd.f32 0.0, %v4015
  %v4017 = vpop.f32.mrb[0].mxu0
  %4018 = vmatprep.mubr.f32.mxu0 0.0
  %4019 = vmatmul.mubr.f32.gmra.mrb[0].mxu0 %v3657
  %v4020 = vpop.f32.mrb[0].mxu0
  %v4021 = vadd.f32 0.0, %v4020
  %v4022 = vpop.f32.mrb[0].mxu0
  %4023 = vmatprep.mubr.f32.mxu0 0.0
  %4024 = vmatmul.mubr.f32.gmra.mrb[0].mxu0 %v3660
  %v4025 = vpop.f32.mrb[0].mxu0
  %v4026 = vadd.f32 0.0, %v4025
  %v4027 = vpop.f32.mrb[0].mxu0
  %4028 = vmatprep.mubr.f32.mxu0 0.0
  %4029 = vmatmul.mubr.f32.gmra.mrb[0].mxu0 %v3663
  %v4030 = vpop.f32.mrb[0].mxu0
  %v4031 = vadd.f32 0.0, %v4030
  %v4032 = vpop.f32.mrb[0].mxu0
  %4033 = vmatprep.mubr.f32.mxu0 0.0
  %4034 = vmatmul.mubr.f32.gmra.mrb[0].mxu0 %v3666
  %v4035 = vpop.f32.mrb[0].mxu0
  %v4036 = vadd.f32 0.0, %v4035
  %v4037 = vpop.f32.mrb[0].mxu0
  %4038 = vmatprep.mubr.f32.mxu0 0.0
  %4039 = vmatmul.mubr.f32.gmra.mrb[0].mxu0 %v3669
  %v4040 = vpop.f32.mrb[0].mxu0
  %v4041 = vadd.f32 0.0, %v4040
  %v4042 = vpop.f32.mrb[0].mxu0
  %4043 = vmatprep.mubr.f32.mxu0 0.0
  %4044 = vmatmul.mubr.f32.gmra.mrb[0].mxu0 %v3672
  %v4045 = vpop.f32.mrb[0].mxu0
  %v4046 = vadd.f32 0.0, %v4045
  %v4047 = vpop.f32.mrb[0].mxu0
  %4048 = vmatprep.mubr.f32.mxu0 0.0
  %4049 = vmatmul.mubr.f32.gmra.mrb[0].mxu0 %v3675
  %v4050 = vpop.f32.mrb[0].mxu0
  %v4051 = vadd.f32 0.0, %v4050
  %v4052 = vpop.f32.mrb[0].mxu0
  %4053 = vmatprep.mubr.f32.mxu0 0.0
  %4054 = vmatmul.mubr.f32.gmra.mrb[0].mxu0 %v3678
  %v4055 = vpop.f32.mrb[0].mxu0
  %v4056 = vadd.f32 0.0, %v4055
  %v4057 = vpop.f32.mrb[0].mxu0
  %4058 = vmatprep.mubr.f32.mxu0 0.0
  %4059 = vmatmul.mubr.f32.gmra.mrb[0].mxu0 %v3681
  %v4060 = vpop.f32.mrb[0].mxu0
  %v4061 = vadd.f32 0.0, %v4060
  %v4062 = vpop.f32.mrb[0].mxu0
  %4063 = vmatprep.mubr.f32.mxu0 0.0
  %4064 = vmatmul.mubr.f32.gmra.mrb[0].mxu0 %v3684
  %v4065 = vpop.f32.mrb[0].mxu0
  %v4066 = vadd.f32 0.0, %v4065
  %v4067 = vpop.f32.mrb[0].mxu0
  %4068 = vmatprep.mubr.f32.mxu0 0.0
  %4069 = vmatmul.mubr.f32.gmra.mrb[0].mxu0 %v3687
  %v4070 = vpop.f32.mrb[0].mxu0
  %v4071 = vadd.f32 0.0, %v4070
  %v4072 = vpop.f32.mrb[0].mxu0
  %4073 = vdwg.mxu0
  %v4074 = vadd.f32 %v3367, %v3756
  %v4075 = vadd.f32 %v3368, %v3761
  %v4076 = vadd.f32 %v3369, %v3766
  %v4077 = vadd.f32 %v3370, %v3771
  %v4078 = vadd.f32 %v3371, %v3776
  %v4079 = vadd.f32 %v3372, %v3781
  %v4080 = vadd.f32 %v3373, %v3786
  %v4081 = vadd.f32 %v3374, %v3791
  %v4082 = vadd.f32 %v3375, %v3796
  %v4083 = vadd.f32 %v3376, %v3801
  %v4084 = vadd.f32 %v3377, %v3806
  %v4085 = vadd.f32 %v3378, %v3811
  %v4086 = vadd.f32 %v3379, %v3816
  %v4087 = vadd.f32 %v3380, %v3821
  %v4088 = vadd.f32 %v3381, %v3826
  %v4089 = vadd.f32 %v3382, %v3831
  %v4090 = vadd.f32 %v3383, %v3836
  %v4091 = vadd.f32 %v3384, %v3841
  %v4092 = vadd.f32 %v3385, %v3846
  %v4093 = vadd.f32 %v3386, %v3851
  %v4094 = vadd.f32 %v3387, %v3856
  %v4095 = vadd.f32 %v3388, %v3861
  %v4096 = vadd.f32 %v3389, %v3866
  %v4097 = vadd.f32 %v3390, %v3871
  %v4098 = vadd.f32 %v3391, %v3876
  %v4099 = vadd.f32 %v3392, %v3881
  %v4100 = vadd.f32 %v3393, %v3886
  %v4101 = vadd.f32 %v3394, %v3891
  %v4102 = vadd.f32 %v3395, %v3896
  %v4103 = vadd.f32 %v3396, %v3901
  %v4104 = vadd.f32 %v3397, %v3906
  %v4105 = vadd.f32 %v3398, %v3911
  %v4106 = vadd.f32 %v3399, %v3916
  %v4107 = vadd.f32 %v3400, %v3921
  %v4108 = vadd.f32 %v3401, %v3926
  %v4109 = vadd.f32 %v3402, %v3931
  %v4110 = vadd.f32 %v3403, %v3936
  %v4111 = vadd.f32 %v3404, %v3941
  %v4112 = vadd.f32 %v3405, %v3946
  %v4113 = vadd.f32 %v3406, %v3951
  %v4114 = vadd.f32 %v3407, %v3956
  %v4115 = vadd.f32 %v3408, %v3961
  %v4116 = vadd.f32 %v3409, %v3966
  %v4117 = vadd.f32 %v3410, %v3971
  %v4118 = vadd.f32 %v3411, %v3976
  %v4119 = vadd.f32 %v3412, %v3981
  %v4120 = vadd.f32 %v3413, %v3986
  %v4121 = vadd.f32 %v3414, %v3991
  %v4122 = vadd.f32 %v3415, %v3996
  %v4123 = vadd.f32 %v3416, %v4001
  %v4124 = vadd.f32 %v3417, %v4006
  %v4125 = vadd.f32 %v3418, %v4011
  %v4126 = vadd.f32 %v3419, %v4016
  %v4127 = vadd.f32 %v3420, %v4021
  %v4128 = vadd.f32 %v3421, %v4026
  %v4129 = vadd.f32 %v3422, %v4031
  %v4130 = vadd.f32 %v3423, %v4036
  %v4131 = vadd.f32 %v3424, %v4041
  %v4132 = vadd.f32 %v3425, %v4046
  %v4133 = vadd.f32 %v3426, %v4051
  %v4134 = vadd.f32 %v3427, %v4056
  %v4135 = vadd.f32 %v3428, %v4061
  %v4136 = vadd.f32 %v3429, %v4066
  %v4137 = vadd.f32 %v3430, %v4071
  %v4138 = vld [vmem:[%s0 + $0x27] sm:$0xff]
  %v4139 = vld [vmem:[%s0 + $0x2f] sm:$0xff]
  %v4140 = vld [vmem:[%s0 + $0x37] sm:$0xff]
  %v4141 = vld [vmem:[%s0 + $0x3f] sm:$0xff]
  %v4142 = vld [vmem:[%s0 + $0x47] sm:$0xff]
  %v4143 = vld [vmem:[%s0 + $0x4f] sm:$0xff]
  %v4144 = vld [vmem:[%s0 + $0x57] sm:$0xff]
  %v4145 = vld [vmem:[%s0 + $0x5f] sm:$0xff]
  %v4146 = vld [vmem:[%s0 + $0x67] sm:$0xff]
  %v4147 = vld [vmem:[%s0 + $0x6f] sm:$0xff]
  %v4148 = vld [vmem:[%s0 + $0x77] sm:$0xff]
  %v4149 = vld [vmem:[%s0 + $0x7f] sm:$0xff]
  %v4150 = vld [vmem:[%s0 + $0x87] sm:$0xff]
  %v4151 = vld [vmem:[%s0 + $0x8f] sm:$0xff]
  %v4152 = vld [vmem:[%s0 + $0x97] sm:$0xff]
  %v4153 = vld [vmem:[%s0 + $0x9f] sm:$0xff]
  %v4154 = vld [vmem:[%s0 + $0xa7] sm:$0xff]
  %v4155 = vld [vmem:[%s0 + $0xaf] sm:$0xff]
  %v4156 = vld [vmem:[%s0 + $0xb7] sm:$0xff]
  %v4157 = vld [vmem:[%s0 + $0xbf] sm:$0xff]
  %v4158 = vld [vmem:[%s0 + $0xc7] sm:$0xff]
  %v4159 = vld [vmem:[%s0 + $0xcf] sm:$0xff]
  %v4160 = vld [vmem:[%s0 + $0xd7] sm:$0xff]
  %v4161 = vld [vmem:[%s0 + $0xdf] sm:$0xff]
  %v4162 = vld [vmem:[%s0 + $0xe7] sm:$0xff]
  %v4163 = vld [vmem:[%s0 + $0xef] sm:$0xff]
  %v4164 = vld [vmem:[%s0 + $0xf7] sm:$0xff]
  %v4165 = vld [vmem:[%s0 + $0xff] sm:$0xff]
  %v4166 = vld [vmem:[%s0 + $0x107] sm:$0xff]
  %v4167 = vld [vmem:[%s0 + $0x10f] sm:$0xff]
  %v4168 = vld [vmem:[%s0 + $0x117] sm:$0xff]
  %v4169 = vld [vmem:[%s0 + $0x11f] sm:$0xff]
  %v4170 = vld [vmem:[%s0 + $0x127] sm:$0xff]
  %v4171 = vld [vmem:[%s0 + $0x12f] sm:$0xff]
  %v4172 = vld [vmem:[%s0 + $0x137] sm:$0xff]
  %v4173 = vld [vmem:[%s0 + $0x13f] sm:$0xff]
  %v4174 = vld [vmem:[%s0 + $0x147] sm:$0xff]
  %v4175 = vld [vmem:[%s0 + $0x14f] sm:$0xff]
  %v4176 = vld [vmem:[%s0 + $0x157] sm:$0xff]
  %v4177 = vld [vmem:[%s0 + $0x15f] sm:$0xff]
  %v4178 = vld [vmem:[%s0 + $0x167] sm:$0xff]
  %v4179 = vld [vmem:[%s0 + $0x16f] sm:$0xff]
  %v4180 = vld [vmem:[%s0 + $0x177] sm:$0xff]
  %v4181 = vld [vmem:[%s0 + $0x17f] sm:$0xff]
  %v4182 = vld [vmem:[%s0 + $0x187] sm:$0xff]
  %v4183 = vld [vmem:[%s0 + $0x18f] sm:$0xff]
  %v4184 = vld [vmem:[%s0 + $0x197] sm:$0xff]
  %v4185 = vld [vmem:[%s0 + $0x19f] sm:$0xff]
  %v4186 = vld [vmem:[%s0 + $0x1a7] sm:$0xff]
  %v4187 = vld [vmem:[%s0 + $0x1af] sm:$0xff]
  %v4188 = vld [vmem:[%s0 + $0x1b7] sm:$0xff]
  %v4189 = vld [vmem:[%s0 + $0x1bf] sm:$0xff]
  %v4190 = vld [vmem:[%s0 + $0x1c7] sm:$0xff]
  %v4191 = vld [vmem:[%s0 + $0x1cf] sm:$0xff]
  %v4192 = vld [vmem:[%s0 + $0x1d7] sm:$0xff]
  %v4193 = vld [vmem:[%s0 + $0x1df] sm:$0xff]
  %v4194 = vld [vmem:[%s0 + $0x1e7] sm:$0xff]
  %v4195 = vld [vmem:[%s0 + $0x1ef] sm:$0xff]
  %v4196 = vld [vmem:[%s0 + $0x1f7] sm:$0xff]
  %v4197 = vld [vmem:[%s0 + $0x1ff] sm:$0xff]
  %v4198 = vld [vmem:[%s0 + $0x207] sm:$0xff]
  %v4199 = vld [vmem:[%s0 + $0x20f] sm:$0xff]
  %v4200 = vld [vmem:[%s0 + $0x217] sm:$0xff]
  %v4201 = vld [vmem:[%s0 + $0x21f] sm:$0xff]
  %v4202 = vld [vmem:[%s2 + $0x60] sm:$0xff]
  %v4203 = vld [vmem:[%s2 + $0x68] sm:$0xff]
  %v4205 = vsel %vm155, %v4138, 0
  %v4208 = vsel %vm155, %v4139, 0
  %v4211 = vsel %vm155, %v4140, 0
  %v4214 = vsel %vm155, %v4141, 0
  %v4217 = vsel %vm155, %v4142, 0
  %v4220 = vsel %vm155, %v4143, 0
  %v4223 = vsel %vm155, %v4144, 0
  %v4226 = vsel %vm155, %v4145, 0
  %v4229 = vsel %vm155, %v4146, 0
  %v4232 = vsel %vm155, %v4147, 0
  %v4235 = vsel %vm155, %v4148, 0
  %v4238 = vsel %vm155, %v4149, 0
  %v4241 = vsel %vm155, %v4150, 0
  %v4244 = vsel %vm155, %v4151, 0
  %v4247 = vsel %vm155, %v4152, 0
  %v4250 = vsel %vm155, %v4153, 0
  %v4253 = vsel %vm155, %v4154, 0
  %v4256 = vsel %vm155, %v4155, 0
  %v4259 = vsel %vm155, %v4156, 0
  %v4262 = vsel %vm155, %v4157, 0
  %v4265 = vsel %vm155, %v4158, 0
  %v4268 = vsel %vm155, %v4159, 0
  %v4271 = vsel %vm155, %v4160, 0
  %v4274 = vsel %vm155, %v4161, 0
  %v4277 = vsel %vm155, %v4162, 0
  %v4280 = vsel %vm155, %v4163, 0
  %v4283 = vsel %vm155, %v4164, 0
  %v4286 = vsel %vm155, %v4165, 0
  %v4289 = vsel %vm155, %v4166, 0
  %v4292 = vsel %vm155, %v4167, 0
  %v4295 = vsel %vm155, %v4168, 0
  %v4298 = vsel %vm155, %v4169, 0
  %v4301 = vsel %vm155, %v4170, 0
  %v4304 = vsel %vm155, %v4171, 0
  %v4307 = vsel %vm155, %v4172, 0
  %v4310 = vsel %vm155, %v4173, 0
  %v4313 = vsel %vm155, %v4174, 0
  %v4316 = vsel %vm155, %v4175, 0
  %v4319 = vsel %vm155, %v4176, 0
  %v4322 = vsel %vm155, %v4177, 0
  %v4325 = vsel %vm155, %v4178, 0
  %v4328 = vsel %vm155, %v4179, 0
  %v4331 = vsel %vm155, %v4180, 0
  %v4334 = vsel %vm155, %v4181, 0
  %v4337 = vsel %vm155, %v4182, 0
  %v4340 = vsel %vm155, %v4183, 0
  %v4343 = vsel %vm155, %v4184, 0
  %v4346 = vsel %vm155, %v4185, 0
  %v4349 = vsel %vm155, %v4186, 0
  %v4352 = vsel %vm155, %v4187, 0
  %v4355 = vsel %vm155, %v4188, 0
  %v4358 = vsel %vm155, %v4189, 0
  %v4361 = vsel %vm155, %v4190, 0
  %v4364 = vsel %vm155, %v4191, 0
  %v4367 = vsel %vm155, %v4192, 0
  %v4370 = vsel %vm155, %v4193, 0
  %v4373 = vsel %vm155, %v4194, 0
  %v4376 = vsel %vm155, %v4195, 0
  %v4379 = vsel %vm155, %v4196, 0
  %v4382 = vsel %vm155, %v4197, 0
  %v4385 = vsel %vm155, %v4198, 0
  %v4388 = vsel %vm155, %v4199, 0
  %v4391 = vsel %vm155, %v4200, 0
  %v4394 = vsel %vm155, %v4201, 0
  %4396 = vmatprep.subr.mxu0 0.0
  %4397 = vmatpush1.msra.mxu0 %v4202
  %4398 = vmatprep.subr.mxu0 0.0
  %4399 = vmatpush1.msra.mxu0 %v4203
  %4400 = vmatprep.subr.mxu0 0.0
  %4401 = vmatpush1.msra.mxu0 0.0
  %4402 = vmatprep.subr.mxu0 0.0
  %4403 = vmatpush1.msra.mxu0 0.0
  %4404 = vmatprep.subr.mxu0 0.0
  %4405 = vmatpush1.msra.mxu0 0.0
  %4406 = vmatprep.subr.mxu0 0.0
  %4407 = vmatpush1.msra.mxu0 0.0
  %4408 = vmatprep.subr.mxu0 0.0
  %4409 = vmatpush1.msra.mxu0 0.0
  %4410 = vmatprep.subr.mxu0 0.0
  %4411 = vmatpush1.msra.mxu0 0.0
  %4412 = vmatprep.subr.mxu0 0.0
  %4413 = vmatpush1.msra.mxu0 0.0
  %4414 = vmatprep.subr.mxu0 0.0
  %4415 = vmatpush1.msra.mxu0 0.0
  %4416 = vmatprep.subr.mxu0 0.0
  %4417 = vmatpush1.msra.mxu0 0.0
  %4418 = vmatprep.subr.mxu0 0.0
  %4419 = vmatpush1.msra.mxu0 0.0
  %4420 = vmatprep.subr.mxu0 0.0
  %4421 = vmatpush1.msra.mxu0 0.0
  %4422 = vmatprep.subr.mxu0 0.0
  %4423 = vmatpush1.msra.mxu0 0.0
  %4424 = vmatprep.subr.mxu0 0.0
  %4425 = vmatpush1.msra.mxu0 0.0
  %4426 = vmatprep.subr.mxu0 0.0
  %4427 = vmatpush1.msra.mxu0 0.0
  %4428 = vmatprep.subr.mxu0 0.0
  %4429 = vmatpush1.msra.mxu0 0.0
  %4430 = vmatprep.subr.mxu0 0.0
  %4431 = vmatpush1.msra.mxu0 0.0
  %4432 = vmatprep.subr.mxu0 0.0
  %4433 = vmatpush1.msra.mxu0 0.0
  %4434 = vmatprep.subr.mxu0 0.0
  %4435 = vmatpush1.msra.mxu0 0.0
  %4436 = vmatprep.subr.mxu0 0.0
  %4437 = vmatpush1.msra.mxu0 0.0
  %4438 = vmatprep.subr.mxu0 0.0
  %4439 = vmatpush1.msra.mxu0 0.0
  %4440 = vmatprep.subr.mxu0 0.0
  %4441 = vmatpush1.msra.mxu0 0.0
  %4442 = vmatprep.subr.mxu0 0.0
  %4443 = vmatpush1.msra.mxu0 0.0
  %4444 = vmatprep.subr.mxu0 0.0
  %4445 = vmatpush1.msra.mxu0 0.0
  %4446 = vmatprep.subr.mxu0 0.0
  %4447 = vmatpush1.msra.mxu0 0.0
  %4448 = vmatprep.subr.mxu0 0.0
  %4449 = vmatpush1.msra.mxu0 0.0
  %4450 = vmatprep.subr.mxu0 0.0
  %4451 = vmatpush1.msra.mxu0 0.0
  %4452 = vmatprep.subr.mxu0 0.0
  %4453 = vmatpush1.msra.mxu0 0.0
  %4454 = vmatprep.subr.mxu0 0.0
  %4455 = vmatpush1.msra.mxu0 0.0
  %4456 = vmatprep.subr.mxu0 0.0
  %4457 = vmatpush1.msra.mxu0 0.0
  %4458 = vmatprep.subr.mxu0 0.0
  %4459 = vmatpush1.msra.mxu0 0.0
  %4460 = vmatprep.mubr.f32.mxu0 0.0
  %4461 = vmatmul.mubr.f32.gmra.mrb[0].mxu0 %v4205
  %v4462 = vpop.f32.mrb[0].mxu0
  %v4463 = vadd.f32 0.0, %v4462
  %v4464 = vpop.f32.mrb[0].mxu0
  %4465 = vmatprep.mubr.f32.mxu0 0.0
  %4466 = vmatmul.mubr.f32.gmra.mrb[0].mxu0 %v4208
  %v4467 = vpop.f32.mrb[0].mxu0
  %v4468 = vadd.f32 0.0, %v4467
  %v4469 = vpop.f32.mrb[0].mxu0
  %4470 = vmatprep.mubr.f32.mxu0 0.0
  %4471 = vmatmul.mubr.f32.gmra.mrb[0].mxu0 %v4211
  %v4472 = vpop.f32.mrb[0].mxu0
  %v4473 = vadd.f32 0.0, %v4472
  %v4474 = vpop.f32.mrb[0].mxu0
  %4475 = vmatprep.mubr.f32.mxu0 0.0
  %4476 = vmatmul.mubr.f32.gmra.mrb[0].mxu0 %v4214
  %v4477 = vpop.f32.mrb[0].mxu0
  %v4478 = vadd.f32 0.0, %v4477
  %v4479 = vpop.f32.mrb[0].mxu0
  %4480 = vmatprep.mubr.f32.mxu0 0.0
  %4481 = vmatmul.mubr.f32.gmra.mrb[0].mxu0 %v4217
  %v4482 = vpop.f32.mrb[0].mxu0
  %v4483 = vadd.f32 0.0, %v4482
  %v4484 = vpop.f32.mrb[0].mxu0
  %4485 = vmatprep.mubr.f32.mxu0 0.0
  %4486 = vmatmul.mubr.f32.gmra.mrb[0].mxu0 %v4220
  %v4487 = vpop.f32.mrb[0].mxu0
  %v4488 = vadd.f32 0.0, %v4487
  %v4489 = vpop.f32.mrb[0].mxu0
  %4490 = vmatprep.mubr.f32.mxu0 0.0
  %4491 = vmatmul.mubr.f32.gmra.mrb[0].mxu0 %v4223
  %v4492 = vpop.f32.mrb[0].mxu0
  %v4493 = vadd.f32 0.0, %v4492
  %v4494 = vpop.f32.mrb[0].mxu0
  %4495 = vmatprep.mubr.f32.mxu0 0.0
  %4496 = vmatmul.mubr.f32.gmra.mrb[0].mxu0 %v4226
  %v4497 = vpop.f32.mrb[0].mxu0
  %v4498 = vadd.f32 0.0, %v4497
  %v4499 = vpop.f32.mrb[0].mxu0
  %4500 = vmatprep.mubr.f32.mxu0 0.0
  %4501 = vmatmul.mubr.f32.gmra.mrb[0].mxu0 %v4229
  %v4502 = vpop.f32.mrb[0].mxu0
  %v4503 = vadd.f32 0.0, %v4502
  %v4504 = vpop.f32.mrb[0].mxu0
  %4505 = vmatprep.mubr.f32.mxu0 0.0
  %4506 = vmatmul.mubr.f32.gmra.mrb[0].mxu0 %v4232
  %v4507 = vpop.f32.mrb[0].mxu0
  %v4508 = vadd.f32 0.0, %v4507
  %v4509 = vpop.f32.mrb[0].mxu0
  %4510 = vmatprep.mubr.f32.mxu0 0.0
  %4511 = vmatmul.mubr.f32.gmra.mrb[0].mxu0 %v4235
  %v4512 = vpop.f32.mrb[0].mxu0
  %v4513 = vadd.f32 0.0, %v4512
  %v4514 = vpop.f32.mrb[0].mxu0
  %4515 = vmatprep.mubr.f32.mxu0 0.0
  %4516 = vmatmul.mubr.f32.gmra.mrb[0].mxu0 %v4238
  %v4517 = vpop.f32.mrb[0].mxu0
  %v4518 = vadd.f32 0.0, %v4517
  %v4519 = vpop.f32.mrb[0].mxu0
  %4520 = vmatprep.mubr.f32.mxu0 0.0
  %4521 = vmatmul.mubr.f32.gmra.mrb[0].mxu0 %v4241
  %v4522 = vpop.f32.mrb[0].mxu0
  %v4523 = vadd.f32 0.0, %v4522
  %v4524 = vpop.f32.mrb[0].mxu0
  %4525 = vmatprep.mubr.f32.mxu0 0.0
  %4526 = vmatmul.mubr.f32.gmra.mrb[0].mxu0 %v4244
  %v4527 = vpop.f32.mrb[0].mxu0
  %v4528 = vadd.f32 0.0, %v4527
  %v4529 = vpop.f32.mrb[0].mxu0
  %4530 = vmatprep.mubr.f32.mxu0 0.0
  %4531 = vmatmul.mubr.f32.gmra.mrb[0].mxu0 %v4247
  %v4532 = vpop.f32.mrb[0].mxu0
  %v4533 = vadd.f32 0.0, %v4532
  %v4534 = vpop.f32.mrb[0].mxu0
  %4535 = vmatprep.mubr.f32.mxu0 0.0
  %4536 = vmatmul.mubr.f32.gmra.mrb[0].mxu0 %v4250
  %v4537 = vpop.f32.mrb[0].mxu0
  %v4538 = vadd.f32 0.0, %v4537
  %v4539 = vpop.f32.mrb[0].mxu0
  %4540 = vmatprep.mubr.f32.mxu0 0.0
  %4541 = vmatmul.mubr.f32.gmra.mrb[0].mxu0 %v4253
  %v4542 = vpop.f32.mrb[0].mxu0
  %v4543 = vadd.f32 0.0, %v4542
  %v4544 = vpop.f32.mrb[0].mxu0
  %4545 = vmatprep.mubr.f32.mxu0 0.0
  %4546 = vmatmul.mubr.f32.gmra.mrb[0].mxu0 %v4256
  %v4547 = vpop.f32.mrb[0].mxu0
  %v4548 = vadd.f32 0.0, %v4547
  %v4549 = vpop.f32.mrb[0].mxu0
  %4550 = vmatprep.mubr.f32.mxu0 0.0
  %4551 = vmatmul.mubr.f32.gmra.mrb[0].mxu0 %v4259
  %v4552 = vpop.f32.mrb[0].mxu0
  %v4553 = vadd.f32 0.0, %v4552
  %v4554 = vpop.f32.mrb[0].mxu0
  %4555 = vmatprep.mubr.f32.mxu0 0.0
  %4556 = vmatmul.mubr.f32.gmra.mrb[0].mxu0 %v4262
  %v4557 = vpop.f32.mrb[0].mxu0
  %v4558 = vadd.f32 0.0, %v4557
  %v4559 = vpop.f32.mrb[0].mxu0
  %4560 = vmatprep.mubr.f32.mxu0 0.0
  %4561 = vmatmul.mubr.f32.gmra.mrb[0].mxu0 %v4265
  %v4562 = vpop.f32.mrb[0].mxu0
  %v4563 = vadd.f32 0.0, %v4562
  %v4564 = vpop.f32.mrb[0].mxu0
  %4565 = vmatprep.mubr.f32.mxu0 0.0
  %4566 = vmatmul.mubr.f32.gmra.mrb[0].mxu0 %v4268
  %v4567 = vpop.f32.mrb[0].mxu0
  %v4568 = vadd.f32 0.0, %v4567
  %v4569 = vpop.f32.mrb[0].mxu0
  %4570 = vmatprep.mubr.f32.mxu0 0.0
  %4571 = vmatmul.mubr.f32.gmra.mrb[0].mxu0 %v4271
  %v4572 = vpop.f32.mrb[0].mxu0
  %v4573 = vadd.f32 0.0, %v4572
  %v4574 = vpop.f32.mrb[0].mxu0
  %4575 = vmatprep.mubr.f32.mxu0 0.0
  %4576 = vmatmul.mubr.f32.gmra.mrb[0].mxu0 %v4274
  %v4577 = vpop.f32.mrb[0].mxu0
  %v4578 = vadd.f32 0.0, %v4577
  %v4579 = vpop.f32.mrb[0].mxu0
  %4580 = vmatprep.mubr.f32.mxu0 0.0
  %4581 = vmatmul.mubr.f32.gmra.mrb[0].mxu0 %v4277
  %v4582 = vpop.f32.mrb[0].mxu0
  %v4583 = vadd.f32 0.0, %v4582
  %v4584 = vpop.f32.mrb[0].mxu0
  %4585 = vmatprep.mubr.f32.mxu0 0.0
  %4586 = vmatmul.mubr.f32.gmra.mrb[0].mxu0 %v4280
  %v4587 = vpop.f32.mrb[0].mxu0
  %v4588 = vadd.f32 0.0, %v4587
  %v4589 = vpop.f32.mrb[0].mxu0
  %4590 = vmatprep.mubr.f32.mxu0 0.0
  %4591 = vmatmul.mubr.f32.gmra.mrb[0].mxu0 %v4283
  %v4592 = vpop.f32.mrb[0].mxu0
  %v4593 = vadd.f32 0.0, %v4592
  %v4594 = vpop.f32.mrb[0].mxu0
  %4595 = vmatprep.mubr.f32.mxu0 0.0
  %4596 = vmatmul.mubr.f32.gmra.mrb[0].mxu0 %v4286
  %v4597 = vpop.f32.mrb[0].mxu0
  %v4598 = vadd.f32 0.0, %v4597
  %v4599 = vpop.f32.mrb[0].mxu0
  %4600 = vmatprep.mubr.f32.mxu0 0.0
  %4601 = vmatmul.mubr.f32.gmra.mrb[0].mxu0 %v4289
  %v4602 = vpop.f32.mrb[0].mxu0
  %v4603 = vadd.f32 0.0, %v4602
  %v4604 = vpop.f32.mrb[0].mxu0
  %4605 = vmatprep.mubr.f32.mxu0 0.0
  %4606 = vmatmul.mubr.f32.gmra.mrb[0].mxu0 %v4292
  %v4607 = vpop.f32.mrb[0].mxu0
  %v4608 = vadd.f32 0.0, %v4607
  %v4609 = vpop.f32.mrb[0].mxu0
  %4610 = vmatprep.mubr.f32.mxu0 0.0
  %4611 = vmatmul.mubr.f32.gmra.mrb[0].mxu0 %v4295
  %v4612 = vpop.f32.mrb[0].mxu0
  %v4613 = vadd.f32 0.0, %v4612
  %v4614 = vpop.f32.mrb[0].mxu0
  %4615 = vmatprep.mubr.f32.mxu0 0.0
  %4616 = vmatmul.mubr.f32.gmra.mrb[0].mxu0 %v4298
  %v4617 = vpop.f32.mrb[0].mxu0
  %v4618 = vadd.f32 0.0, %v4617
  %v4619 = vpop.f32.mrb[0].mxu0
  %4620 = vmatprep.mubr.f32.mxu0 0.0
  %4621 = vmatmul.mubr.f32.gmra.mrb[0].mxu0 %v4301
  %v4622 = vpop.f32.mrb[0].mxu0
  %v4623 = vadd.f32 0.0, %v4622
  %v4624 = vpop.f32.mrb[0].mxu0
  %4625 = vmatprep.mubr.f32.mxu0 0.0
  %4626 = vmatmul.mubr.f32.gmra.mrb[0].mxu0 %v4304
  %v4627 = vpop.f32.mrb[0].mxu0
  %v4628 = vadd.f32 0.0, %v4627
  %v4629 = vpop.f32.mrb[0].mxu0
  %4630 = vmatprep.mubr.f32.mxu0 0.0
  %4631 = vmatmul.mubr.f32.gmra.mrb[0].mxu0 %v4307
  %v4632 = vpop.f32.mrb[0].mxu0
  %v4633 = vadd.f32 0.0, %v4632
  %v4634 = vpop.f32.mrb[0].mxu0
  %4635 = vmatprep.mubr.f32.mxu0 0.0
  %4636 = vmatmul.mubr.f32.gmra.mrb[0].mxu0 %v4310
  %v4637 = vpop.f32.mrb[0].mxu0
  %v4638 = vadd.f32 0.0, %v4637
  %v4639 = vpop.f32.mrb[0].mxu0
  %4640 = vmatprep.mubr.f32.mxu0 0.0
  %4641 = vmatmul.mubr.f32.gmra.mrb[0].mxu0 %v4313
  %v4642 = vpop.f32.mrb[0].mxu0
  %v4643 = vadd.f32 0.0, %v4642
  %v4644 = vpop.f32.mrb[0].mxu0
  %4645 = vmatprep.mubr.f32.mxu0 0.0
  %4646 = vmatmul.mubr.f32.gmra.mrb[0].mxu0 %v4316
  %v4647 = vpop.f32.mrb[0].mxu0
  %v4648 = vadd.f32 0.0, %v4647
  %v4649 = vpop.f32.mrb[0].mxu0
  %4650 = vmatprep.mubr.f32.mxu0 0.0
  %4651 = vmatmul.mubr.f32.gmra.mrb[0].mxu0 %v4319
  %v4652 = vpop.f32.mrb[0].mxu0
  %v4653 = vadd.f32 0.0, %v4652
  %v4654 = vpop.f32.mrb[0].mxu0
  %4655 = vmatprep.mubr.f32.mxu0 0.0
  %4656 = vmatmul.mubr.f32.gmra.mrb[0].mxu0 %v4322
  %v4657 = vpop.f32.mrb[0].mxu0
  %v4658 = vadd.f32 0.0, %v4657
  %v4659 = vpop.f32.mrb[0].mxu0
  %4660 = vmatprep.mubr.f32.mxu0 0.0
  %4661 = vmatmul.mubr.f32.gmra.mrb[0].mxu0 %v4325
  %v4662 = vpop.f32.mrb[0].mxu0
  %v4663 = vadd.f32 0.0, %v4662
  %v4664 = vpop.f32.mrb[0].mxu0
  %4665 = vmatprep.mubr.f32.mxu0 0.0
  %4666 = vmatmul.mubr.f32.gmra.mrb[0].mxu0 %v4328
  %v4667 = vpop.f32.mrb[0].mxu0
  %v4668 = vadd.f32 0.0, %v4667
  %v4669 = vpop.f32.mrb[0].mxu0
  %4670 = vmatprep.mubr.f32.mxu0 0.0
  %4671 = vmatmul.mubr.f32.gmra.mrb[0].mxu0 %v4331
  %v4672 = vpop.f32.mrb[0].mxu0
  %v4673 = vadd.f32 0.0, %v4672
  %v4674 = vpop.f32.mrb[0].mxu0
  %4675 = vmatprep.mubr.f32.mxu0 0.0
  %4676 = vmatmul.mubr.f32.gmra.mrb[0].mxu0 %v4334
  %v4677 = vpop.f32.mrb[0].mxu0
  %v4678 = vadd.f32 0.0, %v4677
  %v4679 = vpop.f32.mrb[0].mxu0
  %4680 = vmatprep.mubr.f32.mxu0 0.0
  %4681 = vmatmul.mubr.f32.gmra.mrb[0].mxu0 %v4337
  %v4682 = vpop.f32.mrb[0].mxu0
  %v4683 = vadd.f32 0.0, %v4682
  %v4684 = vpop.f32.mrb[0].mxu0
  %4685 = vmatprep.mubr.f32.mxu0 0.0
  %4686 = vmatmul.mubr.f32.gmra.mrb[0].mxu0 %v4340
  %v4687 = vpop.f32.mrb[0].mxu0
  %v4688 = vadd.f32 0.0, %v4687
  %v4689 = vpop.f32.mrb[0].mxu0
  %4690 = vmatprep.mubr.f32.mxu0 0.0
  %4691 = vmatmul.mubr.f32.gmra.mrb[0].mxu0 %v4343
  %v4692 = vpop.f32.mrb[0].mxu0
  %v4693 = vadd.f32 0.0, %v4692
  %v4694 = vpop.f32.mrb[0].mxu0
  %4695 = vmatprep.mubr.f32.mxu0 0.0
  %4696 = vmatmul.mubr.f32.gmra.mrb[0].mxu0 %v4346
  %v4697 = vpop.f32.mrb[0].mxu0
  %v4698 = vadd.f32 0.0, %v4697
  %v4699 = vpop.f32.mrb[0].mxu0
  %4700 = vmatprep.mubr.f32.mxu0 0.0
  %4701 = vmatmul.mubr.f32.gmra.mrb[0].mxu0 %v4349
  %v4702 = vpop.f32.mrb[0].mxu0
  %v4703 = vadd.f32 0.0, %v4702
  %v4704 = vpop.f32.mrb[0].mxu0
  %4705 = vmatprep.mubr.f32.mxu0 0.0
  %4706 = vmatmul.mubr.f32.gmra.mrb[0].mxu0 %v4352
  %v4707 = vpop.f32.mrb[0].mxu0
  %v4708 = vadd.f32 0.0, %v4707
  %v4709 = vpop.f32.mrb[0].mxu0
  %4710 = vmatprep.mubr.f32.mxu0 0.0
  %4711 = vmatmul.mubr.f32.gmra.mrb[0].mxu0 %v4355
  %v4712 = vpop.f32.mrb[0].mxu0
  %v4713 = vadd.f32 0.0, %v4712
  %v4714 = vpop.f32.mrb[0].mxu0
  %4715 = vmatprep.mubr.f32.mxu0 0.0
  %4716 = vmatmul.mubr.f32.gmra.mrb[0].mxu0 %v4358
  %v4717 = vpop.f32.mrb[0].mxu0
  %v4718 = vadd.f32 0.0, %v4717
  %v4719 = vpop.f32.mrb[0].mxu0
  %4720 = vmatprep.mubr.f32.mxu0 0.0
  %4721 = vmatmul.mubr.f32.gmra.mrb[0].mxu0 %v4361
  %v4722 = vpop.f32.mrb[0].mxu0
  %v4723 = vadd.f32 0.0, %v4722
  %v4724 = vpop.f32.mrb[0].mxu0
  %4725 = vmatprep.mubr.f32.mxu0 0.0
  %4726 = vmatmul.mubr.f32.gmra.mrb[0].mxu0 %v4364
  %v4727 = vpop.f32.mrb[0].mxu0
  %v4728 = vadd.f32 0.0, %v4727
  %v4729 = vpop.f32.mrb[0].mxu0
  %4730 = vmatprep.mubr.f32.mxu0 0.0
  %4731 = vmatmul.mubr.f32.gmra.mrb[0].mxu0 %v4367
  %v4732 = vpop.f32.mrb[0].mxu0
  %v4733 = vadd.f32 0.0, %v4732
  %v4734 = vpop.f32.mrb[0].mxu0
  %4735 = vmatprep.mubr.f32.mxu0 0.0
  %4736 = vmatmul.mubr.f32.gmra.mrb[0].mxu0 %v4370
  %v4737 = vpop.f32.mrb[0].mxu0
  %v4738 = vadd.f32 0.0, %v4737
  %v4739 = vpop.f32.mrb[0].mxu0
  %4740 = vmatprep.mubr.f32.mxu0 0.0
  %4741 = vmatmul.mubr.f32.gmra.mrb[0].mxu0 %v4373
  %v4742 = vpop.f32.mrb[0].mxu0
  %v4743 = vadd.f32 0.0, %v4742
  %v4744 = vpop.f32.mrb[0].mxu0
  %4745 = vmatprep.mubr.f32.mxu0 0.0
  %4746 = vmatmul.mubr.f32.gmra.mrb[0].mxu0 %v4376
  %v4747 = vpop.f32.mrb[0].mxu0
  %v4748 = vadd.f32 0.0, %v4747
  %v4749 = vpop.f32.mrb[0].mxu0
  %4750 = vmatprep.mubr.f32.mxu0 0.0
  %4751 = vmatmul.mubr.f32.gmra.mrb[0].mxu0 %v4379
  %v4752 = vpop.f32.mrb[0].mxu0
  %v4753 = vadd.f32 0.0, %v4752
  %v4754 = vpop.f32.mrb[0].mxu0
  %4755 = vmatprep.mubr.f32.mxu0 0.0
  %4756 = vmatmul.mubr.f32.gmra.mrb[0].mxu0 %v4382
  %v4757 = vpop.f32.mrb[0].mxu0
  %v4758 = vadd.f32 0.0, %v4757
  %v4759 = vpop.f32.mrb[0].mxu0
  %4760 = vmatprep.mubr.f32.mxu0 0.0
  %4761 = vmatmul.mubr.f32.gmra.mrb[0].mxu0 %v4385
  %v4762 = vpop.f32.mrb[0].mxu0
  %v4763 = vadd.f32 0.0, %v4762
  %v4764 = vpop.f32.mrb[0].mxu0
  %4765 = vmatprep.mubr.f32.mxu0 0.0
  %4766 = vmatmul.mubr.f32.gmra.mrb[0].mxu0 %v4388
  %v4767 = vpop.f32.mrb[0].mxu0
  %v4768 = vadd.f32 0.0, %v4767
  %v4769 = vpop.f32.mrb[0].mxu0
  %4770 = vmatprep.mubr.f32.mxu0 0.0
  %4771 = vmatmul.mubr.f32.gmra.mrb[0].mxu0 %v4391
  %v4772 = vpop.f32.mrb[0].mxu0
  %v4773 = vadd.f32 0.0, %v4772
  %v4774 = vpop.f32.mrb[0].mxu0
  %4775 = vmatprep.mubr.f32.mxu0 0.0
  %4776 = vmatmul.mubr.f32.gmra.mrb[0].mxu0 %v4394
  %v4777 = vpop.f32.mrb[0].mxu0
  %v4778 = vadd.f32 0.0, %v4777
  %v4779 = vpop.f32.mrb[0].mxu0
  %4780 = vdwg.mxu0
  %v4781 = vadd.f32 %v4074, %v4463
  %v4782 = vadd.f32 %v4075, %v4468
  %v4783 = vadd.f32 %v4076, %v4473
  %v4784 = vadd.f32 %v4077, %v4478
  %v4785 = vadd.f32 %v4078, %v4483
  %v4786 = vadd.f32 %v4079, %v4488
  %v4787 = vadd.f32 %v4080, %v4493
  %v4788 = vadd.f32 %v4081, %v4498
  %v4789 = vadd.f32 %v4082, %v4503
  %v4790 = vadd.f32 %v4083, %v4508
  %v4791 = vadd.f32 %v4084, %v4513
  %v4792 = vadd.f32 %v4085, %v4518
  %v4793 = vadd.f32 %v4086, %v4523
  %v4794 = vadd.f32 %v4087, %v4528
  %v4795 = vadd.f32 %v4088, %v4533
  %v4796 = vadd.f32 %v4089, %v4538
  %v4797 = vadd.f32 %v4090, %v4543
  %v4798 = vadd.f32 %v4091, %v4548
  %v4799 = vadd.f32 %v4092, %v4553
  %v4800 = vadd.f32 %v4093, %v4558
  %v4801 = vadd.f32 %v4094, %v4563
  %v4802 = vadd.f32 %v4095, %v4568
  %v4803 = vadd.f32 %v4096, %v4573
  %v4804 = vadd.f32 %v4097, %v4578
  %v4805 = vadd.f32 %v4098, %v4583
  %v4806 = vadd.f32 %v4099, %v4588
  %v4807 = vadd.f32 %v4100, %v4593
  %v4808 = vadd.f32 %v4101, %v4598
  %v4809 = vadd.f32 %v4102, %v4603
  %v4810 = vadd.f32 %v4103, %v4608
  %v4811 = vadd.f32 %v4104, %v4613
  %v4812 = vadd.f32 %v4105, %v4618
  %v4813 = vadd.f32 %v4106, %v4623
  %v4814 = vadd.f32 %v4107, %v4628
  %v4815 = vadd.f32 %v4108, %v4633
  %v4816 = vadd.f32 %v4109, %v4638
  %v4817 = vadd.f32 %v4110, %v4643
  %v4818 = vadd.f32 %v4111, %v4648
  %v4819 = vadd.f32 %v4112, %v4653
  %v4820 = vadd.f32 %v4113, %v4658
  %v4821 = vadd.f32 %v4114, %v4663
  %v4822 = vadd.f32 %v4115, %v4668
  %v4823 = vadd.f32 %v4116, %v4673
  %v4824 = vadd.f32 %v4117, %v4678
  %v4825 = vadd.f32 %v4118, %v4683
  %v4826 = vadd.f32 %v4119, %v4688
  %v4827 = vadd.f32 %v4120, %v4693
  %v4828 = vadd.f32 %v4121, %v4698
  %v4829 = vadd.f32 %v4122, %v4703
  %v4830 = vadd.f32 %v4123, %v4708
  %v4831 = vadd.f32 %v4124, %v4713
  %v4832 = vadd.f32 %v4125, %v4718
  %v4833 = vadd.f32 %v4126, %v4723
  %v4834 = vadd.f32 %v4127, %v4728
  %v4835 = vadd.f32 %v4128, %v4733
  %v4836 = vadd.f32 %v4129, %v4738
  %v4837 = vadd.f32 %v4130, %v4743
  %v4838 = vadd.f32 %v4131, %v4748
  %v4839 = vadd.f32 %v4132, %v4753
  %v4840 = vadd.f32 %v4133, %v4758
  %v4841 = vadd.f32 %v4134, %v4763
  %v4842 = vadd.f32 %v4135, %v4768
  %v4843 = vadd.f32 %v4136, %v4773
  %v4844 = vadd.f32 %v4137, %v4778
  %v4845 = vld [vmem:[%s0 + $0x28] sm:$0xff]
  %v4846 = vld [vmem:[%s0 + $0x30] sm:$0xff]
  %v4847 = vld [vmem:[%s0 + $0x38] sm:$0xff]
  %v4848 = vld [vmem:[%s0 + $0x40] sm:$0xff]
  %v4849 = vld [vmem:[%s0 + $0x48] sm:$0xff]
  %v4850 = vld [vmem:[%s0 + $0x50] sm:$0xff]
  %v4851 = vld [vmem:[%s0 + $0x58] sm:$0xff]
  %v4852 = vld [vmem:[%s0 + $0x60] sm:$0xff]
  %v4853 = vld [vmem:[%s0 + $0x68] sm:$0xff]
  %v4854 = vld [vmem:[%s0 + $0x70] sm:$0xff]
  %v4855 = vld [vmem:[%s0 + $0x78] sm:$0xff]
  %v4856 = vld [vmem:[%s0 + $0x80] sm:$0xff]
  %v4857 = vld [vmem:[%s0 + $0x88] sm:$0xff]
  %v4858 = vld [vmem:[%s0 + $0x90] sm:$0xff]
  %v4859 = vld [vmem:[%s0 + $0x98] sm:$0xff]
  %v4860 = vld [vmem:[%s0 + $0xa0] sm:$0xff]
  %v4861 = vld [vmem:[%s0 + $0xa8] sm:$0xff]
  %v4862 = vld [vmem:[%s0 + $0xb0] sm:$0xff]
  %v4863 = vld [vmem:[%s0 + $0xb8] sm:$0xff]
  %v4864 = vld [vmem:[%s0 + $0xc0] sm:$0xff]
  %v4865 = vld [vmem:[%s0 + $0xc8] sm:$0xff]
  %v4866 = vld [vmem:[%s0 + $0xd0] sm:$0xff]
  %v4867 = vld [vmem:[%s0 + $0xd8] sm:$0xff]
  %v4868 = vld [vmem:[%s0 + $0xe0] sm:$0xff]
  %v4869 = vld [vmem:[%s0 + $0xe8] sm:$0xff]
  %v4870 = vld [vmem:[%s0 + $0xf0] sm:$0xff]
  %v4871 = vld [vmem:[%s0 + $0xf8] sm:$0xff]
  %v4872 = vld [vmem:[%s0 + $0x100] sm:$0xff]
  %v4873 = vld [vmem:[%s0 + $0x108] sm:$0xff]
  %v4874 = vld [vmem:[%s0 + $0x110] sm:$0xff]
  %v4875 = vld [vmem:[%s0 + $0x118] sm:$0xff]
  %v4876 = vld [vmem:[%s0 + $0x120] sm:$0xff]
  %v4877 = vld [vmem:[%s0 + $0x128] sm:$0xff]
  %v4878 = vld [vmem:[%s0 + $0x130] sm:$0xff]
  %v4879 = vld [vmem:[%s0 + $0x138] sm:$0xff]
  %v4880 = vld [vmem:[%s0 + $0x140] sm:$0xff]
  %v4881 = vld [vmem:[%s0 + $0x148] sm:$0xff]
  %v4882 = vld [vmem:[%s0 + $0x150] sm:$0xff]
  %v4883 = vld [vmem:[%s0 + $0x158] sm:$0xff]
  %v4884 = vld [vmem:[%s0 + $0x160] sm:$0xff]
  %v4885 = vld [vmem:[%s0 + $0x168] sm:$0xff]
  %v4886 = vld [vmem:[%s0 + $0x170] sm:$0xff]
  %v4887 = vld [vmem:[%s0 + $0x178] sm:$0xff]
  %v4888 = vld [vmem:[%s0 + $0x180] sm:$0xff]
  %v4889 = vld [vmem:[%s0 + $0x188] sm:$0xff]
  %v4890 = vld [vmem:[%s0 + $0x190] sm:$0xff]
  %v4891 = vld [vmem:[%s0 + $0x198] sm:$0xff]
  %v4892 = vld [vmem:[%s0 + $0x1a0] sm:$0xff]
  %v4893 = vld [vmem:[%s0 + $0x1a8] sm:$0xff]
  %v4894 = vld [vmem:[%s0 + $0x1b0] sm:$0xff]
  %v4895 = vld [vmem:[%s0 + $0x1b8] sm:$0xff]
  %v4896 = vld [vmem:[%s0 + $0x1c0] sm:$0xff]
  %v4897 = vld [vmem:[%s0 + $0x1c8] sm:$0xff]
  %v4898 = vld [vmem:[%s0 + $0x1d0] sm:$0xff]
  %v4899 = vld [vmem:[%s0 + $0x1d8] sm:$0xff]
  %v4900 = vld [vmem:[%s0 + $0x1e0] sm:$0xff]
  %v4901 = vld [vmem:[%s0 + $0x1e8] sm:$0xff]
  %v4902 = vld [vmem:[%s0 + $0x1f0] sm:$0xff]
  %v4903 = vld [vmem:[%s0 + $0x1f8] sm:$0xff]
  %v4904 = vld [vmem:[%s0 + $0x200] sm:$0xff]
  %v4905 = vld [vmem:[%s0 + $0x208] sm:$0xff]
  %v4906 = vld [vmem:[%s0 + $0x210] sm:$0xff]
  %v4907 = vld [vmem:[%s0 + $0x218] sm:$0xff]
  %v4908 = vld [vmem:[%s0 + $0x220] sm:$0xff]
  %v4909 = vld [vmem:[%s2 + $0x70] sm:$0xff]
  %v4910 = vld [vmem:[%s2 + $0x78] sm:$0xff]
  %v4912 = vsel %vm155, %v4845, 0
  %v4915 = vsel %vm155, %v4846, 0
  %v4918 = vsel %vm155, %v4847, 0
  %v4921 = vsel %vm155, %v4848, 0
  %v4924 = vsel %vm155, %v4849, 0
  %v4927 = vsel %vm155, %v4850, 0
  %v4930 = vsel %vm155, %v4851, 0
  %v4933 = vsel %vm155, %v4852, 0
  %v4936 = vsel %vm155, %v4853, 0
  %v4939 = vsel %vm155, %v4854, 0
  %v4942 = vsel %vm155, %v4855, 0
  %v4945 = vsel %vm155, %v4856, 0
  %v4948 = vsel %vm155, %v4857, 0
  %v4951 = vsel %vm155, %v4858, 0
  %v4954 = vsel %vm155, %v4859, 0
  %v4957 = vsel %vm155, %v4860, 0
  %v4960 = vsel %vm155, %v4861, 0
  %v4963 = vsel %vm155, %v4862, 0
  %v4966 = vsel %vm155, %v4863, 0
  %v4969 = vsel %vm155, %v4864, 0
  %v4972 = vsel %vm155, %v4865, 0
  %v4975 = vsel %vm155, %v4866, 0
  %v4978 = vsel %vm155, %v4867, 0
  %v4981 = vsel %vm155, %v4868, 0
  %v4984 = vsel %vm155, %v4869, 0
  %v4987 = vsel %vm155, %v4870, 0
  %v4990 = vsel %vm155, %v4871, 0
  %v4993 = vsel %vm155, %v4872, 0
  %v4996 = vsel %vm155, %v4873, 0
  %v4999 = vsel %vm155, %v4874, 0
  %v5002 = vsel %vm155, %v4875, 0
  %v5005 = vsel %vm155, %v4876, 0
  %v5008 = vsel %vm155, %v4877, 0
  %v5011 = vsel %vm155, %v4878, 0
  %v5014 = vsel %vm155, %v4879, 0
  %v5017 = vsel %vm155, %v4880, 0
  %v5020 = vsel %vm155, %v4881, 0
  %v5023 = vsel %vm155, %v4882, 0
  %v5026 = vsel %vm155, %v4883, 0
  %v5029 = vsel %vm155, %v4884, 0
  %v5032 = vsel %vm155, %v4885, 0
  %v5035 = vsel %vm155, %v4886, 0
  %v5038 = vsel %vm155, %v4887, 0
  %v5041 = vsel %vm155, %v4888, 0
  %v5044 = vsel %vm155, %v4889, 0
  %v5047 = vsel %vm155, %v4890, 0
  %v5050 = vsel %vm155, %v4891, 0
  %v5053 = vsel %vm155, %v4892, 0
  %v5056 = vsel %vm155, %v4893, 0
  %v5059 = vsel %vm155, %v4894, 0
  %v5062 = vsel %vm155, %v4895, 0
  %v5065 = vsel %vm155, %v4896, 0
  %v5068 = vsel %vm155, %v4897, 0
  %v5071 = vsel %vm155, %v4898, 0
  %v5074 = vsel %vm155, %v4899, 0
  %v5077 = vsel %vm155, %v4900, 0
  %v5080 = vsel %vm155, %v4901, 0
  %v5083 = vsel %vm155, %v4902, 0
  %v5086 = vsel %vm155, %v4903, 0
  %v5089 = vsel %vm155, %v4904, 0
  %v5092 = vsel %vm155, %v4905, 0
  %v5095 = vsel %vm155, %v4906, 0
  %v5098 = vsel %vm155, %v4907, 0
  %v5101 = vsel %vm155, %v4908, 0
  %5103 = vmatprep.subr.mxu0 0.0
  %5104 = vmatpush1.msra.mxu0 %v4909
  %5105 = vmatprep.subr.mxu0 0.0
  %5106 = vmatpush1.msra.mxu0 %v4910
  %5107 = vmatprep.subr.mxu0 0.0
  %5108 = vmatpush1.msra.mxu0 0.0
  %5109 = vmatprep.subr.mxu0 0.0
  %5110 = vmatpush1.msra.mxu0 0.0
  %5111 = vmatprep.subr.mxu0 0.0
  %5112 = vmatpush1.msra.mxu0 0.0
  %5113 = vmatprep.subr.mxu0 0.0
  %5114 = vmatpush1.msra.mxu0 0.0
  %5115 = vmatprep.subr.mxu0 0.0
  %5116 = vmatpush1.msra.mxu0 0.0
  %5117 = vmatprep.subr.mxu0 0.0
  %5118 = vmatpush1.msra.mxu0 0.0
  %5119 = vmatprep.subr.mxu0 0.0
  %5120 = vmatpush1.msra.mxu0 0.0
  %5121 = vmatprep.subr.mxu0 0.0
  %5122 = vmatpush1.msra.mxu0 0.0
  %5123 = vmatprep.subr.mxu0 0.0
  %5124 = vmatpush1.msra.mxu0 0.0
  %5125 = vmatprep.subr.mxu0 0.0
  %5126 = vmatpush1.msra.mxu0 0.0
  %5127 = vmatprep.subr.mxu0 0.0
  %5128 = vmatpush1.msra.mxu0 0.0
  %5129 = vmatprep.subr.mxu0 0.0
  %5130 = vmatpush1.msra.mxu0 0.0
  %5131 = vmatprep.subr.mxu0 0.0
  %5132 = vmatpush1.msra.mxu0 0.0
  %5133 = vmatprep.subr.mxu0 0.0
  %5134 = vmatpush1.msra.mxu0 0.0
  %5135 = vmatprep.subr.mxu0 0.0
  %5136 = vmatpush1.msra.mxu0 0.0
  %5137 = vmatprep.subr.mxu0 0.0
  %5138 = vmatpush1.msra.mxu0 0.0
  %5139 = vmatprep.subr.mxu0 0.0
  %5140 = vmatpush1.msra.mxu0 0.0
  %5141 = vmatprep.subr.mxu0 0.0
  %5142 = vmatpush1.msra.mxu0 0.0
  %5143 = vmatprep.subr.mxu0 0.0
  %5144 = vmatpush1.msra.mxu0 0.0
  %5145 = vmatprep.subr.mxu0 0.0
  %5146 = vmatpush1.msra.mxu0 0.0
  %5147 = vmatprep.subr.mxu0 0.0
  %5148 = vmatpush1.msra.mxu0 0.0
  %5149 = vmatprep.subr.mxu0 0.0
  %5150 = vmatpush1.msra.mxu0 0.0
  %5151 = vmatprep.subr.mxu0 0.0
  %5152 = vmatpush1.msra.mxu0 0.0
  %5153 = vmatprep.subr.mxu0 0.0
  %5154 = vmatpush1.msra.mxu0 0.0
  %5155 = vmatprep.subr.mxu0 0.0
  %5156 = vmatpush1.msra.mxu0 0.0
  %5157 = vmatprep.subr.mxu0 0.0
  %5158 = vmatpush1.msra.mxu0 0.0
  %5159 = vmatprep.subr.mxu0 0.0
  %5160 = vmatpush1.msra.mxu0 0.0
  %5161 = vmatprep.subr.mxu0 0.0
  %5162 = vmatpush1.msra.mxu0 0.0
  %5163 = vmatprep.subr.mxu0 0.0
  %5164 = vmatpush1.msra.mxu0 0.0
  %5165 = vmatprep.subr.mxu0 0.0
  %5166 = vmatpush1.msra.mxu0 0.0
  %5167 = vmatprep.mubr.f32.mxu0 0.0
  %5168 = vmatmul.mubr.f32.gmra.mrb[0].mxu0 %v4912
  %v5169 = vpop.f32.mrb[0].mxu0
  %v5170 = vadd.f32 0.0, %v5169
  %v5171 = vpop.f32.mrb[0].mxu0
  %5172 = vmatprep.mubr.f32.mxu0 0.0
  %5173 = vmatmul.mubr.f32.gmra.mrb[0].mxu0 %v4915
  %v5174 = vpop.f32.mrb[0].mxu0
  %v5175 = vadd.f32 0.0, %v5174
  %v5176 = vpop.f32.mrb[0].mxu0
  %5177 = vmatprep.mubr.f32.mxu0 0.0
  %5178 = vmatmul.mubr.f32.gmra.mrb[0].mxu0 %v4918
  %v5179 = vpop.f32.mrb[0].mxu0
  %v5180 = vadd.f32 0.0, %v5179
  %v5181 = vpop.f32.mrb[0].mxu0
  %5182 = vmatprep.mubr.f32.mxu0 0.0
  %5183 = vmatmul.mubr.f32.gmra.mrb[0].mxu0 %v4921
  %v5184 = vpop.f32.mrb[0].mxu0
  %v5185 = vadd.f32 0.0, %v5184
  %v5186 = vpop.f32.mrb[0].mxu0
  %5187 = vmatprep.mubr.f32.mxu0 0.0
  %5188 = vmatmul.mubr.f32.gmra.mrb[0].mxu0 %v4924
  %v5189 = vpop.f32.mrb[0].mxu0
  %v5190 = vadd.f32 0.0, %v5189
  %v5191 = vpop.f32.mrb[0].mxu0
  %5192 = vmatprep.mubr.f32.mxu0 0.0
  %5193 = vmatmul.mubr.f32.gmra.mrb[0].mxu0 %v4927
  %v5194 = vpop.f32.mrb[0].mxu0
  %v5195 = vadd.f32 0.0, %v5194
  %v5196 = vpop.f32.mrb[0].mxu0
  %5197 = vmatprep.mubr.f32.mxu0 0.0
  %5198 = vmatmul.mubr.f32.gmra.mrb[0].mxu0 %v4930
  %v5199 = vpop.f32.mrb[0].mxu0
  %v5200 = vadd.f32 0.0, %v5199
  %v5201 = vpop.f32.mrb[0].mxu0
  %5202 = vmatprep.mubr.f32.mxu0 0.0
  %5203 = vmatmul.mubr.f32.gmra.mrb[0].mxu0 %v4933
  %v5204 = vpop.f32.mrb[0].mxu0
  %v5205 = vadd.f32 0.0, %v5204
  %v5206 = vpop.f32.mrb[0].mxu0
  %5207 = vmatprep.mubr.f32.mxu0 0.0
  %5208 = vmatmul.mubr.f32.gmra.mrb[0].mxu0 %v4936
  %v5209 = vpop.f32.mrb[0].mxu0
  %v5210 = vadd.f32 0.0, %v5209
  %v5211 = vpop.f32.mrb[0].mxu0
  %5212 = vmatprep.mubr.f32.mxu0 0.0
  %5213 = vmatmul.mubr.f32.gmra.mrb[0].mxu0 %v4939
  %v5214 = vpop.f32.mrb[0].mxu0
  %v5215 = vadd.f32 0.0, %v5214
  %v5216 = vpop.f32.mrb[0].mxu0
  %5217 = vmatprep.mubr.f32.mxu0 0.0
  %5218 = vmatmul.mubr.f32.gmra.mrb[0].mxu0 %v4942
  %v5219 = vpop.f32.mrb[0].mxu0
  %v5220 = vadd.f32 0.0, %v5219
  %v5221 = vpop.f32.mrb[0].mxu0
  %5222 = vmatprep.mubr.f32.mxu0 0.0
  %5223 = vmatmul.mubr.f32.gmra.mrb[0].mxu0 %v4945
  %v5224 = vpop.f32.mrb[0].mxu0
  %v5225 = vadd.f32 0.0, %v5224
  %v5226 = vpop.f32.mrb[0].mxu0
  %5227 = vmatprep.mubr.f32.mxu0 0.0
  %5228 = vmatmul.mubr.f32.gmra.mrb[0].mxu0 %v4948
  %v5229 = vpop.f32.mrb[0].mxu0
  %v5230 = vadd.f32 0.0, %v5229
  %v5231 = vpop.f32.mrb[0].mxu0
  %5232 = vmatprep.mubr.f32.mxu0 0.0
  %5233 = vmatmul.mubr.f32.gmra.mrb[0].mxu0 %v4951
  %v5234 = vpop.f32.mrb[0].mxu0
  %v5235 = vadd.f32 0.0, %v5234
  %v5236 = vpop.f32.mrb[0].mxu0
  %5237 = vmatprep.mubr.f32.mxu0 0.0
  %5238 = vmatmul.mubr.f32.gmra.mrb[0].mxu0 %v4954
  %v5239 = vpop.f32.mrb[0].mxu0
  %v5240 = vadd.f32 0.0, %v5239
  %v5241 = vpop.f32.mrb[0].mxu0
  %5242 = vmatprep.mubr.f32.mxu0 0.0
  %5243 = vmatmul.mubr.f32.gmra.mrb[0].mxu0 %v4957
  %v5244 = vpop.f32.mrb[0].mxu0
  %v5245 = vadd.f32 0.0, %v5244
  %v5246 = vpop.f32.mrb[0].mxu0
  %5247 = vmatprep.mubr.f32.mxu0 0.0
  %5248 = vmatmul.mubr.f32.gmra.mrb[0].mxu0 %v4960
  %v5249 = vpop.f32.mrb[0].mxu0
  %v5250 = vadd.f32 0.0, %v5249
  %v5251 = vpop.f32.mrb[0].mxu0
  %5252 = vmatprep.mubr.f32.mxu0 0.0
  %5253 = vmatmul.mubr.f32.gmra.mrb[0].mxu0 %v4963
  %v5254 = vpop.f32.mrb[0].mxu0
  %v5255 = vadd.f32 0.0, %v5254
  %v5256 = vpop.f32.mrb[0].mxu0
  %5257 = vmatprep.mubr.f32.mxu0 0.0
  %5258 = vmatmul.mubr.f32.gmra.mrb[0].mxu0 %v4966
  %v5259 = vpop.f32.mrb[0].mxu0
  %v5260 = vadd.f32 0.0, %v5259
  %v5261 = vpop.f32.mrb[0].mxu0
  %5262 = vmatprep.mubr.f32.mxu0 0.0
  %5263 = vmatmul.mubr.f32.gmra.mrb[0].mxu0 %v4969
  %v5264 = vpop.f32.mrb[0].mxu0
  %v5265 = vadd.f32 0.0, %v5264
  %v5266 = vpop.f32.mrb[0].mxu0
  %5267 = vmatprep.mubr.f32.mxu0 0.0
  %5268 = vmatmul.mubr.f32.gmra.mrb[0].mxu0 %v4972
  %v5269 = vpop.f32.mrb[0].mxu0
  %v5270 = vadd.f32 0.0, %v5269
  %v5271 = vpop.f32.mrb[0].mxu0
  %5272 = vmatprep.mubr.f32.mxu0 0.0
  %5273 = vmatmul.mubr.f32.gmra.mrb[0].mxu0 %v4975
  %v5274 = vpop.f32.mrb[0].mxu0
  %v5275 = vadd.f32 0.0, %v5274
  %v5276 = vpop.f32.mrb[0].mxu0
  %5277 = vmatprep.mubr.f32.mxu0 0.0
  %5278 = vmatmul.mubr.f32.gmra.mrb[0].mxu0 %v4978
  %v5279 = vpop.f32.mrb[0].mxu0
  %v5280 = vadd.f32 0.0, %v5279
  %v5281 = vpop.f32.mrb[0].mxu0
  %5282 = vmatprep.mubr.f32.mxu0 0.0
  %5283 = vmatmul.mubr.f32.gmra.mrb[0].mxu0 %v4981
  %v5284 = vpop.f32.mrb[0].mxu0
  %v5285 = vadd.f32 0.0, %v5284
  %v5286 = vpop.f32.mrb[0].mxu0
  %5287 = vmatprep.mubr.f32.mxu0 0.0
  %5288 = vmatmul.mubr.f32.gmra.mrb[0].mxu0 %v4984
  %v5289 = vpop.f32.mrb[0].mxu0
  %v5290 = vadd.f32 0.0, %v5289
  %v5291 = vpop.f32.mrb[0].mxu0
  %5292 = vmatprep.mubr.f32.mxu0 0.0
  %5293 = vmatmul.mubr.f32.gmra.mrb[0].mxu0 %v4987
  %v5294 = vpop.f32.mrb[0].mxu0
  %v5295 = vadd.f32 0.0, %v5294
  %v5296 = vpop.f32.mrb[0].mxu0
  %5297 = vmatprep.mubr.f32.mxu0 0.0
  %5298 = vmatmul.mubr.f32.gmra.mrb[0].mxu0 %v4990
  %v5299 = vpop.f32.mrb[0].mxu0
  %v5300 = vadd.f32 0.0, %v5299
  %v5301 = vpop.f32.mrb[0].mxu0
  %5302 = vmatprep.mubr.f32.mxu0 0.0
  %5303 = vmatmul.mubr.f32.gmra.mrb[0].mxu0 %v4993
  %v5304 = vpop.f32.mrb[0].mxu0
  %v5305 = vadd.f32 0.0, %v5304
  %v5306 = vpop.f32.mrb[0].mxu0
  %5307 = vmatprep.mubr.f32.mxu0 0.0
  %5308 = vmatmul.mubr.f32.gmra.mrb[0].mxu0 %v4996
  %v5309 = vpop.f32.mrb[0].mxu0
  %v5310 = vadd.f32 0.0, %v5309
  %v5311 = vpop.f32.mrb[0].mxu0
  %5312 = vmatprep.mubr.f32.mxu0 0.0
  %5313 = vmatmul.mubr.f32.gmra.mrb[0].mxu0 %v4999
  %v5314 = vpop.f32.mrb[0].mxu0
  %v5315 = vadd.f32 0.0, %v5314
  %v5316 = vpop.f32.mrb[0].mxu0
  %5317 = vmatprep.mubr.f32.mxu0 0.0
  %5318 = vmatmul.mubr.f32.gmra.mrb[0].mxu0 %v5002
  %v5319 = vpop.f32.mrb[0].mxu0
  %v5320 = vadd.f32 0.0, %v5319
  %v5321 = vpop.f32.mrb[0].mxu0
  %5322 = vmatprep.mubr.f32.mxu0 0.0
  %5323 = vmatmul.mubr.f32.gmra.mrb[0].mxu0 %v5005
  %v5324 = vpop.f32.mrb[0].mxu0
  %v5325 = vadd.f32 0.0, %v5324
  %v5326 = vpop.f32.mrb[0].mxu0
  %5327 = vmatprep.mubr.f32.mxu0 0.0
  %5328 = vmatmul.mubr.f32.gmra.mrb[0].mxu0 %v5008
  %v5329 = vpop.f32.mrb[0].mxu0
  %v5330 = vadd.f32 0.0, %v5329
  %v5331 = vpop.f32.mrb[0].mxu0
  %5332 = vmatprep.mubr.f32.mxu0 0.0
  %5333 = vmatmul.mubr.f32.gmra.mrb[0].mxu0 %v5011
  %v5334 = vpop.f32.mrb[0].mxu0
  %v5335 = vadd.f32 0.0, %v5334
  %v5336 = vpop.f32.mrb[0].mxu0
  %5337 = vmatprep.mubr.f32.mxu0 0.0
  %5338 = vmatmul.mubr.f32.gmra.mrb[0].mxu0 %v5014
  %v5339 = vpop.f32.mrb[0].mxu0
  %v5340 = vadd.f32 0.0, %v5339
  %v5341 = vpop.f32.mrb[0].mxu0
  %5342 = vmatprep.mubr.f32.mxu0 0.0
  %5343 = vmatmul.mubr.f32.gmra.mrb[0].mxu0 %v5017
  %v5344 = vpop.f32.mrb[0].mxu0
  %v5345 = vadd.f32 0.0, %v5344
  %v5346 = vpop.f32.mrb[0].mxu0
  %5347 = vmatprep.mubr.f32.mxu0 0.0
  %5348 = vmatmul.mubr.f32.gmra.mrb[0].mxu0 %v5020
  %v5349 = vpop.f32.mrb[0].mxu0
  %v5350 = vadd.f32 0.0, %v5349
  %v5351 = vpop.f32.mrb[0].mxu0
  %5352 = vmatprep.mubr.f32.mxu0 0.0
  %5353 = vmatmul.mubr.f32.gmra.mrb[0].mxu0 %v5023
  %v5354 = vpop.f32.mrb[0].mxu0
  %v5355 = vadd.f32 0.0, %v5354
  %v5356 = vpop.f32.mrb[0].mxu0
  %5357 = vmatprep.mubr.f32.mxu0 0.0
  %5358 = vmatmul.mubr.f32.gmra.mrb[0].mxu0 %v5026
  %v5359 = vpop.f32.mrb[0].mxu0
  %v5360 = vadd.f32 0.0, %v5359
  %v5361 = vpop.f32.mrb[0].mxu0
  %5362 = vmatprep.mubr.f32.mxu0 0.0
  %5363 = vmatmul.mubr.f32.gmra.mrb[0].mxu0 %v5029
  %v5364 = vpop.f32.mrb[0].mxu0
  %v5365 = vadd.f32 0.0, %v5364
  %v5366 = vpop.f32.mrb[0].mxu0
  %5367 = vmatprep.mubr.f32.mxu0 0.0
  %5368 = vmatmul.mubr.f32.gmra.mrb[0].mxu0 %v5032
  %v5369 = vpop.f32.mrb[0].mxu0
  %v5370 = vadd.f32 0.0, %v5369
  %v5371 = vpop.f32.mrb[0].mxu0
  %5372 = vmatprep.mubr.f32.mxu0 0.0
  %5373 = vmatmul.mubr.f32.gmra.mrb[0].mxu0 %v5035
  %v5374 = vpop.f32.mrb[0].mxu0
  %v5375 = vadd.f32 0.0, %v5374
  %v5376 = vpop.f32.mrb[0].mxu0
  %5377 = vmatprep.mubr.f32.mxu0 0.0
  %5378 = vmatmul.mubr.f32.gmra.mrb[0].mxu0 %v5038
  %v5379 = vpop.f32.mrb[0].mxu0
  %v5380 = vadd.f32 0.0, %v5379
  %v5381 = vpop.f32.mrb[0].mxu0
  %5382 = vmatprep.mubr.f32.mxu0 0.0
  %5383 = vmatmul.mubr.f32.gmra.mrb[0].mxu0 %v5041
  %v5384 = vpop.f32.mrb[0].mxu0
  %v5385 = vadd.f32 0.0, %v5384
  %v5386 = vpop.f32.mrb[0].mxu0
  %5387 = vmatprep.mubr.f32.mxu0 0.0
  %5388 = vmatmul.mubr.f32.gmra.mrb[0].mxu0 %v5044
  %v5389 = vpop.f32.mrb[0].mxu0
  %v5390 = vadd.f32 0.0, %v5389
  %v5391 = vpop.f32.mrb[0].mxu0
  %5392 = vmatprep.mubr.f32.mxu0 0.0
  %5393 = vmatmul.mubr.f32.gmra.mrb[0].mxu0 %v5047
  %v5394 = vpop.f32.mrb[0].mxu0
  %v5395 = vadd.f32 0.0, %v5394
  %v5396 = vpop.f32.mrb[0].mxu0
  %5397 = vmatprep.mubr.f32.mxu0 0.0
  %5398 = vmatmul.mubr.f32.gmra.mrb[0].mxu0 %v5050
  %v5399 = vpop.f32.mrb[0].mxu0
  %v5400 = vadd.f32 0.0, %v5399
  %v5401 = vpop.f32.mrb[0].mxu0
  %5402 = vmatprep.mubr.f32.mxu0 0.0
  %5403 = vmatmul.mubr.f32.gmra.mrb[0].mxu0 %v5053
  %v5404 = vpop.f32.mrb[0].mxu0
  %v5405 = vadd.f32 0.0, %v5404
  %v5406 = vpop.f32.mrb[0].mxu0
  %5407 = vmatprep.mubr.f32.mxu0 0.0
  %5408 = vmatmul.mubr.f32.gmra.mrb[0].mxu0 %v5056
  %v5409 = vpop.f32.mrb[0].mxu0
  %v5410 = vadd.f32 0.0, %v5409
  %v5411 = vpop.f32.mrb[0].mxu0
  %5412 = vmatprep.mubr.f32.mxu0 0.0
  %5413 = vmatmul.mubr.f32.gmra.mrb[0].mxu0 %v5059
  %v5414 = vpop.f32.mrb[0].mxu0
  %v5415 = vadd.f32 0.0, %v5414
  %v5416 = vpop.f32.mrb[0].mxu0
  %5417 = vmatprep.mubr.f32.mxu0 0.0
  %5418 = vmatmul.mubr.f32.gmra.mrb[0].mxu0 %v5062
  %v5419 = vpop.f32.mrb[0].mxu0
  %v5420 = vadd.f32 0.0, %v5419
  %v5421 = vpop.f32.mrb[0].mxu0
  %5422 = vmatprep.mubr.f32.mxu0 0.0
  %5423 = vmatmul.mubr.f32.gmra.mrb[0].mxu0 %v5065
  %v5424 = vpop.f32.mrb[0].mxu0
  %v5425 = vadd.f32 0.0, %v5424
  %v5426 = vpop.f32.mrb[0].mxu0
  %5427 = vmatprep.mubr.f32.mxu0 0.0
  %5428 = vmatmul.mubr.f32.gmra.mrb[0].mxu0 %v5068
  %v5429 = vpop.f32.mrb[0].mxu0
  %v5430 = vadd.f32 0.0, %v5429
  %v5431 = vpop.f32.mrb[0].mxu0
  %5432 = vmatprep.mubr.f32.mxu0 0.0
  %5433 = vmatmul.mubr.f32.gmra.mrb[0].mxu0 %v5071
  %v5434 = vpop.f32.mrb[0].mxu0
  %v5435 = vadd.f32 0.0, %v5434
  %v5436 = vpop.f32.mrb[0].mxu0
  %5437 = vmatprep.mubr.f32.mxu0 0.0
  %5438 = vmatmul.mubr.f32.gmra.mrb[0].mxu0 %v5074
  %v5439 = vpop.f32.mrb[0].mxu0
  %v5440 = vadd.f32 0.0, %v5439
  %v5441 = vpop.f32.mrb[0].mxu0
  %5442 = vmatprep.mubr.f32.mxu0 0.0
  %5443 = vmatmul.mubr.f32.gmra.mrb[0].mxu0 %v5077
  %v5444 = vpop.f32.mrb[0].mxu0
  %v5445 = vadd.f32 0.0, %v5444
  %v5446 = vpop.f32.mrb[0].mxu0
  %5447 = vmatprep.mubr.f32.mxu0 0.0
  %5448 = vmatmul.mubr.f32.gmra.mrb[0].mxu0 %v5080
  %v5449 = vpop.f32.mrb[0].mxu0
  %v5450 = vadd.f32 0.0, %v5449
  %v5451 = vpop.f32.mrb[0].mxu0
  %5452 = vmatprep.mubr.f32.mxu0 0.0
  %5453 = vmatmul.mubr.f32.gmra.mrb[0].mxu0 %v5083
  %v5454 = vpop.f32.mrb[0].mxu0
  %v5455 = vadd.f32 0.0, %v5454
  %v5456 = vpop.f32.mrb[0].mxu0
  %5457 = vmatprep.mubr.f32.mxu0 0.0
  %5458 = vmatmul.mubr.f32.gmra.mrb[0].mxu0 %v5086
  %v5459 = vpop.f32.mrb[0].mxu0
  %v5460 = vadd.f32 0.0, %v5459
  %v5461 = vpop.f32.mrb[0].mxu0
  %5462 = vmatprep.mubr.f32.mxu0 0.0
  %5463 = vmatmul.mubr.f32.gmra.mrb[0].mxu0 %v5089
  %v5464 = vpop.f32.mrb[0].mxu0
  %v5465 = vadd.f32 0.0, %v5464
  %v5466 = vpop.f32.mrb[0].mxu0
  %5467 = vmatprep.mubr.f32.mxu0 0.0
  %5468 = vmatmul.mubr.f32.gmra.mrb[0].mxu0 %v5092
  %v5469 = vpop.f32.mrb[0].mxu0
  %v5470 = vadd.f32 0.0, %v5469
  %v5471 = vpop.f32.mrb[0].mxu0
  %5472 = vmatprep.mubr.f32.mxu0 0.0
  %5473 = vmatmul.mubr.f32.gmra.mrb[0].mxu0 %v5095
  %v5474 = vpop.f32.mrb[0].mxu0
  %v5475 = vadd.f32 0.0, %v5474
  %v5476 = vpop.f32.mrb[0].mxu0
  %5477 = vmatprep.mubr.f32.mxu0 0.0
  %5478 = vmatmul.mubr.f32.gmra.mrb[0].mxu0 %v5098
  %v5479 = vpop.f32.mrb[0].mxu0
  %v5480 = vadd.f32 0.0, %v5479
  %v5481 = vpop.f32.mrb[0].mxu0
  %5482 = vmatprep.mubr.f32.mxu0 0.0
  %5483 = vmatmul.mubr.f32.gmra.mrb[0].mxu0 %v5101
  %v5484 = vpop.f32.mrb[0].mxu0
  %v5485 = vadd.f32 0.0, %v5484
  %v5486 = vpop.f32.mrb[0].mxu0
  %5487 = vdwg.mxu0
  %v5488 = vadd.f32 %v4781, %v5170
  %v5489 = vadd.f32 %v4782, %v5175
  %v5490 = vadd.f32 %v4783, %v5180
  %v5491 = vadd.f32 %v4784, %v5185
  %v5492 = vadd.f32 %v4785, %v5190
  %v5493 = vadd.f32 %v4786, %v5195
  %v5494 = vadd.f32 %v4787, %v5200
  %v5495 = vadd.f32 %v4788, %v5205
  %v5496 = vadd.f32 %v4789, %v5210
  %v5497 = vadd.f32 %v4790, %v5215
  %v5498 = vadd.f32 %v4791, %v5220
  %v5499 = vadd.f32 %v4792, %v5225
  %v5500 = vadd.f32 %v4793, %v5230
  %v5501 = vadd.f32 %v4794, %v5235
  %v5502 = vadd.f32 %v4795, %v5240
  %v5503 = vadd.f32 %v4796, %v5245
  %v5504 = vadd.f32 %v4797, %v5250
  %v5505 = vadd.f32 %v4798, %v5255
  %v5506 = vadd.f32 %v4799, %v5260
  %v5507 = vadd.f32 %v4800, %v5265
  %v5508 = vadd.f32 %v4801, %v5270
  %v5509 = vadd.f32 %v4802, %v5275
  %v5510 = vadd.f32 %v4803, %v5280
  %v5511 = vadd.f32 %v4804, %v5285
  %v5512 = vadd.f32 %v4805, %v5290
  %v5513 = vadd.f32 %v4806, %v5295
  %v5514 = vadd.f32 %v4807, %v5300
  %v5515 = vadd.f32 %v4808, %v5305
  %v5516 = vadd.f32 %v4809, %v5310
  %v5517 = vadd.f32 %v4810, %v5315
  %v5518 = vadd.f32 %v4811, %v5320
  %v5519 = vadd.f32 %v4812, %v5325
  %v5520 = vadd.f32 %v4813, %v5330
  %v5521 = vadd.f32 %v4814, %v5335
  %v5522 = vadd.f32 %v4815, %v5340
  %v5523 = vadd.f32 %v4816, %v5345
  %v5524 = vadd.f32 %v4817, %v5350
  %v5525 = vadd.f32 %v4818, %v5355
  %v5526 = vadd.f32 %v4819, %v5360
  %v5527 = vadd.f32 %v4820, %v5365
  %v5528 = vadd.f32 %v4821, %v5370
  %v5529 = vadd.f32 %v4822, %v5375
  %v5530 = vadd.f32 %v4823, %v5380
  %v5531 = vadd.f32 %v4824, %v5385
  %v5532 = vadd.f32 %v4825, %v5390
  %v5533 = vadd.f32 %v4826, %v5395
  %v5534 = vadd.f32 %v4827, %v5400
  %v5535 = vadd.f32 %v4828, %v5405
  %v5536 = vadd.f32 %v4829, %v5410
  %v5537 = vadd.f32 %v4830, %v5415
  %v5538 = vadd.f32 %v4831, %v5420
  %v5539 = vadd.f32 %v4832, %v5425
  %v5540 = vadd.f32 %v4833, %v5430
  %v5541 = vadd.f32 %v4834, %v5435
  %v5542 = vadd.f32 %v4835, %v5440
  %v5543 = vadd.f32 %v4836, %v5445
  %v5544 = vadd.f32 %v4837, %v5450
  %v5545 = vadd.f32 %v4838, %v5455
  %v5546 = vadd.f32 %v4839, %v5460
  %v5547 = vadd.f32 %v4840, %v5465
  %v5548 = vadd.f32 %v4841, %v5470
  %v5549 = vadd.f32 %v4842, %v5475
  %v5550 = vadd.f32 %v4843, %v5480
  %v5551 = vadd.f32 %v4844, %v5485
  %v5552 = vld [vmem:[%s0 + $0x29] sm:$0xff]
  %v5553 = vld [vmem:[%s0 + $0x31] sm:$0xff]
  %v5554 = vld [vmem:[%s0 + $0x39] sm:$0xff]
  %v5555 = vld [vmem:[%s0 + $0x41] sm:$0xff]
  %v5556 = vld [vmem:[%s0 + $0x49] sm:$0xff]
  %v5557 = vld [vmem:[%s0 + $0x51] sm:$0xff]
  %v5558 = vld [vmem:[%s0 + $0x59] sm:$0xff]
  %v5559 = vld [vmem:[%s0 + $0x61] sm:$0xff]
  %v5560 = vld [vmem:[%s0 + $0x69] sm:$0xff]
  %v5561 = vld [vmem:[%s0 + $0x71] sm:$0xff]
  %v5562 = vld [vmem:[%s0 + $0x79] sm:$0xff]
  %v5563 = vld [vmem:[%s0 + $0x81] sm:$0xff]
  %v5564 = vld [vmem:[%s0 + $0x89] sm:$0xff]
  %v5565 = vld [vmem:[%s0 + $0x91] sm:$0xff]
  %v5566 = vld [vmem:[%s0 + $0x99] sm:$0xff]
  %v5567 = vld [vmem:[%s0 + $0xa1] sm:$0xff]
  %v5568 = vld [vmem:[%s0 + $0xa9] sm:$0xff]
  %v5569 = vld [vmem:[%s0 + $0xb1] sm:$0xff]
  %v5570 = vld [vmem:[%s0 + $0xb9] sm:$0xff]
  %v5571 = vld [vmem:[%s0 + $0xc1] sm:$0xff]
  %v5572 = vld [vmem:[%s0 + $0xc9] sm:$0xff]
  %v5573 = vld [vmem:[%s0 + $0xd1] sm:$0xff]
  %v5574 = vld [vmem:[%s0 + $0xd9] sm:$0xff]
  %v5575 = vld [vmem:[%s0 + $0xe1] sm:$0xff]
  %v5576 = vld [vmem:[%s0 + $0xe9] sm:$0xff]
  %v5577 = vld [vmem:[%s0 + $0xf1] sm:$0xff]
  %v5578 = vld [vmem:[%s0 + $0xf9] sm:$0xff]
  %v5579 = vld [vmem:[%s0 + $0x101] sm:$0xff]
  %v5580 = vld [vmem:[%s0 + $0x109] sm:$0xff]
  %v5581 = vld [vmem:[%s0 + $0x111] sm:$0xff]
  %v5582 = vld [vmem:[%s0 + $0x119] sm:$0xff]
  %v5583 = vld [vmem:[%s0 + $0x121] sm:$0xff]
  %v5584 = vld [vmem:[%s0 + $0x129] sm:$0xff]
  %v5585 = vld [vmem:[%s0 + $0x131] sm:$0xff]
  %v5586 = vld [vmem:[%s0 + $0x139] sm:$0xff]
  %v5587 = vld [vmem:[%s0 + $0x141] sm:$0xff]
  %v5588 = vld [vmem:[%s0 + $0x149] sm:$0xff]
  %v5589 = vld [vmem:[%s0 + $0x151] sm:$0xff]
  %v5590 = vld [vmem:[%s0 + $0x159] sm:$0xff]
  %v5591 = vld [vmem:[%s0 + $0x161] sm:$0xff]
  %v5592 = vld [vmem:[%s0 + $0x169] sm:$0xff]
  %v5593 = vld [vmem:[%s0 + $0x171] sm:$0xff]
  %v5594 = vld [vmem:[%s0 + $0x179] sm:$0xff]
  %v5595 = vld [vmem:[%s0 + $0x181] sm:$0xff]
  %v5596 = vld [vmem:[%s0 + $0x189] sm:$0xff]
  %v5597 = vld [vmem:[%s0 + $0x191] sm:$0xff]
  %v5598 = vld [vmem:[%s0 + $0x199] sm:$0xff]
  %v5599 = vld [vmem:[%s0 + $0x1a1] sm:$0xff]
  %v5600 = vld [vmem:[%s0 + $0x1a9] sm:$0xff]
  %v5601 = vld [vmem:[%s0 + $0x1b1] sm:$0xff]
  %v5602 = vld [vmem:[%s0 + $0x1b9] sm:$0xff]
  %v5603 = vld [vmem:[%s0 + $0x1c1] sm:$0xff]
  %v5604 = vld [vmem:[%s0 + $0x1c9] sm:$0xff]
  %v5605 = vld [vmem:[%s0 + $0x1d1] sm:$0xff]
  %v5606 = vld [vmem:[%s0 + $0x1d9] sm:$0xff]
  %v5607 = vld [vmem:[%s0 + $0x1e1] sm:$0xff]
  %v5608 = vld [vmem:[%s0 + $0x1e9] sm:$0xff]
  %v5609 = vld [vmem:[%s0 + $0x1f1] sm:$0xff]
  %v5610 = vld [vmem:[%s0 + $0x1f9] sm:$0xff]
  %v5611 = vld [vmem:[%s0 + $0x201] sm:$0xff]
  %v5612 = vld [vmem:[%s0 + $0x209] sm:$0xff]
  %v5613 = vld [vmem:[%s0 + $0x211] sm:$0xff]
  %v5614 = vld [vmem:[%s0 + $0x219] sm:$0xff]
  %v5615 = vld [vmem:[%s0 + $0x221] sm:$0xff]
  %v5616 = vld [vmem:[%s2 + $0x80] sm:$0xff]
  %v5617 = vld [vmem:[%s2 + $0x88] sm:$0xff]
  %v5619 = vsel %vm155, %v5552, 0
  %v5622 = vsel %vm155, %v5553, 0
  %v5625 = vsel %vm155, %v5554, 0
  %v5628 = vsel %vm155, %v5555, 0
  %v5631 = vsel %vm155, %v5556, 0
  %v5634 = vsel %vm155, %v5557, 0
  %v5637 = vsel %vm155, %v5558, 0
  %v5640 = vsel %vm155, %v5559, 0
  %v5643 = vsel %vm155, %v5560, 0
  %v5646 = vsel %vm155, %v5561, 0
  %v5649 = vsel %vm155, %v5562, 0
  %v5652 = vsel %vm155, %v5563, 0
  %v5655 = vsel %vm155, %v5564, 0
  %v5658 = vsel %vm155, %v5565, 0
  %v5661 = vsel %vm155, %v5566, 0
  %v5664 = vsel %vm155, %v5567, 0
  %v5667 = vsel %vm155, %v5568, 0
  %v5670 = vsel %vm155, %v5569, 0
  %v5673 = vsel %vm155, %v5570, 0
  %v5676 = vsel %vm155, %v5571, 0
  %v5679 = vsel %vm155, %v5572, 0
  %v5682 = vsel %vm155, %v5573, 0
  %v5685 = vsel %vm155, %v5574, 0
  %v5688 = vsel %vm155, %v5575, 0
  %v5691 = vsel %vm155, %v5576, 0
  %v5694 = vsel %vm155, %v5577, 0
  %v5697 = vsel %vm155, %v5578, 0
  %v5700 = vsel %vm155, %v5579, 0
  %v5703 = vsel %vm155, %v5580, 0
  %v5706 = vsel %vm155, %v5581, 0
  %v5709 = vsel %vm155, %v5582, 0
  %v5712 = vsel %vm155, %v5583, 0
  %v5715 = vsel %vm155, %v5584, 0
  %v5718 = vsel %vm155, %v5585, 0
  %v5721 = vsel %vm155, %v5586, 0
  %v5724 = vsel %vm155, %v5587, 0
  %v5727 = vsel %vm155, %v5588, 0
  %v5730 = vsel %vm155, %v5589, 0
  %v5733 = vsel %vm155, %v5590, 0
  %v5736 = vsel %vm155, %v5591, 0
  %v5739 = vsel %vm155, %v5592, 0
  %v5742 = vsel %vm155, %v5593, 0
  %v5745 = vsel %vm155, %v5594, 0
  %v5748 = vsel %vm155, %v5595, 0
  %v5751 = vsel %vm155, %v5596, 0
  %v5754 = vsel %vm155, %v5597, 0
  %v5757 = vsel %vm155, %v5598, 0
  %v5760 = vsel %vm155, %v5599, 0
  %v5763 = vsel %vm155, %v5600, 0
  %v5766 = vsel %vm155, %v5601, 0
  %v5769 = vsel %vm155, %v5602, 0
  %v5772 = vsel %vm155, %v5603, 0
  %v5775 = vsel %vm155, %v5604, 0
  %v5778 = vsel %vm155, %v5605, 0
  %v5781 = vsel %vm155, %v5606, 0
  %v5784 = vsel %vm155, %v5607, 0
  %v5787 = vsel %vm155, %v5608, 0
  %v5790 = vsel %vm155, %v5609, 0
  %v5793 = vsel %vm155, %v5610, 0
  %v5796 = vsel %vm155, %v5611, 0
  %v5799 = vsel %vm155, %v5612, 0
  %v5802 = vsel %vm155, %v5613, 0
  %v5805 = vsel %vm155, %v5614, 0
  %v5808 = vsel %vm155, %v5615, 0
  %5810 = vmatprep.subr.mxu0 0.0
  %5811 = vmatpush1.msra.mxu0 %v5616
  %5812 = vmatprep.subr.mxu0 0.0
  %5813 = vmatpush1.msra.mxu0 %v5617
  %5814 = vmatprep.subr.mxu0 0.0
  %5815 = vmatpush1.msra.mxu0 0.0
  %5816 = vmatprep.subr.mxu0 0.0
  %5817 = vmatpush1.msra.mxu0 0.0
  %5818 = vmatprep.subr.mxu0 0.0
  %5819 = vmatpush1.msra.mxu0 0.0
  %5820 = vmatprep.subr.mxu0 0.0
  %5821 = vmatpush1.msra.mxu0 0.0
  %5822 = vmatprep.subr.mxu0 0.0
  %5823 = vmatpush1.msra.mxu0 0.0
  %5824 = vmatprep.subr.mxu0 0.0
  %5825 = vmatpush1.msra.mxu0 0.0
  %5826 = vmatprep.subr.mxu0 0.0
  %5827 = vmatpush1.msra.mxu0 0.0
  %5828 = vmatprep.subr.mxu0 0.0
  %5829 = vmatpush1.msra.mxu0 0.0
  %5830 = vmatprep.subr.mxu0 0.0
  %5831 = vmatpush1.msra.mxu0 0.0
  %5832 = vmatprep.subr.mxu0 0.0
  %5833 = vmatpush1.msra.mxu0 0.0
  %5834 = vmatprep.subr.mxu0 0.0
  %5835 = vmatpush1.msra.mxu0 0.0
  %5836 = vmatprep.subr.mxu0 0.0
  %5837 = vmatpush1.msra.mxu0 0.0
  %5838 = vmatprep.subr.mxu0 0.0
  %5839 = vmatpush1.msra.mxu0 0.0
  %5840 = vmatprep.subr.mxu0 0.0
  %5841 = vmatpush1.msra.mxu0 0.0
  %5842 = vmatprep.subr.mxu0 0.0
  %5843 = vmatpush1.msra.mxu0 0.0
  %5844 = vmatprep.subr.mxu0 0.0
  %5845 = vmatpush1.msra.mxu0 0.0
  %5846 = vmatprep.subr.mxu0 0.0
  %5847 = vmatpush1.msra.mxu0 0.0
  %5848 = vmatprep.subr.mxu0 0.0
  %5849 = vmatpush1.msra.mxu0 0.0
  %5850 = vmatprep.subr.mxu0 0.0
  %5851 = vmatpush1.msra.mxu0 0.0
  %5852 = vmatprep.subr.mxu0 0.0
  %5853 = vmatpush1.msra.mxu0 0.0
  %5854 = vmatprep.subr.mxu0 0.0
  %5855 = vmatpush1.msra.mxu0 0.0
  %5856 = vmatprep.subr.mxu0 0.0
  %5857 = vmatpush1.msra.mxu0 0.0
  %5858 = vmatprep.subr.mxu0 0.0
  %5859 = vmatpush1.msra.mxu0 0.0
  %5860 = vmatprep.subr.mxu0 0.0
  %5861 = vmatpush1.msra.mxu0 0.0
  %5862 = vmatprep.subr.mxu0 0.0
  %5863 = vmatpush1.msra.mxu0 0.0
  %5864 = vmatprep.subr.mxu0 0.0
  %5865 = vmatpush1.msra.mxu0 0.0
  %5866 = vmatprep.subr.mxu0 0.0
  %5867 = vmatpush1.msra.mxu0 0.0
  %5868 = vmatprep.subr.mxu0 0.0
  %5869 = vmatpush1.msra.mxu0 0.0
  %5870 = vmatprep.subr.mxu0 0.0
  %5871 = vmatpush1.msra.mxu0 0.0
  %5872 = vmatprep.subr.mxu0 0.0
  %5873 = vmatpush1.msra.mxu0 0.0
  %5874 = vmatprep.mubr.f32.mxu0 0.0
  %5875 = vmatmul.mubr.f32.gmra.mrb[0].mxu0 %v5619
  %v5876 = vpop.f32.mrb[0].mxu0
  %v5877 = vadd.f32 0.0, %v5876
  %v5878 = vpop.f32.mrb[0].mxu0
  %5879 = vmatprep.mubr.f32.mxu0 0.0
  %5880 = vmatmul.mubr.f32.gmra.mrb[0].mxu0 %v5622
  %v5881 = vpop.f32.mrb[0].mxu0
  %v5882 = vadd.f32 0.0, %v5881
  %v5883 = vpop.f32.mrb[0].mxu0
  %5884 = vmatprep.mubr.f32.mxu0 0.0
  %5885 = vmatmul.mubr.f32.gmra.mrb[0].mxu0 %v5625
  %v5886 = vpop.f32.mrb[0].mxu0
  %v5887 = vadd.f32 0.0, %v5886
  %v5888 = vpop.f32.mrb[0].mxu0
  %5889 = vmatprep.mubr.f32.mxu0 0.0
  %5890 = vmatmul.mubr.f32.gmra.mrb[0].mxu0 %v5628
  %v5891 = vpop.f32.mrb[0].mxu0
  %v5892 = vadd.f32 0.0, %v5891
  %v5893 = vpop.f32.mrb[0].mxu0
  %5894 = vmatprep.mubr.f32.mxu0 0.0
  %5895 = vmatmul.mubr.f32.gmra.mrb[0].mxu0 %v5631
  %v5896 = vpop.f32.mrb[0].mxu0
  %v5897 = vadd.f32 0.0, %v5896
  %v5898 = vpop.f32.mrb[0].mxu0
  %5899 = vmatprep.mubr.f32.mxu0 0.0
  %5900 = vmatmul.mubr.f32.gmra.mrb[0].mxu0 %v5634
  %v5901 = vpop.f32.mrb[0].mxu0
  %v5902 = vadd.f32 0.0, %v5901
  %v5903 = vpop.f32.mrb[0].mxu0
  %5904 = vmatprep.mubr.f32.mxu0 0.0
  %5905 = vmatmul.mubr.f32.gmra.mrb[0].mxu0 %v5637
  %v5906 = vpop.f32.mrb[0].mxu0
  %v5907 = vadd.f32 0.0, %v5906
  %v5908 = vpop.f32.mrb[0].mxu0
  %5909 = vmatprep.mubr.f32.mxu0 0.0
  %5910 = vmatmul.mubr.f32.gmra.mrb[0].mxu0 %v5640
  %v5911 = vpop.f32.mrb[0].mxu0
  %v5912 = vadd.f32 0.0, %v5911
  %v5913 = vpop.f32.mrb[0].mxu0
  %5914 = vmatprep.mubr.f32.mxu0 0.0
  %5915 = vmatmul.mubr.f32.gmra.mrb[0].mxu0 %v5643
  %v5916 = vpop.f32.mrb[0].mxu0
  %v5917 = vadd.f32 0.0, %v5916
  %v5918 = vpop.f32.mrb[0].mxu0
  %5919 = vmatprep.mubr.f32.mxu0 0.0
  %5920 = vmatmul.mubr.f32.gmra.mrb[0].mxu0 %v5646
  %v5921 = vpop.f32.mrb[0].mxu0
  %v5922 = vadd.f32 0.0, %v5921
  %v5923 = vpop.f32.mrb[0].mxu0
  %5924 = vmatprep.mubr.f32.mxu0 0.0
  %5925 = vmatmul.mubr.f32.gmra.mrb[0].mxu0 %v5649
  %v5926 = vpop.f32.mrb[0].mxu0
  %v5927 = vadd.f32 0.0, %v5926
  %v5928 = vpop.f32.mrb[0].mxu0
  %5929 = vmatprep.mubr.f32.mxu0 0.0
  %5930 = vmatmul.mubr.f32.gmra.mrb[0].mxu0 %v5652
  %v5931 = vpop.f32.mrb[0].mxu0
  %v5932 = vadd.f32 0.0, %v5931
  %v5933 = vpop.f32.mrb[0].mxu0
  %5934 = vmatprep.mubr.f32.mxu0 0.0
  %5935 = vmatmul.mubr.f32.gmra.mrb[0].mxu0 %v5655
  %v5936 = vpop.f32.mrb[0].mxu0
  %v5937 = vadd.f32 0.0, %v5936
  %v5938 = vpop.f32.mrb[0].mxu0
  %5939 = vmatprep.mubr.f32.mxu0 0.0
  %5940 = vmatmul.mubr.f32.gmra.mrb[0].mxu0 %v5658
  %v5941 = vpop.f32.mrb[0].mxu0
  %v5942 = vadd.f32 0.0, %v5941
  %v5943 = vpop.f32.mrb[0].mxu0
  %5944 = vmatprep.mubr.f32.mxu0 0.0
  %5945 = vmatmul.mubr.f32.gmra.mrb[0].mxu0 %v5661
  %v5946 = vpop.f32.mrb[0].mxu0
  %v5947 = vadd.f32 0.0, %v5946
  %v5948 = vpop.f32.mrb[0].mxu0
  %5949 = vmatprep.mubr.f32.mxu0 0.0
  %5950 = vmatmul.mubr.f32.gmra.mrb[0].mxu0 %v5664
  %v5951 = vpop.f32.mrb[0].mxu0
  %v5952 = vadd.f32 0.0, %v5951
  %v5953 = vpop.f32.mrb[0].mxu0
  %5954 = vmatprep.mubr.f32.mxu0 0.0
  %5955 = vmatmul.mubr.f32.gmra.mrb[0].mxu0 %v5667
  %v5956 = vpop.f32.mrb[0].mxu0
  %v5957 = vadd.f32 0.0, %v5956
  %v5958 = vpop.f32.mrb[0].mxu0
  %5959 = vmatprep.mubr.f32.mxu0 0.0
  %5960 = vmatmul.mubr.f32.gmra.mrb[0].mxu0 %v5670
  %v5961 = vpop.f32.mrb[0].mxu0
  %v5962 = vadd.f32 0.0, %v5961
  %v5963 = vpop.f32.mrb[0].mxu0
  %5964 = vmatprep.mubr.f32.mxu0 0.0
  %5965 = vmatmul.mubr.f32.gmra.mrb[0].mxu0 %v5673
  %v5966 = vpop.f32.mrb[0].mxu0
  %v5967 = vadd.f32 0.0, %v5966
  %v5968 = vpop.f32.mrb[0].mxu0
  %5969 = vmatprep.mubr.f32.mxu0 0.0
  %5970 = vmatmul.mubr.f32.gmra.mrb[0].mxu0 %v5676
  %v5971 = vpop.f32.mrb[0].mxu0
  %v5972 = vadd.f32 0.0, %v5971
  %v5973 = vpop.f32.mrb[0].mxu0
  %5974 = vmatprep.mubr.f32.mxu0 0.0
  %5975 = vmatmul.mubr.f32.gmra.mrb[0].mxu0 %v5679
  %v5976 = vpop.f32.mrb[0].mxu0
  %v5977 = vadd.f32 0.0, %v5976
  %v5978 = vpop.f32.mrb[0].mxu0
  %5979 = vmatprep.mubr.f32.mxu0 0.0
  %5980 = vmatmul.mubr.f32.gmra.mrb[0].mxu0 %v5682
  %v5981 = vpop.f32.mrb[0].mxu0
  %v5982 = vadd.f32 0.0, %v5981
  %v5983 = vpop.f32.mrb[0].mxu0
  %5984 = vmatprep.mubr.f32.mxu0 0.0
  %5985 = vmatmul.mubr.f32.gmra.mrb[0].mxu0 %v5685
  %v5986 = vpop.f32.mrb[0].mxu0
  %v5987 = vadd.f32 0.0, %v5986
  %v5988 = vpop.f32.mrb[0].mxu0
  %5989 = vmatprep.mubr.f32.mxu0 0.0
  %5990 = vmatmul.mubr.f32.gmra.mrb[0].mxu0 %v5688
  %v5991 = vpop.f32.mrb[0].mxu0
  %v5992 = vadd.f32 0.0, %v5991
  %v5993 = vpop.f32.mrb[0].mxu0
  %5994 = vmatprep.mubr.f32.mxu0 0.0
  %5995 = vmatmul.mubr.f32.gmra.mrb[0].mxu0 %v5691
  %v5996 = vpop.f32.mrb[0].mxu0
  %v5997 = vadd.f32 0.0, %v5996
  %v5998 = vpop.f32.mrb[0].mxu0
  %5999 = vmatprep.mubr.f32.mxu0 0.0
  %6000 = vmatmul.mubr.f32.gmra.mrb[0].mxu0 %v5694
  %v6001 = vpop.f32.mrb[0].mxu0
  %v6002 = vadd.f32 0.0, %v6001
  %v6003 = vpop.f32.mrb[0].mxu0
  %6004 = vmatprep.mubr.f32.mxu0 0.0
  %6005 = vmatmul.mubr.f32.gmra.mrb[0].mxu0 %v5697
  %v6006 = vpop.f32.mrb[0].mxu0
  %v6007 = vadd.f32 0.0, %v6006
  %v6008 = vpop.f32.mrb[0].mxu0
  %6009 = vmatprep.mubr.f32.mxu0 0.0
  %6010 = vmatmul.mubr.f32.gmra.mrb[0].mxu0 %v5700
  %v6011 = vpop.f32.mrb[0].mxu0
  %v6012 = vadd.f32 0.0, %v6011
  %v6013 = vpop.f32.mrb[0].mxu0
  %6014 = vmatprep.mubr.f32.mxu0 0.0
  %6015 = vmatmul.mubr.f32.gmra.mrb[0].mxu0 %v5703
  %v6016 = vpop.f32.mrb[0].mxu0
  %v6017 = vadd.f32 0.0, %v6016
  %v6018 = vpop.f32.mrb[0].mxu0
  %6019 = vmatprep.mubr.f32.mxu0 0.0
  %6020 = vmatmul.mubr.f32.gmra.mrb[0].mxu0 %v5706
  %v6021 = vpop.f32.mrb[0].mxu0
  %v6022 = vadd.f32 0.0, %v6021
  %v6023 = vpop.f32.mrb[0].mxu0
  %6024 = vmatprep.mubr.f32.mxu0 0.0
  %6025 = vmatmul.mubr.f32.gmra.mrb[0].mxu0 %v5709
  %v6026 = vpop.f32.mrb[0].mxu0
  %v6027 = vadd.f32 0.0, %v6026
  %v6028 = vpop.f32.mrb[0].mxu0
  %6029 = vmatprep.mubr.f32.mxu0 0.0
  %6030 = vmatmul.mubr.f32.gmra.mrb[0].mxu0 %v5712
  %v6031 = vpop.f32.mrb[0].mxu0
  %v6032 = vadd.f32 0.0, %v6031
  %v6033 = vpop.f32.mrb[0].mxu0
  %6034 = vmatprep.mubr.f32.mxu0 0.0
  %6035 = vmatmul.mubr.f32.gmra.mrb[0].mxu0 %v5715
  %v6036 = vpop.f32.mrb[0].mxu0
  %v6037 = vadd.f32 0.0, %v6036
  %v6038 = vpop.f32.mrb[0].mxu0
  %6039 = vmatprep.mubr.f32.mxu0 0.0
  %6040 = vmatmul.mubr.f32.gmra.mrb[0].mxu0 %v5718
  %v6041 = vpop.f32.mrb[0].mxu0
  %v6042 = vadd.f32 0.0, %v6041
  %v6043 = vpop.f32.mrb[0].mxu0
  %6044 = vmatprep.mubr.f32.mxu0 0.0
  %6045 = vmatmul.mubr.f32.gmra.mrb[0].mxu0 %v5721
  %v6046 = vpop.f32.mrb[0].mxu0
  %v6047 = vadd.f32 0.0, %v6046
  %v6048 = vpop.f32.mrb[0].mxu0
  %6049 = vmatprep.mubr.f32.mxu0 0.0
  %6050 = vmatmul.mubr.f32.gmra.mrb[0].mxu0 %v5724
  %v6051 = vpop.f32.mrb[0].mxu0
  %v6052 = vadd.f32 0.0, %v6051
  %v6053 = vpop.f32.mrb[0].mxu0
  %6054 = vmatprep.mubr.f32.mxu0 0.0
  %6055 = vmatmul.mubr.f32.gmra.mrb[0].mxu0 %v5727
  %v6056 = vpop.f32.mrb[0].mxu0
  %v6057 = vadd.f32 0.0, %v6056
  %v6058 = vpop.f32.mrb[0].mxu0
  %6059 = vmatprep.mubr.f32.mxu0 0.0
  %6060 = vmatmul.mubr.f32.gmra.mrb[0].mxu0 %v5730
  %v6061 = vpop.f32.mrb[0].mxu0
  %v6062 = vadd.f32 0.0, %v6061
  %v6063 = vpop.f32.mrb[0].mxu0
  %6064 = vmatprep.mubr.f32.mxu0 0.0
  %6065 = vmatmul.mubr.f32.gmra.mrb[0].mxu0 %v5733
  %v6066 = vpop.f32.mrb[0].mxu0
  %v6067 = vadd.f32 0.0, %v6066
  %v6068 = vpop.f32.mrb[0].mxu0
  %6069 = vmatprep.mubr.f32.mxu0 0.0
  %6070 = vmatmul.mubr.f32.gmra.mrb[0].mxu0 %v5736
  %v6071 = vpop.f32.mrb[0].mxu0
  %v6072 = vadd.f32 0.0, %v6071
  %v6073 = vpop.f32.mrb[0].mxu0
  %6074 = vmatprep.mubr.f32.mxu0 0.0
  %6075 = vmatmul.mubr.f32.gmra.mrb[0].mxu0 %v5739
  %v6076 = vpop.f32.mrb[0].mxu0
  %v6077 = vadd.f32 0.0, %v6076
  %v6078 = vpop.f32.mrb[0].mxu0
  %6079 = vmatprep.mubr.f32.mxu0 0.0
  %6080 = vmatmul.mubr.f32.gmra.mrb[0].mxu0 %v5742
  %v6081 = vpop.f32.mrb[0].mxu0
  %v6082 = vadd.f32 0.0, %v6081
  %v6083 = vpop.f32.mrb[0].mxu0
  %6084 = vmatprep.mubr.f32.mxu0 0.0
  %6085 = vmatmul.mubr.f32.gmra.mrb[0].mxu0 %v5745
  %v6086 = vpop.f32.mrb[0].mxu0
  %v6087 = vadd.f32 0.0, %v6086
  %v6088 = vpop.f32.mrb[0].mxu0
  %6089 = vmatprep.mubr.f32.mxu0 0.0
  %6090 = vmatmul.mubr.f32.gmra.mrb[0].mxu0 %v5748
  %v6091 = vpop.f32.mrb[0].mxu0
  %v6092 = vadd.f32 0.0, %v6091
  %v6093 = vpop.f32.mrb[0].mxu0
  %6094 = vmatprep.mubr.f32.mxu0 0.0
  %6095 = vmatmul.mubr.f32.gmra.mrb[0].mxu0 %v5751
  %v6096 = vpop.f32.mrb[0].mxu0
  %v6097 = vadd.f32 0.0, %v6096
  %v6098 = vpop.f32.mrb[0].mxu0
  %6099 = vmatprep.mubr.f32.mxu0 0.0
  %6100 = vmatmul.mubr.f32.gmra.mrb[0].mxu0 %v5754
  %v6101 = vpop.f32.mrb[0].mxu0
  %v6102 = vadd.f32 0.0, %v6101
  %v6103 = vpop.f32.mrb[0].mxu0
  %6104 = vmatprep.mubr.f32.mxu0 0.0
  %6105 = vmatmul.mubr.f32.gmra.mrb[0].mxu0 %v5757
  %v6106 = vpop.f32.mrb[0].mxu0
  %v6107 = vadd.f32 0.0, %v6106
  %v6108 = vpop.f32.mrb[0].mxu0
  %6109 = vmatprep.mubr.f32.mxu0 0.0
  %6110 = vmatmul.mubr.f32.gmra.mrb[0].mxu0 %v5760
  %v6111 = vpop.f32.mrb[0].mxu0
  %v6112 = vadd.f32 0.0, %v6111
  %v6113 = vpop.f32.mrb[0].mxu0
  %6114 = vmatprep.mubr.f32.mxu0 0.0
  %6115 = vmatmul.mubr.f32.gmra.mrb[0].mxu0 %v5763
  %v6116 = vpop.f32.mrb[0].mxu0
  %v6117 = vadd.f32 0.0, %v6116
  %v6118 = vpop.f32.mrb[0].mxu0
  %6119 = vmatprep.mubr.f32.mxu0 0.0
  %6120 = vmatmul.mubr.f32.gmra.mrb[0].mxu0 %v5766
  %v6121 = vpop.f32.mrb[0].mxu0
  %v6122 = vadd.f32 0.0, %v6121
  %v6123 = vpop.f32.mrb[0].mxu0
  %6124 = vmatprep.mubr.f32.mxu0 0.0
  %6125 = vmatmul.mubr.f32.gmra.mrb[0].mxu0 %v5769
  %v6126 = vpop.f32.mrb[0].mxu0
  %v6127 = vadd.f32 0.0, %v6126
  %v6128 = vpop.f32.mrb[0].mxu0
  %6129 = vmatprep.mubr.f32.mxu0 0.0
  %6130 = vmatmul.mubr.f32.gmra.mrb[0].mxu0 %v5772
  %v6131 = vpop.f32.mrb[0].mxu0
  %v6132 = vadd.f32 0.0, %v6131
  %v6133 = vpop.f32.mrb[0].mxu0
  %6134 = vmatprep.mubr.f32.mxu0 0.0
  %6135 = vmatmul.mubr.f32.gmra.mrb[0].mxu0 %v5775
  %v6136 = vpop.f32.mrb[0].mxu0
  %v6137 = vadd.f32 0.0, %v6136
  %v6138 = vpop.f32.mrb[0].mxu0
  %6139 = vmatprep.mubr.f32.mxu0 0.0
  %6140 = vmatmul.mubr.f32.gmra.mrb[0].mxu0 %v5778
  %v6141 = vpop.f32.mrb[0].mxu0
  %v6142 = vadd.f32 0.0, %v6141
  %v6143 = vpop.f32.mrb[0].mxu0
  %6144 = vmatprep.mubr.f32.mxu0 0.0
  %6145 = vmatmul.mubr.f32.gmra.mrb[0].mxu0 %v5781
  %v6146 = vpop.f32.mrb[0].mxu0
  %v6147 = vadd.f32 0.0, %v6146
  %v6148 = vpop.f32.mrb[0].mxu0
  %6149 = vmatprep.mubr.f32.mxu0 0.0
  %6150 = vmatmul.mubr.f32.gmra.mrb[0].mxu0 %v5784
  %v6151 = vpop.f32.mrb[0].mxu0
  %v6152 = vadd.f32 0.0, %v6151
  %v6153 = vpop.f32.mrb[0].mxu0
  %6154 = vmatprep.mubr.f32.mxu0 0.0
  %6155 = vmatmul.mubr.f32.gmra.mrb[0].mxu0 %v5787
  %v6156 = vpop.f32.mrb[0].mxu0
  %v6157 = vadd.f32 0.0, %v6156
  %v6158 = vpop.f32.mrb[0].mxu0
  %6159 = vmatprep.mubr.f32.mxu0 0.0
  %6160 = vmatmul.mubr.f32.gmra.mrb[0].mxu0 %v5790
  %v6161 = vpop.f32.mrb[0].mxu0
  %v6162 = vadd.f32 0.0, %v6161
  %v6163 = vpop.f32.mrb[0].mxu0
  %6164 = vmatprep.mubr.f32.mxu0 0.0
  %6165 = vmatmul.mubr.f32.gmra.mrb[0].mxu0 %v5793
  %v6166 = vpop.f32.mrb[0].mxu0
  %v6167 = vadd.f32 0.0, %v6166
  %v6168 = vpop.f32.mrb[0].mxu0
  %6169 = vmatprep.mubr.f32.mxu0 0.0
  %6170 = vmatmul.mubr.f32.gmra.mrb[0].mxu0 %v5796
  %v6171 = vpop.f32.mrb[0].mxu0
  %v6172 = vadd.f32 0.0, %v6171
  %v6173 = vpop.f32.mrb[0].mxu0
  %6174 = vmatprep.mubr.f32.mxu0 0.0
  %6175 = vmatmul.mubr.f32.gmra.mrb[0].mxu0 %v5799
  %v6176 = vpop.f32.mrb[0].mxu0
  %v6177 = vadd.f32 0.0, %v6176
  %v6178 = vpop.f32.mrb[0].mxu0
  %6179 = vmatprep.mubr.f32.mxu0 0.0
  %6180 = vmatmul.mubr.f32.gmra.mrb[0].mxu0 %v5802
  %v6181 = vpop.f32.mrb[0].mxu0
  %v6182 = vadd.f32 0.0, %v6181
  %v6183 = vpop.f32.mrb[0].mxu0
  %6184 = vmatprep.mubr.f32.mxu0 0.0
  %6185 = vmatmul.mubr.f32.gmra.mrb[0].mxu0 %v5805
  %v6186 = vpop.f32.mrb[0].mxu0
  %v6187 = vadd.f32 0.0, %v6186
  %v6188 = vpop.f32.mrb[0].mxu0
  %6189 = vmatprep.mubr.f32.mxu0 0.0
  %6190 = vmatmul.mubr.f32.gmra.mrb[0].mxu0 %v5808
  %v6191 = vpop.f32.mrb[0].mxu0
  %v6192 = vadd.f32 0.0, %v6191
  %v6193 = vpop.f32.mrb[0].mxu0
  %6194 = vdwg.mxu0
  %v6195 = vadd.f32 %v5488, %v5877
  %v6196 = vadd.f32 %v5489, %v5882
  %v6197 = vadd.f32 %v5490, %v5887
  %v6198 = vadd.f32 %v5491, %v5892
  %v6199 = vadd.f32 %v5492, %v5897
  %v6200 = vadd.f32 %v5493, %v5902
  %v6201 = vadd.f32 %v5494, %v5907
  %v6202 = vadd.f32 %v5495, %v5912
  %v6203 = vadd.f32 %v5496, %v5917
  %v6204 = vadd.f32 %v5497, %v5922
  %v6205 = vadd.f32 %v5498, %v5927
  %v6206 = vadd.f32 %v5499, %v5932
  %v6207 = vadd.f32 %v5500, %v5937
  %v6208 = vadd.f32 %v5501, %v5942
  %v6209 = vadd.f32 %v5502, %v5947
  %v6210 = vadd.f32 %v5503, %v5952
  %v6211 = vadd.f32 %v5504, %v5957
  %v6212 = vadd.f32 %v5505, %v5962
  %v6213 = vadd.f32 %v5506, %v5967
  %v6214 = vadd.f32 %v5507, %v5972
  %v6215 = vadd.f32 %v5508, %v5977
  %v6216 = vadd.f32 %v5509, %v5982
  %v6217 = vadd.f32 %v5510, %v5987
  %v6218 = vadd.f32 %v5511, %v5992
  %v6219 = vadd.f32 %v5512, %v5997
  %v6220 = vadd.f32 %v5513, %v6002
  %v6221 = vadd.f32 %v5514, %v6007
  %v6222 = vadd.f32 %v5515, %v6012
  %v6223 = vadd.f32 %v5516, %v6017
  %v6224 = vadd.f32 %v5517, %v6022
  %v6225 = vadd.f32 %v5518, %v6027
  %v6226 = vadd.f32 %v5519, %v6032
  %v6227 = vadd.f32 %v5520, %v6037
  %v6228 = vadd.f32 %v5521, %v6042
  %v6229 = vadd.f32 %v5522, %v6047
  %v6230 = vadd.f32 %v5523, %v6052
  %v6231 = vadd.f32 %v5524, %v6057
  %v6232 = vadd.f32 %v5525, %v6062
  %v6233 = vadd.f32 %v5526, %v6067
  %v6234 = vadd.f32 %v5527, %v6072
  %v6235 = vadd.f32 %v5528, %v6077
  %v6236 = vadd.f32 %v5529, %v6082
  %v6237 = vadd.f32 %v5530, %v6087
  %v6238 = vadd.f32 %v5531, %v6092
  %v6239 = vadd.f32 %v5532, %v6097
  %v6240 = vadd.f32 %v5533, %v6102
  %v6241 = vadd.f32 %v5534, %v6107
  %v6242 = vadd.f32 %v5535, %v6112
  %v6243 = vadd.f32 %v5536, %v6117
  %v6244 = vadd.f32 %v5537, %v6122
  %v6245 = vadd.f32 %v5538, %v6127
  %v6246 = vadd.f32 %v5539, %v6132
  %v6247 = vadd.f32 %v5540, %v6137
  %v6248 = vadd.f32 %v5541, %v6142
  %v6249 = vadd.f32 %v5542, %v6147
  %v6250 = vadd.f32 %v5543, %v6152
  %v6251 = vadd.f32 %v5544, %v6157
  %v6252 = vadd.f32 %v5545, %v6162
  %v6253 = vadd.f32 %v5546, %v6167
  %v6254 = vadd.f32 %v5547, %v6172
  %v6255 = vadd.f32 %v5548, %v6177
  %v6256 = vadd.f32 %v5549, %v6182
  %v6257 = vadd.f32 %v5550, %v6187
  %v6258 = vadd.f32 %v5551, %v6192
  %v6259 = vld [vmem:[%s3] sm:$0x1]
  %v6261 = vlaneseq
  %v6262 = vshrl.u32 %v6261, 7
  %v6263 = vsub.s32 0, %v6262
  %v6264 = vrot.slane %v6259, %v6263
  %v6266 = vadd.f32 %v6195, %v6264
  %v6267 = vadd.f32 %v6196, %v6264
  %v6268 = vadd.f32 %v6197, %v6264
  %v6269 = vadd.f32 %v6198, %v6264
  %v6270 = vadd.f32 %v6199, %v6264
  %v6271 = vadd.f32 %v6200, %v6264
  %v6272 = vadd.f32 %v6201, %v6264
  %v6273 = vadd.f32 %v6202, %v6264
  %v6274 = vadd.f32 %v6203, %v6264
  %v6275 = vadd.f32 %v6204, %v6264
  %v6276 = vadd.f32 %v6205, %v6264
  %v6277 = vadd.f32 %v6206, %v6264
  %v6278 = vadd.f32 %v6207, %v6264
  %v6279 = vadd.f32 %v6208, %v6264
  %v6280 = vadd.f32 %v6209, %v6264
  %v6281 = vadd.f32 %v6210, %v6264
  %v6282 = vadd.f32 %v6211, %v6264
  %v6283 = vadd.f32 %v6212, %v6264
  %v6284 = vadd.f32 %v6213, %v6264
  %v6285 = vadd.f32 %v6214, %v6264
  %v6286 = vadd.f32 %v6215, %v6264
  %v6287 = vadd.f32 %v6216, %v6264
  %v6288 = vadd.f32 %v6217, %v6264
  %v6289 = vadd.f32 %v6218, %v6264
  %v6290 = vadd.f32 %v6219, %v6264
  %v6291 = vadd.f32 %v6220, %v6264
  %v6292 = vadd.f32 %v6221, %v6264
  %v6293 = vadd.f32 %v6222, %v6264
  %v6294 = vadd.f32 %v6223, %v6264
  %v6295 = vadd.f32 %v6224, %v6264
  %v6296 = vadd.f32 %v6225, %v6264
  %v6297 = vadd.f32 %v6226, %v6264
  %v6298 = vadd.f32 %v6227, %v6264
  %v6299 = vadd.f32 %v6228, %v6264
  %v6300 = vadd.f32 %v6229, %v6264
  %v6301 = vadd.f32 %v6230, %v6264
  %v6302 = vadd.f32 %v6231, %v6264
  %v6303 = vadd.f32 %v6232, %v6264
  %v6304 = vadd.f32 %v6233, %v6264
  %v6305 = vadd.f32 %v6234, %v6264
  %v6306 = vadd.f32 %v6235, %v6264
  %v6307 = vadd.f32 %v6236, %v6264
  %v6308 = vadd.f32 %v6237, %v6264
  %v6309 = vadd.f32 %v6238, %v6264
  %v6310 = vadd.f32 %v6239, %v6264
  %v6311 = vadd.f32 %v6240, %v6264
  %v6312 = vadd.f32 %v6241, %v6264
  %v6313 = vadd.f32 %v6242, %v6264
  %v6314 = vadd.f32 %v6243, %v6264
  %v6315 = vadd.f32 %v6244, %v6264
  %v6316 = vadd.f32 %v6245, %v6264
  %v6317 = vadd.f32 %v6246, %v6264
  %v6318 = vadd.f32 %v6247, %v6264
  %v6319 = vadd.f32 %v6248, %v6264
  %v6320 = vadd.f32 %v6249, %v6264
  %v6321 = vadd.f32 %v6250, %v6264
  %v6322 = vadd.f32 %v6251, %v6264
  %v6323 = vadd.f32 %v6252, %v6264
  %v6324 = vadd.f32 %v6253, %v6264
  %v6325 = vadd.f32 %v6254, %v6264
  %v6326 = vadd.f32 %v6255, %v6264
  %v6327 = vadd.f32 %v6256, %v6264
  %v6328 = vadd.f32 %v6257, %v6264
  %v6329 = vadd.f32 %v6258, %v6264
  %v6330 = vmax.f32 %v6266, 0.0
  %v6331 = vmax.f32 %v6267, 0.0
  %v6332 = vmax.f32 %v6268, 0.0
  %v6333 = vmax.f32 %v6269, 0.0
  %v6334 = vmax.f32 %v6270, 0.0
  %v6335 = vmax.f32 %v6271, 0.0
  %v6336 = vmax.f32 %v6272, 0.0
  %v6337 = vmax.f32 %v6273, 0.0
  %v6338 = vmax.f32 %v6274, 0.0
  %v6339 = vmax.f32 %v6275, 0.0
  %v6340 = vmax.f32 %v6276, 0.0
  %v6341 = vmax.f32 %v6277, 0.0
  %v6342 = vmax.f32 %v6278, 0.0
  %v6343 = vmax.f32 %v6279, 0.0
  %v6344 = vmax.f32 %v6280, 0.0
  %v6345 = vmax.f32 %v6281, 0.0
  %v6346 = vmax.f32 %v6282, 0.0
  %v6347 = vmax.f32 %v6283, 0.0
  %v6348 = vmax.f32 %v6284, 0.0
  %v6349 = vmax.f32 %v6285, 0.0
  %v6350 = vmax.f32 %v6286, 0.0
  %v6351 = vmax.f32 %v6287, 0.0
  %v6352 = vmax.f32 %v6288, 0.0
  %v6353 = vmax.f32 %v6289, 0.0
  %v6354 = vmax.f32 %v6290, 0.0
  %v6355 = vmax.f32 %v6291, 0.0
  %v6356 = vmax.f32 %v6292, 0.0
  %v6357 = vmax.f32 %v6293, 0.0
  %v6358 = vmax.f32 %v6294, 0.0
  %v6359 = vmax.f32 %v6295, 0.0
  %v6360 = vmax.f32 %v6296, 0.0
  %v6361 = vmax.f32 %v6297, 0.0
  %v6362 = vmax.f32 %v6298, 0.0
  %v6363 = vmax.f32 %v6299, 0.0
  %v6364 = vmax.f32 %v6300, 0.0
  %v6365 = vmax.f32 %v6301, 0.0
  %v6366 = vmax.f32 %v6302, 0.0
  %v6367 = vmax.f32 %v6303, 0.0
  %v6368 = vmax.f32 %v6304, 0.0
  %v6369 = vmax.f32 %v6305, 0.0
  %v6370 = vmax.f32 %v6306, 0.0
  %v6371 = vmax.f32 %v6307, 0.0
  %v6372 = vmax.f32 %v6308, 0.0
  %v6373 = vmax.f32 %v6309, 0.0
  %v6374 = vmax.f32 %v6310, 0.0
  %v6375 = vmax.f32 %v6311, 0.0
  %v6376 = vmax.f32 %v6312, 0.0
  %v6377 = vmax.f32 %v6313, 0.0
  %v6378 = vmax.f32 %v6314, 0.0
  %v6379 = vmax.f32 %v6315, 0.0
  %v6380 = vmax.f32 %v6316, 0.0
  %v6381 = vmax.f32 %v6317, 0.0
  %v6382 = vmax.f32 %v6318, 0.0
  %v6383 = vmax.f32 %v6319, 0.0
  %v6384 = vmax.f32 %v6320, 0.0
  %v6385 = vmax.f32 %v6321, 0.0
  %v6386 = vmax.f32 %v6322, 0.0
  %v6387 = vmax.f32 %v6323, 0.0
  %v6388 = vmax.f32 %v6324, 0.0
  %v6389 = vmax.f32 %v6325, 0.0
  %v6390 = vmax.f32 %v6326, 0.0
  %v6391 = vmax.f32 %v6327, 0.0
  %v6392 = vmax.f32 %v6328, 0.0
  %v6393 = vmax.f32 %v6329, 0.0
  %v6394 = vld [vmem:[%s1] sm:$0xff]
  %v6395 = vld [vmem:[%s1 + $0x8] sm:$0xff]
  %v6396 = vld [vmem:[%s1 + $0x10] sm:$0xff]
  %v6397 = vld [vmem:[%s1 + $0x18] sm:$0xff]
  %v6398 = vld [vmem:[%s1 + $0x20] sm:$0xff]
  %v6399 = vld [vmem:[%s1 + $0x28] sm:$0xff]
  %v6400 = vld [vmem:[%s1 + $0x30] sm:$0xff]
  %v6401 = vld [vmem:[%s1 + $0x38] sm:$0xff]
  %v6402 = vld [vmem:[%s1 + $0x40] sm:$0xff]
  %v6403 = vld [vmem:[%s1 + $0x48] sm:$0xff]
  %v6404 = vld [vmem:[%s1 + $0x50] sm:$0xff]
  %v6405 = vld [vmem:[%s1 + $0x58] sm:$0xff]
  %v6406 = vld [vmem:[%s1 + $0x60] sm:$0xff]
  %v6407 = vld [vmem:[%s1 + $0x68] sm:$0xff]
  %v6408 = vld [vmem:[%s1 + $0x70] sm:$0xff]
  %v6409 = vld [vmem:[%s1 + $0x78] sm:$0xff]
  %v6410 = vld [vmem:[%s1 + $0x80] sm:$0xff]
  %v6411 = vld [vmem:[%s1 + $0x88] sm:$0xff]
  %v6412 = vld [vmem:[%s1 + $0x90] sm:$0xff]
  %v6413 = vld [vmem:[%s1 + $0x98] sm:$0xff]
  %v6414 = vld [vmem:[%s1 + $0xa0] sm:$0xff]
  %v6415 = vld [vmem:[%s1 + $0xa8] sm:$0xff]
  %v6416 = vld [vmem:[%s1 + $0xb0] sm:$0xff]
  %v6417 = vld [vmem:[%s1 + $0xb8] sm:$0xff]
  %v6418 = vld [vmem:[%s1 + $0xc0] sm:$0xff]
  %v6419 = vld [vmem:[%s1 + $0xc8] sm:$0xff]
  %v6420 = vld [vmem:[%s1 + $0xd0] sm:$0xff]
  %v6421 = vld [vmem:[%s1 + $0xd8] sm:$0xff]
  %v6422 = vld [vmem:[%s1 + $0xe0] sm:$0xff]
  %v6423 = vld [vmem:[%s1 + $0xe8] sm:$0xff]
  %v6424 = vld [vmem:[%s1 + $0xf0] sm:$0xff]
  %v6425 = vld [vmem:[%s1 + $0xf8] sm:$0xff]
  %v6426 = vld [vmem:[%s1 + $0x100] sm:$0xff]
  %v6427 = vld [vmem:[%s1 + $0x108] sm:$0xff]
  %v6428 = vld [vmem:[%s1 + $0x110] sm:$0xff]
  %v6429 = vld [vmem:[%s1 + $0x118] sm:$0xff]
  %v6430 = vld [vmem:[%s1 + $0x120] sm:$0xff]
  %v6431 = vld [vmem:[%s1 + $0x128] sm:$0xff]
  %v6432 = vld [vmem:[%s1 + $0x130] sm:$0xff]
  %v6433 = vld [vmem:[%s1 + $0x138] sm:$0xff]
  %v6434 = vld [vmem:[%s1 + $0x140] sm:$0xff]
  %v6435 = vld [vmem:[%s1 + $0x148] sm:$0xff]
  %v6436 = vld [vmem:[%s1 + $0x150] sm:$0xff]
  %v6437 = vld [vmem:[%s1 + $0x158] sm:$0xff]
  %v6438 = vld [vmem:[%s1 + $0x160] sm:$0xff]
  %v6439 = vld [vmem:[%s1 + $0x168] sm:$0xff]
  %v6440 = vld [vmem:[%s1 + $0x170] sm:$0xff]
  %v6441 = vld [vmem:[%s1 + $0x178] sm:$0xff]
  %v6442 = vld [vmem:[%s1 + $0x180] sm:$0xff]
  %v6443 = vld [vmem:[%s1 + $0x188] sm:$0xff]
  %v6444 = vld [vmem:[%s1 + $0x190] sm:$0xff]
  %v6445 = vld [vmem:[%s1 + $0x198] sm:$0xff]
  %v6446 = vld [vmem:[%s1 + $0x1a0] sm:$0xff]
  %v6447 = vld [vmem:[%s1 + $0x1a8] sm:$0xff]
  %v6448 = vld [vmem:[%s1 + $0x1b0] sm:$0xff]
  %v6449 = vld [vmem:[%s1 + $0x1b8] sm:$0xff]
  %v6450 = vld [vmem:[%s1 + $0x1c0] sm:$0xff]
  %v6451 = vld [vmem:[%s1 + $0x1c8] sm:$0xff]
  %v6452 = vld [vmem:[%s1 + $0x1d0] sm:$0xff]
  %v6453 = vld [vmem:[%s1 + $0x1d8] sm:$0xff]
  %v6454 = vld [vmem:[%s1 + $0x1e0] sm:$0xff]
  %v6455 = vld [vmem:[%s1 + $0x1e8] sm:$0xff]
  %v6456 = vld [vmem:[%s1 + $0x1f0] sm:$0xff]
  %v6457 = vld [vmem:[%s1 + $0x1f8] sm:$0xff]
  %v6458 = vmul.f32 %v6330, %v6394
  %v6459 = vmul.f32 %v6331, %v6395
  %v6460 = vmul.f32 %v6332, %v6396
  %v6461 = vmul.f32 %v6333, %v6397
  %v6462 = vmul.f32 %v6334, %v6398
  %v6463 = vmul.f32 %v6335, %v6399
  %v6464 = vmul.f32 %v6336, %v6400
  %v6465 = vmul.f32 %v6337, %v6401
  %v6466 = vmul.f32 %v6338, %v6402
  %v6467 = vmul.f32 %v6339, %v6403
  %v6468 = vmul.f32 %v6340, %v6404
  %v6469 = vmul.f32 %v6341, %v6405
  %v6470 = vmul.f32 %v6342, %v6406
  %v6471 = vmul.f32 %v6343, %v6407
  %v6472 = vmul.f32 %v6344, %v6408
  %v6473 = vmul.f32 %v6345, %v6409
  %v6474 = vmul.f32 %v6346, %v6410
  %v6475 = vmul.f32 %v6347, %v6411
  %v6476 = vmul.f32 %v6348, %v6412
  %v6477 = vmul.f32 %v6349, %v6413
  %v6478 = vmul.f32 %v6350, %v6414
  %v6479 = vmul.f32 %v6351, %v6415
  %v6480 = vmul.f32 %v6352, %v6416
  %v6481 = vmul.f32 %v6353, %v6417
  %v6482 = vmul.f32 %v6354, %v6418
  %v6483 = vmul.f32 %v6355, %v6419
  %v6484 = vmul.f32 %v6356, %v6420
  %v6485 = vmul.f32 %v6357, %v6421
  %v6486 = vmul.f32 %v6358, %v6422
  %v6487 = vmul.f32 %v6359, %v6423
  %v6488 = vmul.f32 %v6360, %v6424
  %v6489 = vmul.f32 %v6361, %v6425
  %v6490 = vmul.f32 %v6362, %v6426
  %v6491 = vmul.f32 %v6363, %v6427
  %v6492 = vmul.f32 %v6364, %v6428
  %v6493 = vmul.f32 %v6365, %v6429
  %v6494 = vmul.f32 %v6366, %v6430
  %v6495 = vmul.f32 %v6367, %v6431
  %v6496 = vmul.f32 %v6368, %v6432
  %v6497 = vmul.f32 %v6369, %v6433
  %v6498 = vmul.f32 %v6370, %v6434
  %v6499 = vmul.f32 %v6371, %v6435
  %v6500 = vmul.f32 %v6372, %v6436
  %v6501 = vmul.f32 %v6373, %v6437
  %v6502 = vmul.f32 %v6374, %v6438
  %v6503 = vmul.f32 %v6375, %v6439
  %v6504 = vmul.f32 %v6376, %v6440
  %v6505 = vmul.f32 %v6377, %v6441
  %v6506 = vmul.f32 %v6378, %v6442
  %v6507 = vmul.f32 %v6379, %v6443
  %v6508 = vmul.f32 %v6380, %v6444
  %v6509 = vmul.f32 %v6381, %v6445
  %v6510 = vmul.f32 %v6382, %v6446
  %v6511 = vmul.f32 %v6383, %v6447
  %v6512 = vmul.f32 %v6384, %v6448
  %v6513 = vmul.f32 %v6385, %v6449
  %v6514 = vmul.f32 %v6386, %v6450
  %v6515 = vmul.f32 %v6387, %v6451
  %v6516 = vmul.f32 %v6388, %v6452
  %v6517 = vmul.f32 %v6389, %v6453
  %v6518 = vmul.f32 %v6390, %v6454
  %v6519 = vmul.f32 %v6391, %v6455
  %v6520 = vmul.f32 %v6392, %v6456
  %v6521 = vmul.f32 %v6393, %v6457
  %vm6522 = vcmask 261120
  %6523 = vst.msk [vmem:[#allocation2] sm:$0xff] %vm6522, 0.0
  %6524 = vst.msk [vmem:[#allocation2 + $0x8] sm:$0xff] %vm6522, 0.0
  %6525 = vst.msk [vmem:[#allocation2 + $0x10] sm:$0xff] %vm6522, 0.0
  %6526 = vst.msk [vmem:[#allocation2 + $0x218] sm:$0xff] %vm6522, 0.0
  %6527 = vst.msk [vmem:[#allocation2 + $0x220] sm:$0xff] %vm6522, 0.0
  %6528 = vst.msk [vmem:[#allocation2 + $0x228] sm:$0xff] %vm6522, 0.0
  %6529 = vst.msk [vmem:[#allocation2 + $0x18] sm:$0xff] %vm6522, %v6458
  %6530 = vst.msk [vmem:[#allocation2 + $0x20] sm:$0xff] %vm6522, %v6459
  %6531 = vst.msk [vmem:[#allocation2 + $0x28] sm:$0xff] %vm6522, %v6460
  %6532 = vst.msk [vmem:[#allocation2 + $0x30] sm:$0xff] %vm6522, %v6461
  %6533 = vst.msk [vmem:[#allocation2 + $0x38] sm:$0xff] %vm6522, %v6462
  %6534 = vst.msk [vmem:[#allocation2 + $0x40] sm:$0xff] %vm6522, %v6463
  %6535 = vst.msk [vmem:[#allocation2 + $0x48] sm:$0xff] %vm6522, %v6464
  %6536 = vst.msk [vmem:[#allocation2 + $0x50] sm:$0xff] %vm6522, %v6465
  %6537 = vst.msk [vmem:[#allocation2 + $0x58] sm:$0xff] %vm6522, %v6466
  %6538 = vst.msk [vmem:[#allocation2 + $0x60] sm:$0xff] %vm6522, %v6467
  %6539 = vst.msk [vmem:[#allocation2 + $0x68] sm:$0xff] %vm6522, %v6468
  %6540 = vst.msk [vmem:[#allocation2 + $0x70] sm:$0xff] %vm6522, %v6469
  %6541 = vst.msk [vmem:[#allocation2 + $0x78] sm:$0xff] %vm6522, %v6470
  %6542 = vst.msk [vmem:[#allocation2 + $0x80] sm:$0xff] %vm6522, %v6471
  %6543 = vst.msk [vmem:[#allocation2 + $0x88] sm:$0xff] %vm6522, %v6472
  %6544 = vst.msk [vmem:[#allocation2 + $0x90] sm:$0xff] %vm6522, %v6473
  %6545 = vst.msk [vmem:[#allocation2 + $0x98] sm:$0xff] %vm6522, %v6474
  %6546 = vst.msk [vmem:[#allocation2 + $0xa0] sm:$0xff] %vm6522, %v6475
  %6547 = vst.msk [vmem:[#allocation2 + $0xa8] sm:$0xff] %vm6522, %v6476
  %6548 = vst.msk [vmem:[#allocation2 + $0xb0] sm:$0xff] %vm6522, %v6477
  %6549 = vst.msk [vmem:[#allocation2 + $0xb8] sm:$0xff] %vm6522, %v6478
  %6550 = vst.msk [vmem:[#allocation2 + $0xc0] sm:$0xff] %vm6522, %v6479
  %6551 = vst.msk [vmem:[#allocation2 + $0xc8] sm:$0xff] %vm6522, %v6480
  %6552 = vst.msk [vmem:[#allocation2 + $0xd0] sm:$0xff] %vm6522, %v6481
  %6553 = vst.msk [vmem:[#allocation2 + $0xd8] sm:$0xff] %vm6522, %v6482
  %6554 = vst.msk [vmem:[#allocation2 + $0xe0] sm:$0xff] %vm6522, %v6483
  %6555 = vst.msk [vmem:[#allocation2 + $0xe8] sm:$0xff] %vm6522, %v6484
  %6556 = vst.msk [vmem:[#allocation2 + $0xf0] sm:$0xff] %vm6522, %v6485
  %6557 = vst.msk [vmem:[#allocation2 + $0xf8] sm:$0xff] %vm6522, %v6486
  %6558 = vst.msk [vmem:[#allocation2 + $0x100] sm:$0xff] %vm6522, %v6487
  %6559 = vst.msk [vmem:[#allocation2 + $0x108] sm:$0xff] %vm6522, %v6488
  %6560 = vst.msk [vmem:[#allocation2 + $0x110] sm:$0xff] %vm6522, %v6489
  %6561 = vst.msk [vmem:[#allocation2 + $0x118] sm:$0xff] %vm6522, %v6490
  %6562 = vst.msk [vmem:[#allocation2 + $0x120] sm:$0xff] %vm6522, %v6491
  %6563 = vst.msk [vmem:[#allocation2 + $0x128] sm:$0xff] %vm6522, %v6492
  %6564 = vst.msk [vmem:[#allocation2 + $0x130] sm:$0xff] %vm6522, %v6493
  %6565 = vst.msk [vmem:[#allocation2 + $0x138] sm:$0xff] %vm6522, %v6494
  %6566 = vst.msk [vmem:[#allocation2 + $0x140] sm:$0xff] %vm6522, %v6495
  %6567 = vst.msk [vmem:[#allocation2 + $0x148] sm:$0xff] %vm6522, %v6496
  %6568 = vst.msk [vmem:[#allocation2 + $0x150] sm:$0xff] %vm6522, %v6497
  %6569 = vst.msk [vmem:[#allocation2 + $0x158] sm:$0xff] %vm6522, %v6498
  %6570 = vst.msk [vmem:[#allocation2 + $0x160] sm:$0xff] %vm6522, %v6499
  %6571 = vst.msk [vmem:[#allocation2 + $0x168] sm:$0xff] %vm6522, %v6500
  %6572 = vst.msk [vmem:[#allocation2 + $0x170] sm:$0xff] %vm6522, %v6501
  %6573 = vst.msk [vmem:[#allocation2 + $0x178] sm:$0xff] %vm6522, %v6502
  %6574 = vst.msk [vmem:[#allocation2 + $0x180] sm:$0xff] %vm6522, %v6503
  %6575 = vst.msk [vmem:[#allocation2 + $0x188] sm:$0xff] %vm6522, %v6504
  %6576 = vst.msk [vmem:[#allocation2 + $0x190] sm:$0xff] %vm6522, %v6505
  %6577 = vst.msk [vmem:[#allocation2 + $0x198] sm:$0xff] %vm6522, %v6506
  %6578 = vst.msk [vmem:[#allocation2 + $0x1a0] sm:$0xff] %vm6522, %v6507
  %6579 = vst.msk [vmem:[#allocation2 + $0x1a8] sm:$0xff] %vm6522, %v6508
  %6580 = vst.msk [vmem:[#allocation2 + $0x1b0] sm:$0xff] %vm6522, %v6509
  %6581 = vst.msk [vmem:[#allocation2 + $0x1b8] sm:$0xff] %vm6522, %v6510
  %6582 = vst.msk [vmem:[#allocation2 + $0x1c0] sm:$0xff] %vm6522, %v6511
  %6583 = vst.msk [vmem:[#allocation2 + $0x1c8] sm:$0xff] %vm6522, %v6512
  %6584 = vst.msk [vmem:[#allocation2 + $0x1d0] sm:$0xff] %vm6522, %v6513
  %6585 = vst.msk [vmem:[#allocation2 + $0x1d8] sm:$0xff] %vm6522, %v6514
  %6586 = vst.msk [vmem:[#allocation2 + $0x1e0] sm:$0xff] %vm6522, %v6515
  %6587 = vst.msk [vmem:[#allocation2 + $0x1e8] sm:$0xff] %vm6522, %v6516
  %6588 = vst.msk [vmem:[#allocation2 + $0x1f0] sm:$0xff] %vm6522, %v6517
  %6589 = vst.msk [vmem:[#allocation2 + $0x1f8] sm:$0xff] %vm6522, %v6518
  %6590 = vst.msk [vmem:[#allocation2 + $0x200] sm:$0xff] %vm6522, %v6519
  %6591 = vst.msk [vmem:[#allocation2 + $0x208] sm:$0xff] %vm6522, %v6520
  %6592 = vst.msk [vmem:[#allocation2 + $0x210] sm:$0xff] %vm6522, %v6521
  %v6593 = vld [vmem:[#allocation2 + $0x7] sm:$0xff]
  %v6594 = vld [vmem:[#allocation2 + $0xf] sm:$0xff]
  %v6595 = vld [vmem:[#allocation2 + $0x17] sm:$0xff]
  %v6596 = vld [vmem:[#allocation2 + $0x1f] sm:$0xff]
  %v6597 = vld [vmem:[#allocation2 + $0x27] sm:$0xff]
  %v6598 = vld [vmem:[#allocation2 + $0x2f] sm:$0xff]
  %v6599 = vld [vmem:[#allocation2 + $0x37] sm:$0xff]
  %v6600 = vld [vmem:[#allocation2 + $0x3f] sm:$0xff]
  %v6601 = vld [vmem:[#allocation2 + $0x47] sm:$0xff]
  %v6602 = vld [vmem:[#allocation2 + $0x4f] sm:$0xff]
  %v6603 = vld [vmem:[#allocation2 + $0x57] sm:$0xff]
  %v6604 = vld [vmem:[#allocation2 + $0x5f] sm:$0xff]
  %v6605 = vld [vmem:[#allocation2 + $0x67] sm:$0xff]
  %v6606 = vld [vmem:[#allocation2 + $0x6f] sm:$0xff]
  %v6607 = vld [vmem:[#allocation2 + $0x77] sm:$0xff]
  %v6608 = vld [vmem:[#allocation2 + $0x7f] sm:$0xff]
  %v6609 = vld [vmem:[#allocation2 + $0x87] sm:$0xff]
  %v6610 = vld [vmem:[#allocation2 + $0x8f] sm:$0xff]
  %v6611 = vld [vmem:[#allocation2 + $0x97] sm:$0xff]
  %v6612 = vld [vmem:[#allocation2 + $0x9f] sm:$0xff]
  %v6613 = vld [vmem:[#allocation2 + $0xa7] sm:$0xff]
  %v6614 = vld [vmem:[#allocation2 + $0xaf] sm:$0xff]
  %v6615 = vld [vmem:[#allocation2 + $0xb7] sm:$0xff]
  %v6616 = vld [vmem:[#allocation2 + $0xbf] sm:$0xff]
  %v6617 = vld [vmem:[#allocation2 + $0xc7] sm:$0xff]
  %v6618 = vld [vmem:[#allocation2 + $0xcf] sm:$0xff]
  %v6619 = vld [vmem:[#allocation2 + $0xd7] sm:$0xff]
  %v6620 = vld [vmem:[#allocation2 + $0xdf] sm:$0xff]
  %v6621 = vld [vmem:[#allocation2 + $0xe7] sm:$0xff]
  %v6622 = vld [vmem:[#allocation2 + $0xef] sm:$0xff]
  %v6623 = vld [vmem:[#allocation2 + $0xf7] sm:$0xff]
  %v6624 = vld [vmem:[#allocation2 + $0xff] sm:$0xff]
  %v6625 = vld [vmem:[#allocation2 + $0x107] sm:$0xff]
  %v6626 = vld [vmem:[#allocation2 + $0x10f] sm:$0xff]
  %v6627 = vld [vmem:[#allocation2 + $0x117] sm:$0xff]
  %v6628 = vld [vmem:[#allocation2 + $0x11f] sm:$0xff]
  %v6629 = vld [vmem:[#allocation2 + $0x127] sm:$0xff]
  %v6630 = vld [vmem:[#allocation2 + $0x12f] sm:$0xff]
  %v6631 = vld [vmem:[#allocation2 + $0x137] sm:$0xff]
  %v6632 = vld [vmem:[#allocation2 + $0x13f] sm:$0xff]
  %v6633 = vld [vmem:[#allocation2 + $0x147] sm:$0xff]
  %v6634 = vld [vmem:[#allocation2 + $0x14f] sm:$0xff]
  %v6635 = vld [vmem:[#allocation2 + $0x157] sm:$0xff]
  %v6636 = vld [vmem:[#allocation2 + $0x15f] sm:$0xff]
  %v6637 = vld [vmem:[#allocation2 + $0x167] sm:$0xff]
  %v6638 = vld [vmem:[#allocation2 + $0x16f] sm:$0xff]
  %v6639 = vld [vmem:[#allocation2 + $0x177] sm:$0xff]
  %v6640 = vld [vmem:[#allocation2 + $0x17f] sm:$0xff]
  %v6641 = vld [vmem:[#allocation2 + $0x187] sm:$0xff]
  %v6642 = vld [vmem:[#allocation2 + $0x18f] sm:$0xff]
  %v6643 = vld [vmem:[#allocation2 + $0x197] sm:$0xff]
  %v6644 = vld [vmem:[#allocation2 + $0x19f] sm:$0xff]
  %v6645 = vld [vmem:[#allocation2 + $0x1a7] sm:$0xff]
  %v6646 = vld [vmem:[#allocation2 + $0x1af] sm:$0xff]
  %v6647 = vld [vmem:[#allocation2 + $0x1b7] sm:$0xff]
  %v6648 = vld [vmem:[#allocation2 + $0x1bf] sm:$0xff]
  %v6649 = vld [vmem:[#allocation2 + $0x1c7] sm:$0xff]
  %v6650 = vld [vmem:[#allocation2 + $0x1cf] sm:$0xff]
  %v6651 = vld [vmem:[#allocation2 + $0x1d7] sm:$0xff]
  %v6652 = vld [vmem:[#allocation2 + $0x1df] sm:$0xff]
  %v6653 = vld [vmem:[#allocation2 + $0x1e7] sm:$0xff]
  %v6654 = vld [vmem:[#allocation2 + $0x1ef] sm:$0xff]
  %v6655 = vld [vmem:[#allocation2 + $0x1f7] sm:$0xff]
  %v6656 = vld [vmem:[#allocation2 + $0x1ff] sm:$0xff]
  %v6657 = vld [vmem:[%s4] sm:$0xff]
  %v6658 = vld [vmem:[%s4 + $0x8] sm:$0xff]
  %v6659 = vld [vmem:[%s4 + $0x10] sm:$0xff]
  %v6660 = vld [vmem:[%s4 + $0x18] sm:$0xff]
  %v6661 = vld [vmem:[#allocation2 + $0x8] sm:$0xff]
  %v6662 = vld [vmem:[#allocation2 + $0x10] sm:$0xff]
  %v6663 = vld [vmem:[#allocation2 + $0x18] sm:$0xff]
  %v6664 = vld [vmem:[#allocation2 + $0x20] sm:$0xff]
  %v6665 = vld [vmem:[#allocation2 + $0x28] sm:$0xff]
  %v6666 = vld [vmem:[#allocation2 + $0x30] sm:$0xff]
  %v6667 = vld [vmem:[#allocation2 + $0x38] sm:$0xff]
  %v6668 = vld [vmem:[#allocation2 + $0x40] sm:$0xff]
  %v6669 = vld [vmem:[#allocation2 + $0x48] sm:$0xff]
  %v6670 = vld [vmem:[#allocation2 + $0x50] sm:$0xff]
  %v6671 = vld [vmem:[#allocation2 + $0x58] sm:$0xff]
  %v6672 = vld [vmem:[#allocation2 + $0x60] sm:$0xff]
  %v6673 = vld [vmem:[#allocation2 + $0x68] sm:$0xff]
  %v6674 = vld [vmem:[#allocation2 + $0x70] sm:$0xff]
  %v6675 = vld [vmem:[#allocation2 + $0x78] sm:$0xff]
  %v6676 = vld [vmem:[#allocation2 + $0x80] sm:$0xff]
  %v6677 = vld [vmem:[#allocation2 + $0x88] sm:$0xff]
  %v6678 = vld [vmem:[#allocation2 + $0x90] sm:$0xff]
  %v6679 = vld [vmem:[#allocation2 + $0x98] sm:$0xff]
  %v6680 = vld [vmem:[#allocation2 + $0xa0] sm:$0xff]
  %v6681 = vld [vmem:[#allocation2 + $0xa8] sm:$0xff]
  %v6682 = vld [vmem:[#allocation2 + $0xb0] sm:$0xff]
  %v6683 = vld [vmem:[#allocation2 + $0xb8] sm:$0xff]
  %v6684 = vld [vmem:[#allocation2 + $0xc0] sm:$0xff]
  %v6685 = vld [vmem:[#allocation2 + $0xc8] sm:$0xff]
  %v6686 = vld [vmem:[#allocation2 + $0xd0] sm:$0xff]
  %v6687 = vld [vmem:[#allocation2 + $0xd8] sm:$0xff]
  %v6688 = vld [vmem:[#allocation2 + $0xe0] sm:$0xff]
  %v6689 = vld [vmem:[#allocation2 + $0xe8] sm:$0xff]
  %v6690 = vld [vmem:[#allocation2 + $0xf0] sm:$0xff]
  %v6691 = vld [vmem:[#allocation2 + $0xf8] sm:$0xff]
  %v6692 = vld [vmem:[#allocation2 + $0x100] sm:$0xff]
  %v6693 = vld [vmem:[#allocation2 + $0x108] sm:$0xff]
  %v6694 = vld [vmem:[#allocation2 + $0x110] sm:$0xff]
  %v6695 = vld [vmem:[#allocation2 + $0x118] sm:$0xff]
  %v6696 = vld [vmem:[#allocation2 + $0x120] sm:$0xff]
  %v6697 = vld [vmem:[#allocation2 + $0x128] sm:$0xff]
  %v6698 = vld [vmem:[#allocation2 + $0x130] sm:$0xff]
  %v6699 = vld [vmem:[#allocation2 + $0x138] sm:$0xff]
  %v6700 = vld [vmem:[#allocation2 + $0x140] sm:$0xff]
  %v6701 = vld [vmem:[#allocation2 + $0x148] sm:$0xff]
  %v6702 = vld [vmem:[#allocation2 + $0x150] sm:$0xff]
  %v6703 = vld [vmem:[#allocation2 + $0x158] sm:$0xff]
  %v6704 = vld [vmem:[#allocation2 + $0x160] sm:$0xff]
  %v6705 = vld [vmem:[#allocation2 + $0x168] sm:$0xff]
  %v6706 = vld [vmem:[#allocation2 + $0x170] sm:$0xff]
  %v6707 = vld [vmem:[#allocation2 + $0x178] sm:$0xff]
  %v6708 = vld [vmem:[#allocation2 + $0x180] sm:$0xff]
  %v6709 = vld [vmem:[#allocation2 + $0x188] sm:$0xff]
  %v6710 = vld [vmem:[#allocation2 + $0x190] sm:$0xff]
  %v6711 = vld [vmem:[#allocation2 + $0x198] sm:$0xff]
  %v6712 = vld [vmem:[#allocation2 + $0x1a0] sm:$0xff]
  %v6713 = vld [vmem:[#allocation2 + $0x1a8] sm:$0xff]
  %v6714 = vld [vmem:[#allocation2 + $0x1b0] sm:$0xff]
  %v6715 = vld [vmem:[#allocation2 + $0x1b8] sm:$0xff]
  %v6716 = vld [vmem:[#allocation2 + $0x1c0] sm:$0xff]
  %v6717 = vld [vmem:[#allocation2 + $0x1c8] sm:$0xff]
  %v6718 = vld [vmem:[#allocation2 + $0x1d0] sm:$0xff]
  %v6719 = vld [vmem:[#allocation2 + $0x1d8] sm:$0xff]
  %v6720 = vld [vmem:[#allocation2 + $0x1e0] sm:$0xff]
  %v6721 = vld [vmem:[#allocation2 + $0x1e8] sm:$0xff]
  %v6722 = vld [vmem:[#allocation2 + $0x1f0] sm:$0xff]
  %v6723 = vld [vmem:[#allocation2 + $0x1f8] sm:$0xff]
  %v6724 = vld [vmem:[#allocation2 + $0x200] sm:$0xff]
  %v6725 = vld [vmem:[%s4 + $0x20] sm:$0xff]
  %v6726 = vld [vmem:[%s4 + $0x28] sm:$0xff]
  %v6727 = vld [vmem:[%s4 + $0x30] sm:$0xff]
  %v6728 = vld [vmem:[%s4 + $0x38] sm:$0xff]
  %v6730 = vsel %vm6522, %v6661, 0
  %v6733 = vsel %vm6522, %v6662, 0
  %v6736 = vsel %vm6522, %v6663, 0
  %v6739 = vsel %vm6522, %v6664, 0
  %v6742 = vsel %vm6522, %v6665, 0
  %v6745 = vsel %vm6522, %v6666, 0
  %v6748 = vsel %vm6522, %v6667, 0
  %v6751 = vsel %vm6522, %v6668, 0
  %v6754 = vsel %vm6522, %v6669, 0
  %v6757 = vsel %vm6522, %v6670, 0
  %v6760 = vsel %vm6522, %v6671, 0
  %v6763 = vsel %vm6522, %v6672, 0
  %v6766 = vsel %vm6522, %v6673, 0
  %v6769 = vsel %vm6522, %v6674, 0
  %v6772 = vsel %vm6522, %v6675, 0
  %v6775 = vsel %vm6522, %v6676, 0
  %v6778 = vsel %vm6522, %v6677, 0
  %v6781 = vsel %vm6522, %v6678, 0
  %v6784 = vsel %vm6522, %v6679, 0
  %v6787 = vsel %vm6522, %v6680, 0
  %v6790 = vsel %vm6522, %v6681, 0
  %v6793 = vsel %vm6522, %v6682, 0
  %v6796 = vsel %vm6522, %v6683, 0
  %v6799 = vsel %vm6522, %v6684, 0
  %v6802 = vsel %vm6522, %v6685, 0
  %v6805 = vsel %vm6522, %v6686, 0
  %v6808 = vsel %vm6522, %v6687, 0
  %v6811 = vsel %vm6522, %v6688, 0
  %v6814 = vsel %vm6522, %v6689, 0
  %v6817 = vsel %vm6522, %v6690, 0
  %v6820 = vsel %vm6522, %v6691, 0
  %v6823 = vsel %vm6522, %v6692, 0
  %v6826 = vsel %vm6522, %v6693, 0
  %v6829 = vsel %vm6522, %v6694, 0
  %v6832 = vsel %vm6522, %v6695, 0
  %v6835 = vsel %vm6522, %v6696, 0
  %v6838 = vsel %vm6522, %v6697, 0
  %v6841 = vsel %vm6522, %v6698, 0
  %v6844 = vsel %vm6522, %v6699, 0
  %v6847 = vsel %vm6522, %v6700, 0
  %v6850 = vsel %vm6522, %v6701, 0
  %v6853 = vsel %vm6522, %v6702, 0
  %v6856 = vsel %vm6522, %v6703, 0
  %v6859 = vsel %vm6522, %v6704, 0
  %v6862 = vsel %vm6522, %v6705, 0
  %v6865 = vsel %vm6522, %v6706, 0
  %v6868 = vsel %vm6522, %v6707, 0
  %v6871 = vsel %vm6522, %v6708, 0
  %v6874 = vsel %vm6522, %v6709, 0
  %v6877 = vsel %vm6522, %v6710, 0
  %v6880 = vsel %vm6522, %v6711, 0
  %v6883 = vsel %vm6522, %v6712, 0
  %v6886 = vsel %vm6522, %v6713, 0
  %v6889 = vsel %vm6522, %v6714, 0
  %v6892 = vsel %vm6522, %v6715, 0
  %v6895 = vsel %vm6522, %v6716, 0
  %v6898 = vsel %vm6522, %v6717, 0
  %v6901 = vsel %vm6522, %v6718, 0
  %v6904 = vsel %vm6522, %v6719, 0
  %v6907 = vsel %vm6522, %v6720, 0
  %v6910 = vsel %vm6522, %v6721, 0
  %v6913 = vsel %vm6522, %v6722, 0
  %v6916 = vsel %vm6522, %v6723, 0
  %v6919 = vsel %vm6522, %v6724, 0
  %6921 = vmatprep.subr.mxu0 0.0
  %6922 = vmatpush1.msra.mxu0 %v6725
  %6923 = vmatprep.subr.mxu0 0.0
  %6924 = vmatpush1.msra.mxu0 %v6726
  %6925 = vmatprep.subr.mxu0 0.0
  %6926 = vmatpush1.msra.mxu0 %v6727
  %6927 = vmatprep.subr.mxu0 0.0
  %6928 = vmatpush1.msra.mxu0 %v6728
  %6929 = vmatprep.subr.mxu0 0.0
  %6930 = vmatpush1.msra.mxu0 0.0
  %6931 = vmatprep.subr.mxu0 0.0
  %6932 = vmatpush1.msra.mxu0 0.0
  %6933 = vmatprep.subr.mxu0 0.0
  %6934 = vmatpush1.msra.mxu0 0.0
  %6935 = vmatprep.subr.mxu0 0.0
  %6936 = vmatpush1.msra.mxu0 0.0
  %6937 = vmatprep.subr.mxu0 0.0
  %6938 = vmatpush1.msra.mxu0 0.0
  %6939 = vmatprep.subr.mxu0 0.0
  %6940 = vmatpush1.msra.mxu0 0.0
  %6941 = vmatprep.subr.mxu0 0.0
  %6942 = vmatpush1.msra.mxu0 0.0
  %6943 = vmatprep.subr.mxu0 0.0
  %6944 = vmatpush1.msra.mxu0 0.0
  %6945 = vmatprep.subr.mxu0 0.0
  %6946 = vmatpush1.msra.mxu0 0.0
  %6947 = vmatprep.subr.mxu0 0.0
  %6948 = vmatpush1.msra.mxu0 0.0
  %6949 = vmatprep.subr.mxu0 0.0
  %6950 = vmatpush1.msra.mxu0 0.0
  %6951 = vmatprep.subr.mxu0 0.0
  %6952 = vmatpush1.msra.mxu0 0.0
  %6953 = vmatprep.subr.mxu0 0.0
  %6954 = vmatpush1.msra.mxu0 0.0
  %6955 = vmatprep.subr.mxu0 0.0
  %6956 = vmatpush1.msra.mxu0 0.0
  %6957 = vmatprep.subr.mxu0 0.0
  %6958 = vmatpush1.msra.mxu0 0.0
  %6959 = vmatprep.subr.mxu0 0.0
  %6960 = vmatpush1.msra.mxu0 0.0
  %6961 = vmatprep.subr.mxu0 0.0
  %6962 = vmatpush1.msra.mxu0 0.0
  %6963 = vmatprep.subr.mxu0 0.0
  %6964 = vmatpush1.msra.mxu0 0.0
  %6965 = vmatprep.subr.mxu0 0.0
  %6966 = vmatpush1.msra.mxu0 0.0
  %6967 = vmatprep.subr.mxu0 0.0
  %6968 = vmatpush1.msra.mxu0 0.0
  %6969 = vmatprep.subr.mxu0 0.0
  %6970 = vmatpush1.msra.mxu0 0.0
  %6971 = vmatprep.subr.mxu0 0.0
  %6972 = vmatpush1.msra.mxu0 0.0
  %6973 = vmatprep.subr.mxu0 0.0
  %6974 = vmatpush1.msra.mxu0 0.0
  %6975 = vmatprep.subr.mxu0 0.0
  %6976 = vmatpush1.msra.mxu0 0.0
  %6977 = vmatprep.subr.mxu0 0.0
  %6978 = vmatpush1.msra.mxu0 0.0
  %6979 = vmatprep.subr.mxu0 0.0
  %6980 = vmatpush1.msra.mxu0 0.0
  %6981 = vmatprep.subr.mxu0 0.0
  %6982 = vmatpush1.msra.mxu0 0.0
  %6983 = vmatprep.subr.mxu0 0.0
  %6984 = vmatpush1.msra.mxu0 0.0
  %6985 = vmatprep.mubr.f32.mxu0 0.0
  %6986 = vmatmul.mubr.f32.gmra.mrb[0].mxu0 %v6730
  %v6987 = vpop.f32.mrb[0].mxu0
  %v6988 = vadd.f32 0.0, %v6987
  %v6989 = vpop.f32.mrb[0].mxu0
  %6990 = vmatprep.mubr.f32.mxu0 0.0
  %6991 = vmatmul.mubr.f32.gmra.mrb[0].mxu0 %v6733
  %v6992 = vpop.f32.mrb[0].mxu0
  %v6993 = vadd.f32 0.0, %v6992
  %v6994 = vpop.f32.mrb[0].mxu0
  %6995 = vmatprep.mubr.f32.mxu0 0.0
  %6996 = vmatmul.mubr.f32.gmra.mrb[0].mxu0 %v6736
  %v6997 = vpop.f32.mrb[0].mxu0
  %v6998 = vadd.f32 0.0, %v6997
  %v6999 = vpop.f32.mrb[0].mxu0
  %7000 = vmatprep.mubr.f32.mxu0 0.0
  %7001 = vmatmul.mubr.f32.gmra.mrb[0].mxu0 %v6739
  %v7002 = vpop.f32.mrb[0].mxu0
  %v7003 = vadd.f32 0.0, %v7002
  %v7004 = vpop.f32.mrb[0].mxu0
  %7005 = vmatprep.mubr.f32.mxu0 0.0
  %7006 = vmatmul.mubr.f32.gmra.mrb[0].mxu0 %v6742
  %v7007 = vpop.f32.mrb[0].mxu0
  %v7008 = vadd.f32 0.0, %v7007
  %v7009 = vpop.f32.mrb[0].mxu0
  %7010 = vmatprep.mubr.f32.mxu0 0.0
  %7011 = vmatmul.mubr.f32.gmra.mrb[0].mxu0 %v6745
  %v7012 = vpop.f32.mrb[0].mxu0
  %v7013 = vadd.f32 0.0, %v7012
  %v7014 = vpop.f32.mrb[0].mxu0
  %7015 = vmatprep.mubr.f32.mxu0 0.0
  %7016 = vmatmul.mubr.f32.gmra.mrb[0].mxu0 %v6748
  %v7017 = vpop.f32.mrb[0].mxu0
  %v7018 = vadd.f32 0.0, %v7017
  %v7019 = vpop.f32.mrb[0].mxu0
  %7020 = vmatprep.mubr.f32.mxu0 0.0
  %7021 = vmatmul.mubr.f32.gmra.mrb[0].mxu0 %v6751
  %v7022 = vpop.f32.mrb[0].mxu0
  %v7023 = vadd.f32 0.0, %v7022
  %v7024 = vpop.f32.mrb[0].mxu0
  %7025 = vmatprep.mubr.f32.mxu0 0.0
  %7026 = vmatmul.mubr.f32.gmra.mrb[0].mxu0 %v6754
  %v7027 = vpop.f32.mrb[0].mxu0
  %v7028 = vadd.f32 0.0, %v7027
  %v7029 = vpop.f32.mrb[0].mxu0
  %7030 = vmatprep.mubr.f32.mxu0 0.0
  %7031 = vmatmul.mubr.f32.gmra.mrb[0].mxu0 %v6757
  %v7032 = vpop.f32.mrb[0].mxu0
  %v7033 = vadd.f32 0.0, %v7032
  %v7034 = vpop.f32.mrb[0].mxu0
  %7035 = vmatprep.mubr.f32.mxu0 0.0
  %7036 = vmatmul.mubr.f32.gmra.mrb[0].mxu0 %v6760
  %v7037 = vpop.f32.mrb[0].mxu0
  %v7038 = vadd.f32 0.0, %v7037
  %v7039 = vpop.f32.mrb[0].mxu0
  %7040 = vmatprep.mubr.f32.mxu0 0.0
  %7041 = vmatmul.mubr.f32.gmra.mrb[0].mxu0 %v6763
  %v7042 = vpop.f32.mrb[0].mxu0
  %v7043 = vadd.f32 0.0, %v7042
  %v7044 = vpop.f32.mrb[0].mxu0
  %7045 = vmatprep.mubr.f32.mxu0 0.0
  %7046 = vmatmul.mubr.f32.gmra.mrb[0].mxu0 %v6766
  %v7047 = vpop.f32.mrb[0].mxu0
  %v7048 = vadd.f32 0.0, %v7047
  %v7049 = vpop.f32.mrb[0].mxu0
  %7050 = vmatprep.mubr.f32.mxu0 0.0
  %7051 = vmatmul.mubr.f32.gmra.mrb[0].mxu0 %v6769
  %v7052 = vpop.f32.mrb[0].mxu0
  %v7053 = vadd.f32 0.0, %v7052
  %v7054 = vpop.f32.mrb[0].mxu0
  %7055 = vmatprep.mubr.f32.mxu0 0.0
  %7056 = vmatmul.mubr.f32.gmra.mrb[0].mxu0 %v6772
  %v7057 = vpop.f32.mrb[0].mxu0
  %v7058 = vadd.f32 0.0, %v7057
  %v7059 = vpop.f32.mrb[0].mxu0
  %7060 = vmatprep.mubr.f32.mxu0 0.0
  %7061 = vmatmul.mubr.f32.gmra.mrb[0].mxu0 %v6775
  %v7062 = vpop.f32.mrb[0].mxu0
  %v7063 = vadd.f32 0.0, %v7062
  %v7064 = vpop.f32.mrb[0].mxu0
  %7065 = vmatprep.mubr.f32.mxu0 0.0
  %7066 = vmatmul.mubr.f32.gmra.mrb[0].mxu0 %v6778
  %v7067 = vpop.f32.mrb[0].mxu0
  %v7068 = vadd.f32 0.0, %v7067
  %v7069 = vpop.f32.mrb[0].mxu0
  %7070 = vmatprep.mubr.f32.mxu0 0.0
  %7071 = vmatmul.mubr.f32.gmra.mrb[0].mxu0 %v6781
  %v7072 = vpop.f32.mrb[0].mxu0
  %v7073 = vadd.f32 0.0, %v7072
  %v7074 = vpop.f32.mrb[0].mxu0
  %7075 = vmatprep.mubr.f32.mxu0 0.0
  %7076 = vmatmul.mubr.f32.gmra.mrb[0].mxu0 %v6784
  %v7077 = vpop.f32.mrb[0].mxu0
  %v7078 = vadd.f32 0.0, %v7077
  %v7079 = vpop.f32.mrb[0].mxu0
  %7080 = vmatprep.mubr.f32.mxu0 0.0
  %7081 = vmatmul.mubr.f32.gmra.mrb[0].mxu0 %v6787
  %v7082 = vpop.f32.mrb[0].mxu0
  %v7083 = vadd.f32 0.0, %v7082
  %v7084 = vpop.f32.mrb[0].mxu0
  %7085 = vmatprep.mubr.f32.mxu0 0.0
  %7086 = vmatmul.mubr.f32.gmra.mrb[0].mxu0 %v6790
  %v7087 = vpop.f32.mrb[0].mxu0
  %v7088 = vadd.f32 0.0, %v7087
  %v7089 = vpop.f32.mrb[0].mxu0
  %7090 = vmatprep.mubr.f32.mxu0 0.0
  %7091 = vmatmul.mubr.f32.gmra.mrb[0].mxu0 %v6793
  %v7092 = vpop.f32.mrb[0].mxu0
  %v7093 = vadd.f32 0.0, %v7092
  %v7094 = vpop.f32.mrb[0].mxu0
  %7095 = vmatprep.mubr.f32.mxu0 0.0
  %7096 = vmatmul.mubr.f32.gmra.mrb[0].mxu0 %v6796
  %v7097 = vpop.f32.mrb[0].mxu0
  %v7098 = vadd.f32 0.0, %v7097
  %v7099 = vpop.f32.mrb[0].mxu0
  %7100 = vmatprep.mubr.f32.mxu0 0.0
  %7101 = vmatmul.mubr.f32.gmra.mrb[0].mxu0 %v6799
  %v7102 = vpop.f32.mrb[0].mxu0
  %v7103 = vadd.f32 0.0, %v7102
  %v7104 = vpop.f32.mrb[0].mxu0
  %7105 = vmatprep.mubr.f32.mxu0 0.0
  %7106 = vmatmul.mubr.f32.gmra.mrb[0].mxu0 %v6802
  %v7107 = vpop.f32.mrb[0].mxu0
  %v7108 = vadd.f32 0.0, %v7107
  %v7109 = vpop.f32.mrb[0].mxu0
  %7110 = vmatprep.mubr.f32.mxu0 0.0
  %7111 = vmatmul.mubr.f32.gmra.mrb[0].mxu0 %v6805
  %v7112 = vpop.f32.mrb[0].mxu0
  %v7113 = vadd.f32 0.0, %v7112
  %v7114 = vpop.f32.mrb[0].mxu0
  %7115 = vmatprep.mubr.f32.mxu0 0.0
  %7116 = vmatmul.mubr.f32.gmra.mrb[0].mxu0 %v6808
  %v7117 = vpop.f32.mrb[0].mxu0
  %v7118 = vadd.f32 0.0, %v7117
  %v7119 = vpop.f32.mrb[0].mxu0
  %7120 = vmatprep.mubr.f32.mxu0 0.0
  %7121 = vmatmul.mubr.f32.gmra.mrb[0].mxu0 %v6811
  %v7122 = vpop.f32.mrb[0].mxu0
  %v7123 = vadd.f32 0.0, %v7122
  %v7124 = vpop.f32.mrb[0].mxu0
  %7125 = vmatprep.mubr.f32.mxu0 0.0
  %7126 = vmatmul.mubr.f32.gmra.mrb[0].mxu0 %v6814
  %v7127 = vpop.f32.mrb[0].mxu0
  %v7128 = vadd.f32 0.0, %v7127
  %v7129 = vpop.f32.mrb[0].mxu0
  %7130 = vmatprep.mubr.f32.mxu0 0.0
  %7131 = vmatmul.mubr.f32.gmra.mrb[0].mxu0 %v6817
  %v7132 = vpop.f32.mrb[0].mxu0
  %v7133 = vadd.f32 0.0, %v7132
  %v7134 = vpop.f32.mrb[0].mxu0
  %7135 = vmatprep.mubr.f32.mxu0 0.0
  %7136 = vmatmul.mubr.f32.gmra.mrb[0].mxu0 %v6820
  %v7137 = vpop.f32.mrb[0].mxu0
  %v7138 = vadd.f32 0.0, %v7137
  %v7139 = vpop.f32.mrb[0].mxu0
  %7140 = vmatprep.mubr.f32.mxu0 0.0
  %7141 = vmatmul.mubr.f32.gmra.mrb[0].mxu0 %v6823
  %v7142 = vpop.f32.mrb[0].mxu0
  %v7143 = vadd.f32 0.0, %v7142
  %v7144 = vpop.f32.mrb[0].mxu0
  %7145 = vmatprep.mubr.f32.mxu0 0.0
  %7146 = vmatmul.mubr.f32.gmra.mrb[0].mxu0 %v6826
  %v7147 = vpop.f32.mrb[0].mxu0
  %v7148 = vadd.f32 0.0, %v7147
  %v7149 = vpop.f32.mrb[0].mxu0
  %7150 = vmatprep.mubr.f32.mxu0 0.0
  %7151 = vmatmul.mubr.f32.gmra.mrb[0].mxu0 %v6829
  %v7152 = vpop.f32.mrb[0].mxu0
  %v7153 = vadd.f32 0.0, %v7152
  %v7154 = vpop.f32.mrb[0].mxu0
  %7155 = vmatprep.mubr.f32.mxu0 0.0
  %7156 = vmatmul.mubr.f32.gmra.mrb[0].mxu0 %v6832
  %v7157 = vpop.f32.mrb[0].mxu0
  %v7158 = vadd.f32 0.0, %v7157
  %v7159 = vpop.f32.mrb[0].mxu0
  %7160 = vmatprep.mubr.f32.mxu0 0.0
  %7161 = vmatmul.mubr.f32.gmra.mrb[0].mxu0 %v6835
  %v7162 = vpop.f32.mrb[0].mxu0
  %v7163 = vadd.f32 0.0, %v7162
  %v7164 = vpop.f32.mrb[0].mxu0
  %7165 = vmatprep.mubr.f32.mxu0 0.0
  %7166 = vmatmul.mubr.f32.gmra.mrb[0].mxu0 %v6838
  %v7167 = vpop.f32.mrb[0].mxu0
  %v7168 = vadd.f32 0.0, %v7167
  %v7169 = vpop.f32.mrb[0].mxu0
  %7170 = vmatprep.mubr.f32.mxu0 0.0
  %7171 = vmatmul.mubr.f32.gmra.mrb[0].mxu0 %v6841
  %v7172 = vpop.f32.mrb[0].mxu0
  %v7173 = vadd.f32 0.0, %v7172
  %v7174 = vpop.f32.mrb[0].mxu0
  %7175 = vmatprep.mubr.f32.mxu0 0.0
  %7176 = vmatmul.mubr.f32.gmra.mrb[0].mxu0 %v6844
  %v7177 = vpop.f32.mrb[0].mxu0
  %v7178 = vadd.f32 0.0, %v7177
  %v7179 = vpop.f32.mrb[0].mxu0
  %7180 = vmatprep.mubr.f32.mxu0 0.0
  %7181 = vmatmul.mubr.f32.gmra.mrb[0].mxu0 %v6847
  %v7182 = vpop.f32.mrb[0].mxu0
  %v7183 = vadd.f32 0.0, %v7182
  %v7184 = vpop.f32.mrb[0].mxu0
  %7185 = vmatprep.mubr.f32.mxu0 0.0
  %7186 = vmatmul.mubr.f32.gmra.mrb[0].mxu0 %v6850
  %v7187 = vpop.f32.mrb[0].mxu0
  %v7188 = vadd.f32 0.0, %v7187
  %v7189 = vpop.f32.mrb[0].mxu0
  %7190 = vmatprep.mubr.f32.mxu0 0.0
  %7191 = vmatmul.mubr.f32.gmra.mrb[0].mxu0 %v6853
  %v7192 = vpop.f32.mrb[0].mxu0
  %v7193 = vadd.f32 0.0, %v7192
  %v7194 = vpop.f32.mrb[0].mxu0
  %7195 = vmatprep.mubr.f32.mxu0 0.0
  %7196 = vmatmul.mubr.f32.gmra.mrb[0].mxu0 %v6856
  %v7197 = vpop.f32.mrb[0].mxu0
  %v7198 = vadd.f32 0.0, %v7197
  %v7199 = vpop.f32.mrb[0].mxu0
  %7200 = vmatprep.mubr.f32.mxu0 0.0
  %7201 = vmatmul.mubr.f32.gmra.mrb[0].mxu0 %v6859
  %v7202 = vpop.f32.mrb[0].mxu0
  %v7203 = vadd.f32 0.0, %v7202
  %v7204 = vpop.f32.mrb[0].mxu0
  %7205 = vmatprep.mubr.f32.mxu0 0.0
  %7206 = vmatmul.mubr.f32.gmra.mrb[0].mxu0 %v6862
  %v7207 = vpop.f32.mrb[0].mxu0
  %v7208 = vadd.f32 0.0, %v7207
  %v7209 = vpop.f32.mrb[0].mxu0
  %7210 = vmatprep.mubr.f32.mxu0 0.0
  %7211 = vmatmul.mubr.f32.gmra.mrb[0].mxu0 %v6865
  %v7212 = vpop.f32.mrb[0].mxu0
  %v7213 = vadd.f32 0.0, %v7212
  %v7214 = vpop.f32.mrb[0].mxu0
  %7215 = vmatprep.mubr.f32.mxu0 0.0
  %7216 = vmatmul.mubr.f32.gmra.mrb[0].mxu0 %v6868
  %v7217 = vpop.f32.mrb[0].mxu0
  %v7218 = vadd.f32 0.0, %v7217
  %v7219 = vpop.f32.mrb[0].mxu0
  %7220 = vmatprep.mubr.f32.mxu0 0.0
  %7221 = vmatmul.mubr.f32.gmra.mrb[0].mxu0 %v6871
  %v7222 = vpop.f32.mrb[0].mxu0
  %v7223 = vadd.f32 0.0, %v7222
  %v7224 = vpop.f32.mrb[0].mxu0
  %7225 = vmatprep.mubr.f32.mxu0 0.0
  %7226 = vmatmul.mubr.f32.gmra.mrb[0].mxu0 %v6874
  %v7227 = vpop.f32.mrb[0].mxu0
  %v7228 = vadd.f32 0.0, %v7227
  %v7229 = vpop.f32.mrb[0].mxu0
  %7230 = vmatprep.mubr.f32.mxu0 0.0
  %7231 = vmatmul.mubr.f32.gmra.mrb[0].mxu0 %v6877
  %v7232 = vpop.f32.mrb[0].mxu0
  %v7233 = vadd.f32 0.0, %v7232
  %v7234 = vpop.f32.mrb[0].mxu0
  %7235 = vmatprep.mubr.f32.mxu0 0.0
  %7236 = vmatmul.mubr.f32.gmra.mrb[0].mxu0 %v6880
  %v7237 = vpop.f32.mrb[0].mxu0
  %v7238 = vadd.f32 0.0, %v7237
  %v7239 = vpop.f32.mrb[0].mxu0
  %7240 = vmatprep.mubr.f32.mxu0 0.0
  %7241 = vmatmul.mubr.f32.gmra.mrb[0].mxu0 %v6883
  %v7242 = vpop.f32.mrb[0].mxu0
  %v7243 = vadd.f32 0.0, %v7242
  %v7244 = vpop.f32.mrb[0].mxu0
  %7245 = vmatprep.mubr.f32.mxu0 0.0
  %7246 = vmatmul.mubr.f32.gmra.mrb[0].mxu0 %v6886
  %v7247 = vpop.f32.mrb[0].mxu0
  %v7248 = vadd.f32 0.0, %v7247
  %v7249 = vpop.f32.mrb[0].mxu0
  %7250 = vmatprep.mubr.f32.mxu0 0.0
  %7251 = vmatmul.mubr.f32.gmra.mrb[0].mxu0 %v6889
  %v7252 = vpop.f32.mrb[0].mxu0
  %v7253 = vadd.f32 0.0, %v7252
  %v7254 = vpop.f32.mrb[0].mxu0
  %7255 = vmatprep.mubr.f32.mxu0 0.0
  %7256 = vmatmul.mubr.f32.gmra.mrb[0].mxu0 %v6892
  %v7257 = vpop.f32.mrb[0].mxu0
  %v7258 = vadd.f32 0.0, %v7257
  %v7259 = vpop.f32.mrb[0].mxu0
  %7260 = vmatprep.mubr.f32.mxu0 0.0
  %7261 = vmatmul.mubr.f32.gmra.mrb[0].mxu0 %v6895
  %v7262 = vpop.f32.mrb[0].mxu0
  %v7263 = vadd.f32 0.0, %v7262
  %v7264 = vpop.f32.mrb[0].mxu0
  %7265 = vmatprep.mubr.f32.mxu0 0.0
  %7266 = vmatmul.mubr.f32.gmra.mrb[0].mxu0 %v6898
  %v7267 = vpop.f32.mrb[0].mxu0
  %v7268 = vadd.f32 0.0, %v7267
  %v7269 = vpop.f32.mrb[0].mxu0
  %7270 = vmatprep.mubr.f32.mxu0 0.0
  %7271 = vmatmul.mubr.f32.gmra.mrb[0].mxu0 %v6901
  %v7272 = vpop.f32.mrb[0].mxu0
  %v7273 = vadd.f32 0.0, %v7272
  %v7274 = vpop.f32.mrb[0].mxu0
  %7275 = vmatprep.mubr.f32.mxu0 0.0
  %7276 = vmatmul.mubr.f32.gmra.mrb[0].mxu0 %v6904
  %v7277 = vpop.f32.mrb[0].mxu0
  %v7278 = vadd.f32 0.0, %v7277
  %v7279 = vpop.f32.mrb[0].mxu0
  %7280 = vmatprep.mubr.f32.mxu0 0.0
  %7281 = vmatmul.mubr.f32.gmra.mrb[0].mxu0 %v6907
  %v7282 = vpop.f32.mrb[0].mxu0
  %v7283 = vadd.f32 0.0, %v7282
  %v7284 = vpop.f32.mrb[0].mxu0
  %7285 = vmatprep.mubr.f32.mxu0 0.0
  %7286 = vmatmul.mubr.f32.gmra.mrb[0].mxu0 %v6910
  %v7287 = vpop.f32.mrb[0].mxu0
  %v7288 = vadd.f32 0.0, %v7287
  %v7289 = vpop.f32.mrb[0].mxu0
  %7290 = vmatprep.mubr.f32.mxu0 0.0
  %7291 = vmatmul.mubr.f32.gmra.mrb[0].mxu0 %v6913
  %v7292 = vpop.f32.mrb[0].mxu0
  %v7293 = vadd.f32 0.0, %v7292
  %v7294 = vpop.f32.mrb[0].mxu0
  %7295 = vmatprep.mubr.f32.mxu0 0.0
  %7296 = vmatmul.mubr.f32.gmra.mrb[0].mxu0 %v6916
  %v7297 = vpop.f32.mrb[0].mxu0
  %v7298 = vadd.f32 0.0, %v7297
  %v7299 = vpop.f32.mrb[0].mxu0
  %7300 = vmatprep.mubr.f32.mxu0 0.0
  %7301 = vmatmul.mubr.f32.gmra.mrb[0].mxu0 %v6919
  %v7302 = vpop.f32.mrb[0].mxu0
  %v7303 = vadd.f32 0.0, %v7302
  %v7304 = vpop.f32.mrb[0].mxu0
  %7305 = vdwg.mxu0
  %v7307 = vsel %vm6522, %v6593, 0
  %v7310 = vsel %vm6522, %v6594, 0
  %v7313 = vsel %vm6522, %v6595, 0
  %v7316 = vsel %vm6522, %v6596, 0
  %v7319 = vsel %vm6522, %v6597, 0
  %v7322 = vsel %vm6522, %v6598, 0
  %v7325 = vsel %vm6522, %v6599, 0
  %v7328 = vsel %vm6522, %v6600, 0
  %v7331 = vsel %vm6522, %v6601, 0
  %v7334 = vsel %vm6522, %v6602, 0
  %v7337 = vsel %vm6522, %v6603, 0
  %v7340 = vsel %vm6522, %v6604, 0
  %v7343 = vsel %vm6522, %v6605, 0
  %v7346 = vsel %vm6522, %v6606, 0
  %v7349 = vsel %vm6522, %v6607, 0
  %v7352 = vsel %vm6522, %v6608, 0
  %v7355 = vsel %vm6522, %v6609, 0
  %v7358 = vsel %vm6522, %v6610, 0
  %v7361 = vsel %vm6522, %v6611, 0
  %v7364 = vsel %vm6522, %v6612, 0
  %v7367 = vsel %vm6522, %v6613, 0
  %v7370 = vsel %vm6522, %v6614, 0
  %v7373 = vsel %vm6522, %v6615, 0
  %v7376 = vsel %vm6522, %v6616, 0
  %v7379 = vsel %vm6522, %v6617, 0
  %v7382 = vsel %vm6522, %v6618, 0
  %v7385 = vsel %vm6522, %v6619, 0
  %v7388 = vsel %vm6522, %v6620, 0
  %v7391 = vsel %vm6522, %v6621, 0
  %v7394 = vsel %vm6522, %v6622, 0
  %v7397 = vsel %vm6522, %v6623, 0
  %v7400 = vsel %vm6522, %v6624, 0
  %v7403 = vsel %vm6522, %v6625, 0
  %v7406 = vsel %vm6522, %v6626, 0
  %v7409 = vsel %vm6522, %v6627, 0
  %v7412 = vsel %vm6522, %v6628, 0
  %v7415 = vsel %vm6522, %v6629, 0
  %v7418 = vsel %vm6522, %v6630, 0
  %v7421 = vsel %vm6522, %v6631, 0
  %v7424 = vsel %vm6522, %v6632, 0
  %v7427 = vsel %vm6522, %v6633, 0
  %v7430 = vsel %vm6522, %v6634, 0
  %v7433 = vsel %vm6522, %v6635, 0
  %v7436 = vsel %vm6522, %v6636, 0
  %v7439 = vsel %vm6522, %v6637, 0
  %v7442 = vsel %vm6522, %v6638, 0
  %v7445 = vsel %vm6522, %v6639, 0
  %v7448 = vsel %vm6522, %v6640, 0
  %v7451 = vsel %vm6522, %v6641, 0
  %v7454 = vsel %vm6522, %v6642, 0
  %v7457 = vsel %vm6522, %v6643, 0
  %v7460 = vsel %vm6522, %v6644, 0
  %v7463 = vsel %vm6522, %v6645, 0
  %v7466 = vsel %vm6522, %v6646, 0
  %v7469 = vsel %vm6522, %v6647, 0
  %v7472 = vsel %vm6522, %v6648, 0
  %v7475 = vsel %vm6522, %v6649, 0
  %v7478 = vsel %vm6522, %v6650, 0
  %v7481 = vsel %vm6522, %v6651, 0
  %v7484 = vsel %vm6522, %v6652, 0
  %v7487 = vsel %vm6522, %v6653, 0
  %v7490 = vsel %vm6522, %v6654, 0
  %v7493 = vsel %vm6522, %v6655, 0
  %v7496 = vsel %vm6522, %v6656, 0
  %7498 = vmatprep.subr.mxu0 0.0
  %7499 = vmatpush1.msra.mxu0 %v6657
  %7500 = vmatprep.subr.mxu0 0.0
  %7501 = vmatpush1.msra.mxu0 %v6658
  %7502 = vmatprep.subr.mxu0 0.0
  %7503 = vmatpush1.msra.mxu0 %v6659
  %7504 = vmatprep.subr.mxu0 0.0
  %7505 = vmatpush1.msra.mxu0 %v6660
  %7506 = vmatprep.subr.mxu0 0.0
  %7507 = vmatpush1.msra.mxu0 0.0
  %7508 = vmatprep.subr.mxu0 0.0
  %7509 = vmatpush1.msra.mxu0 0.0
  %7510 = vmatprep.subr.mxu0 0.0
  %7511 = vmatpush1.msra.mxu0 0.0
  %7512 = vmatprep.subr.mxu0 0.0
  %7513 = vmatpush1.msra.mxu0 0.0
  %7514 = vmatprep.subr.mxu0 0.0
  %7515 = vmatpush1.msra.mxu0 0.0
  %7516 = vmatprep.subr.mxu0 0.0
  %7517 = vmatpush1.msra.mxu0 0.0
  %7518 = vmatprep.subr.mxu0 0.0
  %7519 = vmatpush1.msra.mxu0 0.0
  %7520 = vmatprep.subr.mxu0 0.0
  %7521 = vmatpush1.msra.mxu0 0.0
  %7522 = vmatprep.subr.mxu0 0.0
  %7523 = vmatpush1.msra.mxu0 0.0
  %7524 = vmatprep.subr.mxu0 0.0
  %7525 = vmatpush1.msra.mxu0 0.0
  %7526 = vmatprep.subr.mxu0 0.0
  %7527 = vmatpush1.msra.mxu0 0.0
  %7528 = vmatprep.subr.mxu0 0.0
  %7529 = vmatpush1.msra.mxu0 0.0
  %7530 = vmatprep.subr.mxu0 0.0
  %7531 = vmatpush1.msra.mxu0 0.0
  %7532 = vmatprep.subr.mxu0 0.0
  %7533 = vmatpush1.msra.mxu0 0.0
  %7534 = vmatprep.subr.mxu0 0.0
  %7535 = vmatpush1.msra.mxu0 0.0
  %7536 = vmatprep.subr.mxu0 0.0
  %7537 = vmatpush1.msra.mxu0 0.0
  %7538 = vmatprep.subr.mxu0 0.0
  %7539 = vmatpush1.msra.mxu0 0.0
  %7540 = vmatprep.subr.mxu0 0.0
  %7541 = vmatpush1.msra.mxu0 0.0
  %7542 = vmatprep.subr.mxu0 0.0
  %7543 = vmatpush1.msra.mxu0 0.0
  %7544 = vmatprep.subr.mxu0 0.0
  %7545 = vmatpush1.msra.mxu0 0.0
  %7546 = vmatprep.subr.mxu0 0.0
  %7547 = vmatpush1.msra.mxu0 0.0
  %7548 = vmatprep.subr.mxu0 0.0
  %7549 = vmatpush1.msra.mxu0 0.0
  %7550 = vmatprep.subr.mxu0 0.0
  %7551 = vmatpush1.msra.mxu0 0.0
  %7552 = vmatprep.subr.mxu0 0.0
  %7553 = vmatpush1.msra.mxu0 0.0
  %7554 = vmatprep.subr.mxu0 0.0
  %7555 = vmatpush1.msra.mxu0 0.0
  %7556 = vmatprep.subr.mxu0 0.0
  %7557 = vmatpush1.msra.mxu0 0.0
  %7558 = vmatprep.subr.mxu0 0.0
  %7559 = vmatpush1.msra.mxu0 0.0
  %7560 = vmatprep.subr.mxu0 0.0
  %7561 = vmatpush1.msra.mxu0 0.0
  %7562 = vmatprep.mubr.f32.mxu0 0.0
  %7563 = vmatmul.mubr.f32.gmra.mrb[0].mxu0 %v7307
  %v7564 = vpop.f32.mrb[0].mxu0
  %v7565 = vadd.f32 %v6988, %v7564
  %v7566 = vpop.f32.mrb[0].mxu0
  %7567 = vmatprep.mubr.f32.mxu0 0.0
  %7568 = vmatmul.mubr.f32.gmra.mrb[0].mxu0 %v7310
  %v7569 = vpop.f32.mrb[0].mxu0
  %v7570 = vadd.f32 %v6993, %v7569
  %v7571 = vpop.f32.mrb[0].mxu0
  %7572 = vmatprep.mubr.f32.mxu0 0.0
  %7573 = vmatmul.mubr.f32.gmra.mrb[0].mxu0 %v7313
  %v7574 = vpop.f32.mrb[0].mxu0
  %v7575 = vadd.f32 %v6998, %v7574
  %v7576 = vpop.f32.mrb[0].mxu0
  %7577 = vmatprep.mubr.f32.mxu0 0.0
  %7578 = vmatmul.mubr.f32.gmra.mrb[0].mxu0 %v7316
  %v7579 = vpop.f32.mrb[0].mxu0
  %v7580 = vadd.f32 %v7003, %v7579
  %v7581 = vpop.f32.mrb[0].mxu0
  %7582 = vmatprep.mubr.f32.mxu0 0.0
  %7583 = vmatmul.mubr.f32.gmra.mrb[0].mxu0 %v7319
  %v7584 = vpop.f32.mrb[0].mxu0
  %v7585 = vadd.f32 %v7008, %v7584
  %v7586 = vpop.f32.mrb[0].mxu0
  %7587 = vmatprep.mubr.f32.mxu0 0.0
  %7588 = vmatmul.mubr.f32.gmra.mrb[0].mxu0 %v7322
  %v7589 = vpop.f32.mrb[0].mxu0
  %v7590 = vadd.f32 %v7013, %v7589
  %v7591 = vpop.f32.mrb[0].mxu0
  %7592 = vmatprep.mubr.f32.mxu0 0.0
  %7593 = vmatmul.mubr.f32.gmra.mrb[0].mxu0 %v7325
  %v7594 = vpop.f32.mrb[0].mxu0
  %v7595 = vadd.f32 %v7018, %v7594
  %v7596 = vpop.f32.mrb[0].mxu0
  %7597 = vmatprep.mubr.f32.mxu0 0.0
  %7598 = vmatmul.mubr.f32.gmra.mrb[0].mxu0 %v7328
  %v7599 = vpop.f32.mrb[0].mxu0
  %v7600 = vadd.f32 %v7023, %v7599
  %v7601 = vpop.f32.mrb[0].mxu0
  %7602 = vmatprep.mubr.f32.mxu0 0.0
  %7603 = vmatmul.mubr.f32.gmra.mrb[0].mxu0 %v7331
  %v7604 = vpop.f32.mrb[0].mxu0
  %v7605 = vadd.f32 %v7028, %v7604
  %v7606 = vpop.f32.mrb[0].mxu0
  %7607 = vmatprep.mubr.f32.mxu0 0.0
  %7608 = vmatmul.mubr.f32.gmra.mrb[0].mxu0 %v7334
  %v7609 = vpop.f32.mrb[0].mxu0
  %v7610 = vadd.f32 %v7033, %v7609
  %v7611 = vpop.f32.mrb[0].mxu0
  %7612 = vmatprep.mubr.f32.mxu0 0.0
  %7613 = vmatmul.mubr.f32.gmra.mrb[0].mxu0 %v7337
  %v7614 = vpop.f32.mrb[0].mxu0
  %v7615 = vadd.f32 %v7038, %v7614
  %v7616 = vpop.f32.mrb[0].mxu0
  %7617 = vmatprep.mubr.f32.mxu0 0.0
  %7618 = vmatmul.mubr.f32.gmra.mrb[0].mxu0 %v7340
  %v7619 = vpop.f32.mrb[0].mxu0
  %v7620 = vadd.f32 %v7043, %v7619
  %v7621 = vpop.f32.mrb[0].mxu0
  %7622 = vmatprep.mubr.f32.mxu0 0.0
  %7623 = vmatmul.mubr.f32.gmra.mrb[0].mxu0 %v7343
  %v7624 = vpop.f32.mrb[0].mxu0
  %v7625 = vadd.f32 %v7048, %v7624
  %v7626 = vpop.f32.mrb[0].mxu0
  %7627 = vmatprep.mubr.f32.mxu0 0.0
  %7628 = vmatmul.mubr.f32.gmra.mrb[0].mxu0 %v7346
  %v7629 = vpop.f32.mrb[0].mxu0
  %v7630 = vadd.f32 %v7053, %v7629
  %v7631 = vpop.f32.mrb[0].mxu0
  %7632 = vmatprep.mubr.f32.mxu0 0.0
  %7633 = vmatmul.mubr.f32.gmra.mrb[0].mxu0 %v7349
  %v7634 = vpop.f32.mrb[0].mxu0
  %v7635 = vadd.f32 %v7058, %v7634
  %v7636 = vpop.f32.mrb[0].mxu0
  %7637 = vmatprep.mubr.f32.mxu0 0.0
  %7638 = vmatmul.mubr.f32.gmra.mrb[0].mxu0 %v7352
  %v7639 = vpop.f32.mrb[0].mxu0
  %v7640 = vadd.f32 %v7063, %v7639
  %v7641 = vpop.f32.mrb[0].mxu0
  %7642 = vmatprep.mubr.f32.mxu0 0.0
  %7643 = vmatmul.mubr.f32.gmra.mrb[0].mxu0 %v7355
  %v7644 = vpop.f32.mrb[0].mxu0
  %v7645 = vadd.f32 %v7068, %v7644
  %v7646 = vpop.f32.mrb[0].mxu0
  %7647 = vmatprep.mubr.f32.mxu0 0.0
  %7648 = vmatmul.mubr.f32.gmra.mrb[0].mxu0 %v7358
  %v7649 = vpop.f32.mrb[0].mxu0
  %v7650 = vadd.f32 %v7073, %v7649
  %v7651 = vpop.f32.mrb[0].mxu0
  %7652 = vmatprep.mubr.f32.mxu0 0.0
  %7653 = vmatmul.mubr.f32.gmra.mrb[0].mxu0 %v7361
  %v7654 = vpop.f32.mrb[0].mxu0
  %v7655 = vadd.f32 %v7078, %v7654
  %v7656 = vpop.f32.mrb[0].mxu0
  %7657 = vmatprep.mubr.f32.mxu0 0.0
  %7658 = vmatmul.mubr.f32.gmra.mrb[0].mxu0 %v7364
  %v7659 = vpop.f32.mrb[0].mxu0
  %v7660 = vadd.f32 %v7083, %v7659
  %v7661 = vpop.f32.mrb[0].mxu0
  %7662 = vmatprep.mubr.f32.mxu0 0.0
  %7663 = vmatmul.mubr.f32.gmra.mrb[0].mxu0 %v7367
  %v7664 = vpop.f32.mrb[0].mxu0
  %v7665 = vadd.f32 %v7088, %v7664
  %v7666 = vpop.f32.mrb[0].mxu0
  %7667 = vmatprep.mubr.f32.mxu0 0.0
  %7668 = vmatmul.mubr.f32.gmra.mrb[0].mxu0 %v7370
  %v7669 = vpop.f32.mrb[0].mxu0
  %v7670 = vadd.f32 %v7093, %v7669
  %v7671 = vpop.f32.mrb[0].mxu0
  %7672 = vmatprep.mubr.f32.mxu0 0.0
  %7673 = vmatmul.mubr.f32.gmra.mrb[0].mxu0 %v7373
  %v7674 = vpop.f32.mrb[0].mxu0
  %v7675 = vadd.f32 %v7098, %v7674
  %v7676 = vpop.f32.mrb[0].mxu0
  %7677 = vmatprep.mubr.f32.mxu0 0.0
  %7678 = vmatmul.mubr.f32.gmra.mrb[0].mxu0 %v7376
  %v7679 = vpop.f32.mrb[0].mxu0
  %v7680 = vadd.f32 %v7103, %v7679
  %v7681 = vpop.f32.mrb[0].mxu0
  %7682 = vmatprep.mubr.f32.mxu0 0.0
  %7683 = vmatmul.mubr.f32.gmra.mrb[0].mxu0 %v7379
  %v7684 = vpop.f32.mrb[0].mxu0
  %v7685 = vadd.f32 %v7108, %v7684
  %v7686 = vpop.f32.mrb[0].mxu0
  %7687 = vmatprep.mubr.f32.mxu0 0.0
  %7688 = vmatmul.mubr.f32.gmra.mrb[0].mxu0 %v7382
  %v7689 = vpop.f32.mrb[0].mxu0
  %v7690 = vadd.f32 %v7113, %v7689
  %v7691 = vpop.f32.mrb[0].mxu0
  %7692 = vmatprep.mubr.f32.mxu0 0.0
  %7693 = vmatmul.mubr.f32.gmra.mrb[0].mxu0 %v7385
  %v7694 = vpop.f32.mrb[0].mxu0
  %v7695 = vadd.f32 %v7118, %v7694
  %v7696 = vpop.f32.mrb[0].mxu0
  %7697 = vmatprep.mubr.f32.mxu0 0.0
  %7698 = vmatmul.mubr.f32.gmra.mrb[0].mxu0 %v7388
  %v7699 = vpop.f32.mrb[0].mxu0
  %v7700 = vadd.f32 %v7123, %v7699
  %v7701 = vpop.f32.mrb[0].mxu0
  %7702 = vmatprep.mubr.f32.mxu0 0.0
  %7703 = vmatmul.mubr.f32.gmra.mrb[0].mxu0 %v7391
  %v7704 = vpop.f32.mrb[0].mxu0
  %v7705 = vadd.f32 %v7128, %v7704
  %v7706 = vpop.f32.mrb[0].mxu0
  %7707 = vmatprep.mubr.f32.mxu0 0.0
  %7708 = vmatmul.mubr.f32.gmra.mrb[0].mxu0 %v7394
  %v7709 = vpop.f32.mrb[0].mxu0
  %v7710 = vadd.f32 %v7133, %v7709
  %v7711 = vpop.f32.mrb[0].mxu0
  %7712 = vmatprep.mubr.f32.mxu0 0.0
  %7713 = vmatmul.mubr.f32.gmra.mrb[0].mxu0 %v7397
  %v7714 = vpop.f32.mrb[0].mxu0
  %v7715 = vadd.f32 %v7138, %v7714
  %v7716 = vpop.f32.mrb[0].mxu0
  %7717 = vmatprep.mubr.f32.mxu0 0.0
  %7718 = vmatmul.mubr.f32.gmra.mrb[0].mxu0 %v7400
  %v7719 = vpop.f32.mrb[0].mxu0
  %v7720 = vadd.f32 %v7143, %v7719
  %v7721 = vpop.f32.mrb[0].mxu0
  %7722 = vmatprep.mubr.f32.mxu0 0.0
  %7723 = vmatmul.mubr.f32.gmra.mrb[0].mxu0 %v7403
  %v7724 = vpop.f32.mrb[0].mxu0
  %v7725 = vadd.f32 %v7148, %v7724
  %v7726 = vpop.f32.mrb[0].mxu0
  %7727 = vmatprep.mubr.f32.mxu0 0.0
  %7728 = vmatmul.mubr.f32.gmra.mrb[0].mxu0 %v7406
  %v7729 = vpop.f32.mrb[0].mxu0
  %v7730 = vadd.f32 %v7153, %v7729
  %v7731 = vpop.f32.mrb[0].mxu0
  %7732 = vmatprep.mubr.f32.mxu0 0.0
  %7733 = vmatmul.mubr.f32.gmra.mrb[0].mxu0 %v7409
  %v7734 = vpop.f32.mrb[0].mxu0
  %v7735 = vadd.f32 %v7158, %v7734
  %v7736 = vpop.f32.mrb[0].mxu0
  %7737 = vmatprep.mubr.f32.mxu0 0.0
  %7738 = vmatmul.mubr.f32.gmra.mrb[0].mxu0 %v7412
  %v7739 = vpop.f32.mrb[0].mxu0
  %v7740 = vadd.f32 %v7163, %v7739
  %v7741 = vpop.f32.mrb[0].mxu0
  %7742 = vmatprep.mubr.f32.mxu0 0.0
  %7743 = vmatmul.mubr.f32.gmra.mrb[0].mxu0 %v7415
  %v7744 = vpop.f32.mrb[0].mxu0
  %v7745 = vadd.f32 %v7168, %v7744
  %v7746 = vpop.f32.mrb[0].mxu0
  %7747 = vmatprep.mubr.f32.mxu0 0.0
  %7748 = vmatmul.mubr.f32.gmra.mrb[0].mxu0 %v7418
  %v7749 = vpop.f32.mrb[0].mxu0
  %v7750 = vadd.f32 %v7173, %v7749
  %v7751 = vpop.f32.mrb[0].mxu0
  %7752 = vmatprep.mubr.f32.mxu0 0.0
  %7753 = vmatmul.mubr.f32.gmra.mrb[0].mxu0 %v7421
  %v7754 = vpop.f32.mrb[0].mxu0
  %v7755 = vadd.f32 %v7178, %v7754
  %v7756 = vpop.f32.mrb[0].mxu0
  %7757 = vmatprep.mubr.f32.mxu0 0.0
  %7758 = vmatmul.mubr.f32.gmra.mrb[0].mxu0 %v7424
  %v7759 = vpop.f32.mrb[0].mxu0
  %v7760 = vadd.f32 %v7183, %v7759
  %v7761 = vpop.f32.mrb[0].mxu0
  %7762 = vmatprep.mubr.f32.mxu0 0.0
  %7763 = vmatmul.mubr.f32.gmra.mrb[0].mxu0 %v7427
  %v7764 = vpop.f32.mrb[0].mxu0
  %v7765 = vadd.f32 %v7188, %v7764
  %v7766 = vpop.f32.mrb[0].mxu0
  %7767 = vmatprep.mubr.f32.mxu0 0.0
  %7768 = vmatmul.mubr.f32.gmra.mrb[0].mxu0 %v7430
  %v7769 = vpop.f32.mrb[0].mxu0
  %v7770 = vadd.f32 %v7193, %v7769
  %v7771 = vpop.f32.mrb[0].mxu0
  %7772 = vmatprep.mubr.f32.mxu0 0.0
  %7773 = vmatmul.mubr.f32.gmra.mrb[0].mxu0 %v7433
  %v7774 = vpop.f32.mrb[0].mxu0
  %v7775 = vadd.f32 %v7198, %v7774
  %v7776 = vpop.f32.mrb[0].mxu0
  %7777 = vmatprep.mubr.f32.mxu0 0.0
  %7778 = vmatmul.mubr.f32.gmra.mrb[0].mxu0 %v7436
  %v7779 = vpop.f32.mrb[0].mxu0
  %v7780 = vadd.f32 %v7203, %v7779
  %v7781 = vpop.f32.mrb[0].mxu0
  %7782 = vmatprep.mubr.f32.mxu0 0.0
  %7783 = vmatmul.mubr.f32.gmra.mrb[0].mxu0 %v7439
  %v7784 = vpop.f32.mrb[0].mxu0
  %v7785 = vadd.f32 %v7208, %v7784
  %v7786 = vpop.f32.mrb[0].mxu0
  %7787 = vmatprep.mubr.f32.mxu0 0.0
  %7788 = vmatmul.mubr.f32.gmra.mrb[0].mxu0 %v7442
  %v7789 = vpop.f32.mrb[0].mxu0
  %v7790 = vadd.f32 %v7213, %v7789
  %v7791 = vpop.f32.mrb[0].mxu0
  %7792 = vmatprep.mubr.f32.mxu0 0.0
  %7793 = vmatmul.mubr.f32.gmra.mrb[0].mxu0 %v7445
  %v7794 = vpop.f32.mrb[0].mxu0
  %v7795 = vadd.f32 %v7218, %v7794
  %v7796 = vpop.f32.mrb[0].mxu0
  %7797 = vmatprep.mubr.f32.mxu0 0.0
  %7798 = vmatmul.mubr.f32.gmra.mrb[0].mxu0 %v7448
  %v7799 = vpop.f32.mrb[0].mxu0
  %v7800 = vadd.f32 %v7223, %v7799
  %v7801 = vpop.f32.mrb[0].mxu0
  %7802 = vmatprep.mubr.f32.mxu0 0.0
  %7803 = vmatmul.mubr.f32.gmra.mrb[0].mxu0 %v7451
  %v7804 = vpop.f32.mrb[0].mxu0
  %v7805 = vadd.f32 %v7228, %v7804
  %v7806 = vpop.f32.mrb[0].mxu0
  %7807 = vmatprep.mubr.f32.mxu0 0.0
  %7808 = vmatmul.mubr.f32.gmra.mrb[0].mxu0 %v7454
  %v7809 = vpop.f32.mrb[0].mxu0
  %v7810 = vadd.f32 %v7233, %v7809
  %v7811 = vpop.f32.mrb[0].mxu0
  %7812 = vmatprep.mubr.f32.mxu0 0.0
  %7813 = vmatmul.mubr.f32.gmra.mrb[0].mxu0 %v7457
  %v7814 = vpop.f32.mrb[0].mxu0
  %v7815 = vadd.f32 %v7238, %v7814
  %v7816 = vpop.f32.mrb[0].mxu0
  %7817 = vmatprep.mubr.f32.mxu0 0.0
  %7818 = vmatmul.mubr.f32.gmra.mrb[0].mxu0 %v7460
  %v7819 = vpop.f32.mrb[0].mxu0
  %v7820 = vadd.f32 %v7243, %v7819
  %v7821 = vpop.f32.mrb[0].mxu0
  %7822 = vmatprep.mubr.f32.mxu0 0.0
  %7823 = vmatmul.mubr.f32.gmra.mrb[0].mxu0 %v7463
  %v7824 = vpop.f32.mrb[0].mxu0
  %v7825 = vadd.f32 %v7248, %v7824
  %v7826 = vpop.f32.mrb[0].mxu0
  %7827 = vmatprep.mubr.f32.mxu0 0.0
  %7828 = vmatmul.mubr.f32.gmra.mrb[0].mxu0 %v7466
  %v7829 = vpop.f32.mrb[0].mxu0
  %v7830 = vadd.f32 %v7253, %v7829
  %v7831 = vpop.f32.mrb[0].mxu0
  %7832 = vmatprep.mubr.f32.mxu0 0.0
  %7833 = vmatmul.mubr.f32.gmra.mrb[0].mxu0 %v7469
  %v7834 = vpop.f32.mrb[0].mxu0
  %v7835 = vadd.f32 %v7258, %v7834
  %v7836 = vpop.f32.mrb[0].mxu0
  %7837 = vmatprep.mubr.f32.mxu0 0.0
  %7838 = vmatmul.mubr.f32.gmra.mrb[0].mxu0 %v7472
  %v7839 = vpop.f32.mrb[0].mxu0
  %v7840 = vadd.f32 %v7263, %v7839
  %v7841 = vpop.f32.mrb[0].mxu0
  %7842 = vmatprep.mubr.f32.mxu0 0.0
  %7843 = vmatmul.mubr.f32.gmra.mrb[0].mxu0 %v7475
  %v7844 = vpop.f32.mrb[0].mxu0
  %v7845 = vadd.f32 %v7268, %v7844
  %v7846 = vpop.f32.mrb[0].mxu0
  %7847 = vmatprep.mubr.f32.mxu0 0.0
  %7848 = vmatmul.mubr.f32.gmra.mrb[0].mxu0 %v7478
  %v7849 = vpop.f32.mrb[0].mxu0
  %v7850 = vadd.f32 %v7273, %v7849
  %v7851 = vpop.f32.mrb[0].mxu0
  %7852 = vmatprep.mubr.f32.mxu0 0.0
  %7853 = vmatmul.mubr.f32.gmra.mrb[0].mxu0 %v7481
  %v7854 = vpop.f32.mrb[0].mxu0
  %v7855 = vadd.f32 %v7278, %v7854
  %v7856 = vpop.f32.mrb[0].mxu0
  %7857 = vmatprep.mubr.f32.mxu0 0.0
  %7858 = vmatmul.mubr.f32.gmra.mrb[0].mxu0 %v7484
  %v7859 = vpop.f32.mrb[0].mxu0
  %v7860 = vadd.f32 %v7283, %v7859
  %v7861 = vpop.f32.mrb[0].mxu0
  %7862 = vmatprep.mubr.f32.mxu0 0.0
  %7863 = vmatmul.mubr.f32.gmra.mrb[0].mxu0 %v7487
  %v7864 = vpop.f32.mrb[0].mxu0
  %v7865 = vadd.f32 %v7288, %v7864
  %v7866 = vpop.f32.mrb[0].mxu0
  %7867 = vmatprep.mubr.f32.mxu0 0.0
  %7868 = vmatmul.mubr.f32.gmra.mrb[0].mxu0 %v7490
  %v7869 = vpop.f32.mrb[0].mxu0
  %v7870 = vadd.f32 %v7293, %v7869
  %v7871 = vpop.f32.mrb[0].mxu0
  %7872 = vmatprep.mubr.f32.mxu0 0.0
  %7873 = vmatmul.mubr.f32.gmra.mrb[0].mxu0 %v7493
  %v7874 = vpop.f32.mrb[0].mxu0
  %v7875 = vadd.f32 %v7298, %v7874
  %v7876 = vpop.f32.mrb[0].mxu0
  %7877 = vmatprep.mubr.f32.mxu0 0.0
  %7878 = vmatmul.mubr.f32.gmra.mrb[0].mxu0 %v7496
  %v7879 = vpop.f32.mrb[0].mxu0
  %v7880 = vadd.f32 %v7303, %v7879
  %v7881 = vpop.f32.mrb[0].mxu0
  %7882 = vdwg.mxu0
  %v7883 = vld [vmem:[#allocation2 + $0x9] sm:$0xff]
  %v7884 = vld [vmem:[#allocation2 + $0x11] sm:$0xff]
  %v7885 = vld [vmem:[#allocation2 + $0x19] sm:$0xff]
  %v7886 = vld [vmem:[#allocation2 + $0x21] sm:$0xff]
  %v7887 = vld [vmem:[#allocation2 + $0x29] sm:$0xff]
  %v7888 = vld [vmem:[#allocation2 + $0x31] sm:$0xff]
  %v7889 = vld [vmem:[#allocation2 + $0x39] sm:$0xff]
  %v7890 = vld [vmem:[#allocation2 + $0x41] sm:$0xff]
  %v7891 = vld [vmem:[#allocation2 + $0x49] sm:$0xff]
  %v7892 = vld [vmem:[#allocation2 + $0x51] sm:$0xff]
  %v7893 = vld [vmem:[#allocation2 + $0x59] sm:$0xff]
  %v7894 = vld [vmem:[#allocation2 + $0x61] sm:$0xff]
  %v7895 = vld [vmem:[#allocation2 + $0x69] sm:$0xff]
  %v7896 = vld [vmem:[#allocation2 + $0x71] sm:$0xff]
  %v7897 = vld [vmem:[#allocation2 + $0x79] sm:$0xff]
  %v7898 = vld [vmem:[#allocation2 + $0x81] sm:$0xff]
  %v7899 = vld [vmem:[#allocation2 + $0x89] sm:$0xff]
  %v7900 = vld [vmem:[#allocation2 + $0x91] sm:$0xff]
  %v7901 = vld [vmem:[#allocation2 + $0x99] sm:$0xff]
  %v7902 = vld [vmem:[#allocation2 + $0xa1] sm:$0xff]
  %v7903 = vld [vmem:[#allocation2 + $0xa9] sm:$0xff]
  %v7904 = vld [vmem:[#allocation2 + $0xb1] sm:$0xff]
  %v7905 = vld [vmem:[#allocation2 + $0xb9] sm:$0xff]
  %v7906 = vld [vmem:[#allocation2 + $0xc1] sm:$0xff]
  %v7907 = vld [vmem:[#allocation2 + $0xc9] sm:$0xff]
  %v7908 = vld [vmem:[#allocation2 + $0xd1] sm:$0xff]
  %v7909 = vld [vmem:[#allocation2 + $0xd9] sm:$0xff]
  %v7910 = vld [vmem:[#allocation2 + $0xe1] sm:$0xff]
  %v7911 = vld [vmem:[#allocation2 + $0xe9] sm:$0xff]
  %v7912 = vld [vmem:[#allocation2 + $0xf1] sm:$0xff]
  %v7913 = vld [vmem:[#allocation2 + $0xf9] sm:$0xff]
  %v7914 = vld [vmem:[#allocation2 + $0x101] sm:$0xff]
  %v7915 = vld [vmem:[#allocation2 + $0x109] sm:$0xff]
  %v7916 = vld [vmem:[#allocation2 + $0x111] sm:$0xff]
  %v7917 = vld [vmem:[#allocation2 + $0x119] sm:$0xff]
  %v7918 = vld [vmem:[#allocation2 + $0x121] sm:$0xff]
  %v7919 = vld [vmem:[#allocation2 + $0x129] sm:$0xff]
  %v7920 = vld [vmem:[#allocation2 + $0x131] sm:$0xff]
  %v7921 = vld [vmem:[#allocation2 + $0x139] sm:$0xff]
  %v7922 = vld [vmem:[#allocation2 + $0x141] sm:$0xff]
  %v7923 = vld [vmem:[#allocation2 + $0x149] sm:$0xff]
  %v7924 = vld [vmem:[#allocation2 + $0x151] sm:$0xff]
  %v7925 = vld [vmem:[#allocation2 + $0x159] sm:$0xff]
  %v7926 = vld [vmem:[#allocation2 + $0x161] sm:$0xff]
  %v7927 = vld [vmem:[#allocation2 + $0x169] sm:$0xff]
  %v7928 = vld [vmem:[#allocation2 + $0x171] sm:$0xff]
  %v7929 = vld [vmem:[#allocation2 + $0x179] sm:$0xff]
  %v7930 = vld [vmem:[#allocation2 + $0x181] sm:$0xff]
  %v7931 = vld [vmem:[#allocation2 + $0x189] sm:$0xff]
  %v7932 = vld [vmem:[#allocation2 + $0x191] sm:$0xff]
  %v7933 = vld [vmem:[#allocation2 + $0x199] sm:$0xff]
  %v7934 = vld [vmem:[#allocation2 + $0x1a1] sm:$0xff]
  %v7935 = vld [vmem:[#allocation2 + $0x1a9] sm:$0xff]
  %v7936 = vld [vmem:[#allocation2 + $0x1b1] sm:$0xff]
  %v7937 = vld [vmem:[#allocation2 + $0x1b9] sm:$0xff]
  %v7938 = vld [vmem:[#allocation2 + $0x1c1] sm:$0xff]
  %v7939 = vld [vmem:[#allocation2 + $0x1c9] sm:$0xff]
  %v7940 = vld [vmem:[#allocation2 + $0x1d1] sm:$0xff]
  %v7941 = vld [vmem:[#allocation2 + $0x1d9] sm:$0xff]
  %v7942 = vld [vmem:[#allocation2 + $0x1e1] sm:$0xff]
  %v7943 = vld [vmem:[#allocation2 + $0x1e9] sm:$0xff]
  %v7944 = vld [vmem:[#allocation2 + $0x1f1] sm:$0xff]
  %v7945 = vld [vmem:[#allocation2 + $0x1f9] sm:$0xff]
  %v7946 = vld [vmem:[#allocation2 + $0x201] sm:$0xff]
  %v7947 = vld [vmem:[%s4 + $0x40] sm:$0xff]
  %v7948 = vld [vmem:[%s4 + $0x48] sm:$0xff]
  %v7949 = vld [vmem:[%s4 + $0x50] sm:$0xff]
  %v7950 = vld [vmem:[%s4 + $0x58] sm:$0xff]
  %v7952 = vsel %vm6522, %v7883, 0
  %v7955 = vsel %vm6522, %v7884, 0
  %v7958 = vsel %vm6522, %v7885, 0
  %v7961 = vsel %vm6522, %v7886, 0
  %v7964 = vsel %vm6522, %v7887, 0
  %v7967 = vsel %vm6522, %v7888, 0
  %v7970 = vsel %vm6522, %v7889, 0
  %v7973 = vsel %vm6522, %v7890, 0
  %v7976 = vsel %vm6522, %v7891, 0
  %v7979 = vsel %vm6522, %v7892, 0
  %v7982 = vsel %vm6522, %v7893, 0
  %v7985 = vsel %vm6522, %v7894, 0
  %v7988 = vsel %vm6522, %v7895, 0
  %v7991 = vsel %vm6522, %v7896, 0
  %v7994 = vsel %vm6522, %v7897, 0
  %v7997 = vsel %vm6522, %v7898, 0
  %v8000 = vsel %vm6522, %v7899, 0
  %v8003 = vsel %vm6522, %v7900, 0
  %v8006 = vsel %vm6522, %v7901, 0
  %v8009 = vsel %vm6522, %v7902, 0
  %v8012 = vsel %vm6522, %v7903, 0
  %v8015 = vsel %vm6522, %v7904, 0
  %v8018 = vsel %vm6522, %v7905, 0
  %v8021 = vsel %vm6522, %v7906, 0
  %v8024 = vsel %vm6522, %v7907, 0
  %v8027 = vsel %vm6522, %v7908, 0
  %v8030 = vsel %vm6522, %v7909, 0
  %v8033 = vsel %vm6522, %v7910, 0
  %v8036 = vsel %vm6522, %v7911, 0
  %v8039 = vsel %vm6522, %v7912, 0
  %v8042 = vsel %vm6522, %v7913, 0
  %v8045 = vsel %vm6522, %v7914, 0
  %v8048 = vsel %vm6522, %v7915, 0
  %v8051 = vsel %vm6522, %v7916, 0
  %v8054 = vsel %vm6522, %v7917, 0
  %v8057 = vsel %vm6522, %v7918, 0
  %v8060 = vsel %vm6522, %v7919, 0
  %v8063 = vsel %vm6522, %v7920, 0
  %v8066 = vsel %vm6522, %v7921, 0
  %v8069 = vsel %vm6522, %v7922, 0
  %v8072 = vsel %vm6522, %v7923, 0
  %v8075 = vsel %vm6522, %v7924, 0
  %v8078 = vsel %vm6522, %v7925, 0
  %v8081 = vsel %vm6522, %v7926, 0
  %v8084 = vsel %vm6522, %v7927, 0
  %v8087 = vsel %vm6522, %v7928, 0
  %v8090 = vsel %vm6522, %v7929, 0
  %v8093 = vsel %vm6522, %v7930, 0
  %v8096 = vsel %vm6522, %v7931, 0
  %v8099 = vsel %vm6522, %v7932, 0
  %v8102 = vsel %vm6522, %v7933, 0
  %v8105 = vsel %vm6522, %v7934, 0
  %v8108 = vsel %vm6522, %v7935, 0
  %v8111 = vsel %vm6522, %v7936, 0
  %v8114 = vsel %vm6522, %v7937, 0
  %v8117 = vsel %vm6522, %v7938, 0
  %v8120 = vsel %vm6522, %v7939, 0
  %v8123 = vsel %vm6522, %v7940, 0
  %v8126 = vsel %vm6522, %v7941, 0
  %v8129 = vsel %vm6522, %v7942, 0
  %v8132 = vsel %vm6522, %v7943, 0
  %v8135 = vsel %vm6522, %v7944, 0
  %v8138 = vsel %vm6522, %v7945, 0
  %v8141 = vsel %vm6522, %v7946, 0
  %8143 = vmatprep.subr.mxu0 0.0
  %8144 = vmatpush1.msra.mxu0 %v7947
  %8145 = vmatprep.subr.mxu0 0.0
  %8146 = vmatpush1.msra.mxu0 %v7948
  %8147 = vmatprep.subr.mxu0 0.0
  %8148 = vmatpush1.msra.mxu0 %v7949
  %8149 = vmatprep.subr.mxu0 0.0
  %8150 = vmatpush1.msra.mxu0 %v7950
  %8151 = vmatprep.subr.mxu0 0.0
  %8152 = vmatpush1.msra.mxu0 0.0
  %8153 = vmatprep.subr.mxu0 0.0
  %8154 = vmatpush1.msra.mxu0 0.0
  %8155 = vmatprep.subr.mxu0 0.0
  %8156 = vmatpush1.msra.mxu0 0.0
  %8157 = vmatprep.subr.mxu0 0.0
  %8158 = vmatpush1.msra.mxu0 0.0
  %8159 = vmatprep.subr.mxu0 0.0
  %8160 = vmatpush1.msra.mxu0 0.0
  %8161 = vmatprep.subr.mxu0 0.0
  %8162 = vmatpush1.msra.mxu0 0.0
  %8163 = vmatprep.subr.mxu0 0.0
  %8164 = vmatpush1.msra.mxu0 0.0
  %8165 = vmatprep.subr.mxu0 0.0
  %8166 = vmatpush1.msra.mxu0 0.0
  %8167 = vmatprep.subr.mxu0 0.0
  %8168 = vmatpush1.msra.mxu0 0.0
  %8169 = vmatprep.subr.mxu0 0.0
  %8170 = vmatpush1.msra.mxu0 0.0
  %8171 = vmatprep.subr.mxu0 0.0
  %8172 = vmatpush1.msra.mxu0 0.0
  %8173 = vmatprep.subr.mxu0 0.0
  %8174 = vmatpush1.msra.mxu0 0.0
  %8175 = vmatprep.subr.mxu0 0.0
  %8176 = vmatpush1.msra.mxu0 0.0
  %8177 = vmatprep.subr.mxu0 0.0
  %8178 = vmatpush1.msra.mxu0 0.0
  %8179 = vmatprep.subr.mxu0 0.0
  %8180 = vmatpush1.msra.mxu0 0.0
  %8181 = vmatprep.subr.mxu0 0.0
  %8182 = vmatpush1.msra.mxu0 0.0
  %8183 = vmatprep.subr.mxu0 0.0
  %8184 = vmatpush1.msra.mxu0 0.0
  %8185 = vmatprep.subr.mxu0 0.0
  %8186 = vmatpush1.msra.mxu0 0.0
  %8187 = vmatprep.subr.mxu0 0.0
  %8188 = vmatpush1.msra.mxu0 0.0
  %8189 = vmatprep.subr.mxu0 0.0
  %8190 = vmatpush1.msra.mxu0 0.0
  %8191 = vmatprep.subr.mxu0 0.0
  %8192 = vmatpush1.msra.mxu0 0.0
  %8193 = vmatprep.subr.mxu0 0.0
  %8194 = vmatpush1.msra.mxu0 0.0
  %8195 = vmatprep.subr.mxu0 0.0
  %8196 = vmatpush1.msra.mxu0 0.0
  %8197 = vmatprep.subr.mxu0 0.0
  %8198 = vmatpush1.msra.mxu0 0.0
  %8199 = vmatprep.subr.mxu0 0.0
  %8200 = vmatpush1.msra.mxu0 0.0
  %8201 = vmatprep.subr.mxu0 0.0
  %8202 = vmatpush1.msra.mxu0 0.0
  %8203 = vmatprep.subr.mxu0 0.0
  %8204 = vmatpush1.msra.mxu0 0.0
  %8205 = vmatprep.subr.mxu0 0.0
  %8206 = vmatpush1.msra.mxu0 0.0
  %8207 = vmatprep.mubr.f32.mxu0 0.0
  %8208 = vmatmul.mubr.f32.gmra.mrb[0].mxu0 %v7952
  %v8209 = vpop.f32.mrb[0].mxu0
  %v8210 = vadd.f32 0.0, %v8209
  %v8211 = vpop.f32.mrb[0].mxu0
  %8212 = vmatprep.mubr.f32.mxu0 0.0
  %8213 = vmatmul.mubr.f32.gmra.mrb[0].mxu0 %v7955
  %v8214 = vpop.f32.mrb[0].mxu0
  %v8215 = vadd.f32 0.0, %v8214
  %v8216 = vpop.f32.mrb[0].mxu0
  %8217 = vmatprep.mubr.f32.mxu0 0.0
  %8218 = vmatmul.mubr.f32.gmra.mrb[0].mxu0 %v7958
  %v8219 = vpop.f32.mrb[0].mxu0
  %v8220 = vadd.f32 0.0, %v8219
  %v8221 = vpop.f32.mrb[0].mxu0
  %8222 = vmatprep.mubr.f32.mxu0 0.0
  %8223 = vmatmul.mubr.f32.gmra.mrb[0].mxu0 %v7961
  %v8224 = vpop.f32.mrb[0].mxu0
  %v8225 = vadd.f32 0.0, %v8224
  %v8226 = vpop.f32.mrb[0].mxu0
  %8227 = vmatprep.mubr.f32.mxu0 0.0
  %8228 = vmatmul.mubr.f32.gmra.mrb[0].mxu0 %v7964
  %v8229 = vpop.f32.mrb[0].mxu0
  %v8230 = vadd.f32 0.0, %v8229
  %v8231 = vpop.f32.mrb[0].mxu0
  %8232 = vmatprep.mubr.f32.mxu0 0.0
  %8233 = vmatmul.mubr.f32.gmra.mrb[0].mxu0 %v7967
  %v8234 = vpop.f32.mrb[0].mxu0
  %v8235 = vadd.f32 0.0, %v8234
  %v8236 = vpop.f32.mrb[0].mxu0
  %8237 = vmatprep.mubr.f32.mxu0 0.0
  %8238 = vmatmul.mubr.f32.gmra.mrb[0].mxu0 %v7970
  %v8239 = vpop.f32.mrb[0].mxu0
  %v8240 = vadd.f32 0.0, %v8239
  %v8241 = vpop.f32.mrb[0].mxu0
  %8242 = vmatprep.mubr.f32.mxu0 0.0
  %8243 = vmatmul.mubr.f32.gmra.mrb[0].mxu0 %v7973
  %v8244 = vpop.f32.mrb[0].mxu0
  %v8245 = vadd.f32 0.0, %v8244
  %v8246 = vpop.f32.mrb[0].mxu0
  %8247 = vmatprep.mubr.f32.mxu0 0.0
  %8248 = vmatmul.mubr.f32.gmra.mrb[0].mxu0 %v7976
  %v8249 = vpop.f32.mrb[0].mxu0
  %v8250 = vadd.f32 0.0, %v8249
  %v8251 = vpop.f32.mrb[0].mxu0
  %8252 = vmatprep.mubr.f32.mxu0 0.0
  %8253 = vmatmul.mubr.f32.gmra.mrb[0].mxu0 %v7979
  %v8254 = vpop.f32.mrb[0].mxu0
  %v8255 = vadd.f32 0.0, %v8254
  %v8256 = vpop.f32.mrb[0].mxu0
  %8257 = vmatprep.mubr.f32.mxu0 0.0
  %8258 = vmatmul.mubr.f32.gmra.mrb[0].mxu0 %v7982
  %v8259 = vpop.f32.mrb[0].mxu0
  %v8260 = vadd.f32 0.0, %v8259
  %v8261 = vpop.f32.mrb[0].mxu0
  %8262 = vmatprep.mubr.f32.mxu0 0.0
  %8263 = vmatmul.mubr.f32.gmra.mrb[0].mxu0 %v7985
  %v8264 = vpop.f32.mrb[0].mxu0
  %v8265 = vadd.f32 0.0, %v8264
  %v8266 = vpop.f32.mrb[0].mxu0
  %8267 = vmatprep.mubr.f32.mxu0 0.0
  %8268 = vmatmul.mubr.f32.gmra.mrb[0].mxu0 %v7988
  %v8269 = vpop.f32.mrb[0].mxu0
  %v8270 = vadd.f32 0.0, %v8269
  %v8271 = vpop.f32.mrb[0].mxu0
  %8272 = vmatprep.mubr.f32.mxu0 0.0
  %8273 = vmatmul.mubr.f32.gmra.mrb[0].mxu0 %v7991
  %v8274 = vpop.f32.mrb[0].mxu0
  %v8275 = vadd.f32 0.0, %v8274
  %v8276 = vpop.f32.mrb[0].mxu0
  %8277 = vmatprep.mubr.f32.mxu0 0.0
  %8278 = vmatmul.mubr.f32.gmra.mrb[0].mxu0 %v7994
  %v8279 = vpop.f32.mrb[0].mxu0
  %v8280 = vadd.f32 0.0, %v8279
  %v8281 = vpop.f32.mrb[0].mxu0
  %8282 = vmatprep.mubr.f32.mxu0 0.0
  %8283 = vmatmul.mubr.f32.gmra.mrb[0].mxu0 %v7997
  %v8284 = vpop.f32.mrb[0].mxu0
  %v8285 = vadd.f32 0.0, %v8284
  %v8286 = vpop.f32.mrb[0].mxu0
  %8287 = vmatprep.mubr.f32.mxu0 0.0
  %8288 = vmatmul.mubr.f32.gmra.mrb[0].mxu0 %v8000
  %v8289 = vpop.f32.mrb[0].mxu0
  %v8290 = vadd.f32 0.0, %v8289
  %v8291 = vpop.f32.mrb[0].mxu0
  %8292 = vmatprep.mubr.f32.mxu0 0.0
  %8293 = vmatmul.mubr.f32.gmra.mrb[0].mxu0 %v8003
  %v8294 = vpop.f32.mrb[0].mxu0
  %v8295 = vadd.f32 0.0, %v8294
  %v8296 = vpop.f32.mrb[0].mxu0
  %8297 = vmatprep.mubr.f32.mxu0 0.0
  %8298 = vmatmul.mubr.f32.gmra.mrb[0].mxu0 %v8006
  %v8299 = vpop.f32.mrb[0].mxu0
  %v8300 = vadd.f32 0.0, %v8299
  %v8301 = vpop.f32.mrb[0].mxu0
  %8302 = vmatprep.mubr.f32.mxu0 0.0
  %8303 = vmatmul.mubr.f32.gmra.mrb[0].mxu0 %v8009
  %v8304 = vpop.f32.mrb[0].mxu0
  %v8305 = vadd.f32 0.0, %v8304
  %v8306 = vpop.f32.mrb[0].mxu0
  %8307 = vmatprep.mubr.f32.mxu0 0.0
  %8308 = vmatmul.mubr.f32.gmra.mrb[0].mxu0 %v8012
  %v8309 = vpop.f32.mrb[0].mxu0
  %v8310 = vadd.f32 0.0, %v8309
  %v8311 = vpop.f32.mrb[0].mxu0
  %8312 = vmatprep.mubr.f32.mxu0 0.0
  %8313 = vmatmul.mubr.f32.gmra.mrb[0].mxu0 %v8015
  %v8314 = vpop.f32.mrb[0].mxu0
  %v8315 = vadd.f32 0.0, %v8314
  %v8316 = vpop.f32.mrb[0].mxu0
  %8317 = vmatprep.mubr.f32.mxu0 0.0
  %8318 = vmatmul.mubr.f32.gmra.mrb[0].mxu0 %v8018
  %v8319 = vpop.f32.mrb[0].mxu0
  %v8320 = vadd.f32 0.0, %v8319
  %v8321 = vpop.f32.mrb[0].mxu0
  %8322 = vmatprep.mubr.f32.mxu0 0.0
  %8323 = vmatmul.mubr.f32.gmra.mrb[0].mxu0 %v8021
  %v8324 = vpop.f32.mrb[0].mxu0
  %v8325 = vadd.f32 0.0, %v8324
  %v8326 = vpop.f32.mrb[0].mxu0
  %8327 = vmatprep.mubr.f32.mxu0 0.0
  %8328 = vmatmul.mubr.f32.gmra.mrb[0].mxu0 %v8024
  %v8329 = vpop.f32.mrb[0].mxu0
  %v8330 = vadd.f32 0.0, %v8329
  %v8331 = vpop.f32.mrb[0].mxu0
  %8332 = vmatprep.mubr.f32.mxu0 0.0
  %8333 = vmatmul.mubr.f32.gmra.mrb[0].mxu0 %v8027
  %v8334 = vpop.f32.mrb[0].mxu0
  %v8335 = vadd.f32 0.0, %v8334
  %v8336 = vpop.f32.mrb[0].mxu0
  %8337 = vmatprep.mubr.f32.mxu0 0.0
  %8338 = vmatmul.mubr.f32.gmra.mrb[0].mxu0 %v8030
  %v8339 = vpop.f32.mrb[0].mxu0
  %v8340 = vadd.f32 0.0, %v8339
  %v8341 = vpop.f32.mrb[0].mxu0
  %8342 = vmatprep.mubr.f32.mxu0 0.0
  %8343 = vmatmul.mubr.f32.gmra.mrb[0].mxu0 %v8033
  %v8344 = vpop.f32.mrb[0].mxu0
  %v8345 = vadd.f32 0.0, %v8344
  %v8346 = vpop.f32.mrb[0].mxu0
  %8347 = vmatprep.mubr.f32.mxu0 0.0
  %8348 = vmatmul.mubr.f32.gmra.mrb[0].mxu0 %v8036
  %v8349 = vpop.f32.mrb[0].mxu0
  %v8350 = vadd.f32 0.0, %v8349
  %v8351 = vpop.f32.mrb[0].mxu0
  %8352 = vmatprep.mubr.f32.mxu0 0.0
  %8353 = vmatmul.mubr.f32.gmra.mrb[0].mxu0 %v8039
  %v8354 = vpop.f32.mrb[0].mxu0
  %v8355 = vadd.f32 0.0, %v8354
  %v8356 = vpop.f32.mrb[0].mxu0
  %8357 = vmatprep.mubr.f32.mxu0 0.0
  %8358 = vmatmul.mubr.f32.gmra.mrb[0].mxu0 %v8042
  %v8359 = vpop.f32.mrb[0].mxu0
  %v8360 = vadd.f32 0.0, %v8359
  %v8361 = vpop.f32.mrb[0].mxu0
  %8362 = vmatprep.mubr.f32.mxu0 0.0
  %8363 = vmatmul.mubr.f32.gmra.mrb[0].mxu0 %v8045
  %v8364 = vpop.f32.mrb[0].mxu0
  %v8365 = vadd.f32 0.0, %v8364
  %v8366 = vpop.f32.mrb[0].mxu0
  %8367 = vmatprep.mubr.f32.mxu0 0.0
  %8368 = vmatmul.mubr.f32.gmra.mrb[0].mxu0 %v8048
  %v8369 = vpop.f32.mrb[0].mxu0
  %v8370 = vadd.f32 0.0, %v8369
  %v8371 = vpop.f32.mrb[0].mxu0
  %8372 = vmatprep.mubr.f32.mxu0 0.0
  %8373 = vmatmul.mubr.f32.gmra.mrb[0].mxu0 %v8051
  %v8374 = vpop.f32.mrb[0].mxu0
  %v8375 = vadd.f32 0.0, %v8374
  %v8376 = vpop.f32.mrb[0].mxu0
  %8377 = vmatprep.mubr.f32.mxu0 0.0
  %8378 = vmatmul.mubr.f32.gmra.mrb[0].mxu0 %v8054
  %v8379 = vpop.f32.mrb[0].mxu0
  %v8380 = vadd.f32 0.0, %v8379
  %v8381 = vpop.f32.mrb[0].mxu0
  %8382 = vmatprep.mubr.f32.mxu0 0.0
  %8383 = vmatmul.mubr.f32.gmra.mrb[0].mxu0 %v8057
  %v8384 = vpop.f32.mrb[0].mxu0
  %v8385 = vadd.f32 0.0, %v8384
  %v8386 = vpop.f32.mrb[0].mxu0
  %8387 = vmatprep.mubr.f32.mxu0 0.0
  %8388 = vmatmul.mubr.f32.gmra.mrb[0].mxu0 %v8060
  %v8389 = vpop.f32.mrb[0].mxu0
  %v8390 = vadd.f32 0.0, %v8389
  %v8391 = vpop.f32.mrb[0].mxu0
  %8392 = vmatprep.mubr.f32.mxu0 0.0
  %8393 = vmatmul.mubr.f32.gmra.mrb[0].mxu0 %v8063
  %v8394 = vpop.f32.mrb[0].mxu0
  %v8395 = vadd.f32 0.0, %v8394
  %v8396 = vpop.f32.mrb[0].mxu0
  %8397 = vmatprep.mubr.f32.mxu0 0.0
  %8398 = vmatmul.mubr.f32.gmra.mrb[0].mxu0 %v8066
  %v8399 = vpop.f32.mrb[0].mxu0
  %v8400 = vadd.f32 0.0, %v8399
  %v8401 = vpop.f32.mrb[0].mxu0
  %8402 = vmatprep.mubr.f32.mxu0 0.0
  %8403 = vmatmul.mubr.f32.gmra.mrb[0].mxu0 %v8069
  %v8404 = vpop.f32.mrb[0].mxu0
  %v8405 = vadd.f32 0.0, %v8404
  %v8406 = vpop.f32.mrb[0].mxu0
  %8407 = vmatprep.mubr.f32.mxu0 0.0
  %8408 = vmatmul.mubr.f32.gmra.mrb[0].mxu0 %v8072
  %v8409 = vpop.f32.mrb[0].mxu0
  %v8410 = vadd.f32 0.0, %v8409
  %v8411 = vpop.f32.mrb[0].mxu0
  %8412 = vmatprep.mubr.f32.mxu0 0.0
  %8413 = vmatmul.mubr.f32.gmra.mrb[0].mxu0 %v8075
  %v8414 = vpop.f32.mrb[0].mxu0
  %v8415 = vadd.f32 0.0, %v8414
  %v8416 = vpop.f32.mrb[0].mxu0
  %8417 = vmatprep.mubr.f32.mxu0 0.0
  %8418 = vmatmul.mubr.f32.gmra.mrb[0].mxu0 %v8078
  %v8419 = vpop.f32.mrb[0].mxu0
  %v8420 = vadd.f32 0.0, %v8419
  %v8421 = vpop.f32.mrb[0].mxu0
  %8422 = vmatprep.mubr.f32.mxu0 0.0
  %8423 = vmatmul.mubr.f32.gmra.mrb[0].mxu0 %v8081
  %v8424 = vpop.f32.mrb[0].mxu0
  %v8425 = vadd.f32 0.0, %v8424
  %v8426 = vpop.f32.mrb[0].mxu0
  %8427 = vmatprep.mubr.f32.mxu0 0.0
  %8428 = vmatmul.mubr.f32.gmra.mrb[0].mxu0 %v8084
  %v8429 = vpop.f32.mrb[0].mxu0
  %v8430 = vadd.f32 0.0, %v8429
  %v8431 = vpop.f32.mrb[0].mxu0
  %8432 = vmatprep.mubr.f32.mxu0 0.0
  %8433 = vmatmul.mubr.f32.gmra.mrb[0].mxu0 %v8087
  %v8434 = vpop.f32.mrb[0].mxu0
  %v8435 = vadd.f32 0.0, %v8434
  %v8436 = vpop.f32.mrb[0].mxu0
  %8437 = vmatprep.mubr.f32.mxu0 0.0
  %8438 = vmatmul.mubr.f32.gmra.mrb[0].mxu0 %v8090
  %v8439 = vpop.f32.mrb[0].mxu0
  %v8440 = vadd.f32 0.0, %v8439
  %v8441 = vpop.f32.mrb[0].mxu0
  %8442 = vmatprep.mubr.f32.mxu0 0.0
  %8443 = vmatmul.mubr.f32.gmra.mrb[0].mxu0 %v8093
  %v8444 = vpop.f32.mrb[0].mxu0
  %v8445 = vadd.f32 0.0, %v8444
  %v8446 = vpop.f32.mrb[0].mxu0
  %8447 = vmatprep.mubr.f32.mxu0 0.0
  %8448 = vmatmul.mubr.f32.gmra.mrb[0].mxu0 %v8096
  %v8449 = vpop.f32.mrb[0].mxu0
  %v8450 = vadd.f32 0.0, %v8449
  %v8451 = vpop.f32.mrb[0].mxu0
  %8452 = vmatprep.mubr.f32.mxu0 0.0
  %8453 = vmatmul.mubr.f32.gmra.mrb[0].mxu0 %v8099
  %v8454 = vpop.f32.mrb[0].mxu0
  %v8455 = vadd.f32 0.0, %v8454
  %v8456 = vpop.f32.mrb[0].mxu0
  %8457 = vmatprep.mubr.f32.mxu0 0.0
  %8458 = vmatmul.mubr.f32.gmra.mrb[0].mxu0 %v8102
  %v8459 = vpop.f32.mrb[0].mxu0
  %v8460 = vadd.f32 0.0, %v8459
  %v8461 = vpop.f32.mrb[0].mxu0
  %8462 = vmatprep.mubr.f32.mxu0 0.0
  %8463 = vmatmul.mubr.f32.gmra.mrb[0].mxu0 %v8105
  %v8464 = vpop.f32.mrb[0].mxu0
  %v8465 = vadd.f32 0.0, %v8464
  %v8466 = vpop.f32.mrb[0].mxu0
  %8467 = vmatprep.mubr.f32.mxu0 0.0
  %8468 = vmatmul.mubr.f32.gmra.mrb[0].mxu0 %v8108
  %v8469 = vpop.f32.mrb[0].mxu0
  %v8470 = vadd.f32 0.0, %v8469
  %v8471 = vpop.f32.mrb[0].mxu0
  %8472 = vmatprep.mubr.f32.mxu0 0.0
  %8473 = vmatmul.mubr.f32.gmra.mrb[0].mxu0 %v8111
  %v8474 = vpop.f32.mrb[0].mxu0
  %v8475 = vadd.f32 0.0, %v8474
  %v8476 = vpop.f32.mrb[0].mxu0
  %8477 = vmatprep.mubr.f32.mxu0 0.0
  %8478 = vmatmul.mubr.f32.gmra.mrb[0].mxu0 %v8114
  %v8479 = vpop.f32.mrb[0].mxu0
  %v8480 = vadd.f32 0.0, %v8479
  %v8481 = vpop.f32.mrb[0].mxu0
  %8482 = vmatprep.mubr.f32.mxu0 0.0
  %8483 = vmatmul.mubr.f32.gmra.mrb[0].mxu0 %v8117
  %v8484 = vpop.f32.mrb[0].mxu0
  %v8485 = vadd.f32 0.0, %v8484
  %v8486 = vpop.f32.mrb[0].mxu0
  %8487 = vmatprep.mubr.f32.mxu0 0.0
  %8488 = vmatmul.mubr.f32.gmra.mrb[0].mxu0 %v8120
  %v8489 = vpop.f32.mrb[0].mxu0
  %v8490 = vadd.f32 0.0, %v8489
  %v8491 = vpop.f32.mrb[0].mxu0
  %8492 = vmatprep.mubr.f32.mxu0 0.0
  %8493 = vmatmul.mubr.f32.gmra.mrb[0].mxu0 %v8123
  %v8494 = vpop.f32.mrb[0].mxu0
  %v8495 = vadd.f32 0.0, %v8494
  %v8496 = vpop.f32.mrb[0].mxu0
  %8497 = vmatprep.mubr.f32.mxu0 0.0
  %8498 = vmatmul.mubr.f32.gmra.mrb[0].mxu0 %v8126
  %v8499 = vpop.f32.mrb[0].mxu0
  %v8500 = vadd.f32 0.0, %v8499
  %v8501 = vpop.f32.mrb[0].mxu0
  %8502 = vmatprep.mubr.f32.mxu0 0.0
  %8503 = vmatmul.mubr.f32.gmra.mrb[0].mxu0 %v8129
  %v8504 = vpop.f32.mrb[0].mxu0
  %v8505 = vadd.f32 0.0, %v8504
  %v8506 = vpop.f32.mrb[0].mxu0
  %8507 = vmatprep.mubr.f32.mxu0 0.0
  %8508 = vmatmul.mubr.f32.gmra.mrb[0].mxu0 %v8132
  %v8509 = vpop.f32.mrb[0].mxu0
  %v8510 = vadd.f32 0.0, %v8509
  %v8511 = vpop.f32.mrb[0].mxu0
  %8512 = vmatprep.mubr.f32.mxu0 0.0
  %8513 = vmatmul.mubr.f32.gmra.mrb[0].mxu0 %v8135
  %v8514 = vpop.f32.mrb[0].mxu0
  %v8515 = vadd.f32 0.0, %v8514
  %v8516 = vpop.f32.mrb[0].mxu0
  %8517 = vmatprep.mubr.f32.mxu0 0.0
  %8518 = vmatmul.mubr.f32.gmra.mrb[0].mxu0 %v8138
  %v8519 = vpop.f32.mrb[0].mxu0
  %v8520 = vadd.f32 0.0, %v8519
  %v8521 = vpop.f32.mrb[0].mxu0
  %8522 = vmatprep.mubr.f32.mxu0 0.0
  %8523 = vmatmul.mubr.f32.gmra.mrb[0].mxu0 %v8141
  %v8524 = vpop.f32.mrb[0].mxu0
  %v8525 = vadd.f32 0.0, %v8524
  %v8526 = vpop.f32.mrb[0].mxu0
  %8527 = vdwg.mxu0
  %v8528 = vadd.f32 %v7565, %v8210
  %v8529 = vadd.f32 %v7570, %v8215
  %v8530 = vadd.f32 %v7575, %v8220
  %v8531 = vadd.f32 %v7580, %v8225
  %v8532 = vadd.f32 %v7585, %v8230
  %v8533 = vadd.f32 %v7590, %v8235
  %v8534 = vadd.f32 %v7595, %v8240
  %v8535 = vadd.f32 %v7600, %v8245
  %v8536 = vadd.f32 %v7605, %v8250
  %v8537 = vadd.f32 %v7610, %v8255
  %v8538 = vadd.f32 %v7615, %v8260
  %v8539 = vadd.f32 %v7620, %v8265
  %v8540 = vadd.f32 %v7625, %v8270
  %v8541 = vadd.f32 %v7630, %v8275
  %v8542 = vadd.f32 %v7635, %v8280
  %v8543 = vadd.f32 %v7640, %v8285
  %v8544 = vadd.f32 %v7645, %v8290
  %v8545 = vadd.f32 %v7650, %v8295
  %v8546 = vadd.f32 %v7655, %v8300
  %v8547 = vadd.f32 %v7660, %v8305
  %v8548 = vadd.f32 %v7665, %v8310
  %v8549 = vadd.f32 %v7670, %v8315
  %v8550 = vadd.f32 %v7675, %v8320
  %v8551 = vadd.f32 %v7680, %v8325
  %v8552 = vadd.f32 %v7685, %v8330
  %v8553 = vadd.f32 %v7690, %v8335
  %v8554 = vadd.f32 %v7695, %v8340
  %v8555 = vadd.f32 %v7700, %v8345
  %v8556 = vadd.f32 %v7705, %v8350
  %v8557 = vadd.f32 %v7710, %v8355
  %v8558 = vadd.f32 %v7715, %v8360
  %v8559 = vadd.f32 %v7720, %v8365
  %v8560 = vadd.f32 %v7725, %v8370
  %v8561 = vadd.f32 %v7730, %v8375
  %v8562 = vadd.f32 %v7735, %v8380
  %v8563 = vadd.f32 %v7740, %v8385
  %v8564 = vadd.f32 %v7745, %v8390
  %v8565 = vadd.f32 %v7750, %v8395
  %v8566 = vadd.f32 %v7755, %v8400
  %v8567 = vadd.f32 %v7760, %v8405
  %v8568 = vadd.f32 %v7765, %v8410
  %v8569 = vadd.f32 %v7770, %v8415
  %v8570 = vadd.f32 %v7775, %v8420
  %v8571 = vadd.f32 %v7780, %v8425
  %v8572 = vadd.f32 %v7785, %v8430
  %v8573 = vadd.f32 %v7790, %v8435
  %v8574 = vadd.f32 %v7795, %v8440
  %v8575 = vadd.f32 %v7800, %v8445
  %v8576 = vadd.f32 %v7805, %v8450
  %v8577 = vadd.f32 %v7810, %v8455
  %v8578 = vadd.f32 %v7815, %v8460
  %v8579 = vadd.f32 %v7820, %v8465
  %v8580 = vadd.f32 %v7825, %v8470
  %v8581 = vadd.f32 %v7830, %v8475
  %v8582 = vadd.f32 %v7835, %v8480
  %v8583 = vadd.f32 %v7840, %v8485
  %v8584 = vadd.f32 %v7845, %v8490
  %v8585 = vadd.f32 %v7850, %v8495
  %v8586 = vadd.f32 %v7855, %v8500
  %v8587 = vadd.f32 %v7860, %v8505
  %v8588 = vadd.f32 %v7865, %v8510
  %v8589 = vadd.f32 %v7870, %v8515
  %v8590 = vadd.f32 %v7875, %v8520
  %v8591 = vadd.f32 %v7880, %v8525
  %v8592 = vld [vmem:[#allocation2 + $0x17] sm:$0xff]
  %v8593 = vld [vmem:[#allocation2 + $0x1f] sm:$0xff]
  %v8594 = vld [vmem:[#allocation2 + $0x27] sm:$0xff]
  %v8595 = vld [vmem:[#allocation2 + $0x2f] sm:$0xff]
  %v8596 = vld [vmem:[#allocation2 + $0x37] sm:$0xff]
  %v8597 = vld [vmem:[#allocation2 + $0x3f] sm:$0xff]
  %v8598 = vld [vmem:[#allocation2 + $0x47] sm:$0xff]
  %v8599 = vld [vmem:[#allocation2 + $0x4f] sm:$0xff]
  %v8600 = vld [vmem:[#allocation2 + $0x57] sm:$0xff]
  %v8601 = vld [vmem:[#allocation2 + $0x5f] sm:$0xff]
  %v8602 = vld [vmem:[#allocation2 + $0x67] sm:$0xff]
  %v8603 = vld [vmem:[#allocation2 + $0x6f] sm:$0xff]
  %v8604 = vld [vmem:[#allocation2 + $0x77] sm:$0xff]
  %v8605 = vld [vmem:[#allocation2 + $0x7f] sm:$0xff]
  %v8606 = vld [vmem:[#allocation2 + $0x87] sm:$0xff]
  %v8607 = vld [vmem:[#allocation2 + $0x8f] sm:$0xff]
  %v8608 = vld [vmem:[#allocation2 + $0x97] sm:$0xff]
  %v8609 = vld [vmem:[#allocation2 + $0x9f] sm:$0xff]
  %v8610 = vld [vmem:[#allocation2 + $0xa7] sm:$0xff]
  %v8611 = vld [vmem:[#allocation2 + $0xaf] sm:$0xff]
  %v8612 = vld [vmem:[#allocation2 + $0xb7] sm:$0xff]
  %v8613 = vld [vmem:[#allocation2 + $0xbf] sm:$0xff]
  %v8614 = vld [vmem:[#allocation2 + $0xc7] sm:$0xff]
  %v8615 = vld [vmem:[#allocation2 + $0xcf] sm:$0xff]
  %v8616 = vld [vmem:[#allocation2 + $0xd7] sm:$0xff]
  %v8617 = vld [vmem:[#allocation2 + $0xdf] sm:$0xff]
  %v8618 = vld [vmem:[#allocation2 + $0xe7] sm:$0xff]
  %v8619 = vld [vmem:[#allocation2 + $0xef] sm:$0xff]
  %v8620 = vld [vmem:[#allocation2 + $0xf7] sm:$0xff]
  %v8621 = vld [vmem:[#allocation2 + $0xff] sm:$0xff]
  %v8622 = vld [vmem:[#allocation2 + $0x107] sm:$0xff]
  %v8623 = vld [vmem:[#allocation2 + $0x10f] sm:$0xff]
  %v8624 = vld [vmem:[#allocation2 + $0x117] sm:$0xff]
  %v8625 = vld [vmem:[#allocation2 + $0x11f] sm:$0xff]
  %v8626 = vld [vmem:[#allocation2 + $0x127] sm:$0xff]
  %v8627 = vld [vmem:[#allocation2 + $0x12f] sm:$0xff]
  %v8628 = vld [vmem:[#allocation2 + $0x137] sm:$0xff]
  %v8629 = vld [vmem:[#allocation2 + $0x13f] sm:$0xff]
  %v8630 = vld [vmem:[#allocation2 + $0x147] sm:$0xff]
  %v8631 = vld [vmem:[#allocation2 + $0x14f] sm:$0xff]
  %v8632 = vld [vmem:[#allocation2 + $0x157] sm:$0xff]
  %v8633 = vld [vmem:[#allocation2 + $0x15f] sm:$0xff]
  %v8634 = vld [vmem:[#allocation2 + $0x167] sm:$0xff]
  %v8635 = vld [vmem:[#allocation2 + $0x16f] sm:$0xff]
  %v8636 = vld [vmem:[#allocation2 + $0x177] sm:$0xff]
  %v8637 = vld [vmem:[#allocation2 + $0x17f] sm:$0xff]
  %v8638 = vld [vmem:[#allocation2 + $0x187] sm:$0xff]
  %v8639 = vld [vmem:[#allocation2 + $0x18f] sm:$0xff]
  %v8640 = vld [vmem:[#allocation2 + $0x197] sm:$0xff]
  %v8641 = vld [vmem:[#allocation2 + $0x19f] sm:$0xff]
  %v8642 = vld [vmem:[#allocation2 + $0x1a7] sm:$0xff]
  %v8643 = vld [vmem:[#allocation2 + $0x1af] sm:$0xff]
  %v8644 = vld [vmem:[#allocation2 + $0x1b7] sm:$0xff]
  %v8645 = vld [vmem:[#allocation2 + $0x1bf] sm:$0xff]
  %v8646 = vld [vmem:[#allocation2 + $0x1c7] sm:$0xff]
  %v8647 = vld [vmem:[#allocation2 + $0x1cf] sm:$0xff]
  %v8648 = vld [vmem:[#allocation2 + $0x1d7] sm:$0xff]
  %v8649 = vld [vmem:[#allocation2 + $0x1df] sm:$0xff]
  %v8650 = vld [vmem:[#allocation2 + $0x1e7] sm:$0xff]
  %v8651 = vld [vmem:[#allocation2 + $0x1ef] sm:$0xff]
  %v8652 = vld [vmem:[#allocation2 + $0x1f7] sm:$0xff]
  %v8653 = vld [vmem:[#allocation2 + $0x1ff] sm:$0xff]
  %v8654 = vld [vmem:[#allocation2 + $0x207] sm:$0xff]
  %v8655 = vld [vmem:[#allocation2 + $0x20f] sm:$0xff]
  %v8656 = vld [vmem:[%s4 + $0x60] sm:$0xff]
  %v8657 = vld [vmem:[%s4 + $0x68] sm:$0xff]
  %v8658 = vld [vmem:[%s4 + $0x70] sm:$0xff]
  %v8659 = vld [vmem:[%s4 + $0x78] sm:$0xff]
  %v8661 = vsel %vm6522, %v8592, 0
  %v8664 = vsel %vm6522, %v8593, 0
  %v8667 = vsel %vm6522, %v8594, 0
  %v8670 = vsel %vm6522, %v8595, 0
  %v8673 = vsel %vm6522, %v8596, 0
  %v8676 = vsel %vm6522, %v8597, 0
  %v8679 = vsel %vm6522, %v8598, 0
  %v8682 = vsel %vm6522, %v8599, 0
  %v8685 = vsel %vm6522, %v8600, 0
  %v8688 = vsel %vm6522, %v8601, 0
  %v8691 = vsel %vm6522, %v8602, 0
  %v8694 = vsel %vm6522, %v8603, 0
  %v8697 = vsel %vm6522, %v8604, 0
  %v8700 = vsel %vm6522, %v8605, 0
  %v8703 = vsel %vm6522, %v8606, 0
  %v8706 = vsel %vm6522, %v8607, 0
  %v8709 = vsel %vm6522, %v8608, 0
  %v8712 = vsel %vm6522, %v8609, 0
  %v8715 = vsel %vm6522, %v8610, 0
  %v8718 = vsel %vm6522, %v8611, 0
  %v8721 = vsel %vm6522, %v8612, 0
  %v8724 = vsel %vm6522, %v8613, 0
  %v8727 = vsel %vm6522, %v8614, 0
  %v8730 = vsel %vm6522, %v8615, 0
  %v8733 = vsel %vm6522, %v8616, 0
  %v8736 = vsel %vm6522, %v8617, 0
  %v8739 = vsel %vm6522, %v8618, 0
  %v8742 = vsel %vm6522, %v8619, 0
  %v8745 = vsel %vm6522, %v8620, 0
  %v8748 = vsel %vm6522, %v8621, 0
  %v8751 = vsel %vm6522, %v8622, 0
  %v8754 = vsel %vm6522, %v8623, 0
  %v8757 = vsel %vm6522, %v8624, 0
  %v8760 = vsel %vm6522, %v8625, 0
  %v8763 = vsel %vm6522, %v8626, 0
  %v8766 = vsel %vm6522, %v8627, 0
  %v8769 = vsel %vm6522, %v8628, 0
  %v8772 = vsel %vm6522, %v8629, 0
  %v8775 = vsel %vm6522, %v8630, 0
  %v8778 = vsel %vm6522, %v8631, 0
  %v8781 = vsel %vm6522, %v8632, 0
  %v8784 = vsel %vm6522, %v8633, 0
  %v8787 = vsel %vm6522, %v8634, 0
  %v8790 = vsel %vm6522, %v8635, 0
  %v8793 = vsel %vm6522, %v8636, 0
  %v8796 = vsel %vm6522, %v8637, 0
  %v8799 = vsel %vm6522, %v8638, 0
  %v8802 = vsel %vm6522, %v8639, 0
  %v8805 = vsel %vm6522, %v8640, 0
  %v8808 = vsel %vm6522, %v8641, 0
  %v8811 = vsel %vm6522, %v8642, 0
  %v8814 = vsel %vm6522, %v8643, 0
  %v8817 = vsel %vm6522, %v8644, 0
  %v8820 = vsel %vm6522, %v8645, 0
  %v8823 = vsel %vm6522, %v8646, 0
  %v8826 = vsel %vm6522, %v8647, 0
  %v8829 = vsel %vm6522, %v8648, 0
  %v8832 = vsel %vm6522, %v8649, 0
  %v8835 = vsel %vm6522, %v8650, 0
  %v8838 = vsel %vm6522, %v8651, 0
  %v8841 = vsel %vm6522, %v8652, 0
  %v8844 = vsel %vm6522, %v8653, 0
  %v8847 = vsel %vm6522, %v8654, 0
  %v8850 = vsel %vm6522, %v8655, 0
  %8852 = vmatprep.subr.mxu0 0.0
  %8853 = vmatpush1.msra.mxu0 %v8656
  %8854 = vmatprep.subr.mxu0 0.0
  %8855 = vmatpush1.msra.mxu0 %v8657
  %8856 = vmatprep.subr.mxu0 0.0
  %8857 = vmatpush1.msra.mxu0 %v8658
  %8858 = vmatprep.subr.mxu0 0.0
  %8859 = vmatpush1.msra.mxu0 %v8659
  %8860 = vmatprep.subr.mxu0 0.0
  %8861 = vmatpush1.msra.mxu0 0.0
  %8862 = vmatprep.subr.mxu0 0.0
  %8863 = vmatpush1.msra.mxu0 0.0
  %8864 = vmatprep.subr.mxu0 0.0
  %8865 = vmatpush1.msra.mxu0 0.0
  %8866 = vmatprep.subr.mxu0 0.0
  %8867 = vmatpush1.msra.mxu0 0.0
  %8868 = vmatprep.subr.mxu0 0.0
  %8869 = vmatpush1.msra.mxu0 0.0
  %8870 = vmatprep.subr.mxu0 0.0
  %8871 = vmatpush1.msra.mxu0 0.0
  %8872 = vmatprep.subr.mxu0 0.0
  %8873 = vmatpush1.msra.mxu0 0.0
  %8874 = vmatprep.subr.mxu0 0.0
  %8875 = vmatpush1.msra.mxu0 0.0
  %8876 = vmatprep.subr.mxu0 0.0
  %8877 = vmatpush1.msra.mxu0 0.0
  %8878 = vmatprep.subr.mxu0 0.0
  %8879 = vmatpush1.msra.mxu0 0.0
  %8880 = vmatprep.subr.mxu0 0.0
  %8881 = vmatpush1.msra.mxu0 0.0
  %8882 = vmatprep.subr.mxu0 0.0
  %8883 = vmatpush1.msra.mxu0 0.0
  %8884 = vmatprep.subr.mxu0 0.0
  %8885 = vmatpush1.msra.mxu0 0.0
  %8886 = vmatprep.subr.mxu0 0.0
  %8887 = vmatpush1.msra.mxu0 0.0
  %8888 = vmatprep.subr.mxu0 0.0
  %8889 = vmatpush1.msra.mxu0 0.0
  %8890 = vmatprep.subr.mxu0 0.0
  %8891 = vmatpush1.msra.mxu0 0.0
  %8892 = vmatprep.subr.mxu0 0.0
  %8893 = vmatpush1.msra.mxu0 0.0
  %8894 = vmatprep.subr.mxu0 0.0
  %8895 = vmatpush1.msra.mxu0 0.0
  %8896 = vmatprep.subr.mxu0 0.0
  %8897 = vmatpush1.msra.mxu0 0.0
  %8898 = vmatprep.subr.mxu0 0.0
  %8899 = vmatpush1.msra.mxu0 0.0
  %8900 = vmatprep.subr.mxu0 0.0
  %8901 = vmatpush1.msra.mxu0 0.0
  %8902 = vmatprep.subr.mxu0 0.0
  %8903 = vmatpush1.msra.mxu0 0.0
  %8904 = vmatprep.subr.mxu0 0.0
  %8905 = vmatpush1.msra.mxu0 0.0
  %8906 = vmatprep.subr.mxu0 0.0
  %8907 = vmatpush1.msra.mxu0 0.0
  %8908 = vmatprep.subr.mxu0 0.0
  %8909 = vmatpush1.msra.mxu0 0.0
  %8910 = vmatprep.subr.mxu0 0.0
  %8911 = vmatpush1.msra.mxu0 0.0
  %8912 = vmatprep.subr.mxu0 0.0
  %8913 = vmatpush1.msra.mxu0 0.0
  %8914 = vmatprep.subr.mxu0 0.0
  %8915 = vmatpush1.msra.mxu0 0.0
  %8916 = vmatprep.mubr.f32.mxu0 0.0
  %8917 = vmatmul.mubr.f32.gmra.mrb[0].mxu0 %v8661
  %v8918 = vpop.f32.mrb[0].mxu0
  %v8919 = vadd.f32 0.0, %v8918
  %v8920 = vpop.f32.mrb[0].mxu0
  %8921 = vmatprep.mubr.f32.mxu0 0.0
  %8922 = vmatmul.mubr.f32.gmra.mrb[0].mxu0 %v8664
  %v8923 = vpop.f32.mrb[0].mxu0
  %v8924 = vadd.f32 0.0, %v8923
  %v8925 = vpop.f32.mrb[0].mxu0
  %8926 = vmatprep.mubr.f32.mxu0 0.0
  %8927 = vmatmul.mubr.f32.gmra.mrb[0].mxu0 %v8667
  %v8928 = vpop.f32.mrb[0].mxu0
  %v8929 = vadd.f32 0.0, %v8928
  %v8930 = vpop.f32.mrb[0].mxu0
  %8931 = vmatprep.mubr.f32.mxu0 0.0
  %8932 = vmatmul.mubr.f32.gmra.mrb[0].mxu0 %v8670
  %v8933 = vpop.f32.mrb[0].mxu0
  %v8934 = vadd.f32 0.0, %v8933
  %v8935 = vpop.f32.mrb[0].mxu0
  %8936 = vmatprep.mubr.f32.mxu0 0.0
  %8937 = vmatmul.mubr.f32.gmra.mrb[0].mxu0 %v8673
  %v8938 = vpop.f32.mrb[0].mxu0
  %v8939 = vadd.f32 0.0, %v8938
  %v8940 = vpop.f32.mrb[0].mxu0
  %8941 = vmatprep.mubr.f32.mxu0 0.0
  %8942 = vmatmul.mubr.f32.gmra.mrb[0].mxu0 %v8676
  %v8943 = vpop.f32.mrb[0].mxu0
  %v8944 = vadd.f32 0.0, %v8943
  %v8945 = vpop.f32.mrb[0].mxu0
  %8946 = vmatprep.mubr.f32.mxu0 0.0
  %8947 = vmatmul.mubr.f32.gmra.mrb[0].mxu0 %v8679
  %v8948 = vpop.f32.mrb[0].mxu0
  %v8949 = vadd.f32 0.0, %v8948
  %v8950 = vpop.f32.mrb[0].mxu0
  %8951 = vmatprep.mubr.f32.mxu0 0.0
  %8952 = vmatmul.mubr.f32.gmra.mrb[0].mxu0 %v8682
  %v8953 = vpop.f32.mrb[0].mxu0
  %v8954 = vadd.f32 0.0, %v8953
  %v8955 = vpop.f32.mrb[0].mxu0
  %8956 = vmatprep.mubr.f32.mxu0 0.0
  %8957 = vmatmul.mubr.f32.gmra.mrb[0].mxu0 %v8685
  %v8958 = vpop.f32.mrb[0].mxu0
  %v8959 = vadd.f32 0.0, %v8958
  %v8960 = vpop.f32.mrb[0].mxu0
  %8961 = vmatprep.mubr.f32.mxu0 0.0
  %8962 = vmatmul.mubr.f32.gmra.mrb[0].mxu0 %v8688
  %v8963 = vpop.f32.mrb[0].mxu0
  %v8964 = vadd.f32 0.0, %v8963
  %v8965 = vpop.f32.mrb[0].mxu0
  %8966 = vmatprep.mubr.f32.mxu0 0.0
  %8967 = vmatmul.mubr.f32.gmra.mrb[0].mxu0 %v8691
  %v8968 = vpop.f32.mrb[0].mxu0
  %v8969 = vadd.f32 0.0, %v8968
  %v8970 = vpop.f32.mrb[0].mxu0
  %8971 = vmatprep.mubr.f32.mxu0 0.0
  %8972 = vmatmul.mubr.f32.gmra.mrb[0].mxu0 %v8694
  %v8973 = vpop.f32.mrb[0].mxu0
  %v8974 = vadd.f32 0.0, %v8973
  %v8975 = vpop.f32.mrb[0].mxu0
  %8976 = vmatprep.mubr.f32.mxu0 0.0
  %8977 = vmatmul.mubr.f32.gmra.mrb[0].mxu0 %v8697
  %v8978 = vpop.f32.mrb[0].mxu0
  %v8979 = vadd.f32 0.0, %v8978
  %v8980 = vpop.f32.mrb[0].mxu0
  %8981 = vmatprep.mubr.f32.mxu0 0.0
  %8982 = vmatmul.mubr.f32.gmra.mrb[0].mxu0 %v8700
  %v8983 = vpop.f32.mrb[0].mxu0
  %v8984 = vadd.f32 0.0, %v8983
  %v8985 = vpop.f32.mrb[0].mxu0
  %8986 = vmatprep.mubr.f32.mxu0 0.0
  %8987 = vmatmul.mubr.f32.gmra.mrb[0].mxu0 %v8703
  %v8988 = vpop.f32.mrb[0].mxu0
  %v8989 = vadd.f32 0.0, %v8988
  %v8990 = vpop.f32.mrb[0].mxu0
  %8991 = vmatprep.mubr.f32.mxu0 0.0
  %8992 = vmatmul.mubr.f32.gmra.mrb[0].mxu0 %v8706
  %v8993 = vpop.f32.mrb[0].mxu0
  %v8994 = vadd.f32 0.0, %v8993
  %v8995 = vpop.f32.mrb[0].mxu0
  %8996 = vmatprep.mubr.f32.mxu0 0.0
  %8997 = vmatmul.mubr.f32.gmra.mrb[0].mxu0 %v8709
  %v8998 = vpop.f32.mrb[0].mxu0
  %v8999 = vadd.f32 0.0, %v8998
  %v9000 = vpop.f32.mrb[0].mxu0
  %9001 = vmatprep.mubr.f32.mxu0 0.0
  %9002 = vmatmul.mubr.f32.gmra.mrb[0].mxu0 %v8712
  %v9003 = vpop.f32.mrb[0].mxu0
  %v9004 = vadd.f32 0.0, %v9003
  %v9005 = vpop.f32.mrb[0].mxu0
  %9006 = vmatprep.mubr.f32.mxu0 0.0
  %9007 = vmatmul.mubr.f32.gmra.mrb[0].mxu0 %v8715
  %v9008 = vpop.f32.mrb[0].mxu0
  %v9009 = vadd.f32 0.0, %v9008
  %v9010 = vpop.f32.mrb[0].mxu0
  %9011 = vmatprep.mubr.f32.mxu0 0.0
  %9012 = vmatmul.mubr.f32.gmra.mrb[0].mxu0 %v8718
  %v9013 = vpop.f32.mrb[0].mxu0
  %v9014 = vadd.f32 0.0, %v9013
  %v9015 = vpop.f32.mrb[0].mxu0
  %9016 = vmatprep.mubr.f32.mxu0 0.0
  %9017 = vmatmul.mubr.f32.gmra.mrb[0].mxu0 %v8721
  %v9018 = vpop.f32.mrb[0].mxu0
  %v9019 = vadd.f32 0.0, %v9018
  %v9020 = vpop.f32.mrb[0].mxu0
  %9021 = vmatprep.mubr.f32.mxu0 0.0
  %9022 = vmatmul.mubr.f32.gmra.mrb[0].mxu0 %v8724
  %v9023 = vpop.f32.mrb[0].mxu0
  %v9024 = vadd.f32 0.0, %v9023
  %v9025 = vpop.f32.mrb[0].mxu0
  %9026 = vmatprep.mubr.f32.mxu0 0.0
  %9027 = vmatmul.mubr.f32.gmra.mrb[0].mxu0 %v8727
  %v9028 = vpop.f32.mrb[0].mxu0
  %v9029 = vadd.f32 0.0, %v9028
  %v9030 = vpop.f32.mrb[0].mxu0
  %9031 = vmatprep.mubr.f32.mxu0 0.0
  %9032 = vmatmul.mubr.f32.gmra.mrb[0].mxu0 %v8730
  %v9033 = vpop.f32.mrb[0].mxu0
  %v9034 = vadd.f32 0.0, %v9033
  %v9035 = vpop.f32.mrb[0].mxu0
  %9036 = vmatprep.mubr.f32.mxu0 0.0
  %9037 = vmatmul.mubr.f32.gmra.mrb[0].mxu0 %v8733
  %v9038 = vpop.f32.mrb[0].mxu0
  %v9039 = vadd.f32 0.0, %v9038
  %v9040 = vpop.f32.mrb[0].mxu0
  %9041 = vmatprep.mubr.f32.mxu0 0.0
  %9042 = vmatmul.mubr.f32.gmra.mrb[0].mxu0 %v8736
  %v9043 = vpop.f32.mrb[0].mxu0
  %v9044 = vadd.f32 0.0, %v9043
  %v9045 = vpop.f32.mrb[0].mxu0
  %9046 = vmatprep.mubr.f32.mxu0 0.0
  %9047 = vmatmul.mubr.f32.gmra.mrb[0].mxu0 %v8739
  %v9048 = vpop.f32.mrb[0].mxu0
  %v9049 = vadd.f32 0.0, %v9048
  %v9050 = vpop.f32.mrb[0].mxu0
  %9051 = vmatprep.mubr.f32.mxu0 0.0
  %9052 = vmatmul.mubr.f32.gmra.mrb[0].mxu0 %v8742
  %v9053 = vpop.f32.mrb[0].mxu0
  %v9054 = vadd.f32 0.0, %v9053
  %v9055 = vpop.f32.mrb[0].mxu0
  %9056 = vmatprep.mubr.f32.mxu0 0.0
  %9057 = vmatmul.mubr.f32.gmra.mrb[0].mxu0 %v8745
  %v9058 = vpop.f32.mrb[0].mxu0
  %v9059 = vadd.f32 0.0, %v9058
  %v9060 = vpop.f32.mrb[0].mxu0
  %9061 = vmatprep.mubr.f32.mxu0 0.0
  %9062 = vmatmul.mubr.f32.gmra.mrb[0].mxu0 %v8748
  %v9063 = vpop.f32.mrb[0].mxu0
  %v9064 = vadd.f32 0.0, %v9063
  %v9065 = vpop.f32.mrb[0].mxu0
  %9066 = vmatprep.mubr.f32.mxu0 0.0
  %9067 = vmatmul.mubr.f32.gmra.mrb[0].mxu0 %v8751
  %v9068 = vpop.f32.mrb[0].mxu0
  %v9069 = vadd.f32 0.0, %v9068
  %v9070 = vpop.f32.mrb[0].mxu0
  %9071 = vmatprep.mubr.f32.mxu0 0.0
  %9072 = vmatmul.mubr.f32.gmra.mrb[0].mxu0 %v8754
  %v9073 = vpop.f32.mrb[0].mxu0
  %v9074 = vadd.f32 0.0, %v9073
  %v9075 = vpop.f32.mrb[0].mxu0
  %9076 = vmatprep.mubr.f32.mxu0 0.0
  %9077 = vmatmul.mubr.f32.gmra.mrb[0].mxu0 %v8757
  %v9078 = vpop.f32.mrb[0].mxu0
  %v9079 = vadd.f32 0.0, %v9078
  %v9080 = vpop.f32.mrb[0].mxu0
  %9081 = vmatprep.mubr.f32.mxu0 0.0
  %9082 = vmatmul.mubr.f32.gmra.mrb[0].mxu0 %v8760
  %v9083 = vpop.f32.mrb[0].mxu0
  %v9084 = vadd.f32 0.0, %v9083
  %v9085 = vpop.f32.mrb[0].mxu0
  %9086 = vmatprep.mubr.f32.mxu0 0.0
  %9087 = vmatmul.mubr.f32.gmra.mrb[0].mxu0 %v8763
  %v9088 = vpop.f32.mrb[0].mxu0
  %v9089 = vadd.f32 0.0, %v9088
  %v9090 = vpop.f32.mrb[0].mxu0
  %9091 = vmatprep.mubr.f32.mxu0 0.0
  %9092 = vmatmul.mubr.f32.gmra.mrb[0].mxu0 %v8766
  %v9093 = vpop.f32.mrb[0].mxu0
  %v9094 = vadd.f32 0.0, %v9093
  %v9095 = vpop.f32.mrb[0].mxu0
  %9096 = vmatprep.mubr.f32.mxu0 0.0
  %9097 = vmatmul.mubr.f32.gmra.mrb[0].mxu0 %v8769
  %v9098 = vpop.f32.mrb[0].mxu0
  %v9099 = vadd.f32 0.0, %v9098
  %v9100 = vpop.f32.mrb[0].mxu0
  %9101 = vmatprep.mubr.f32.mxu0 0.0
  %9102 = vmatmul.mubr.f32.gmra.mrb[0].mxu0 %v8772
  %v9103 = vpop.f32.mrb[0].mxu0
  %v9104 = vadd.f32 0.0, %v9103
  %v9105 = vpop.f32.mrb[0].mxu0
  %9106 = vmatprep.mubr.f32.mxu0 0.0
  %9107 = vmatmul.mubr.f32.gmra.mrb[0].mxu0 %v8775
  %v9108 = vpop.f32.mrb[0].mxu0
  %v9109 = vadd.f32 0.0, %v9108
  %v9110 = vpop.f32.mrb[0].mxu0
  %9111 = vmatprep.mubr.f32.mxu0 0.0
  %9112 = vmatmul.mubr.f32.gmra.mrb[0].mxu0 %v8778
  %v9113 = vpop.f32.mrb[0].mxu0
  %v9114 = vadd.f32 0.0, %v9113
  %v9115 = vpop.f32.mrb[0].mxu0
  %9116 = vmatprep.mubr.f32.mxu0 0.0
  %9117 = vmatmul.mubr.f32.gmra.mrb[0].mxu0 %v8781
  %v9118 = vpop.f32.mrb[0].mxu0
  %v9119 = vadd.f32 0.0, %v9118
  %v9120 = vpop.f32.mrb[0].mxu0
  %9121 = vmatprep.mubr.f32.mxu0 0.0
  %9122 = vmatmul.mubr.f32.gmra.mrb[0].mxu0 %v8784
  %v9123 = vpop.f32.mrb[0].mxu0
  %v9124 = vadd.f32 0.0, %v9123
  %v9125 = vpop.f32.mrb[0].mxu0
  %9126 = vmatprep.mubr.f32.mxu0 0.0
  %9127 = vmatmul.mubr.f32.gmra.mrb[0].mxu0 %v8787
  %v9128 = vpop.f32.mrb[0].mxu0
  %v9129 = vadd.f32 0.0, %v9128
  %v9130 = vpop.f32.mrb[0].mxu0
  %9131 = vmatprep.mubr.f32.mxu0 0.0
  %9132 = vmatmul.mubr.f32.gmra.mrb[0].mxu0 %v8790
  %v9133 = vpop.f32.mrb[0].mxu0
  %v9134 = vadd.f32 0.0, %v9133
  %v9135 = vpop.f32.mrb[0].mxu0
  %9136 = vmatprep.mubr.f32.mxu0 0.0
  %9137 = vmatmul.mubr.f32.gmra.mrb[0].mxu0 %v8793
  %v9138 = vpop.f32.mrb[0].mxu0
  %v9139 = vadd.f32 0.0, %v9138
  %v9140 = vpop.f32.mrb[0].mxu0
  %9141 = vmatprep.mubr.f32.mxu0 0.0
  %9142 = vmatmul.mubr.f32.gmra.mrb[0].mxu0 %v8796
  %v9143 = vpop.f32.mrb[0].mxu0
  %v9144 = vadd.f32 0.0, %v9143
  %v9145 = vpop.f32.mrb[0].mxu0
  %9146 = vmatprep.mubr.f32.mxu0 0.0
  %9147 = vmatmul.mubr.f32.gmra.mrb[0].mxu0 %v8799
  %v9148 = vpop.f32.mrb[0].mxu0
  %v9149 = vadd.f32 0.0, %v9148
  %v9150 = vpop.f32.mrb[0].mxu0
  %9151 = vmatprep.mubr.f32.mxu0 0.0
  %9152 = vmatmul.mubr.f32.gmra.mrb[0].mxu0 %v8802
  %v9153 = vpop.f32.mrb[0].mxu0
  %v9154 = vadd.f32 0.0, %v9153
  %v9155 = vpop.f32.mrb[0].mxu0
  %9156 = vmatprep.mubr.f32.mxu0 0.0
  %9157 = vmatmul.mubr.f32.gmra.mrb[0].mxu0 %v8805
  %v9158 = vpop.f32.mrb[0].mxu0
  %v9159 = vadd.f32 0.0, %v9158
  %v9160 = vpop.f32.mrb[0].mxu0
  %9161 = vmatprep.mubr.f32.mxu0 0.0
  %9162 = vmatmul.mubr.f32.gmra.mrb[0].mxu0 %v8808
  %v9163 = vpop.f32.mrb[0].mxu0
  %v9164 = vadd.f32 0.0, %v9163
  %v9165 = vpop.f32.mrb[0].mxu0
  %9166 = vmatprep.mubr.f32.mxu0 0.0
  %9167 = vmatmul.mubr.f32.gmra.mrb[0].mxu0 %v8811
  %v9168 = vpop.f32.mrb[0].mxu0
  %v9169 = vadd.f32 0.0, %v9168
  %v9170 = vpop.f32.mrb[0].mxu0
  %9171 = vmatprep.mubr.f32.mxu0 0.0
  %9172 = vmatmul.mubr.f32.gmra.mrb[0].mxu0 %v8814
  %v9173 = vpop.f32.mrb[0].mxu0
  %v9174 = vadd.f32 0.0, %v9173
  %v9175 = vpop.f32.mrb[0].mxu0
  %9176 = vmatprep.mubr.f32.mxu0 0.0
  %9177 = vmatmul.mubr.f32.gmra.mrb[0].mxu0 %v8817
  %v9178 = vpop.f32.mrb[0].mxu0
  %v9179 = vadd.f32 0.0, %v9178
  %v9180 = vpop.f32.mrb[0].mxu0
  %9181 = vmatprep.mubr.f32.mxu0 0.0
  %9182 = vmatmul.mubr.f32.gmra.mrb[0].mxu0 %v8820
  %v9183 = vpop.f32.mrb[0].mxu0
  %v9184 = vadd.f32 0.0, %v9183
  %v9185 = vpop.f32.mrb[0].mxu0
  %9186 = vmatprep.mubr.f32.mxu0 0.0
  %9187 = vmatmul.mubr.f32.gmra.mrb[0].mxu0 %v8823
  %v9188 = vpop.f32.mrb[0].mxu0
  %v9189 = vadd.f32 0.0, %v9188
  %v9190 = vpop.f32.mrb[0].mxu0
  %9191 = vmatprep.mubr.f32.mxu0 0.0
  %9192 = vmatmul.mubr.f32.gmra.mrb[0].mxu0 %v8826
  %v9193 = vpop.f32.mrb[0].mxu0
  %v9194 = vadd.f32 0.0, %v9193
  %v9195 = vpop.f32.mrb[0].mxu0
  %9196 = vmatprep.mubr.f32.mxu0 0.0
  %9197 = vmatmul.mubr.f32.gmra.mrb[0].mxu0 %v8829
  %v9198 = vpop.f32.mrb[0].mxu0
  %v9199 = vadd.f32 0.0, %v9198
  %v9200 = vpop.f32.mrb[0].mxu0
  %9201 = vmatprep.mubr.f32.mxu0 0.0
  %9202 = vmatmul.mubr.f32.gmra.mrb[0].mxu0 %v8832
  %v9203 = vpop.f32.mrb[0].mxu0
  %v9204 = vadd.f32 0.0, %v9203
  %v9205 = vpop.f32.mrb[0].mxu0
  %9206 = vmatprep.mubr.f32.mxu0 0.0
  %9207 = vmatmul.mubr.f32.gmra.mrb[0].mxu0 %v8835
  %v9208 = vpop.f32.mrb[0].mxu0
  %v9209 = vadd.f32 0.0, %v9208
  %v9210 = vpop.f32.mrb[0].mxu0
  %9211 = vmatprep.mubr.f32.mxu0 0.0
  %9212 = vmatmul.mubr.f32.gmra.mrb[0].mxu0 %v8838
  %v9213 = vpop.f32.mrb[0].mxu0
  %v9214 = vadd.f32 0.0, %v9213
  %v9215 = vpop.f32.mrb[0].mxu0
  %9216 = vmatprep.mubr.f32.mxu0 0.0
  %9217 = vmatmul.mubr.f32.gmra.mrb[0].mxu0 %v8841
  %v9218 = vpop.f32.mrb[0].mxu0
  %v9219 = vadd.f32 0.0, %v9218
  %v9220 = vpop.f32.mrb[0].mxu0
  %9221 = vmatprep.mubr.f32.mxu0 0.0
  %9222 = vmatmul.mubr.f32.gmra.mrb[0].mxu0 %v8844
  %v9223 = vpop.f32.mrb[0].mxu0
  %v9224 = vadd.f32 0.0, %v9223
  %v9225 = vpop.f32.mrb[0].mxu0
  %9226 = vmatprep.mubr.f32.mxu0 0.0
  %9227 = vmatmul.mubr.f32.gmra.mrb[0].mxu0 %v8847
  %v9228 = vpop.f32.mrb[0].mxu0
  %v9229 = vadd.f32 0.0, %v9228
  %v9230 = vpop.f32.mrb[0].mxu0
  %9231 = vmatprep.mubr.f32.mxu0 0.0
  %9232 = vmatmul.mubr.f32.gmra.mrb[0].mxu0 %v8850
  %v9233 = vpop.f32.mrb[0].mxu0
  %v9234 = vadd.f32 0.0, %v9233
  %v9235 = vpop.f32.mrb[0].mxu0
  %9236 = vdwg.mxu0
  %v9237 = vadd.f32 %v8528, %v8919
  %v9238 = vadd.f32 %v8529, %v8924
  %v9239 = vadd.f32 %v8530, %v8929
  %v9240 = vadd.f32 %v8531, %v8934
  %v9241 = vadd.f32 %v8532, %v8939
  %v9242 = vadd.f32 %v8533, %v8944
  %v9243 = vadd.f32 %v8534, %v8949
  %v9244 = vadd.f32 %v8535, %v8954
  %v9245 = vadd.f32 %v8536, %v8959
  %v9246 = vadd.f32 %v8537, %v8964
  %v9247 = vadd.f32 %v8538, %v8969
  %v9248 = vadd.f32 %v8539, %v8974
  %v9249 = vadd.f32 %v8540, %v8979
  %v9250 = vadd.f32 %v8541, %v8984
  %v9251 = vadd.f32 %v8542, %v8989
  %v9252 = vadd.f32 %v8543, %v8994
  %v9253 = vadd.f32 %v8544, %v8999
  %v9254 = vadd.f32 %v8545, %v9004
  %v9255 = vadd.f32 %v8546, %v9009
  %v9256 = vadd.f32 %v8547, %v9014
  %v9257 = vadd.f32 %v8548, %v9019
  %v9258 = vadd.f32 %v8549, %v9024
  %v9259 = vadd.f32 %v8550, %v9029
  %v9260 = vadd.f32 %v8551, %v9034
  %v9261 = vadd.f32 %v8552, %v9039
  %v9262 = vadd.f32 %v8553, %v9044
  %v9263 = vadd.f32 %v8554, %v9049
  %v9264 = vadd.f32 %v8555, %v9054
  %v9265 = vadd.f32 %v8556, %v9059
  %v9266 = vadd.f32 %v8557, %v9064
  %v9267 = vadd.f32 %v8558, %v9069
  %v9268 = vadd.f32 %v8559, %v9074
  %v9269 = vadd.f32 %v8560, %v9079
  %v9270 = vadd.f32 %v8561, %v9084
  %v9271 = vadd.f32 %v8562, %v9089
  %v9272 = vadd.f32 %v8563, %v9094
  %v9273 = vadd.f32 %v8564, %v9099
  %v9274 = vadd.f32 %v8565, %v9104
  %v9275 = vadd.f32 %v8566, %v9109
  %v9276 = vadd.f32 %v8567, %v9114
  %v9277 = vadd.f32 %v8568, %v9119
  %v9278 = vadd.f32 %v8569, %v9124
  %v9279 = vadd.f32 %v8570, %v9129
  %v9280 = vadd.f32 %v8571, %v9134
  %v9281 = vadd.f32 %v8572, %v9139
  %v9282 = vadd.f32 %v8573, %v9144
  %v9283 = vadd.f32 %v8574, %v9149
  %v9284 = vadd.f32 %v8575, %v9154
  %v9285 = vadd.f32 %v8576, %v9159
  %v9286 = vadd.f32 %v8577, %v9164
  %v9287 = vadd.f32 %v8578, %v9169
  %v9288 = vadd.f32 %v8579, %v9174
  %v9289 = vadd.f32 %v8580, %v9179
  %v9290 = vadd.f32 %v8581, %v9184
  %v9291 = vadd.f32 %v8582, %v9189
  %v9292 = vadd.f32 %v8583, %v9194
  %v9293 = vadd.f32 %v8584, %v9199
  %v9294 = vadd.f32 %v8585, %v9204
  %v9295 = vadd.f32 %v8586, %v9209
  %v9296 = vadd.f32 %v8587, %v9214
  %v9297 = vadd.f32 %v8588, %v9219
  %v9298 = vadd.f32 %v8589, %v9224
  %v9299 = vadd.f32 %v8590, %v9229
  %v9300 = vadd.f32 %v8591, %v9234
  %v9301 = vld [vmem:[#allocation2 + $0x18] sm:$0xff]
  %v9302 = vld [vmem:[#allocation2 + $0x20] sm:$0xff]
  %v9303 = vld [vmem:[#allocation2 + $0x28] sm:$0xff]
  %v9304 = vld [vmem:[#allocation2 + $0x30] sm:$0xff]
  %v9305 = vld [vmem:[#allocation2 + $0x38] sm:$0xff]
  %v9306 = vld [vmem:[#allocation2 + $0x40] sm:$0xff]
  %v9307 = vld [vmem:[#allocation2 + $0x48] sm:$0xff]
  %v9308 = vld [vmem:[#allocation2 + $0x50] sm:$0xff]
  %v9309 = vld [vmem:[#allocation2 + $0x58] sm:$0xff]
  %v9310 = vld [vmem:[#allocation2 + $0x60] sm:$0xff]
  %v9311 = vld [vmem:[#allocation2 + $0x68] sm:$0xff]
  %v9312 = vld [vmem:[#allocation2 + $0x70] sm:$0xff]
  %v9313 = vld [vmem:[#allocation2 + $0x78] sm:$0xff]
  %v9314 = vld [vmem:[#allocation2 + $0x80] sm:$0xff]
  %v9315 = vld [vmem:[#allocation2 + $0x88] sm:$0xff]
  %v9316 = vld [vmem:[#allocation2 + $0x90] sm:$0xff]
  %v9317 = vld [vmem:[#allocation2 + $0x98] sm:$0xff]
  %v9318 = vld [vmem:[#allocation2 + $0xa0] sm:$0xff]
  %v9319 = vld [vmem:[#allocation2 + $0xa8] sm:$0xff]
  %v9320 = vld [vmem:[#allocation2 + $0xb0] sm:$0xff]
  %v9321 = vld [vmem:[#allocation2 + $0xb8] sm:$0xff]
  %v9322 = vld [vmem:[#allocation2 + $0xc0] sm:$0xff]
  %v9323 = vld [vmem:[#allocation2 + $0xc8] sm:$0xff]
  %v9324 = vld [vmem:[#allocation2 + $0xd0] sm:$0xff]
  %v9325 = vld [vmem:[#allocation2 + $0xd8] sm:$0xff]
  %v9326 = vld [vmem:[#allocation2 + $0xe0] sm:$0xff]
  %v9327 = vld [vmem:[#allocation2 + $0xe8] sm:$0xff]
  %v9328 = vld [vmem:[#allocation2 + $0xf0] sm:$0xff]
  %v9329 = vld [vmem:[#allocation2 + $0xf8] sm:$0xff]
  %v9330 = vld [vmem:[#allocation2 + $0x100] sm:$0xff]
  %v9331 = vld [vmem:[#allocation2 + $0x108] sm:$0xff]
  %v9332 = vld [vmem:[#allocation2 + $0x110] sm:$0xff]
  %v9333 = vld [vmem:[#allocation2 + $0x118] sm:$0xff]
  %v9334 = vld [vmem:[#allocation2 + $0x120] sm:$0xff]
  %v9335 = vld [vmem:[#allocation2 + $0x128] sm:$0xff]
  %v9336 = vld [vmem:[#allocation2 + $0x130] sm:$0xff]
  %v9337 = vld [vmem:[#allocation2 + $0x138] sm:$0xff]
  %v9338 = vld [vmem:[#allocation2 + $0x140] sm:$0xff]
  %v9339 = vld [vmem:[#allocation2 + $0x148] sm:$0xff]
  %v9340 = vld [vmem:[#allocation2 + $0x150] sm:$0xff]
  %v9341 = vld [vmem:[#allocation2 + $0x158] sm:$0xff]
  %v9342 = vld [vmem:[#allocation2 + $0x160] sm:$0xff]
  %v9343 = vld [vmem:[#allocation2 + $0x168] sm:$0xff]
  %v9344 = vld [vmem:[#allocation2 + $0x170] sm:$0xff]
  %v9345 = vld [vmem:[#allocation2 + $0x178] sm:$0xff]
  %v9346 = vld [vmem:[#allocation2 + $0x180] sm:$0xff]
  %v9347 = vld [vmem:[#allocation2 + $0x188] sm:$0xff]
  %v9348 = vld [vmem:[#allocation2 + $0x190] sm:$0xff]
  %v9349 = vld [vmem:[#allocation2 + $0x198] sm:$0xff]
  %v9350 = vld [vmem:[#allocation2 + $0x1a0] sm:$0xff]
  %v9351 = vld [vmem:[#allocation2 + $0x1a8] sm:$0xff]
  %v9352 = vld [vmem:[#allocation2 + $0x1b0] sm:$0xff]
  %v9353 = vld [vmem:[#allocation2 + $0x1b8] sm:$0xff]
  %v9354 = vld [vmem:[#allocation2 + $0x1c0] sm:$0xff]
  %v9355 = vld [vmem:[#allocation2 + $0x1c8] sm:$0xff]
  %v9356 = vld [vmem:[#allocation2 + $0x1d0] sm:$0xff]
  %v9357 = vld [vmem:[#allocation2 + $0x1d8] sm:$0xff]
  %v9358 = vld [vmem:[#allocation2 + $0x1e0] sm:$0xff]
  %v9359 = vld [vmem:[#allocation2 + $0x1e8] sm:$0xff]
  %v9360 = vld [vmem:[#allocation2 + $0x1f0] sm:$0xff]
  %v9361 = vld [vmem:[#allocation2 + $0x1f8] sm:$0xff]
  %v9362 = vld [vmem:[#allocation2 + $0x200] sm:$0xff]
  %v9363 = vld [vmem:[#allocation2 + $0x208] sm:$0xff]
  %v9364 = vld [vmem:[#allocation2 + $0x210] sm:$0xff]
  %v9365 = vld [vmem:[%s4 + $0x80] sm:$0xff]
  %v9366 = vld [vmem:[%s4 + $0x88] sm:$0xff]
  %v9367 = vld [vmem:[%s4 + $0x90] sm:$0xff]
  %v9368 = vld [vmem:[%s4 + $0x98] sm:$0xff]
  %v9370 = vsel %vm6522, %v9301, 0
  %v9373 = vsel %vm6522, %v9302, 0
  %v9376 = vsel %vm6522, %v9303, 0
  %v9379 = vsel %vm6522, %v9304, 0
  %v9382 = vsel %vm6522, %v9305, 0
  %v9385 = vsel %vm6522, %v9306, 0
  %v9388 = vsel %vm6522, %v9307, 0
  %v9391 = vsel %vm6522, %v9308, 0
  %v9394 = vsel %vm6522, %v9309, 0
  %v9397 = vsel %vm6522, %v9310, 0
  %v9400 = vsel %vm6522, %v9311, 0
  %v9403 = vsel %vm6522, %v9312, 0
  %v9406 = vsel %vm6522, %v9313, 0
  %v9409 = vsel %vm6522, %v9314, 0
  %v9412 = vsel %vm6522, %v9315, 0
  %v9415 = vsel %vm6522, %v9316, 0
  %v9418 = vsel %vm6522, %v9317, 0
  %v9421 = vsel %vm6522, %v9318, 0
  %v9424 = vsel %vm6522, %v9319, 0
  %v9427 = vsel %vm6522, %v9320, 0
  %v9430 = vsel %vm6522, %v9321, 0
  %v9433 = vsel %vm6522, %v9322, 0
  %v9436 = vsel %vm6522, %v9323, 0
  %v9439 = vsel %vm6522, %v9324, 0
  %v9442 = vsel %vm6522, %v9325, 0
  %v9445 = vsel %vm6522, %v9326, 0
  %v9448 = vsel %vm6522, %v9327, 0
  %v9451 = vsel %vm6522, %v9328, 0
  %v9454 = vsel %vm6522, %v9329, 0
  %v9457 = vsel %vm6522, %v9330, 0
  %v9460 = vsel %vm6522, %v9331, 0
  %v9463 = vsel %vm6522, %v9332, 0
  %v9466 = vsel %vm6522, %v9333, 0
  %v9469 = vsel %vm6522, %v9334, 0
  %v9472 = vsel %vm6522, %v9335, 0
  %v9475 = vsel %vm6522, %v9336, 0
  %v9478 = vsel %vm6522, %v9337, 0
  %v9481 = vsel %vm6522, %v9338, 0
  %v9484 = vsel %vm6522, %v9339, 0
  %v9487 = vsel %vm6522, %v9340, 0
  %v9490 = vsel %vm6522, %v9341, 0
  %v9493 = vsel %vm6522, %v9342, 0
  %v9496 = vsel %vm6522, %v9343, 0
  %v9499 = vsel %vm6522, %v9344, 0
  %v9502 = vsel %vm6522, %v9345, 0
  %v9505 = vsel %vm6522, %v9346, 0
  %v9508 = vsel %vm6522, %v9347, 0
  %v9511 = vsel %vm6522, %v9348, 0
  %v9514 = vsel %vm6522, %v9349, 0
  %v9517 = vsel %vm6522, %v9350, 0
  %v9520 = vsel %vm6522, %v9351, 0
  %v9523 = vsel %vm6522, %v9352, 0
  %v9526 = vsel %vm6522, %v9353, 0
  %v9529 = vsel %vm6522, %v9354, 0
  %v9532 = vsel %vm6522, %v9355, 0
  %v9535 = vsel %vm6522, %v9356, 0
  %v9538 = vsel %vm6522, %v9357, 0
  %v9541 = vsel %vm6522, %v9358, 0
  %v9544 = vsel %vm6522, %v9359, 0
  %v9547 = vsel %vm6522, %v9360, 0
  %v9550 = vsel %vm6522, %v9361, 0
  %v9553 = vsel %vm6522, %v9362, 0
  %v9556 = vsel %vm6522, %v9363, 0
  %v9559 = vsel %vm6522, %v9364, 0
  %9561 = vmatprep.subr.mxu0 0.0
  %9562 = vmatpush1.msra.mxu0 %v9365
  %9563 = vmatprep.subr.mxu0 0.0
  %9564 = vmatpush1.msra.mxu0 %v9366
  %9565 = vmatprep.subr.mxu0 0.0
  %9566 = vmatpush1.msra.mxu0 %v9367
  %9567 = vmatprep.subr.mxu0 0.0
  %9568 = vmatpush1.msra.mxu0 %v9368
  %9569 = vmatprep.subr.mxu0 0.0
  %9570 = vmatpush1.msra.mxu0 0.0
  %9571 = vmatprep.subr.mxu0 0.0
  %9572 = vmatpush1.msra.mxu0 0.0
  %9573 = vmatprep.subr.mxu0 0.0
  %9574 = vmatpush1.msra.mxu0 0.0
  %9575 = vmatprep.subr.mxu0 0.0
  %9576 = vmatpush1.msra.mxu0 0.0
  %9577 = vmatprep.subr.mxu0 0.0
  %9578 = vmatpush1.msra.mxu0 0.0
  %9579 = vmatprep.subr.mxu0 0.0
  %9580 = vmatpush1.msra.mxu0 0.0
  %9581 = vmatprep.subr.mxu0 0.0
  %9582 = vmatpush1.msra.mxu0 0.0
  %9583 = vmatprep.subr.mxu0 0.0
  %9584 = vmatpush1.msra.mxu0 0.0
  %9585 = vmatprep.subr.mxu0 0.0
  %9586 = vmatpush1.msra.mxu0 0.0
  %9587 = vmatprep.subr.mxu0 0.0
  %9588 = vmatpush1.msra.mxu0 0.0
  %9589 = vmatprep.subr.mxu0 0.0
  %9590 = vmatpush1.msra.mxu0 0.0
  %9591 = vmatprep.subr.mxu0 0.0
  %9592 = vmatpush1.msra.mxu0 0.0
  %9593 = vmatprep.subr.mxu0 0.0
  %9594 = vmatpush1.msra.mxu0 0.0
  %9595 = vmatprep.subr.mxu0 0.0
  %9596 = vmatpush1.msra.mxu0 0.0
  %9597 = vmatprep.subr.mxu0 0.0
  %9598 = vmatpush1.msra.mxu0 0.0
  %9599 = vmatprep.subr.mxu0 0.0
  %9600 = vmatpush1.msra.mxu0 0.0
  %9601 = vmatprep.subr.mxu0 0.0
  %9602 = vmatpush1.msra.mxu0 0.0
  %9603 = vmatprep.subr.mxu0 0.0
  %9604 = vmatpush1.msra.mxu0 0.0
  %9605 = vmatprep.subr.mxu0 0.0
  %9606 = vmatpush1.msra.mxu0 0.0
  %9607 = vmatprep.subr.mxu0 0.0
  %9608 = vmatpush1.msra.mxu0 0.0
  %9609 = vmatprep.subr.mxu0 0.0
  %9610 = vmatpush1.msra.mxu0 0.0
  %9611 = vmatprep.subr.mxu0 0.0
  %9612 = vmatpush1.msra.mxu0 0.0
  %9613 = vmatprep.subr.mxu0 0.0
  %9614 = vmatpush1.msra.mxu0 0.0
  %9615 = vmatprep.subr.mxu0 0.0
  %9616 = vmatpush1.msra.mxu0 0.0
  %9617 = vmatprep.subr.mxu0 0.0
  %9618 = vmatpush1.msra.mxu0 0.0
  %9619 = vmatprep.subr.mxu0 0.0
  %9620 = vmatpush1.msra.mxu0 0.0
  %9621 = vmatprep.subr.mxu0 0.0
  %9622 = vmatpush1.msra.mxu0 0.0
  %9623 = vmatprep.subr.mxu0 0.0
  %9624 = vmatpush1.msra.mxu0 0.0
  %9625 = vmatprep.mubr.f32.mxu0 0.0
  %9626 = vmatmul.mubr.f32.gmra.mrb[0].mxu0 %v9370
  %v9627 = vpop.f32.mrb[0].mxu0
  %v9628 = vadd.f32 0.0, %v9627
  %v9629 = vpop.f32.mrb[0].mxu0
  %9630 = vmatprep.mubr.f32.mxu0 0.0
  %9631 = vmatmul.mubr.f32.gmra.mrb[0].mxu0 %v9373
  %v9632 = vpop.f32.mrb[0].mxu0
  %v9633 = vadd.f32 0.0, %v9632
  %v9634 = vpop.f32.mrb[0].mxu0
  %9635 = vmatprep.mubr.f32.mxu0 0.0
  %9636 = vmatmul.mubr.f32.gmra.mrb[0].mxu0 %v9376
  %v9637 = vpop.f32.mrb[0].mxu0
  %v9638 = vadd.f32 0.0, %v9637
  %v9639 = vpop.f32.mrb[0].mxu0
  %9640 = vmatprep.mubr.f32.mxu0 0.0
  %9641 = vmatmul.mubr.f32.gmra.mrb[0].mxu0 %v9379
  %v9642 = vpop.f32.mrb[0].mxu0
  %v9643 = vadd.f32 0.0, %v9642
  %v9644 = vpop.f32.mrb[0].mxu0
  %9645 = vmatprep.mubr.f32.mxu0 0.0
  %9646 = vmatmul.mubr.f32.gmra.mrb[0].mxu0 %v9382
  %v9647 = vpop.f32.mrb[0].mxu0
  %v9648 = vadd.f32 0.0, %v9647
  %v9649 = vpop.f32.mrb[0].mxu0
  %9650 = vmatprep.mubr.f32.mxu0 0.0
  %9651 = vmatmul.mubr.f32.gmra.mrb[0].mxu0 %v9385
  %v9652 = vpop.f32.mrb[0].mxu0
  %v9653 = vadd.f32 0.0, %v9652
  %v9654 = vpop.f32.mrb[0].mxu0
  %9655 = vmatprep.mubr.f32.mxu0 0.0
  %9656 = vmatmul.mubr.f32.gmra.mrb[0].mxu0 %v9388
  %v9657 = vpop.f32.mrb[0].mxu0
  %v9658 = vadd.f32 0.0, %v9657
  %v9659 = vpop.f32.mrb[0].mxu0
  %9660 = vmatprep.mubr.f32.mxu0 0.0
  %9661 = vmatmul.mubr.f32.gmra.mrb[0].mxu0 %v9391
  %v9662 = vpop.f32.mrb[0].mxu0
  %v9663 = vadd.f32 0.0, %v9662
  %v9664 = vpop.f32.mrb[0].mxu0
  %9665 = vmatprep.mubr.f32.mxu0 0.0
  %9666 = vmatmul.mubr.f32.gmra.mrb[0].mxu0 %v9394
  %v9667 = vpop.f32.mrb[0].mxu0
  %v9668 = vadd.f32 0.0, %v9667
  %v9669 = vpop.f32.mrb[0].mxu0
  %9670 = vmatprep.mubr.f32.mxu0 0.0
  %9671 = vmatmul.mubr.f32.gmra.mrb[0].mxu0 %v9397
  %v9672 = vpop.f32.mrb[0].mxu0
  %v9673 = vadd.f32 0.0, %v9672
  %v9674 = vpop.f32.mrb[0].mxu0
  %9675 = vmatprep.mubr.f32.mxu0 0.0
  %9676 = vmatmul.mubr.f32.gmra.mrb[0].mxu0 %v9400
  %v9677 = vpop.f32.mrb[0].mxu0
  %v9678 = vadd.f32 0.0, %v9677
  %v9679 = vpop.f32.mrb[0].mxu0
  %9680 = vmatprep.mubr.f32.mxu0 0.0
  %9681 = vmatmul.mubr.f32.gmra.mrb[0].mxu0 %v9403
  %v9682 = vpop.f32.mrb[0].mxu0
  %v9683 = vadd.f32 0.0, %v9682
  %v9684 = vpop.f32.mrb[0].mxu0
  %9685 = vmatprep.mubr.f32.mxu0 0.0
  %9686 = vmatmul.mubr.f32.gmra.mrb[0].mxu0 %v9406
  %v9687 = vpop.f32.mrb[0].mxu0
  %v9688 = vadd.f32 0.0, %v9687
  %v9689 = vpop.f32.mrb[0].mxu0
  %9690 = vmatprep.mubr.f32.mxu0 0.0
  %9691 = vmatmul.mubr.f32.gmra.mrb[0].mxu0 %v9409
  %v9692 = vpop.f32.mrb[0].mxu0
  %v9693 = vadd.f32 0.0, %v9692
  %v9694 = vpop.f32.mrb[0].mxu0
  %9695 = vmatprep.mubr.f32.mxu0 0.0
  %9696 = vmatmul.mubr.f32.gmra.mrb[0].mxu0 %v9412
  %v9697 = vpop.f32.mrb[0].mxu0
  %v9698 = vadd.f32 0.0, %v9697
  %v9699 = vpop.f32.mrb[0].mxu0
  %9700 = vmatprep.mubr.f32.mxu0 0.0
  %9701 = vmatmul.mubr.f32.gmra.mrb[0].mxu0 %v9415
  %v9702 = vpop.f32.mrb[0].mxu0
  %v9703 = vadd.f32 0.0, %v9702
  %v9704 = vpop.f32.mrb[0].mxu0
  %9705 = vmatprep.mubr.f32.mxu0 0.0
  %9706 = vmatmul.mubr.f32.gmra.mrb[0].mxu0 %v9418
  %v9707 = vpop.f32.mrb[0].mxu0
  %v9708 = vadd.f32 0.0, %v9707
  %v9709 = vpop.f32.mrb[0].mxu0
  %9710 = vmatprep.mubr.f32.mxu0 0.0
  %9711 = vmatmul.mubr.f32.gmra.mrb[0].mxu0 %v9421
  %v9712 = vpop.f32.mrb[0].mxu0
  %v9713 = vadd.f32 0.0, %v9712
  %v9714 = vpop.f32.mrb[0].mxu0
  %9715 = vmatprep.mubr.f32.mxu0 0.0
  %9716 = vmatmul.mubr.f32.gmra.mrb[0].mxu0 %v9424
  %v9717 = vpop.f32.mrb[0].mxu0
  %v9718 = vadd.f32 0.0, %v9717
  %v9719 = vpop.f32.mrb[0].mxu0
  %9720 = vmatprep.mubr.f32.mxu0 0.0
  %9721 = vmatmul.mubr.f32.gmra.mrb[0].mxu0 %v9427
  %v9722 = vpop.f32.mrb[0].mxu0
  %v9723 = vadd.f32 0.0, %v9722
  %v9724 = vpop.f32.mrb[0].mxu0
  %9725 = vmatprep.mubr.f32.mxu0 0.0
  %9726 = vmatmul.mubr.f32.gmra.mrb[0].mxu0 %v9430
  %v9727 = vpop.f32.mrb[0].mxu0
  %v9728 = vadd.f32 0.0, %v9727
  %v9729 = vpop.f32.mrb[0].mxu0
  %9730 = vmatprep.mubr.f32.mxu0 0.0
  %9731 = vmatmul.mubr.f32.gmra.mrb[0].mxu0 %v9433
  %v9732 = vpop.f32.mrb[0].mxu0
  %v9733 = vadd.f32 0.0, %v9732
  %v9734 = vpop.f32.mrb[0].mxu0
  %9735 = vmatprep.mubr.f32.mxu0 0.0
  %9736 = vmatmul.mubr.f32.gmra.mrb[0].mxu0 %v9436
  %v9737 = vpop.f32.mrb[0].mxu0
  %v9738 = vadd.f32 0.0, %v9737
  %v9739 = vpop.f32.mrb[0].mxu0
  %9740 = vmatprep.mubr.f32.mxu0 0.0
  %9741 = vmatmul.mubr.f32.gmra.mrb[0].mxu0 %v9439
  %v9742 = vpop.f32.mrb[0].mxu0
  %v9743 = vadd.f32 0.0, %v9742
  %v9744 = vpop.f32.mrb[0].mxu0
  %9745 = vmatprep.mubr.f32.mxu0 0.0
  %9746 = vmatmul.mubr.f32.gmra.mrb[0].mxu0 %v9442
  %v9747 = vpop.f32.mrb[0].mxu0
  %v9748 = vadd.f32 0.0, %v9747
  %v9749 = vpop.f32.mrb[0].mxu0
  %9750 = vmatprep.mubr.f32.mxu0 0.0
  %9751 = vmatmul.mubr.f32.gmra.mrb[0].mxu0 %v9445
  %v9752 = vpop.f32.mrb[0].mxu0
  %v9753 = vadd.f32 0.0, %v9752
  %v9754 = vpop.f32.mrb[0].mxu0
  %9755 = vmatprep.mubr.f32.mxu0 0.0
  %9756 = vmatmul.mubr.f32.gmra.mrb[0].mxu0 %v9448
  %v9757 = vpop.f32.mrb[0].mxu0
  %v9758 = vadd.f32 0.0, %v9757
  %v9759 = vpop.f32.mrb[0].mxu0
  %9760 = vmatprep.mubr.f32.mxu0 0.0
  %9761 = vmatmul.mubr.f32.gmra.mrb[0].mxu0 %v9451
  %v9762 = vpop.f32.mrb[0].mxu0
  %v9763 = vadd.f32 0.0, %v9762
  %v9764 = vpop.f32.mrb[0].mxu0
  %9765 = vmatprep.mubr.f32.mxu0 0.0
  %9766 = vmatmul.mubr.f32.gmra.mrb[0].mxu0 %v9454
  %v9767 = vpop.f32.mrb[0].mxu0
  %v9768 = vadd.f32 0.0, %v9767
  %v9769 = vpop.f32.mrb[0].mxu0
  %9770 = vmatprep.mubr.f32.mxu0 0.0
  %9771 = vmatmul.mubr.f32.gmra.mrb[0].mxu0 %v9457
  %v9772 = vpop.f32.mrb[0].mxu0
  %v9773 = vadd.f32 0.0, %v9772
  %v9774 = vpop.f32.mrb[0].mxu0
  %9775 = vmatprep.mubr.f32.mxu0 0.0
  %9776 = vmatmul.mubr.f32.gmra.mrb[0].mxu0 %v9460
  %v9777 = vpop.f32.mrb[0].mxu0
  %v9778 = vadd.f32 0.0, %v9777
  %v9779 = vpop.f32.mrb[0].mxu0
  %9780 = vmatprep.mubr.f32.mxu0 0.0
  %9781 = vmatmul.mubr.f32.gmra.mrb[0].mxu0 %v9463
  %v9782 = vpop.f32.mrb[0].mxu0
  %v9783 = vadd.f32 0.0, %v9782
  %v9784 = vpop.f32.mrb[0].mxu0
  %9785 = vmatprep.mubr.f32.mxu0 0.0
  %9786 = vmatmul.mubr.f32.gmra.mrb[0].mxu0 %v9466
  %v9787 = vpop.f32.mrb[0].mxu0
  %v9788 = vadd.f32 0.0, %v9787
  %v9789 = vpop.f32.mrb[0].mxu0
  %9790 = vmatprep.mubr.f32.mxu0 0.0
  %9791 = vmatmul.mubr.f32.gmra.mrb[0].mxu0 %v9469
  %v9792 = vpop.f32.mrb[0].mxu0
  %v9793 = vadd.f32 0.0, %v9792
  %v9794 = vpop.f32.mrb[0].mxu0
  %9795 = vmatprep.mubr.f32.mxu0 0.0
  %9796 = vmatmul.mubr.f32.gmra.mrb[0].mxu0 %v9472
  %v9797 = vpop.f32.mrb[0].mxu0
  %v9798 = vadd.f32 0.0, %v9797
  %v9799 = vpop.f32.mrb[0].mxu0
  %9800 = vmatprep.mubr.f32.mxu0 0.0
  %9801 = vmatmul.mubr.f32.gmra.mrb[0].mxu0 %v9475
  %v9802 = vpop.f32.mrb[0].mxu0
  %v9803 = vadd.f32 0.0, %v9802
  %v9804 = vpop.f32.mrb[0].mxu0
  %9805 = vmatprep.mubr.f32.mxu0 0.0
  %9806 = vmatmul.mubr.f32.gmra.mrb[0].mxu0 %v9478
  %v9807 = vpop.f32.mrb[0].mxu0
  %v9808 = vadd.f32 0.0, %v9807
  %v9809 = vpop.f32.mrb[0].mxu0
  %9810 = vmatprep.mubr.f32.mxu0 0.0
  %9811 = vmatmul.mubr.f32.gmra.mrb[0].mxu0 %v9481
  %v9812 = vpop.f32.mrb[0].mxu0
  %v9813 = vadd.f32 0.0, %v9812
  %v9814 = vpop.f32.mrb[0].mxu0
  %9815 = vmatprep.mubr.f32.mxu0 0.0
  %9816 = vmatmul.mubr.f32.gmra.mrb[0].mxu0 %v9484
  %v9817 = vpop.f32.mrb[0].mxu0
  %v9818 = vadd.f32 0.0, %v9817
  %v9819 = vpop.f32.mrb[0].mxu0
  %9820 = vmatprep.mubr.f32.mxu0 0.0
  %9821 = vmatmul.mubr.f32.gmra.mrb[0].mxu0 %v9487
  %v9822 = vpop.f32.mrb[0].mxu0
  %v9823 = vadd.f32 0.0, %v9822
  %v9824 = vpop.f32.mrb[0].mxu0
  %9825 = vmatprep.mubr.f32.mxu0 0.0
  %9826 = vmatmul.mubr.f32.gmra.mrb[0].mxu0 %v9490
  %v9827 = vpop.f32.mrb[0].mxu0
  %v9828 = vadd.f32 0.0, %v9827
  %v9829 = vpop.f32.mrb[0].mxu0
  %9830 = vmatprep.mubr.f32.mxu0 0.0
  %9831 = vmatmul.mubr.f32.gmra.mrb[0].mxu0 %v9493
  %v9832 = vpop.f32.mrb[0].mxu0
  %v9833 = vadd.f32 0.0, %v9832
  %v9834 = vpop.f32.mrb[0].mxu0
  %9835 = vmatprep.mubr.f32.mxu0 0.0
  %9836 = vmatmul.mubr.f32.gmra.mrb[0].mxu0 %v9496
  %v9837 = vpop.f32.mrb[0].mxu0
  %v9838 = vadd.f32 0.0, %v9837
  %v9839 = vpop.f32.mrb[0].mxu0
  %9840 = vmatprep.mubr.f32.mxu0 0.0
  %9841 = vmatmul.mubr.f32.gmra.mrb[0].mxu0 %v9499
  %v9842 = vpop.f32.mrb[0].mxu0
  %v9843 = vadd.f32 0.0, %v9842
  %v9844 = vpop.f32.mrb[0].mxu0
  %9845 = vmatprep.mubr.f32.mxu0 0.0
  %9846 = vmatmul.mubr.f32.gmra.mrb[0].mxu0 %v9502
  %v9847 = vpop.f32.mrb[0].mxu0
  %v9848 = vadd.f32 0.0, %v9847
  %v9849 = vpop.f32.mrb[0].mxu0
  %9850 = vmatprep.mubr.f32.mxu0 0.0
  %9851 = vmatmul.mubr.f32.gmra.mrb[0].mxu0 %v9505
  %v9852 = vpop.f32.mrb[0].mxu0
  %v9853 = vadd.f32 0.0, %v9852
  %v9854 = vpop.f32.mrb[0].mxu0
  %9855 = vmatprep.mubr.f32.mxu0 0.0
  %9856 = vmatmul.mubr.f32.gmra.mrb[0].mxu0 %v9508
  %v9857 = vpop.f32.mrb[0].mxu0
  %v9858 = vadd.f32 0.0, %v9857
  %v9859 = vpop.f32.mrb[0].mxu0
  %9860 = vmatprep.mubr.f32.mxu0 0.0
  %9861 = vmatmul.mubr.f32.gmra.mrb[0].mxu0 %v9511
  %v9862 = vpop.f32.mrb[0].mxu0
  %v9863 = vadd.f32 0.0, %v9862
  %v9864 = vpop.f32.mrb[0].mxu0
  %9865 = vmatprep.mubr.f32.mxu0 0.0
  %9866 = vmatmul.mubr.f32.gmra.mrb[0].mxu0 %v9514
  %v9867 = vpop.f32.mrb[0].mxu0
  %v9868 = vadd.f32 0.0, %v9867
  %v9869 = vpop.f32.mrb[0].mxu0
  %9870 = vmatprep.mubr.f32.mxu0 0.0
  %9871 = vmatmul.mubr.f32.gmra.mrb[0].mxu0 %v9517
  %v9872 = vpop.f32.mrb[0].mxu0
  %v9873 = vadd.f32 0.0, %v9872
  %v9874 = vpop.f32.mrb[0].mxu0
  %9875 = vmatprep.mubr.f32.mxu0 0.0
  %9876 = vmatmul.mubr.f32.gmra.mrb[0].mxu0 %v9520
  %v9877 = vpop.f32.mrb[0].mxu0
  %v9878 = vadd.f32 0.0, %v9877
  %v9879 = vpop.f32.mrb[0].mxu0
  %9880 = vmatprep.mubr.f32.mxu0 0.0
  %9881 = vmatmul.mubr.f32.gmra.mrb[0].mxu0 %v9523
  %v9882 = vpop.f32.mrb[0].mxu0
  %v9883 = vadd.f32 0.0, %v9882
  %v9884 = vpop.f32.mrb[0].mxu0
  %9885 = vmatprep.mubr.f32.mxu0 0.0
  %9886 = vmatmul.mubr.f32.gmra.mrb[0].mxu0 %v9526
  %v9887 = vpop.f32.mrb[0].mxu0
  %v9888 = vadd.f32 0.0, %v9887
  %v9889 = vpop.f32.mrb[0].mxu0
  %9890 = vmatprep.mubr.f32.mxu0 0.0
  %9891 = vmatmul.mubr.f32.gmra.mrb[0].mxu0 %v9529
  %v9892 = vpop.f32.mrb[0].mxu0
  %v9893 = vadd.f32 0.0, %v9892
  %v9894 = vpop.f32.mrb[0].mxu0
  %9895 = vmatprep.mubr.f32.mxu0 0.0
  %9896 = vmatmul.mubr.f32.gmra.mrb[0].mxu0 %v9532
  %v9897 = vpop.f32.mrb[0].mxu0
  %v9898 = vadd.f32 0.0, %v9897
  %v9899 = vpop.f32.mrb[0].mxu0
  %9900 = vmatprep.mubr.f32.mxu0 0.0
  %9901 = vmatmul.mubr.f32.gmra.mrb[0].mxu0 %v9535
  %v9902 = vpop.f32.mrb[0].mxu0
  %v9903 = vadd.f32 0.0, %v9902
  %v9904 = vpop.f32.mrb[0].mxu0
  %9905 = vmatprep.mubr.f32.mxu0 0.0
  %9906 = vmatmul.mubr.f32.gmra.mrb[0].mxu0 %v9538
  %v9907 = vpop.f32.mrb[0].mxu0
  %v9908 = vadd.f32 0.0, %v9907
  %v9909 = vpop.f32.mrb[0].mxu0
  %9910 = vmatprep.mubr.f32.mxu0 0.0
  %9911 = vmatmul.mubr.f32.gmra.mrb[0].mxu0 %v9541
  %v9912 = vpop.f32.mrb[0].mxu0
  %v9913 = vadd.f32 0.0, %v9912
  %v9914 = vpop.f32.mrb[0].mxu0
  %9915 = vmatprep.mubr.f32.mxu0 0.0
  %9916 = vmatmul.mubr.f32.gmra.mrb[0].mxu0 %v9544
  %v9917 = vpop.f32.mrb[0].mxu0
  %v9918 = vadd.f32 0.0, %v9917
  %v9919 = vpop.f32.mrb[0].mxu0
  %9920 = vmatprep.mubr.f32.mxu0 0.0
  %9921 = vmatmul.mubr.f32.gmra.mrb[0].mxu0 %v9547
  %v9922 = vpop.f32.mrb[0].mxu0
  %v9923 = vadd.f32 0.0, %v9922
  %v9924 = vpop.f32.mrb[0].mxu0
  %9925 = vmatprep.mubr.f32.mxu0 0.0
  %9926 = vmatmul.mubr.f32.gmra.mrb[0].mxu0 %v9550
  %v9927 = vpop.f32.mrb[0].mxu0
  %v9928 = vadd.f32 0.0, %v9927
  %v9929 = vpop.f32.mrb[0].mxu0
  %9930 = vmatprep.mubr.f32.mxu0 0.0
  %9931 = vmatmul.mubr.f32.gmra.mrb[0].mxu0 %v9553
  %v9932 = vpop.f32.mrb[0].mxu0
  %v9933 = vadd.f32 0.0, %v9932
  %v9934 = vpop.f32.mrb[0].mxu0
  %9935 = vmatprep.mubr.f32.mxu0 0.0
  %9936 = vmatmul.mubr.f32.gmra.mrb[0].mxu0 %v9556
  %v9937 = vpop.f32.mrb[0].mxu0
  %v9938 = vadd.f32 0.0, %v9937
  %v9939 = vpop.f32.mrb[0].mxu0
  %9940 = vmatprep.mubr.f32.mxu0 0.0
  %9941 = vmatmul.mubr.f32.gmra.mrb[0].mxu0 %v9559
  %v9942 = vpop.f32.mrb[0].mxu0
  %v9943 = vadd.f32 0.0, %v9942
  %v9944 = vpop.f32.mrb[0].mxu0
  %9945 = vdwg.mxu0
  %v9946 = vadd.f32 %v9237, %v9628
  %v9947 = vadd.f32 %v9238, %v9633
  %v9948 = vadd.f32 %v9239, %v9638
  %v9949 = vadd.f32 %v9240, %v9643
  %v9950 = vadd.f32 %v9241, %v9648
  %v9951 = vadd.f32 %v9242, %v9653
  %v9952 = vadd.f32 %v9243, %v9658
  %v9953 = vadd.f32 %v9244, %v9663
  %v9954 = vadd.f32 %v9245, %v9668
  %v9955 = vadd.f32 %v9246, %v9673
  %v9956 = vadd.f32 %v9247, %v9678
  %v9957 = vadd.f32 %v9248, %v9683
  %v9958 = vadd.f32 %v9249, %v9688
  %v9959 = vadd.f32 %v9250, %v9693
  %v9960 = vadd.f32 %v9251, %v9698
  %v9961 = vadd.f32 %v9252, %v9703
  %v9962 = vadd.f32 %v9253, %v9708
  %v9963 = vadd.f32 %v9254, %v9713
  %v9964 = vadd.f32 %v9255, %v9718
  %v9965 = vadd.f32 %v9256, %v9723
  %v9966 = vadd.f32 %v9257, %v9728
  %v9967 = vadd.f32 %v9258, %v9733
  %v9968 = vadd.f32 %v9259, %v9738
  %v9969 = vadd.f32 %v9260, %v9743
  %v9970 = vadd.f32 %v9261, %v9748
  %v9971 = vadd.f32 %v9262, %v9753
  %v9972 = vadd.f32 %v9263, %v9758
  %v9973 = vadd.f32 %v9264, %v9763
  %v9974 = vadd.f32 %v9265, %v9768
  %v9975 = vadd.f32 %v9266, %v9773
  %v9976 = vadd.f32 %v9267, %v9778
  %v9977 = vadd.f32 %v9268, %v9783
  %v9978 = vadd.f32 %v9269, %v9788
  %v9979 = vadd.f32 %v9270, %v9793
  %v9980 = vadd.f32 %v9271, %v9798
  %v9981 = vadd.f32 %v9272, %v9803
  %v9982 = vadd.f32 %v9273, %v9808
  %v9983 = vadd.f32 %v9274, %v9813
  %v9984 = vadd.f32 %v9275, %v9818
  %v9985 = vadd.f32 %v9276, %v9823
  %v9986 = vadd.f32 %v9277, %v9828
  %v9987 = vadd.f32 %v9278, %v9833
  %v9988 = vadd.f32 %v9279, %v9838
  %v9989 = vadd.f32 %v9280, %v9843
  %v9990 = vadd.f32 %v9281, %v9848
  %v9991 = vadd.f32 %v9282, %v9853
  %v9992 = vadd.f32 %v9283, %v9858
  %v9993 = vadd.f32 %v9284, %v9863
  %v9994 = vadd.f32 %v9285, %v9868
  %v9995 = vadd.f32 %v9286, %v9873
  %v9996 = vadd.f32 %v9287, %v9878
  %v9997 = vadd.f32 %v9288, %v9883
  %v9998 = vadd.f32 %v9289, %v9888
  %v9999 = vadd.f32 %v9290, %v9893
  %v10000 = vadd.f32 %v9291, %v9898
  %v10001 = vadd.f32 %v9292, %v9903
  %v10002 = vadd.f32 %v9293, %v9908
  %v10003 = vadd.f32 %v9294, %v9913
  %v10004 = vadd.f32 %v9295, %v9918
  %v10005 = vadd.f32 %v9296, %v9923
  %v10006 = vadd.f32 %v9297, %v9928
  %v10007 = vadd.f32 %v9298, %v9933
  %v10008 = vadd.f32 %v9299, %v9938
  %v10009 = vadd.f32 %v9300, %v9943
  %v10010 = vld [vmem:[#allocation2 + $0x19] sm:$0xff]
  %v10011 = vld [vmem:[#allocation2 + $0x21] sm:$0xff]
  %v10012 = vld [vmem:[#allocation2 + $0x29] sm:$0xff]
  %v10013 = vld [vmem:[#allocation2 + $0x31] sm:$0xff]
  %v10014 = vld [vmem:[#allocation2 + $0x39] sm:$0xff]
  %v10015 = vld [vmem:[#allocation2 + $0x41] sm:$0xff]
  %v10016 = vld [vmem:[#allocation2 + $0x49] sm:$0xff]
  %v10017 = vld [vmem:[#allocation2 + $0x51] sm:$0xff]
  %v10018 = vld [vmem:[#allocation2 + $0x59] sm:$0xff]
  %v10019 = vld [vmem:[#allocation2 + $0x61] sm:$0xff]
  %v10020 = vld [vmem:[#allocation2 + $0x69] sm:$0xff]
  %v10021 = vld [vmem:[#allocation2 + $0x71] sm:$0xff]
  %v10022 = vld [vmem:[#allocation2 + $0x79] sm:$0xff]
  %v10023 = vld [vmem:[#allocation2 + $0x81] sm:$0xff]
  %v10024 = vld [vmem:[#allocation2 + $0x89] sm:$0xff]
  %v10025 = vld [vmem:[#allocation2 + $0x91] sm:$0xff]
  %v10026 = vld [vmem:[#allocation2 + $0x99] sm:$0xff]
  %v10027 = vld [vmem:[#allocation2 + $0xa1] sm:$0xff]
  %v10028 = vld [vmem:[#allocation2 + $0xa9] sm:$0xff]
  %v10029 = vld [vmem:[#allocation2 + $0xb1] sm:$0xff]
  %v10030 = vld [vmem:[#allocation2 + $0xb9] sm:$0xff]
  %v10031 = vld [vmem:[#allocation2 + $0xc1] sm:$0xff]
  %v10032 = vld [vmem:[#allocation2 + $0xc9] sm:$0xff]
  %v10033 = vld [vmem:[#allocation2 + $0xd1] sm:$0xff]
  %v10034 = vld [vmem:[#allocation2 + $0xd9] sm:$0xff]
  %v10035 = vld [vmem:[#allocation2 + $0xe1] sm:$0xff]
  %v10036 = vld [vmem:[#allocation2 + $0xe9] sm:$0xff]
  %v10037 = vld [vmem:[#allocation2 + $0xf1] sm:$0xff]
  %v10038 = vld [vmem:[#allocation2 + $0xf9] sm:$0xff]
  %v10039 = vld [vmem:[#allocation2 + $0x101] sm:$0xff]
  %v10040 = vld [vmem:[#allocation2 + $0x109] sm:$0xff]
  %v10041 = vld [vmem:[#allocation2 + $0x111] sm:$0xff]
  %v10042 = vld [vmem:[#allocation2 + $0x119] sm:$0xff]
  %v10043 = vld [vmem:[#allocation2 + $0x121] sm:$0xff]
  %v10044 = vld [vmem:[#allocation2 + $0x129] sm:$0xff]
  %v10045 = vld [vmem:[#allocation2 + $0x131] sm:$0xff]
  %v10046 = vld [vmem:[#allocation2 + $0x139] sm:$0xff]
  %v10047 = vld [vmem:[#allocation2 + $0x141] sm:$0xff]
  %v10048 = vld [vmem:[#allocation2 + $0x149] sm:$0xff]
  %v10049 = vld [vmem:[#allocation2 + $0x151] sm:$0xff]
  %v10050 = vld [vmem:[#allocation2 + $0x159] sm:$0xff]
  %v10051 = vld [vmem:[#allocation2 + $0x161] sm:$0xff]
  %v10052 = vld [vmem:[#allocation2 + $0x169] sm:$0xff]
  %v10053 = vld [vmem:[#allocation2 + $0x171] sm:$0xff]
  %v10054 = vld [vmem:[#allocation2 + $0x179] sm:$0xff]
  %v10055 = vld [vmem:[#allocation2 + $0x181] sm:$0xff]
  %v10056 = vld [vmem:[#allocation2 + $0x189] sm:$0xff]
  %v10057 = vld [vmem:[#allocation2 + $0x191] sm:$0xff]
  %v10058 = vld [vmem:[#allocation2 + $0x199] sm:$0xff]
  %v10059 = vld [vmem:[#allocation2 + $0x1a1] sm:$0xff]
  %v10060 = vld [vmem:[#allocation2 + $0x1a9] sm:$0xff]
  %v10061 = vld [vmem:[#allocation2 + $0x1b1] sm:$0xff]
  %v10062 = vld [vmem:[#allocation2 + $0x1b9] sm:$0xff]
  %v10063 = vld [vmem:[#allocation2 + $0x1c1] sm:$0xff]
  %v10064 = vld [vmem:[#allocation2 + $0x1c9] sm:$0xff]
  %v10065 = vld [vmem:[#allocation2 + $0x1d1] sm:$0xff]
  %v10066 = vld [vmem:[#allocation2 + $0x1d9] sm:$0xff]
  %v10067 = vld [vmem:[#allocation2 + $0x1e1] sm:$0xff]
  %v10068 = vld [vmem:[#allocation2 + $0x1e9] sm:$0xff]
  %v10069 = vld [vmem:[#allocation2 + $0x1f1] sm:$0xff]
  %v10070 = vld [vmem:[#allocation2 + $0x1f9] sm:$0xff]
  %v10071 = vld [vmem:[#allocation2 + $0x201] sm:$0xff]
  %v10072 = vld [vmem:[#allocation2 + $0x209] sm:$0xff]
  %v10073 = vld [vmem:[#allocation2 + $0x211] sm:$0xff]
  %v10074 = vld [vmem:[%s4 + $0xa0] sm:$0xff]
  %v10075 = vld [vmem:[%s4 + $0xa8] sm:$0xff]
  %v10076 = vld [vmem:[%s4 + $0xb0] sm:$0xff]
  %v10077 = vld [vmem:[%s4 + $0xb8] sm:$0xff]
  %v10079 = vsel %vm6522, %v10010, 0
  %v10082 = vsel %vm6522, %v10011, 0
  %v10085 = vsel %vm6522, %v10012, 0
  %v10088 = vsel %vm6522, %v10013, 0
  %v10091 = vsel %vm6522, %v10014, 0
  %v10094 = vsel %vm6522, %v10015, 0
  %v10097 = vsel %vm6522, %v10016, 0
  %v10100 = vsel %vm6522, %v10017, 0
  %v10103 = vsel %vm6522, %v10018, 0
  %v10106 = vsel %vm6522, %v10019, 0
  %v10109 = vsel %vm6522, %v10020, 0
  %v10112 = vsel %vm6522, %v10021, 0
  %v10115 = vsel %vm6522, %v10022, 0
  %v10118 = vsel %vm6522, %v10023, 0
  %v10121 = vsel %vm6522, %v10024, 0
  %v10124 = vsel %vm6522, %v10025, 0
  %v10127 = vsel %vm6522, %v10026, 0
  %v10130 = vsel %vm6522, %v10027, 0
  %v10133 = vsel %vm6522, %v10028, 0
  %v10136 = vsel %vm6522, %v10029, 0
  %v10139 = vsel %vm6522, %v10030, 0
  %v10142 = vsel %vm6522, %v10031, 0
  %v10145 = vsel %vm6522, %v10032, 0
  %v10148 = vsel %vm6522, %v10033, 0
  %v10151 = vsel %vm6522, %v10034, 0
  %v10154 = vsel %vm6522, %v10035, 0
  %v10157 = vsel %vm6522, %v10036, 0
  %v10160 = vsel %vm6522, %v10037, 0
  %v10163 = vsel %vm6522, %v10038, 0
  %v10166 = vsel %vm6522, %v10039, 0
  %v10169 = vsel %vm6522, %v10040, 0
  %v10172 = vsel %vm6522, %v10041, 0
  %v10175 = vsel %vm6522, %v10042, 0
  %v10178 = vsel %vm6522, %v10043, 0
  %v10181 = vsel %vm6522, %v10044, 0
  %v10184 = vsel %vm6522, %v10045, 0
  %v10187 = vsel %vm6522, %v10046, 0
  %v10190 = vsel %vm6522, %v10047, 0
  %v10193 = vsel %vm6522, %v10048, 0
  %v10196 = vsel %vm6522, %v10049, 0
  %v10199 = vsel %vm6522, %v10050, 0
  %v10202 = vsel %vm6522, %v10051, 0
  %v10205 = vsel %vm6522, %v10052, 0
  %v10208 = vsel %vm6522, %v10053, 0
  %v10211 = vsel %vm6522, %v10054, 0
  %v10214 = vsel %vm6522, %v10055, 0
  %v10217 = vsel %vm6522, %v10056, 0
  %v10220 = vsel %vm6522, %v10057, 0
  %v10223 = vsel %vm6522, %v10058, 0
  %v10226 = vsel %vm6522, %v10059, 0
  %v10229 = vsel %vm6522, %v10060, 0
  %v10232 = vsel %vm6522, %v10061, 0
  %v10235 = vsel %vm6522, %v10062, 0
  %v10238 = vsel %vm6522, %v10063, 0
  %v10241 = vsel %vm6522, %v10064, 0
  %v10244 = vsel %vm6522, %v10065, 0
  %v10247 = vsel %vm6522, %v10066, 0
  %v10250 = vsel %vm6522, %v10067, 0
  %v10253 = vsel %vm6522, %v10068, 0
  %v10256 = vsel %vm6522, %v10069, 0
  %v10259 = vsel %vm6522, %v10070, 0
  %v10262 = vsel %vm6522, %v10071, 0
  %v10265 = vsel %vm6522, %v10072, 0
  %v10268 = vsel %vm6522, %v10073, 0
  %10270 = vmatprep.subr.mxu0 0.0
  %10271 = vmatpush1.msra.mxu0 %v10074
  %10272 = vmatprep.subr.mxu0 0.0
  %10273 = vmatpush1.msra.mxu0 %v10075
  %10274 = vmatprep.subr.mxu0 0.0
  %10275 = vmatpush1.msra.mxu0 %v10076
  %10276 = vmatprep.subr.mxu0 0.0
  %10277 = vmatpush1.msra.mxu0 %v10077
  %10278 = vmatprep.subr.mxu0 0.0
  %10279 = vmatpush1.msra.mxu0 0.0
  %10280 = vmatprep.subr.mxu0 0.0
  %10281 = vmatpush1.msra.mxu0 0.0
  %10282 = vmatprep.subr.mxu0 0.0
  %10283 = vmatpush1.msra.mxu0 0.0
  %10284 = vmatprep.subr.mxu0 0.0
  %10285 = vmatpush1.msra.mxu0 0.0
  %10286 = vmatprep.subr.mxu0 0.0
  %10287 = vmatpush1.msra.mxu0 0.0
  %10288 = vmatprep.subr.mxu0 0.0
  %10289 = vmatpush1.msra.mxu0 0.0
  %10290 = vmatprep.subr.mxu0 0.0
  %10291 = vmatpush1.msra.mxu0 0.0
  %10292 = vmatprep.subr.mxu0 0.0
  %10293 = vmatpush1.msra.mxu0 0.0
  %10294 = vmatprep.subr.mxu0 0.0
  %10295 = vmatpush1.msra.mxu0 0.0
  %10296 = vmatprep.subr.mxu0 0.0
  %10297 = vmatpush1.msra.mxu0 0.0
  %10298 = vmatprep.subr.mxu0 0.0
  %10299 = vmatpush1.msra.mxu0 0.0
  %10300 = vmatprep.subr.mxu0 0.0
  %10301 = vmatpush1.msra.mxu0 0.0
  %10302 = vmatprep.subr.mxu0 0.0
  %10303 = vmatpush1.msra.mxu0 0.0
  %10304 = vmatprep.subr.mxu0 0.0
  %10305 = vmatpush1.msra.mxu0 0.0
  %10306 = vmatprep.subr.mxu0 0.0
  %10307 = vmatpush1.msra.mxu0 0.0
  %10308 = vmatprep.subr.mxu0 0.0
  %10309 = vmatpush1.msra.mxu0 0.0
  %10310 = vmatprep.subr.mxu0 0.0
  %10311 = vmatpush1.msra.mxu0 0.0
  %10312 = vmatprep.subr.mxu0 0.0
  %10313 = vmatpush1.msra.mxu0 0.0
  %10314 = vmatprep.subr.mxu0 0.0
  %10315 = vmatpush1.msra.mxu0 0.0
  %10316 = vmatprep.subr.mxu0 0.0
  %10317 = vmatpush1.msra.mxu0 0.0
  %10318 = vmatprep.subr.mxu0 0.0
  %10319 = vmatpush1.msra.mxu0 0.0
  %10320 = vmatprep.subr.mxu0 0.0
  %10321 = vmatpush1.msra.mxu0 0.0
  %10322 = vmatprep.subr.mxu0 0.0
  %10323 = vmatpush1.msra.mxu0 0.0
  %10324 = vmatprep.subr.mxu0 0.0
  %10325 = vmatpush1.msra.mxu0 0.0
  %10326 = vmatprep.subr.mxu0 0.0
  %10327 = vmatpush1.msra.mxu0 0.0
  %10328 = vmatprep.subr.mxu0 0.0
  %10329 = vmatpush1.msra.mxu0 0.0
  %10330 = vmatprep.subr.mxu0 0.0
  %10331 = vmatpush1.msra.mxu0 0.0
  %10332 = vmatprep.subr.mxu0 0.0
  %10333 = vmatpush1.msra.mxu0 0.0
  %10334 = vmatprep.mubr.f32.mxu0 0.0
  %10335 = vmatmul.mubr.f32.gmra.mrb[0].mxu0 %v10079
  %v10336 = vpop.f32.mrb[0].mxu0
  %v10337 = vadd.f32 0.0, %v10336
  %v10338 = vpop.f32.mrb[0].mxu0
  %10339 = vmatprep.mubr.f32.mxu0 0.0
  %10340 = vmatmul.mubr.f32.gmra.mrb[0].mxu0 %v10082
  %v10341 = vpop.f32.mrb[0].mxu0
  %v10342 = vadd.f32 0.0, %v10341
  %v10343 = vpop.f32.mrb[0].mxu0
  %10344 = vmatprep.mubr.f32.mxu0 0.0
  %10345 = vmatmul.mubr.f32.gmra.mrb[0].mxu0 %v10085
  %v10346 = vpop.f32.mrb[0].mxu0
  %v10347 = vadd.f32 0.0, %v10346
  %v10348 = vpop.f32.mrb[0].mxu0
  %10349 = vmatprep.mubr.f32.mxu0 0.0
  %10350 = vmatmul.mubr.f32.gmra.mrb[0].mxu0 %v10088
  %v10351 = vpop.f32.mrb[0].mxu0
  %v10352 = vadd.f32 0.0, %v10351
  %v10353 = vpop.f32.mrb[0].mxu0
  %10354 = vmatprep.mubr.f32.mxu0 0.0
  %10355 = vmatmul.mubr.f32.gmra.mrb[0].mxu0 %v10091
  %v10356 = vpop.f32.mrb[0].mxu0
  %v10357 = vadd.f32 0.0, %v10356
  %v10358 = vpop.f32.mrb[0].mxu0
  %10359 = vmatprep.mubr.f32.mxu0 0.0
  %10360 = vmatmul.mubr.f32.gmra.mrb[0].mxu0 %v10094
  %v10361 = vpop.f32.mrb[0].mxu0
  %v10362 = vadd.f32 0.0, %v10361
  %v10363 = vpop.f32.mrb[0].mxu0
  %10364 = vmatprep.mubr.f32.mxu0 0.0
  %10365 = vmatmul.mubr.f32.gmra.mrb[0].mxu0 %v10097
  %v10366 = vpop.f32.mrb[0].mxu0
  %v10367 = vadd.f32 0.0, %v10366
  %v10368 = vpop.f32.mrb[0].mxu0
  %10369 = vmatprep.mubr.f32.mxu0 0.0
  %10370 = vmatmul.mubr.f32.gmra.mrb[0].mxu0 %v10100
  %v10371 = vpop.f32.mrb[0].mxu0
  %v10372 = vadd.f32 0.0, %v10371
  %v10373 = vpop.f32.mrb[0].mxu0
  %10374 = vmatprep.mubr.f32.mxu0 0.0
  %10375 = vmatmul.mubr.f32.gmra.mrb[0].mxu0 %v10103
  %v10376 = vpop.f32.mrb[0].mxu0
  %v10377 = vadd.f32 0.0, %v10376
  %v10378 = vpop.f32.mrb[0].mxu0
  %10379 = vmatprep.mubr.f32.mxu0 0.0
  %10380 = vmatmul.mubr.f32.gmra.mrb[0].mxu0 %v10106
  %v10381 = vpop.f32.mrb[0].mxu0
  %v10382 = vadd.f32 0.0, %v10381
  %v10383 = vpop.f32.mrb[0].mxu0
  %10384 = vmatprep.mubr.f32.mxu0 0.0
  %10385 = vmatmul.mubr.f32.gmra.mrb[0].mxu0 %v10109
  %v10386 = vpop.f32.mrb[0].mxu0
  %v10387 = vadd.f32 0.0, %v10386
  %v10388 = vpop.f32.mrb[0].mxu0
  %10389 = vmatprep.mubr.f32.mxu0 0.0
  %10390 = vmatmul.mubr.f32.gmra.mrb[0].mxu0 %v10112
  %v10391 = vpop.f32.mrb[0].mxu0
  %v10392 = vadd.f32 0.0, %v10391
  %v10393 = vpop.f32.mrb[0].mxu0
  %10394 = vmatprep.mubr.f32.mxu0 0.0
  %10395 = vmatmul.mubr.f32.gmra.mrb[0].mxu0 %v10115
  %v10396 = vpop.f32.mrb[0].mxu0
  %v10397 = vadd.f32 0.0, %v10396
  %v10398 = vpop.f32.mrb[0].mxu0
  %10399 = vmatprep.mubr.f32.mxu0 0.0
  %10400 = vmatmul.mubr.f32.gmra.mrb[0].mxu0 %v10118
  %v10401 = vpop.f32.mrb[0].mxu0
  %v10402 = vadd.f32 0.0, %v10401
  %v10403 = vpop.f32.mrb[0].mxu0
  %10404 = vmatprep.mubr.f32.mxu0 0.0
  %10405 = vmatmul.mubr.f32.gmra.mrb[0].mxu0 %v10121
  %v10406 = vpop.f32.mrb[0].mxu0
  %v10407 = vadd.f32 0.0, %v10406
  %v10408 = vpop.f32.mrb[0].mxu0
  %10409 = vmatprep.mubr.f32.mxu0 0.0
  %10410 = vmatmul.mubr.f32.gmra.mrb[0].mxu0 %v10124
  %v10411 = vpop.f32.mrb[0].mxu0
  %v10412 = vadd.f32 0.0, %v10411
  %v10413 = vpop.f32.mrb[0].mxu0
  %10414 = vmatprep.mubr.f32.mxu0 0.0
  %10415 = vmatmul.mubr.f32.gmra.mrb[0].mxu0 %v10127
  %v10416 = vpop.f32.mrb[0].mxu0
  %v10417 = vadd.f32 0.0, %v10416
  %v10418 = vpop.f32.mrb[0].mxu0
  %10419 = vmatprep.mubr.f32.mxu0 0.0
  %10420 = vmatmul.mubr.f32.gmra.mrb[0].mxu0 %v10130
  %v10421 = vpop.f32.mrb[0].mxu0
  %v10422 = vadd.f32 0.0, %v10421
  %v10423 = vpop.f32.mrb[0].mxu0
  %10424 = vmatprep.mubr.f32.mxu0 0.0
  %10425 = vmatmul.mubr.f32.gmra.mrb[0].mxu0 %v10133
  %v10426 = vpop.f32.mrb[0].mxu0
  %v10427 = vadd.f32 0.0, %v10426
  %v10428 = vpop.f32.mrb[0].mxu0
  %10429 = vmatprep.mubr.f32.mxu0 0.0
  %10430 = vmatmul.mubr.f32.gmra.mrb[0].mxu0 %v10136
  %v10431 = vpop.f32.mrb[0].mxu0
  %v10432 = vadd.f32 0.0, %v10431
  %v10433 = vpop.f32.mrb[0].mxu0
  %10434 = vmatprep.mubr.f32.mxu0 0.0
  %10435 = vmatmul.mubr.f32.gmra.mrb[0].mxu0 %v10139
  %v10436 = vpop.f32.mrb[0].mxu0
  %v10437 = vadd.f32 0.0, %v10436
  %v10438 = vpop.f32.mrb[0].mxu0
  %10439 = vmatprep.mubr.f32.mxu0 0.0
  %10440 = vmatmul.mubr.f32.gmra.mrb[0].mxu0 %v10142
  %v10441 = vpop.f32.mrb[0].mxu0
  %v10442 = vadd.f32 0.0, %v10441
  %v10443 = vpop.f32.mrb[0].mxu0
  %10444 = vmatprep.mubr.f32.mxu0 0.0
  %10445 = vmatmul.mubr.f32.gmra.mrb[0].mxu0 %v10145
  %v10446 = vpop.f32.mrb[0].mxu0
  %v10447 = vadd.f32 0.0, %v10446
  %v10448 = vpop.f32.mrb[0].mxu0
  %10449 = vmatprep.mubr.f32.mxu0 0.0
  %10450 = vmatmul.mubr.f32.gmra.mrb[0].mxu0 %v10148
  %v10451 = vpop.f32.mrb[0].mxu0
  %v10452 = vadd.f32 0.0, %v10451
  %v10453 = vpop.f32.mrb[0].mxu0
  %10454 = vmatprep.mubr.f32.mxu0 0.0
  %10455 = vmatmul.mubr.f32.gmra.mrb[0].mxu0 %v10151
  %v10456 = vpop.f32.mrb[0].mxu0
  %v10457 = vadd.f32 0.0, %v10456
  %v10458 = vpop.f32.mrb[0].mxu0
  %10459 = vmatprep.mubr.f32.mxu0 0.0
  %10460 = vmatmul.mubr.f32.gmra.mrb[0].mxu0 %v10154
  %v10461 = vpop.f32.mrb[0].mxu0
  %v10462 = vadd.f32 0.0, %v10461
  %v10463 = vpop.f32.mrb[0].mxu0
  %10464 = vmatprep.mubr.f32.mxu0 0.0
  %10465 = vmatmul.mubr.f32.gmra.mrb[0].mxu0 %v10157
  %v10466 = vpop.f32.mrb[0].mxu0
  %v10467 = vadd.f32 0.0, %v10466
  %v10468 = vpop.f32.mrb[0].mxu0
  %10469 = vmatprep.mubr.f32.mxu0 0.0
  %10470 = vmatmul.mubr.f32.gmra.mrb[0].mxu0 %v10160
  %v10471 = vpop.f32.mrb[0].mxu0
  %v10472 = vadd.f32 0.0, %v10471
  %v10473 = vpop.f32.mrb[0].mxu0
  %10474 = vmatprep.mubr.f32.mxu0 0.0
  %10475 = vmatmul.mubr.f32.gmra.mrb[0].mxu0 %v10163
  %v10476 = vpop.f32.mrb[0].mxu0
  %v10477 = vadd.f32 0.0, %v10476
  %v10478 = vpop.f32.mrb[0].mxu0
  %10479 = vmatprep.mubr.f32.mxu0 0.0
  %10480 = vmatmul.mubr.f32.gmra.mrb[0].mxu0 %v10166
  %v10481 = vpop.f32.mrb[0].mxu0
  %v10482 = vadd.f32 0.0, %v10481
  %v10483 = vpop.f32.mrb[0].mxu0
  %10484 = vmatprep.mubr.f32.mxu0 0.0
  %10485 = vmatmul.mubr.f32.gmra.mrb[0].mxu0 %v10169
  %v10486 = vpop.f32.mrb[0].mxu0
  %v10487 = vadd.f32 0.0, %v10486
  %v10488 = vpop.f32.mrb[0].mxu0
  %10489 = vmatprep.mubr.f32.mxu0 0.0
  %10490 = vmatmul.mubr.f32.gmra.mrb[0].mxu0 %v10172
  %v10491 = vpop.f32.mrb[0].mxu0
  %v10492 = vadd.f32 0.0, %v10491
  %v10493 = vpop.f32.mrb[0].mxu0
  %10494 = vmatprep.mubr.f32.mxu0 0.0
  %10495 = vmatmul.mubr.f32.gmra.mrb[0].mxu0 %v10175
  %v10496 = vpop.f32.mrb[0].mxu0
  %v10497 = vadd.f32 0.0, %v10496
  %v10498 = vpop.f32.mrb[0].mxu0
  %10499 = vmatprep.mubr.f32.mxu0 0.0
  %10500 = vmatmul.mubr.f32.gmra.mrb[0].mxu0 %v10178
  %v10501 = vpop.f32.mrb[0].mxu0
  %v10502 = vadd.f32 0.0, %v10501
  %v10503 = vpop.f32.mrb[0].mxu0
  %10504 = vmatprep.mubr.f32.mxu0 0.0
  %10505 = vmatmul.mubr.f32.gmra.mrb[0].mxu0 %v10181
  %v10506 = vpop.f32.mrb[0].mxu0
  %v10507 = vadd.f32 0.0, %v10506
  %v10508 = vpop.f32.mrb[0].mxu0
  %10509 = vmatprep.mubr.f32.mxu0 0.0
  %10510 = vmatmul.mubr.f32.gmra.mrb[0].mxu0 %v10184
  %v10511 = vpop.f32.mrb[0].mxu0
  %v10512 = vadd.f32 0.0, %v10511
  %v10513 = vpop.f32.mrb[0].mxu0
  %10514 = vmatprep.mubr.f32.mxu0 0.0
  %10515 = vmatmul.mubr.f32.gmra.mrb[0].mxu0 %v10187
  %v10516 = vpop.f32.mrb[0].mxu0
  %v10517 = vadd.f32 0.0, %v10516
  %v10518 = vpop.f32.mrb[0].mxu0
  %10519 = vmatprep.mubr.f32.mxu0 0.0
  %10520 = vmatmul.mubr.f32.gmra.mrb[0].mxu0 %v10190
  %v10521 = vpop.f32.mrb[0].mxu0
  %v10522 = vadd.f32 0.0, %v10521
  %v10523 = vpop.f32.mrb[0].mxu0
  %10524 = vmatprep.mubr.f32.mxu0 0.0
  %10525 = vmatmul.mubr.f32.gmra.mrb[0].mxu0 %v10193
  %v10526 = vpop.f32.mrb[0].mxu0
  %v10527 = vadd.f32 0.0, %v10526
  %v10528 = vpop.f32.mrb[0].mxu0
  %10529 = vmatprep.mubr.f32.mxu0 0.0
  %10530 = vmatmul.mubr.f32.gmra.mrb[0].mxu0 %v10196
  %v10531 = vpop.f32.mrb[0].mxu0
  %v10532 = vadd.f32 0.0, %v10531
  %v10533 = vpop.f32.mrb[0].mxu0
  %10534 = vmatprep.mubr.f32.mxu0 0.0
  %10535 = vmatmul.mubr.f32.gmra.mrb[0].mxu0 %v10199
  %v10536 = vpop.f32.mrb[0].mxu0
  %v10537 = vadd.f32 0.0, %v10536
  %v10538 = vpop.f32.mrb[0].mxu0
  %10539 = vmatprep.mubr.f32.mxu0 0.0
  %10540 = vmatmul.mubr.f32.gmra.mrb[0].mxu0 %v10202
  %v10541 = vpop.f32.mrb[0].mxu0
  %v10542 = vadd.f32 0.0, %v10541
  %v10543 = vpop.f32.mrb[0].mxu0
  %10544 = vmatprep.mubr.f32.mxu0 0.0
  %10545 = vmatmul.mubr.f32.gmra.mrb[0].mxu0 %v10205
  %v10546 = vpop.f32.mrb[0].mxu0
  %v10547 = vadd.f32 0.0, %v10546
  %v10548 = vpop.f32.mrb[0].mxu0
  %10549 = vmatprep.mubr.f32.mxu0 0.0
  %10550 = vmatmul.mubr.f32.gmra.mrb[0].mxu0 %v10208
  %v10551 = vpop.f32.mrb[0].mxu0
  %v10552 = vadd.f32 0.0, %v10551
  %v10553 = vpop.f32.mrb[0].mxu0
  %10554 = vmatprep.mubr.f32.mxu0 0.0
  %10555 = vmatmul.mubr.f32.gmra.mrb[0].mxu0 %v10211
  %v10556 = vpop.f32.mrb[0].mxu0
  %v10557 = vadd.f32 0.0, %v10556
  %v10558 = vpop.f32.mrb[0].mxu0
  %10559 = vmatprep.mubr.f32.mxu0 0.0
  %10560 = vmatmul.mubr.f32.gmra.mrb[0].mxu0 %v10214
  %v10561 = vpop.f32.mrb[0].mxu0
  %v10562 = vadd.f32 0.0, %v10561
  %v10563 = vpop.f32.mrb[0].mxu0
  %10564 = vmatprep.mubr.f32.mxu0 0.0
  %10565 = vmatmul.mubr.f32.gmra.mrb[0].mxu0 %v10217
  %v10566 = vpop.f32.mrb[0].mxu0
  %v10567 = vadd.f32 0.0, %v10566
  %v10568 = vpop.f32.mrb[0].mxu0
  %10569 = vmatprep.mubr.f32.mxu0 0.0
  %10570 = vmatmul.mubr.f32.gmra.mrb[0].mxu0 %v10220
  %v10571 = vpop.f32.mrb[0].mxu0
  %v10572 = vadd.f32 0.0, %v10571
  %v10573 = vpop.f32.mrb[0].mxu0
  %10574 = vmatprep.mubr.f32.mxu0 0.0
  %10575 = vmatmul.mubr.f32.gmra.mrb[0].mxu0 %v10223
  %v10576 = vpop.f32.mrb[0].mxu0
  %v10577 = vadd.f32 0.0, %v10576
  %v10578 = vpop.f32.mrb[0].mxu0
  %10579 = vmatprep.mubr.f32.mxu0 0.0
  %10580 = vmatmul.mubr.f32.gmra.mrb[0].mxu0 %v10226
  %v10581 = vpop.f32.mrb[0].mxu0
  %v10582 = vadd.f32 0.0, %v10581
  %v10583 = vpop.f32.mrb[0].mxu0
  %10584 = vmatprep.mubr.f32.mxu0 0.0
  %10585 = vmatmul.mubr.f32.gmra.mrb[0].mxu0 %v10229
  %v10586 = vpop.f32.mrb[0].mxu0
  %v10587 = vadd.f32 0.0, %v10586
  %v10588 = vpop.f32.mrb[0].mxu0
  %10589 = vmatprep.mubr.f32.mxu0 0.0
  %10590 = vmatmul.mubr.f32.gmra.mrb[0].mxu0 %v10232
  %v10591 = vpop.f32.mrb[0].mxu0
  %v10592 = vadd.f32 0.0, %v10591
  %v10593 = vpop.f32.mrb[0].mxu0
  %10594 = vmatprep.mubr.f32.mxu0 0.0
  %10595 = vmatmul.mubr.f32.gmra.mrb[0].mxu0 %v10235
  %v10596 = vpop.f32.mrb[0].mxu0
  %v10597 = vadd.f32 0.0, %v10596
  %v10598 = vpop.f32.mrb[0].mxu0
  %10599 = vmatprep.mubr.f32.mxu0 0.0
  %10600 = vmatmul.mubr.f32.gmra.mrb[0].mxu0 %v10238
  %v10601 = vpop.f32.mrb[0].mxu0
  %v10602 = vadd.f32 0.0, %v10601
  %v10603 = vpop.f32.mrb[0].mxu0
  %10604 = vmatprep.mubr.f32.mxu0 0.0
  %10605 = vmatmul.mubr.f32.gmra.mrb[0].mxu0 %v10241
  %v10606 = vpop.f32.mrb[0].mxu0
  %v10607 = vadd.f32 0.0, %v10606
  %v10608 = vpop.f32.mrb[0].mxu0
  %10609 = vmatprep.mubr.f32.mxu0 0.0
  %10610 = vmatmul.mubr.f32.gmra.mrb[0].mxu0 %v10244
  %v10611 = vpop.f32.mrb[0].mxu0
  %v10612 = vadd.f32 0.0, %v10611
  %v10613 = vpop.f32.mrb[0].mxu0
  %10614 = vmatprep.mubr.f32.mxu0 0.0
  %10615 = vmatmul.mubr.f32.gmra.mrb[0].mxu0 %v10247
  %v10616 = vpop.f32.mrb[0].mxu0
  %v10617 = vadd.f32 0.0, %v10616
  %v10618 = vpop.f32.mrb[0].mxu0
  %10619 = vmatprep.mubr.f32.mxu0 0.0
  %10620 = vmatmul.mubr.f32.gmra.mrb[0].mxu0 %v10250
  %v10621 = vpop.f32.mrb[0].mxu0
  %v10622 = vadd.f32 0.0, %v10621
  %v10623 = vpop.f32.mrb[0].mxu0
  %10624 = vmatprep.mubr.f32.mxu0 0.0
  %10625 = vmatmul.mubr.f32.gmra.mrb[0].mxu0 %v10253
  %v10626 = vpop.f32.mrb[0].mxu0
  %v10627 = vadd.f32 0.0, %v10626
  %v10628 = vpop.f32.mrb[0].mxu0
  %10629 = vmatprep.mubr.f32.mxu0 0.0
  %10630 = vmatmul.mubr.f32.gmra.mrb[0].mxu0 %v10256
  %v10631 = vpop.f32.mrb[0].mxu0
  %v10632 = vadd.f32 0.0, %v10631
  %v10633 = vpop.f32.mrb[0].mxu0
  %10634 = vmatprep.mubr.f32.mxu0 0.0
  %10635 = vmatmul.mubr.f32.gmra.mrb[0].mxu0 %v10259
  %v10636 = vpop.f32.mrb[0].mxu0
  %v10637 = vadd.f32 0.0, %v10636
  %v10638 = vpop.f32.mrb[0].mxu0
  %10639 = vmatprep.mubr.f32.mxu0 0.0
  %10640 = vmatmul.mubr.f32.gmra.mrb[0].mxu0 %v10262
  %v10641 = vpop.f32.mrb[0].mxu0
  %v10642 = vadd.f32 0.0, %v10641
  %v10643 = vpop.f32.mrb[0].mxu0
  %10644 = vmatprep.mubr.f32.mxu0 0.0
  %10645 = vmatmul.mubr.f32.gmra.mrb[0].mxu0 %v10265
  %v10646 = vpop.f32.mrb[0].mxu0
  %v10647 = vadd.f32 0.0, %v10646
  %v10648 = vpop.f32.mrb[0].mxu0
  %10649 = vmatprep.mubr.f32.mxu0 0.0
  %10650 = vmatmul.mubr.f32.gmra.mrb[0].mxu0 %v10268
  %v10651 = vpop.f32.mrb[0].mxu0
  %v10652 = vadd.f32 0.0, %v10651
  %v10653 = vpop.f32.mrb[0].mxu0
  %10654 = vdwg.mxu0
  %v10655 = vadd.f32 %v9946, %v10337
  %v10656 = vadd.f32 %v9947, %v10342
  %v10657 = vadd.f32 %v9948, %v10347
  %v10658 = vadd.f32 %v9949, %v10352
  %v10659 = vadd.f32 %v9950, %v10357
  %v10660 = vadd.f32 %v9951, %v10362
  %v10661 = vadd.f32 %v9952, %v10367
  %v10662 = vadd.f32 %v9953, %v10372
  %v10663 = vadd.f32 %v9954, %v10377
  %v10664 = vadd.f32 %v9955, %v10382
  %v10665 = vadd.f32 %v9956, %v10387
  %v10666 = vadd.f32 %v9957, %v10392
  %v10667 = vadd.f32 %v9958, %v10397
  %v10668 = vadd.f32 %v9959, %v10402
  %v10669 = vadd.f32 %v9960, %v10407
  %v10670 = vadd.f32 %v9961, %v10412
  %v10671 = vadd.f32 %v9962, %v10417
  %v10672 = vadd.f32 %v9963, %v10422
  %v10673 = vadd.f32 %v9964, %v10427
  %v10674 = vadd.f32 %v9965, %v10432
  %v10675 = vadd.f32 %v9966, %v10437
  %v10676 = vadd.f32 %v9967, %v10442
  %v10677 = vadd.f32 %v9968, %v10447
  %v10678 = vadd.f32 %v9969, %v10452
  %v10679 = vadd.f32 %v9970, %v10457
  %v10680 = vadd.f32 %v9971, %v10462
  %v10681 = vadd.f32 %v9972, %v10467
  %v10682 = vadd.f32 %v9973, %v10472
  %v10683 = vadd.f32 %v9974, %v10477
  %v10684 = vadd.f32 %v9975, %v10482
  %v10685 = vadd.f32 %v9976, %v10487
  %v10686 = vadd.f32 %v9977, %v10492
  %v10687 = vadd.f32 %v9978, %v10497
  %v10688 = vadd.f32 %v9979, %v10502
  %v10689 = vadd.f32 %v9980, %v10507
  %v10690 = vadd.f32 %v9981, %v10512
  %v10691 = vadd.f32 %v9982, %v10517
  %v10692 = vadd.f32 %v9983, %v10522
  %v10693 = vadd.f32 %v9984, %v10527
  %v10694 = vadd.f32 %v9985, %v10532
  %v10695 = vadd.f32 %v9986, %v10537
  %v10696 = vadd.f32 %v9987, %v10542
  %v10697 = vadd.f32 %v9988, %v10547
  %v10698 = vadd.f32 %v9989, %v10552
  %v10699 = vadd.f32 %v9990, %v10557
  %v10700 = vadd.f32 %v9991, %v10562
  %v10701 = vadd.f32 %v9992, %v10567
  %v10702 = vadd.f32 %v9993, %v10572
  %v10703 = vadd.f32 %v9994, %v10577
  %v10704 = vadd.f32 %v9995, %v10582
  %v10705 = vadd.f32 %v9996, %v10587
  %v10706 = vadd.f32 %v9997, %v10592
  %v10707 = vadd.f32 %v9998, %v10597
  %v10708 = vadd.f32 %v9999, %v10602
  %v10709 = vadd.f32 %v10000, %v10607
  %v10710 = vadd.f32 %v10001, %v10612
  %v10711 = vadd.f32 %v10002, %v10617
  %v10712 = vadd.f32 %v10003, %v10622
  %v10713 = vadd.f32 %v10004, %v10627
  %v10714 = vadd.f32 %v10005, %v10632
  %v10715 = vadd.f32 %v10006, %v10637
  %v10716 = vadd.f32 %v10007, %v10642
  %v10717 = vadd.f32 %v10008, %v10647
  %v10718 = vadd.f32 %v10009, %v10652
  %v10719 = vld [vmem:[#allocation2 + $0x27] sm:$0xff]
  %v10720 = vld [vmem:[#allocation2 + $0x2f] sm:$0xff]
  %v10721 = vld [vmem:[#allocation2 + $0x37] sm:$0xff]
  %v10722 = vld [vmem:[#allocation2 + $0x3f] sm:$0xff]
  %v10723 = vld [vmem:[#allocation2 + $0x47] sm:$0xff]
  %v10724 = vld [vmem:[#allocation2 + $0x4f] sm:$0xff]
  %v10725 = vld [vmem:[#allocation2 + $0x57] sm:$0xff]
  %v10726 = vld [vmem:[#allocation2 + $0x5f] sm:$0xff]
  %v10727 = vld [vmem:[#allocation2 + $0x67] sm:$0xff]
  %v10728 = vld [vmem:[#allocation2 + $0x6f] sm:$0xff]
  %v10729 = vld [vmem:[#allocation2 + $0x77] sm:$0xff]
  %v10730 = vld [vmem:[#allocation2 + $0x7f] sm:$0xff]
  %v10731 = vld [vmem:[#allocation2 + $0x87] sm:$0xff]
  %v10732 = vld [vmem:[#allocation2 + $0x8f] sm:$0xff]
  %v10733 = vld [vmem:[#allocation2 + $0x97] sm:$0xff]
  %v10734 = vld [vmem:[#allocation2 + $0x9f] sm:$0xff]
  %v10735 = vld [vmem:[#allocation2 + $0xa7] sm:$0xff]
  %v10736 = vld [vmem:[#allocation2 + $0xaf] sm:$0xff]
  %v10737 = vld [vmem:[#allocation2 + $0xb7] sm:$0xff]
  %v10738 = vld [vmem:[#allocation2 + $0xbf] sm:$0xff]
  %v10739 = vld [vmem:[#allocation2 + $0xc7] sm:$0xff]
  %v10740 = vld [vmem:[#allocation2 + $0xcf] sm:$0xff]
  %v10741 = vld [vmem:[#allocation2 + $0xd7] sm:$0xff]
  %v10742 = vld [vmem:[#allocation2 + $0xdf] sm:$0xff]
  %v10743 = vld [vmem:[#allocation2 + $0xe7] sm:$0xff]
  %v10744 = vld [vmem:[#allocation2 + $0xef] sm:$0xff]
  %v10745 = vld [vmem:[#allocation2 + $0xf7] sm:$0xff]
  %v10746 = vld [vmem:[#allocation2 + $0xff] sm:$0xff]
  %v10747 = vld [vmem:[#allocation2 + $0x107] sm:$0xff]
  %v10748 = vld [vmem:[#allocation2 + $0x10f] sm:$0xff]
  %v10749 = vld [vmem:[#allocation2 + $0x117] sm:$0xff]
  %v10750 = vld [vmem:[#allocation2 + $0x11f] sm:$0xff]
  %v10751 = vld [vmem:[#allocation2 + $0x127] sm:$0xff]
  %v10752 = vld [vmem:[#allocation2 + $0x12f] sm:$0xff]
  %v10753 = vld [vmem:[#allocation2 + $0x137] sm:$0xff]
  %v10754 = vld [vmem:[#allocation2 + $0x13f] sm:$0xff]
  %v10755 = vld [vmem:[#allocation2 + $0x147] sm:$0xff]
  %v10756 = vld [vmem:[#allocation2 + $0x14f] sm:$0xff]
  %v10757 = vld [vmem:[#allocation2 + $0x157] sm:$0xff]
  %v10758 = vld [vmem:[#allocation2 + $0x15f] sm:$0xff]
  %v10759 = vld [vmem:[#allocation2 + $0x167] sm:$0xff]
  %v10760 = vld [vmem:[#allocation2 + $0x16f] sm:$0xff]
  %v10761 = vld [vmem:[#allocation2 + $0x177] sm:$0xff]
  %v10762 = vld [vmem:[#allocation2 + $0x17f] sm:$0xff]
  %v10763 = vld [vmem:[#allocation2 + $0x187] sm:$0xff]
  %v10764 = vld [vmem:[#allocation2 + $0x18f] sm:$0xff]
  %v10765 = vld [vmem:[#allocation2 + $0x197] sm:$0xff]
  %v10766 = vld [vmem:[#allocation2 + $0x19f] sm:$0xff]
  %v10767 = vld [vmem:[#allocation2 + $0x1a7] sm:$0xff]
  %v10768 = vld [vmem:[#allocation2 + $0x1af] sm:$0xff]
  %v10769 = vld [vmem:[#allocation2 + $0x1b7] sm:$0xff]
  %v10770 = vld [vmem:[#allocation2 + $0x1bf] sm:$0xff]
  %v10771 = vld [vmem:[#allocation2 + $0x1c7] sm:$0xff]
  %v10772 = vld [vmem:[#allocation2 + $0x1cf] sm:$0xff]
  %v10773 = vld [vmem:[#allocation2 + $0x1d7] sm:$0xff]
  %v10774 = vld [vmem:[#allocation2 + $0x1df] sm:$0xff]
  %v10775 = vld [vmem:[#allocation2 + $0x1e7] sm:$0xff]
  %v10776 = vld [vmem:[#allocation2 + $0x1ef] sm:$0xff]
  %v10777 = vld [vmem:[#allocation2 + $0x1f7] sm:$0xff]
  %v10778 = vld [vmem:[#allocation2 + $0x1ff] sm:$0xff]
  %v10779 = vld [vmem:[#allocation2 + $0x207] sm:$0xff]
  %v10780 = vld [vmem:[#allocation2 + $0x20f] sm:$0xff]
  %v10781 = vld [vmem:[#allocation2 + $0x217] sm:$0xff]
  %v10782 = vld [vmem:[#allocation2 + $0x21f] sm:$0xff]
  %v10783 = vld [vmem:[%s4 + $0xc0] sm:$0xff]
  %v10784 = vld [vmem:[%s4 + $0xc8] sm:$0xff]
  %v10785 = vld [vmem:[%s4 + $0xd0] sm:$0xff]
  %v10786 = vld [vmem:[%s4 + $0xd8] sm:$0xff]
  %v10788 = vsel %vm6522, %v10719, 0
  %v10791 = vsel %vm6522, %v10720, 0
  %v10794 = vsel %vm6522, %v10721, 0
  %v10797 = vsel %vm6522, %v10722, 0
  %v10800 = vsel %vm6522, %v10723, 0
  %v10803 = vsel %vm6522, %v10724, 0
  %v10806 = vsel %vm6522, %v10725, 0
  %v10809 = vsel %vm6522, %v10726, 0
  %v10812 = vsel %vm6522, %v10727, 0
  %v10815 = vsel %vm6522, %v10728, 0
  %v10818 = vsel %vm6522, %v10729, 0
  %v10821 = vsel %vm6522, %v10730, 0
  %v10824 = vsel %vm6522, %v10731, 0
  %v10827 = vsel %vm6522, %v10732, 0
  %v10830 = vsel %vm6522, %v10733, 0
  %v10833 = vsel %vm6522, %v10734, 0
  %v10836 = vsel %vm6522, %v10735, 0
  %v10839 = vsel %vm6522, %v10736, 0
  %v10842 = vsel %vm6522, %v10737, 0
  %v10845 = vsel %vm6522, %v10738, 0
  %v10848 = vsel %vm6522, %v10739, 0
  %v10851 = vsel %vm6522, %v10740, 0
  %v10854 = vsel %vm6522, %v10741, 0
  %v10857 = vsel %vm6522, %v10742, 0
  %v10860 = vsel %vm6522, %v10743, 0
  %v10863 = vsel %vm6522, %v10744, 0
  %v10866 = vsel %vm6522, %v10745, 0
  %v10869 = vsel %vm6522, %v10746, 0
  %v10872 = vsel %vm6522, %v10747, 0
  %v10875 = vsel %vm6522, %v10748, 0
  %v10878 = vsel %vm6522, %v10749, 0
  %v10881 = vsel %vm6522, %v10750, 0
  %v10884 = vsel %vm6522, %v10751, 0
  %v10887 = vsel %vm6522, %v10752, 0
  %v10890 = vsel %vm6522, %v10753, 0
  %v10893 = vsel %vm6522, %v10754, 0
  %v10896 = vsel %vm6522, %v10755, 0
  %v10899 = vsel %vm6522, %v10756, 0
  %v10902 = vsel %vm6522, %v10757, 0
  %v10905 = vsel %vm6522, %v10758, 0
  %v10908 = vsel %vm6522, %v10759, 0
  %v10911 = vsel %vm6522, %v10760, 0
  %v10914 = vsel %vm6522, %v10761, 0
  %v10917 = vsel %vm6522, %v10762, 0
  %v10920 = vsel %vm6522, %v10763, 0
  %v10923 = vsel %vm6522, %v10764, 0
  %v10926 = vsel %vm6522, %v10765, 0
  %v10929 = vsel %vm6522, %v10766, 0
  %v10932 = vsel %vm6522, %v10767, 0
  %v10935 = vsel %vm6522, %v10768, 0
  %v10938 = vsel %vm6522, %v10769, 0
  %v10941 = vsel %vm6522, %v10770, 0
  %v10944 = vsel %vm6522, %v10771, 0
  %v10947 = vsel %vm6522, %v10772, 0
  %v10950 = vsel %vm6522, %v10773, 0
  %v10953 = vsel %vm6522, %v10774, 0
  %v10956 = vsel %vm6522, %v10775, 0
  %v10959 = vsel %vm6522, %v10776, 0
  %v10962 = vsel %vm6522, %v10777, 0
  %v10965 = vsel %vm6522, %v10778, 0
  %v10968 = vsel %vm6522, %v10779, 0
  %v10971 = vsel %vm6522, %v10780, 0
  %v10974 = vsel %vm6522, %v10781, 0
  %v10977 = vsel %vm6522, %v10782, 0
  %10979 = vmatprep.subr.mxu0 0.0
  %10980 = vmatpush1.msra.mxu0 %v10783
  %10981 = vmatprep.subr.mxu0 0.0
  %10982 = vmatpush1.msra.mxu0 %v10784
  %10983 = vmatprep.subr.mxu0 0.0
  %10984 = vmatpush1.msra.mxu0 %v10785
  %10985 = vmatprep.subr.mxu0 0.0
  %10986 = vmatpush1.msra.mxu0 %v10786
  %10987 = vmatprep.subr.mxu0 0.0
  %10988 = vmatpush1.msra.mxu0 0.0
  %10989 = vmatprep.subr.mxu0 0.0
  %10990 = vmatpush1.msra.mxu0 0.0
  %10991 = vmatprep.subr.mxu0 0.0
  %10992 = vmatpush1.msra.mxu0 0.0
  %10993 = vmatprep.subr.mxu0 0.0
  %10994 = vmatpush1.msra.mxu0 0.0
  %10995 = vmatprep.subr.mxu0 0.0
  %10996 = vmatpush1.msra.mxu0 0.0
  %10997 = vmatprep.subr.mxu0 0.0
  %10998 = vmatpush1.msra.mxu0 0.0
  %10999 = vmatprep.subr.mxu0 0.0
  %11000 = vmatpush1.msra.mxu0 0.0
  %11001 = vmatprep.subr.mxu0 0.0
  %11002 = vmatpush1.msra.mxu0 0.0
  %11003 = vmatprep.subr.mxu0 0.0
  %11004 = vmatpush1.msra.mxu0 0.0
  %11005 = vmatprep.subr.mxu0 0.0
  %11006 = vmatpush1.msra.mxu0 0.0
  %11007 = vmatprep.subr.mxu0 0.0
  %11008 = vmatpush1.msra.mxu0 0.0
  %11009 = vmatprep.subr.mxu0 0.0
  %11010 = vmatpush1.msra.mxu0 0.0
  %11011 = vmatprep.subr.mxu0 0.0
  %11012 = vmatpush1.msra.mxu0 0.0
  %11013 = vmatprep.subr.mxu0 0.0
  %11014 = vmatpush1.msra.mxu0 0.0
  %11015 = vmatprep.subr.mxu0 0.0
  %11016 = vmatpush1.msra.mxu0 0.0
  %11017 = vmatprep.subr.mxu0 0.0
  %11018 = vmatpush1.msra.mxu0 0.0
  %11019 = vmatprep.subr.mxu0 0.0
  %11020 = vmatpush1.msra.mxu0 0.0
  %11021 = vmatprep.subr.mxu0 0.0
  %11022 = vmatpush1.msra.mxu0 0.0
  %11023 = vmatprep.subr.mxu0 0.0
  %11024 = vmatpush1.msra.mxu0 0.0
  %11025 = vmatprep.subr.mxu0 0.0
  %11026 = vmatpush1.msra.mxu0 0.0
  %11027 = vmatprep.subr.mxu0 0.0
  %11028 = vmatpush1.msra.mxu0 0.0
  %11029 = vmatprep.subr.mxu0 0.0
  %11030 = vmatpush1.msra.mxu0 0.0
  %11031 = vmatprep.subr.mxu0 0.0
  %11032 = vmatpush1.msra.mxu0 0.0
  %11033 = vmatprep.subr.mxu0 0.0
  %11034 = vmatpush1.msra.mxu0 0.0
  %11035 = vmatprep.subr.mxu0 0.0
  %11036 = vmatpush1.msra.mxu0 0.0
  %11037 = vmatprep.subr.mxu0 0.0
  %11038 = vmatpush1.msra.mxu0 0.0
  %11039 = vmatprep.subr.mxu0 0.0
  %11040 = vmatpush1.msra.mxu0 0.0
  %11041 = vmatprep.subr.mxu0 0.0
  %11042 = vmatpush1.msra.mxu0 0.0
  %11043 = vmatprep.mubr.f32.mxu0 0.0
  %11044 = vmatmul.mubr.f32.gmra.mrb[0].mxu0 %v10788
  %v11045 = vpop.f32.mrb[0].mxu0
  %v11046 = vadd.f32 0.0, %v11045
  %v11047 = vpop.f32.mrb[0].mxu0
  %11048 = vmatprep.mubr.f32.mxu0 0.0
  %11049 = vmatmul.mubr.f32.gmra.mrb[0].mxu0 %v10791
  %v11050 = vpop.f32.mrb[0].mxu0
  %v11051 = vadd.f32 0.0, %v11050
  %v11052 = vpop.f32.mrb[0].mxu0
  %11053 = vmatprep.mubr.f32.mxu0 0.0
  %11054 = vmatmul.mubr.f32.gmra.mrb[0].mxu0 %v10794
  %v11055 = vpop.f32.mrb[0].mxu0
  %v11056 = vadd.f32 0.0, %v11055
  %v11057 = vpop.f32.mrb[0].mxu0
  %11058 = vmatprep.mubr.f32.mxu0 0.0
  %11059 = vmatmul.mubr.f32.gmra.mrb[0].mxu0 %v10797
  %v11060 = vpop.f32.mrb[0].mxu0
  %v11061 = vadd.f32 0.0, %v11060
  %v11062 = vpop.f32.mrb[0].mxu0
  %11063 = vmatprep.mubr.f32.mxu0 0.0
  %11064 = vmatmul.mubr.f32.gmra.mrb[0].mxu0 %v10800
  %v11065 = vpop.f32.mrb[0].mxu0
  %v11066 = vadd.f32 0.0, %v11065
  %v11067 = vpop.f32.mrb[0].mxu0
  %11068 = vmatprep.mubr.f32.mxu0 0.0
  %11069 = vmatmul.mubr.f32.gmra.mrb[0].mxu0 %v10803
  %v11070 = vpop.f32.mrb[0].mxu0
  %v11071 = vadd.f32 0.0, %v11070
  %v11072 = vpop.f32.mrb[0].mxu0
  %11073 = vmatprep.mubr.f32.mxu0 0.0
  %11074 = vmatmul.mubr.f32.gmra.mrb[0].mxu0 %v10806
  %v11075 = vpop.f32.mrb[0].mxu0
  %v11076 = vadd.f32 0.0, %v11075
  %v11077 = vpop.f32.mrb[0].mxu0
  %11078 = vmatprep.mubr.f32.mxu0 0.0
  %11079 = vmatmul.mubr.f32.gmra.mrb[0].mxu0 %v10809
  %v11080 = vpop.f32.mrb[0].mxu0
  %v11081 = vadd.f32 0.0, %v11080
  %v11082 = vpop.f32.mrb[0].mxu0
  %11083 = vmatprep.mubr.f32.mxu0 0.0
  %11084 = vmatmul.mubr.f32.gmra.mrb[0].mxu0 %v10812
  %v11085 = vpop.f32.mrb[0].mxu0
  %v11086 = vadd.f32 0.0, %v11085
  %v11087 = vpop.f32.mrb[0].mxu0
  %11088 = vmatprep.mubr.f32.mxu0 0.0
  %11089 = vmatmul.mubr.f32.gmra.mrb[0].mxu0 %v10815
  %v11090 = vpop.f32.mrb[0].mxu0
  %v11091 = vadd.f32 0.0, %v11090
  %v11092 = vpop.f32.mrb[0].mxu0
  %11093 = vmatprep.mubr.f32.mxu0 0.0
  %11094 = vmatmul.mubr.f32.gmra.mrb[0].mxu0 %v10818
  %v11095 = vpop.f32.mrb[0].mxu0
  %v11096 = vadd.f32 0.0, %v11095
  %v11097 = vpop.f32.mrb[0].mxu0
  %11098 = vmatprep.mubr.f32.mxu0 0.0
  %11099 = vmatmul.mubr.f32.gmra.mrb[0].mxu0 %v10821
  %v11100 = vpop.f32.mrb[0].mxu0
  %v11101 = vadd.f32 0.0, %v11100
  %v11102 = vpop.f32.mrb[0].mxu0
  %11103 = vmatprep.mubr.f32.mxu0 0.0
  %11104 = vmatmul.mubr.f32.gmra.mrb[0].mxu0 %v10824
  %v11105 = vpop.f32.mrb[0].mxu0
  %v11106 = vadd.f32 0.0, %v11105
  %v11107 = vpop.f32.mrb[0].mxu0
  %11108 = vmatprep.mubr.f32.mxu0 0.0
  %11109 = vmatmul.mubr.f32.gmra.mrb[0].mxu0 %v10827
  %v11110 = vpop.f32.mrb[0].mxu0
  %v11111 = vadd.f32 0.0, %v11110
  %v11112 = vpop.f32.mrb[0].mxu0
  %11113 = vmatprep.mubr.f32.mxu0 0.0
  %11114 = vmatmul.mubr.f32.gmra.mrb[0].mxu0 %v10830
  %v11115 = vpop.f32.mrb[0].mxu0
  %v11116 = vadd.f32 0.0, %v11115
  %v11117 = vpop.f32.mrb[0].mxu0
  %11118 = vmatprep.mubr.f32.mxu0 0.0
  %11119 = vmatmul.mubr.f32.gmra.mrb[0].mxu0 %v10833
  %v11120 = vpop.f32.mrb[0].mxu0
  %v11121 = vadd.f32 0.0, %v11120
  %v11122 = vpop.f32.mrb[0].mxu0
  %11123 = vmatprep.mubr.f32.mxu0 0.0
  %11124 = vmatmul.mubr.f32.gmra.mrb[0].mxu0 %v10836
  %v11125 = vpop.f32.mrb[0].mxu0
  %v11126 = vadd.f32 0.0, %v11125
  %v11127 = vpop.f32.mrb[0].mxu0
  %11128 = vmatprep.mubr.f32.mxu0 0.0
  %11129 = vmatmul.mubr.f32.gmra.mrb[0].mxu0 %v10839
  %v11130 = vpop.f32.mrb[0].mxu0
  %v11131 = vadd.f32 0.0, %v11130
  %v11132 = vpop.f32.mrb[0].mxu0
  %11133 = vmatprep.mubr.f32.mxu0 0.0
  %11134 = vmatmul.mubr.f32.gmra.mrb[0].mxu0 %v10842
  %v11135 = vpop.f32.mrb[0].mxu0
  %v11136 = vadd.f32 0.0, %v11135
  %v11137 = vpop.f32.mrb[0].mxu0
  %11138 = vmatprep.mubr.f32.mxu0 0.0
  %11139 = vmatmul.mubr.f32.gmra.mrb[0].mxu0 %v10845
  %v11140 = vpop.f32.mrb[0].mxu0
  %v11141 = vadd.f32 0.0, %v11140
  %v11142 = vpop.f32.mrb[0].mxu0
  %11143 = vmatprep.mubr.f32.mxu0 0.0
  %11144 = vmatmul.mubr.f32.gmra.mrb[0].mxu0 %v10848
  %v11145 = vpop.f32.mrb[0].mxu0
  %v11146 = vadd.f32 0.0, %v11145
  %v11147 = vpop.f32.mrb[0].mxu0
  %11148 = vmatprep.mubr.f32.mxu0 0.0
  %11149 = vmatmul.mubr.f32.gmra.mrb[0].mxu0 %v10851
  %v11150 = vpop.f32.mrb[0].mxu0
  %v11151 = vadd.f32 0.0, %v11150
  %v11152 = vpop.f32.mrb[0].mxu0
  %11153 = vmatprep.mubr.f32.mxu0 0.0
  %11154 = vmatmul.mubr.f32.gmra.mrb[0].mxu0 %v10854
  %v11155 = vpop.f32.mrb[0].mxu0
  %v11156 = vadd.f32 0.0, %v11155
  %v11157 = vpop.f32.mrb[0].mxu0
  %11158 = vmatprep.mubr.f32.mxu0 0.0
  %11159 = vmatmul.mubr.f32.gmra.mrb[0].mxu0 %v10857
  %v11160 = vpop.f32.mrb[0].mxu0
  %v11161 = vadd.f32 0.0, %v11160
  %v11162 = vpop.f32.mrb[0].mxu0
  %11163 = vmatprep.mubr.f32.mxu0 0.0
  %11164 = vmatmul.mubr.f32.gmra.mrb[0].mxu0 %v10860
  %v11165 = vpop.f32.mrb[0].mxu0
  %v11166 = vadd.f32 0.0, %v11165
  %v11167 = vpop.f32.mrb[0].mxu0
  %11168 = vmatprep.mubr.f32.mxu0 0.0
  %11169 = vmatmul.mubr.f32.gmra.mrb[0].mxu0 %v10863
  %v11170 = vpop.f32.mrb[0].mxu0
  %v11171 = vadd.f32 0.0, %v11170
  %v11172 = vpop.f32.mrb[0].mxu0
  %11173 = vmatprep.mubr.f32.mxu0 0.0
  %11174 = vmatmul.mubr.f32.gmra.mrb[0].mxu0 %v10866
  %v11175 = vpop.f32.mrb[0].mxu0
  %v11176 = vadd.f32 0.0, %v11175
  %v11177 = vpop.f32.mrb[0].mxu0
  %11178 = vmatprep.mubr.f32.mxu0 0.0
  %11179 = vmatmul.mubr.f32.gmra.mrb[0].mxu0 %v10869
  %v11180 = vpop.f32.mrb[0].mxu0
  %v11181 = vadd.f32 0.0, %v11180
  %v11182 = vpop.f32.mrb[0].mxu0
  %11183 = vmatprep.mubr.f32.mxu0 0.0
  %11184 = vmatmul.mubr.f32.gmra.mrb[0].mxu0 %v10872
  %v11185 = vpop.f32.mrb[0].mxu0
  %v11186 = vadd.f32 0.0, %v11185
  %v11187 = vpop.f32.mrb[0].mxu0
  %11188 = vmatprep.mubr.f32.mxu0 0.0
  %11189 = vmatmul.mubr.f32.gmra.mrb[0].mxu0 %v10875
  %v11190 = vpop.f32.mrb[0].mxu0
  %v11191 = vadd.f32 0.0, %v11190
  %v11192 = vpop.f32.mrb[0].mxu0
  %11193 = vmatprep.mubr.f32.mxu0 0.0
  %11194 = vmatmul.mubr.f32.gmra.mrb[0].mxu0 %v10878
  %v11195 = vpop.f32.mrb[0].mxu0
  %v11196 = vadd.f32 0.0, %v11195
  %v11197 = vpop.f32.mrb[0].mxu0
  %11198 = vmatprep.mubr.f32.mxu0 0.0
  %11199 = vmatmul.mubr.f32.gmra.mrb[0].mxu0 %v10881
  %v11200 = vpop.f32.mrb[0].mxu0
  %v11201 = vadd.f32 0.0, %v11200
  %v11202 = vpop.f32.mrb[0].mxu0
  %11203 = vmatprep.mubr.f32.mxu0 0.0
  %11204 = vmatmul.mubr.f32.gmra.mrb[0].mxu0 %v10884
  %v11205 = vpop.f32.mrb[0].mxu0
  %v11206 = vadd.f32 0.0, %v11205
  %v11207 = vpop.f32.mrb[0].mxu0
  %11208 = vmatprep.mubr.f32.mxu0 0.0
  %11209 = vmatmul.mubr.f32.gmra.mrb[0].mxu0 %v10887
  %v11210 = vpop.f32.mrb[0].mxu0
  %v11211 = vadd.f32 0.0, %v11210
  %v11212 = vpop.f32.mrb[0].mxu0
  %11213 = vmatprep.mubr.f32.mxu0 0.0
  %11214 = vmatmul.mubr.f32.gmra.mrb[0].mxu0 %v10890
  %v11215 = vpop.f32.mrb[0].mxu0
  %v11216 = vadd.f32 0.0, %v11215
  %v11217 = vpop.f32.mrb[0].mxu0
  %11218 = vmatprep.mubr.f32.mxu0 0.0
  %11219 = vmatmul.mubr.f32.gmra.mrb[0].mxu0 %v10893
  %v11220 = vpop.f32.mrb[0].mxu0
  %v11221 = vadd.f32 0.0, %v11220
  %v11222 = vpop.f32.mrb[0].mxu0
  %11223 = vmatprep.mubr.f32.mxu0 0.0
  %11224 = vmatmul.mubr.f32.gmra.mrb[0].mxu0 %v10896
  %v11225 = vpop.f32.mrb[0].mxu0
  %v11226 = vadd.f32 0.0, %v11225
  %v11227 = vpop.f32.mrb[0].mxu0
  %11228 = vmatprep.mubr.f32.mxu0 0.0
  %11229 = vmatmul.mubr.f32.gmra.mrb[0].mxu0 %v10899
  %v11230 = vpop.f32.mrb[0].mxu0
  %v11231 = vadd.f32 0.0, %v11230
  %v11232 = vpop.f32.mrb[0].mxu0
  %11233 = vmatprep.mubr.f32.mxu0 0.0
  %11234 = vmatmul.mubr.f32.gmra.mrb[0].mxu0 %v10902
  %v11235 = vpop.f32.mrb[0].mxu0
  %v11236 = vadd.f32 0.0, %v11235
  %v11237 = vpop.f32.mrb[0].mxu0
  %11238 = vmatprep.mubr.f32.mxu0 0.0
  %11239 = vmatmul.mubr.f32.gmra.mrb[0].mxu0 %v10905
  %v11240 = vpop.f32.mrb[0].mxu0
  %v11241 = vadd.f32 0.0, %v11240
  %v11242 = vpop.f32.mrb[0].mxu0
  %11243 = vmatprep.mubr.f32.mxu0 0.0
  %11244 = vmatmul.mubr.f32.gmra.mrb[0].mxu0 %v10908
  %v11245 = vpop.f32.mrb[0].mxu0
  %v11246 = vadd.f32 0.0, %v11245
  %v11247 = vpop.f32.mrb[0].mxu0
  %11248 = vmatprep.mubr.f32.mxu0 0.0
  %11249 = vmatmul.mubr.f32.gmra.mrb[0].mxu0 %v10911
  %v11250 = vpop.f32.mrb[0].mxu0
  %v11251 = vadd.f32 0.0, %v11250
  %v11252 = vpop.f32.mrb[0].mxu0
  %11253 = vmatprep.mubr.f32.mxu0 0.0
  %11254 = vmatmul.mubr.f32.gmra.mrb[0].mxu0 %v10914
  %v11255 = vpop.f32.mrb[0].mxu0
  %v11256 = vadd.f32 0.0, %v11255
  %v11257 = vpop.f32.mrb[0].mxu0
  %11258 = vmatprep.mubr.f32.mxu0 0.0
  %11259 = vmatmul.mubr.f32.gmra.mrb[0].mxu0 %v10917
  %v11260 = vpop.f32.mrb[0].mxu0
  %v11261 = vadd.f32 0.0, %v11260
  %v11262 = vpop.f32.mrb[0].mxu0
  %11263 = vmatprep.mubr.f32.mxu0 0.0
  %11264 = vmatmul.mubr.f32.gmra.mrb[0].mxu0 %v10920
  %v11265 = vpop.f32.mrb[0].mxu0
  %v11266 = vadd.f32 0.0, %v11265
  %v11267 = vpop.f32.mrb[0].mxu0
  %11268 = vmatprep.mubr.f32.mxu0 0.0
  %11269 = vmatmul.mubr.f32.gmra.mrb[0].mxu0 %v10923
  %v11270 = vpop.f32.mrb[0].mxu0
  %v11271 = vadd.f32 0.0, %v11270
  %v11272 = vpop.f32.mrb[0].mxu0
  %11273 = vmatprep.mubr.f32.mxu0 0.0
  %11274 = vmatmul.mubr.f32.gmra.mrb[0].mxu0 %v10926
  %v11275 = vpop.f32.mrb[0].mxu0
  %v11276 = vadd.f32 0.0, %v11275
  %v11277 = vpop.f32.mrb[0].mxu0
  %11278 = vmatprep.mubr.f32.mxu0 0.0
  %11279 = vmatmul.mubr.f32.gmra.mrb[0].mxu0 %v10929
  %v11280 = vpop.f32.mrb[0].mxu0
  %v11281 = vadd.f32 0.0, %v11280
  %v11282 = vpop.f32.mrb[0].mxu0
  %11283 = vmatprep.mubr.f32.mxu0 0.0
  %11284 = vmatmul.mubr.f32.gmra.mrb[0].mxu0 %v10932
  %v11285 = vpop.f32.mrb[0].mxu0
  %v11286 = vadd.f32 0.0, %v11285
  %v11287 = vpop.f32.mrb[0].mxu0
  %11288 = vmatprep.mubr.f32.mxu0 0.0
  %11289 = vmatmul.mubr.f32.gmra.mrb[0].mxu0 %v10935
  %v11290 = vpop.f32.mrb[0].mxu0
  %v11291 = vadd.f32 0.0, %v11290
  %v11292 = vpop.f32.mrb[0].mxu0
  %11293 = vmatprep.mubr.f32.mxu0 0.0
  %11294 = vmatmul.mubr.f32.gmra.mrb[0].mxu0 %v10938
  %v11295 = vpop.f32.mrb[0].mxu0
  %v11296 = vadd.f32 0.0, %v11295
  %v11297 = vpop.f32.mrb[0].mxu0
  %11298 = vmatprep.mubr.f32.mxu0 0.0
  %11299 = vmatmul.mubr.f32.gmra.mrb[0].mxu0 %v10941
  %v11300 = vpop.f32.mrb[0].mxu0
  %v11301 = vadd.f32 0.0, %v11300
  %v11302 = vpop.f32.mrb[0].mxu0
  %11303 = vmatprep.mubr.f32.mxu0 0.0
  %11304 = vmatmul.mubr.f32.gmra.mrb[0].mxu0 %v10944
  %v11305 = vpop.f32.mrb[0].mxu0
  %v11306 = vadd.f32 0.0, %v11305
  %v11307 = vpop.f32.mrb[0].mxu0
  %11308 = vmatprep.mubr.f32.mxu0 0.0
  %11309 = vmatmul.mubr.f32.gmra.mrb[0].mxu0 %v10947
  %v11310 = vpop.f32.mrb[0].mxu0
  %v11311 = vadd.f32 0.0, %v11310
  %v11312 = vpop.f32.mrb[0].mxu0
  %11313 = vmatprep.mubr.f32.mxu0 0.0
  %11314 = vmatmul.mubr.f32.gmra.mrb[0].mxu0 %v10950
  %v11315 = vpop.f32.mrb[0].mxu0
  %v11316 = vadd.f32 0.0, %v11315
  %v11317 = vpop.f32.mrb[0].mxu0
  %11318 = vmatprep.mubr.f32.mxu0 0.0
  %11319 = vmatmul.mubr.f32.gmra.mrb[0].mxu0 %v10953
  %v11320 = vpop.f32.mrb[0].mxu0
  %v11321 = vadd.f32 0.0, %v11320
  %v11322 = vpop.f32.mrb[0].mxu0
  %11323 = vmatprep.mubr.f32.mxu0 0.0
  %11324 = vmatmul.mubr.f32.gmra.mrb[0].mxu0 %v10956
  %v11325 = vpop.f32.mrb[0].mxu0
  %v11326 = vadd.f32 0.0, %v11325
  %v11327 = vpop.f32.mrb[0].mxu0
  %11328 = vmatprep.mubr.f32.mxu0 0.0
  %11329 = vmatmul.mubr.f32.gmra.mrb[0].mxu0 %v10959
  %v11330 = vpop.f32.mrb[0].mxu0
  %v11331 = vadd.f32 0.0, %v11330
  %v11332 = vpop.f32.mrb[0].mxu0
  %11333 = vmatprep.mubr.f32.mxu0 0.0
  %11334 = vmatmul.mubr.f32.gmra.mrb[0].mxu0 %v10962
  %v11335 = vpop.f32.mrb[0].mxu0
  %v11336 = vadd.f32 0.0, %v11335
  %v11337 = vpop.f32.mrb[0].mxu0
  %11338 = vmatprep.mubr.f32.mxu0 0.0
  %11339 = vmatmul.mubr.f32.gmra.mrb[0].mxu0 %v10965
  %v11340 = vpop.f32.mrb[0].mxu0
  %v11341 = vadd.f32 0.0, %v11340
  %v11342 = vpop.f32.mrb[0].mxu0
  %11343 = vmatprep.mubr.f32.mxu0 0.0
  %11344 = vmatmul.mubr.f32.gmra.mrb[0].mxu0 %v10968
  %v11345 = vpop.f32.mrb[0].mxu0
  %v11346 = vadd.f32 0.0, %v11345
  %v11347 = vpop.f32.mrb[0].mxu0
  %11348 = vmatprep.mubr.f32.mxu0 0.0
  %11349 = vmatmul.mubr.f32.gmra.mrb[0].mxu0 %v10971
  %v11350 = vpop.f32.mrb[0].mxu0
  %v11351 = vadd.f32 0.0, %v11350
  %v11352 = vpop.f32.mrb[0].mxu0
  %11353 = vmatprep.mubr.f32.mxu0 0.0
  %11354 = vmatmul.mubr.f32.gmra.mrb[0].mxu0 %v10974
  %v11355 = vpop.f32.mrb[0].mxu0
  %v11356 = vadd.f32 0.0, %v11355
  %v11357 = vpop.f32.mrb[0].mxu0
  %11358 = vmatprep.mubr.f32.mxu0 0.0
  %11359 = vmatmul.mubr.f32.gmra.mrb[0].mxu0 %v10977
  %v11360 = vpop.f32.mrb[0].mxu0
  %v11361 = vadd.f32 0.0, %v11360
  %v11362 = vpop.f32.mrb[0].mxu0
  %11363 = vdwg.mxu0
  %v11364 = vadd.f32 %v10655, %v11046
  %v11365 = vadd.f32 %v10656, %v11051
  %v11366 = vadd.f32 %v10657, %v11056
  %v11367 = vadd.f32 %v10658, %v11061
  %v11368 = vadd.f32 %v10659, %v11066
  %v11369 = vadd.f32 %v10660, %v11071
  %v11370 = vadd.f32 %v10661, %v11076
  %v11371 = vadd.f32 %v10662, %v11081
  %v11372 = vadd.f32 %v10663, %v11086
  %v11373 = vadd.f32 %v10664, %v11091
  %v11374 = vadd.f32 %v10665, %v11096
  %v11375 = vadd.f32 %v10666, %v11101
  %v11376 = vadd.f32 %v10667, %v11106
  %v11377 = vadd.f32 %v10668, %v11111
  %v11378 = vadd.f32 %v10669, %v11116
  %v11379 = vadd.f32 %v10670, %v11121
  %v11380 = vadd.f32 %v10671, %v11126
  %v11381 = vadd.f32 %v10672, %v11131
  %v11382 = vadd.f32 %v10673, %v11136
  %v11383 = vadd.f32 %v10674, %v11141
  %v11384 = vadd.f32 %v10675, %v11146
  %v11385 = vadd.f32 %v10676, %v11151
  %v11386 = vadd.f32 %v10677, %v11156
  %v11387 = vadd.f32 %v10678, %v11161
  %v11388 = vadd.f32 %v10679, %v11166
  %v11389 = vadd.f32 %v10680, %v11171
  %v11390 = vadd.f32 %v10681, %v11176
  %v11391 = vadd.f32 %v10682, %v11181
  %v11392 = vadd.f32 %v10683, %v11186
  %v11393 = vadd.f32 %v10684, %v11191
  %v11394 = vadd.f32 %v10685, %v11196
  %v11395 = vadd.f32 %v10686, %v11201
  %v11396 = vadd.f32 %v10687, %v11206
  %v11397 = vadd.f32 %v10688, %v11211
  %v11398 = vadd.f32 %v10689, %v11216
  %v11399 = vadd.f32 %v10690, %v11221
  %v11400 = vadd.f32 %v10691, %v11226
  %v11401 = vadd.f32 %v10692, %v11231
  %v11402 = vadd.f32 %v10693, %v11236
  %v11403 = vadd.f32 %v10694, %v11241
  %v11404 = vadd.f32 %v10695, %v11246
  %v11405 = vadd.f32 %v10696, %v11251
  %v11406 = vadd.f32 %v10697, %v11256
  %v11407 = vadd.f32 %v10698, %v11261
  %v11408 = vadd.f32 %v10699, %v11266
  %v11409 = vadd.f32 %v10700, %v11271
  %v11410 = vadd.f32 %v10701, %v11276
  %v11411 = vadd.f32 %v10702, %v11281
  %v11412 = vadd.f32 %v10703, %v11286
  %v11413 = vadd.f32 %v10704, %v11291
  %v11414 = vadd.f32 %v10705, %v11296
  %v11415 = vadd.f32 %v10706, %v11301
  %v11416 = vadd.f32 %v10707, %v11306
  %v11417 = vadd.f32 %v10708, %v11311
  %v11418 = vadd.f32 %v10709, %v11316
  %v11419 = vadd.f32 %v10710, %v11321
  %v11420 = vadd.f32 %v10711, %v11326
  %v11421 = vadd.f32 %v10712, %v11331
  %v11422 = vadd.f32 %v10713, %v11336
  %v11423 = vadd.f32 %v10714, %v11341
  %v11424 = vadd.f32 %v10715, %v11346
  %v11425 = vadd.f32 %v10716, %v11351
  %v11426 = vadd.f32 %v10717, %v11356
  %v11427 = vadd.f32 %v10718, %v11361
  %v11428 = vld [vmem:[#allocation2 + $0x28] sm:$0xff]
  %v11429 = vld [vmem:[#allocation2 + $0x30] sm:$0xff]
  %v11430 = vld [vmem:[#allocation2 + $0x38] sm:$0xff]
  %v11431 = vld [vmem:[#allocation2 + $0x40] sm:$0xff]
  %v11432 = vld [vmem:[#allocation2 + $0x48] sm:$0xff]
  %v11433 = vld [vmem:[#allocation2 + $0x50] sm:$0xff]
  %v11434 = vld [vmem:[#allocation2 + $0x58] sm:$0xff]
  %v11435 = vld [vmem:[#allocation2 + $0x60] sm:$0xff]
  %v11436 = vld [vmem:[#allocation2 + $0x68] sm:$0xff]
  %v11437 = vld [vmem:[#allocation2 + $0x70] sm:$0xff]
  %v11438 = vld [vmem:[#allocation2 + $0x78] sm:$0xff]
  %v11439 = vld [vmem:[#allocation2 + $0x80] sm:$0xff]
  %v11440 = vld [vmem:[#allocation2 + $0x88] sm:$0xff]
  %v11441 = vld [vmem:[#allocation2 + $0x90] sm:$0xff]
  %v11442 = vld [vmem:[#allocation2 + $0x98] sm:$0xff]
  %v11443 = vld [vmem:[#allocation2 + $0xa0] sm:$0xff]
  %v11444 = vld [vmem:[#allocation2 + $0xa8] sm:$0xff]
  %v11445 = vld [vmem:[#allocation2 + $0xb0] sm:$0xff]
  %v11446 = vld [vmem:[#allocation2 + $0xb8] sm:$0xff]
  %v11447 = vld [vmem:[#allocation2 + $0xc0] sm:$0xff]
  %v11448 = vld [vmem:[#allocation2 + $0xc8] sm:$0xff]
  %v11449 = vld [vmem:[#allocation2 + $0xd0] sm:$0xff]
  %v11450 = vld [vmem:[#allocation2 + $0xd8] sm:$0xff]
  %v11451 = vld [vmem:[#allocation2 + $0xe0] sm:$0xff]
  %v11452 = vld [vmem:[#allocation2 + $0xe8] sm:$0xff]
  %v11453 = vld [vmem:[#allocation2 + $0xf0] sm:$0xff]
  %v11454 = vld [vmem:[#allocation2 + $0xf8] sm:$0xff]
  %v11455 = vld [vmem:[#allocation2 + $0x100] sm:$0xff]
  %v11456 = vld [vmem:[#allocation2 + $0x108] sm:$0xff]
  %v11457 = vld [vmem:[#allocation2 + $0x110] sm:$0xff]
  %v11458 = vld [vmem:[#allocation2 + $0x118] sm:$0xff]
  %v11459 = vld [vmem:[#allocation2 + $0x120] sm:$0xff]
  %v11460 = vld [vmem:[#allocation2 + $0x128] sm:$0xff]
  %v11461 = vld [vmem:[#allocation2 + $0x130] sm:$0xff]
  %v11462 = vld [vmem:[#allocation2 + $0x138] sm:$0xff]
  %v11463 = vld [vmem:[#allocation2 + $0x140] sm:$0xff]
  %v11464 = vld [vmem:[#allocation2 + $0x148] sm:$0xff]
  %v11465 = vld [vmem:[#allocation2 + $0x150] sm:$0xff]
  %v11466 = vld [vmem:[#allocation2 + $0x158] sm:$0xff]
  %v11467 = vld [vmem:[#allocation2 + $0x160] sm:$0xff]
  %v11468 = vld [vmem:[#allocation2 + $0x168] sm:$0xff]
  %v11469 = vld [vmem:[#allocation2 + $0x170] sm:$0xff]
  %v11470 = vld [vmem:[#allocation2 + $0x178] sm:$0xff]
  %v11471 = vld [vmem:[#allocation2 + $0x180] sm:$0xff]
  %v11472 = vld [vmem:[#allocation2 + $0x188] sm:$0xff]
  %v11473 = vld [vmem:[#allocation2 + $0x190] sm:$0xff]
  %v11474 = vld [vmem:[#allocation2 + $0x198] sm:$0xff]
  %v11475 = vld [vmem:[#allocation2 + $0x1a0] sm:$0xff]
  %v11476 = vld [vmem:[#allocation2 + $0x1a8] sm:$0xff]
  %v11477 = vld [vmem:[#allocation2 + $0x1b0] sm:$0xff]
  %v11478 = vld [vmem:[#allocation2 + $0x1b8] sm:$0xff]
  %v11479 = vld [vmem:[#allocation2 + $0x1c0] sm:$0xff]
  %v11480 = vld [vmem:[#allocation2 + $0x1c8] sm:$0xff]
  %v11481 = vld [vmem:[#allocation2 + $0x1d0] sm:$0xff]
  %v11482 = vld [vmem:[#allocation2 + $0x1d8] sm:$0xff]
  %v11483 = vld [vmem:[#allocation2 + $0x1e0] sm:$0xff]
  %v11484 = vld [vmem:[#allocation2 + $0x1e8] sm:$0xff]
  %v11485 = vld [vmem:[#allocation2 + $0x1f0] sm:$0xff]
  %v11486 = vld [vmem:[#allocation2 + $0x1f8] sm:$0xff]
  %v11487 = vld [vmem:[#allocation2 + $0x200] sm:$0xff]
  %v11488 = vld [vmem:[#allocation2 + $0x208] sm:$0xff]
  %v11489 = vld [vmem:[#allocation2 + $0x210] sm:$0xff]
  %v11490 = vld [vmem:[#allocation2 + $0x218] sm:$0xff]
  %v11491 = vld [vmem:[#allocation2 + $0x220] sm:$0xff]
  %v11492 = vld [vmem:[%s4 + $0xe0] sm:$0xff]
  %v11493 = vld [vmem:[%s4 + $0xe8] sm:$0xff]
  %v11494 = vld [vmem:[%s4 + $0xf0] sm:$0xff]
  %v11495 = vld [vmem:[%s4 + $0xf8] sm:$0xff]
  %v11497 = vsel %vm6522, %v11428, 0
  %v11500 = vsel %vm6522, %v11429, 0
  %v11503 = vsel %vm6522, %v11430, 0
  %v11506 = vsel %vm6522, %v11431, 0
  %v11509 = vsel %vm6522, %v11432, 0
  %v11512 = vsel %vm6522, %v11433, 0
  %v11515 = vsel %vm6522, %v11434, 0
  %v11518 = vsel %vm6522, %v11435, 0
  %v11521 = vsel %vm6522, %v11436, 0
  %v11524 = vsel %vm6522, %v11437, 0
  %v11527 = vsel %vm6522, %v11438, 0
  %v11530 = vsel %vm6522, %v11439, 0
  %v11533 = vsel %vm6522, %v11440, 0
  %v11536 = vsel %vm6522, %v11441, 0
  %v11539 = vsel %vm6522, %v11442, 0
  %v11542 = vsel %vm6522, %v11443, 0
  %v11545 = vsel %vm6522, %v11444, 0
  %v11548 = vsel %vm6522, %v11445, 0
  %v11551 = vsel %vm6522, %v11446, 0
  %v11554 = vsel %vm6522, %v11447, 0
  %v11557 = vsel %vm6522, %v11448, 0
  %v11560 = vsel %vm6522, %v11449, 0
  %v11563 = vsel %vm6522, %v11450, 0
  %v11566 = vsel %vm6522, %v11451, 0
  %v11569 = vsel %vm6522, %v11452, 0
  %v11572 = vsel %vm6522, %v11453, 0
  %v11575 = vsel %vm6522, %v11454, 0
  %v11578 = vsel %vm6522, %v11455, 0
  %v11581 = vsel %vm6522, %v11456, 0
  %v11584 = vsel %vm6522, %v11457, 0
  %v11587 = vsel %vm6522, %v11458, 0
  %v11590 = vsel %vm6522, %v11459, 0
  %v11593 = vsel %vm6522, %v11460, 0
  %v11596 = vsel %vm6522, %v11461, 0
  %v11599 = vsel %vm6522, %v11462, 0
  %v11602 = vsel %vm6522, %v11463, 0
  %v11605 = vsel %vm6522, %v11464, 0
  %v11608 = vsel %vm6522, %v11465, 0
  %v11611 = vsel %vm6522, %v11466, 0
  %v11614 = vsel %vm6522, %v11467, 0
  %v11617 = vsel %vm6522, %v11468, 0
  %v11620 = vsel %vm6522, %v11469, 0
  %v11623 = vsel %vm6522, %v11470, 0
  %v11626 = vsel %vm6522, %v11471, 0
  %v11629 = vsel %vm6522, %v11472, 0
  %v11632 = vsel %vm6522, %v11473, 0
  %v11635 = vsel %vm6522, %v11474, 0
  %v11638 = vsel %vm6522, %v11475, 0
  %v11641 = vsel %vm6522, %v11476, 0
  %v11644 = vsel %vm6522, %v11477, 0
  %v11647 = vsel %vm6522, %v11478, 0
  %v11650 = vsel %vm6522, %v11479, 0
  %v11653 = vsel %vm6522, %v11480, 0
  %v11656 = vsel %vm6522, %v11481, 0
  %v11659 = vsel %vm6522, %v11482, 0
  %v11662 = vsel %vm6522, %v11483, 0
  %v11665 = vsel %vm6522, %v11484, 0
  %v11668 = vsel %vm6522, %v11485, 0
  %v11671 = vsel %vm6522, %v11486, 0
  %v11674 = vsel %vm6522, %v11487, 0
  %v11677 = vsel %vm6522, %v11488, 0
  %v11680 = vsel %vm6522, %v11489, 0
  %v11683 = vsel %vm6522, %v11490, 0
  %v11686 = vsel %vm6522, %v11491, 0
  %11688 = vmatprep.subr.mxu0 0.0
  %11689 = vmatpush1.msra.mxu0 %v11492
  %11690 = vmatprep.subr.mxu0 0.0
  %11691 = vmatpush1.msra.mxu0 %v11493
  %11692 = vmatprep.subr.mxu0 0.0
  %11693 = vmatpush1.msra.mxu0 %v11494
  %11694 = vmatprep.subr.mxu0 0.0
  %11695 = vmatpush1.msra.mxu0 %v11495
  %11696 = vmatprep.subr.mxu0 0.0
  %11697 = vmatpush1.msra.mxu0 0.0
  %11698 = vmatprep.subr.mxu0 0.0
  %11699 = vmatpush1.msra.mxu0 0.0
  %11700 = vmatprep.subr.mxu0 0.0
  %11701 = vmatpush1.msra.mxu0 0.0
  %11702 = vmatprep.subr.mxu0 0.0
  %11703 = vmatpush1.msra.mxu0 0.0
  %11704 = vmatprep.subr.mxu0 0.0
  %11705 = vmatpush1.msra.mxu0 0.0
  %11706 = vmatprep.subr.mxu0 0.0
  %11707 = vmatpush1.msra.mxu0 0.0
  %11708 = vmatprep.subr.mxu0 0.0
  %11709 = vmatpush1.msra.mxu0 0.0
  %11710 = vmatprep.subr.mxu0 0.0
  %11711 = vmatpush1.msra.mxu0 0.0
  %11712 = vmatprep.subr.mxu0 0.0
  %11713 = vmatpush1.msra.mxu0 0.0
  %11714 = vmatprep.subr.mxu0 0.0
  %11715 = vmatpush1.msra.mxu0 0.0
  %11716 = vmatprep.subr.mxu0 0.0
  %11717 = vmatpush1.msra.mxu0 0.0
  %11718 = vmatprep.subr.mxu0 0.0
  %11719 = vmatpush1.msra.mxu0 0.0
  %11720 = vmatprep.subr.mxu0 0.0
  %11721 = vmatpush1.msra.mxu0 0.0
  %11722 = vmatprep.subr.mxu0 0.0
  %11723 = vmatpush1.msra.mxu0 0.0
  %11724 = vmatprep.subr.mxu0 0.0
  %11725 = vmatpush1.msra.mxu0 0.0
  %11726 = vmatprep.subr.mxu0 0.0
  %11727 = vmatpush1.msra.mxu0 0.0
  %11728 = vmatprep.subr.mxu0 0.0
  %11729 = vmatpush1.msra.mxu0 0.0
  %11730 = vmatprep.subr.mxu0 0.0
  %11731 = vmatpush1.msra.mxu0 0.0
  %11732 = vmatprep.subr.mxu0 0.0
  %11733 = vmatpush1.msra.mxu0 0.0
  %11734 = vmatprep.subr.mxu0 0.0
  %11735 = vmatpush1.msra.mxu0 0.0
  %11736 = vmatprep.subr.mxu0 0.0
  %11737 = vmatpush1.msra.mxu0 0.0
  %11738 = vmatprep.subr.mxu0 0.0
  %11739 = vmatpush1.msra.mxu0 0.0
  %11740 = vmatprep.subr.mxu0 0.0
  %11741 = vmatpush1.msra.mxu0 0.0
  %11742 = vmatprep.subr.mxu0 0.0
  %11743 = vmatpush1.msra.mxu0 0.0
  %11744 = vmatprep.subr.mxu0 0.0
  %11745 = vmatpush1.msra.mxu0 0.0
  %11746 = vmatprep.subr.mxu0 0.0
  %11747 = vmatpush1.msra.mxu0 0.0
  %11748 = vmatprep.subr.mxu0 0.0
  %11749 = vmatpush1.msra.mxu0 0.0
  %11750 = vmatprep.subr.mxu0 0.0
  %11751 = vmatpush1.msra.mxu0 0.0
  %11752 = vmatprep.mubr.f32.mxu0 0.0
  %11753 = vmatmul.mubr.f32.gmra.mrb[0].mxu0 %v11497
  %v11754 = vpop.f32.mrb[0].mxu0
  %v11755 = vadd.f32 0.0, %v11754
  %v11756 = vpop.f32.mrb[0].mxu0
  %11757 = vmatprep.mubr.f32.mxu0 0.0
  %11758 = vmatmul.mubr.f32.gmra.mrb[0].mxu0 %v11500
  %v11759 = vpop.f32.mrb[0].mxu0
  %v11760 = vadd.f32 0.0, %v11759
  %v11761 = vpop.f32.mrb[0].mxu0
  %11762 = vmatprep.mubr.f32.mxu0 0.0
  %11763 = vmatmul.mubr.f32.gmra.mrb[0].mxu0 %v11503
  %v11764 = vpop.f32.mrb[0].mxu0
  %v11765 = vadd.f32 0.0, %v11764
  %v11766 = vpop.f32.mrb[0].mxu0
  %11767 = vmatprep.mubr.f32.mxu0 0.0
  %11768 = vmatmul.mubr.f32.gmra.mrb[0].mxu0 %v11506
  %v11769 = vpop.f32.mrb[0].mxu0
  %v11770 = vadd.f32 0.0, %v11769
  %v11771 = vpop.f32.mrb[0].mxu0
  %11772 = vmatprep.mubr.f32.mxu0 0.0
  %11773 = vmatmul.mubr.f32.gmra.mrb[0].mxu0 %v11509
  %v11774 = vpop.f32.mrb[0].mxu0
  %v11775 = vadd.f32 0.0, %v11774
  %v11776 = vpop.f32.mrb[0].mxu0
  %11777 = vmatprep.mubr.f32.mxu0 0.0
  %11778 = vmatmul.mubr.f32.gmra.mrb[0].mxu0 %v11512
  %v11779 = vpop.f32.mrb[0].mxu0
  %v11780 = vadd.f32 0.0, %v11779
  %v11781 = vpop.f32.mrb[0].mxu0
  %11782 = vmatprep.mubr.f32.mxu0 0.0
  %11783 = vmatmul.mubr.f32.gmra.mrb[0].mxu0 %v11515
  %v11784 = vpop.f32.mrb[0].mxu0
  %v11785 = vadd.f32 0.0, %v11784
  %v11786 = vpop.f32.mrb[0].mxu0
  %11787 = vmatprep.mubr.f32.mxu0 0.0
  %11788 = vmatmul.mubr.f32.gmra.mrb[0].mxu0 %v11518
  %v11789 = vpop.f32.mrb[0].mxu0
  %v11790 = vadd.f32 0.0, %v11789
  %v11791 = vpop.f32.mrb[0].mxu0
  %11792 = vmatprep.mubr.f32.mxu0 0.0
  %11793 = vmatmul.mubr.f32.gmra.mrb[0].mxu0 %v11521
  %v11794 = vpop.f32.mrb[0].mxu0
  %v11795 = vadd.f32 0.0, %v11794
  %v11796 = vpop.f32.mrb[0].mxu0
  %11797 = vmatprep.mubr.f32.mxu0 0.0
  %11798 = vmatmul.mubr.f32.gmra.mrb[0].mxu0 %v11524
  %v11799 = vpop.f32.mrb[0].mxu0
  %v11800 = vadd.f32 0.0, %v11799
  %v11801 = vpop.f32.mrb[0].mxu0
  %11802 = vmatprep.mubr.f32.mxu0 0.0
  %11803 = vmatmul.mubr.f32.gmra.mrb[0].mxu0 %v11527
  %v11804 = vpop.f32.mrb[0].mxu0
  %v11805 = vadd.f32 0.0, %v11804
  %v11806 = vpop.f32.mrb[0].mxu0
  %11807 = vmatprep.mubr.f32.mxu0 0.0
  %11808 = vmatmul.mubr.f32.gmra.mrb[0].mxu0 %v11530
  %v11809 = vpop.f32.mrb[0].mxu0
  %v11810 = vadd.f32 0.0, %v11809
  %v11811 = vpop.f32.mrb[0].mxu0
  %11812 = vmatprep.mubr.f32.mxu0 0.0
  %11813 = vmatmul.mubr.f32.gmra.mrb[0].mxu0 %v11533
  %v11814 = vpop.f32.mrb[0].mxu0
  %v11815 = vadd.f32 0.0, %v11814
  %v11816 = vpop.f32.mrb[0].mxu0
  %11817 = vmatprep.mubr.f32.mxu0 0.0
  %11818 = vmatmul.mubr.f32.gmra.mrb[0].mxu0 %v11536
  %v11819 = vpop.f32.mrb[0].mxu0
  %v11820 = vadd.f32 0.0, %v11819
  %v11821 = vpop.f32.mrb[0].mxu0
  %11822 = vmatprep.mubr.f32.mxu0 0.0
  %11823 = vmatmul.mubr.f32.gmra.mrb[0].mxu0 %v11539
  %v11824 = vpop.f32.mrb[0].mxu0
  %v11825 = vadd.f32 0.0, %v11824
  %v11826 = vpop.f32.mrb[0].mxu0
  %11827 = vmatprep.mubr.f32.mxu0 0.0
  %11828 = vmatmul.mubr.f32.gmra.mrb[0].mxu0 %v11542
  %v11829 = vpop.f32.mrb[0].mxu0
  %v11830 = vadd.f32 0.0, %v11829
  %v11831 = vpop.f32.mrb[0].mxu0
  %11832 = vmatprep.mubr.f32.mxu0 0.0
  %11833 = vmatmul.mubr.f32.gmra.mrb[0].mxu0 %v11545
  %v11834 = vpop.f32.mrb[0].mxu0
  %v11835 = vadd.f32 0.0, %v11834
  %v11836 = vpop.f32.mrb[0].mxu0
  %11837 = vmatprep.mubr.f32.mxu0 0.0
  %11838 = vmatmul.mubr.f32.gmra.mrb[0].mxu0 %v11548
  %v11839 = vpop.f32.mrb[0].mxu0
  %v11840 = vadd.f32 0.0, %v11839
  %v11841 = vpop.f32.mrb[0].mxu0
  %11842 = vmatprep.mubr.f32.mxu0 0.0
  %11843 = vmatmul.mubr.f32.gmra.mrb[0].mxu0 %v11551
  %v11844 = vpop.f32.mrb[0].mxu0
  %v11845 = vadd.f32 0.0, %v11844
  %v11846 = vpop.f32.mrb[0].mxu0
  %11847 = vmatprep.mubr.f32.mxu0 0.0
  %11848 = vmatmul.mubr.f32.gmra.mrb[0].mxu0 %v11554
  %v11849 = vpop.f32.mrb[0].mxu0
  %v11850 = vadd.f32 0.0, %v11849
  %v11851 = vpop.f32.mrb[0].mxu0
  %11852 = vmatprep.mubr.f32.mxu0 0.0
  %11853 = vmatmul.mubr.f32.gmra.mrb[0].mxu0 %v11557
  %v11854 = vpop.f32.mrb[0].mxu0
  %v11855 = vadd.f32 0.0, %v11854
  %v11856 = vpop.f32.mrb[0].mxu0
  %11857 = vmatprep.mubr.f32.mxu0 0.0
  %11858 = vmatmul.mubr.f32.gmra.mrb[0].mxu0 %v11560
  %v11859 = vpop.f32.mrb[0].mxu0
  %v11860 = vadd.f32 0.0, %v11859
  %v11861 = vpop.f32.mrb[0].mxu0
  %11862 = vmatprep.mubr.f32.mxu0 0.0
  %11863 = vmatmul.mubr.f32.gmra.mrb[0].mxu0 %v11563
  %v11864 = vpop.f32.mrb[0].mxu0
  %v11865 = vadd.f32 0.0, %v11864
  %v11866 = vpop.f32.mrb[0].mxu0
  %11867 = vmatprep.mubr.f32.mxu0 0.0
  %11868 = vmatmul.mubr.f32.gmra.mrb[0].mxu0 %v11566
  %v11869 = vpop.f32.mrb[0].mxu0
  %v11870 = vadd.f32 0.0, %v11869
  %v11871 = vpop.f32.mrb[0].mxu0
  %11872 = vmatprep.mubr.f32.mxu0 0.0
  %11873 = vmatmul.mubr.f32.gmra.mrb[0].mxu0 %v11569
  %v11874 = vpop.f32.mrb[0].mxu0
  %v11875 = vadd.f32 0.0, %v11874
  %v11876 = vpop.f32.mrb[0].mxu0
  %11877 = vmatprep.mubr.f32.mxu0 0.0
  %11878 = vmatmul.mubr.f32.gmra.mrb[0].mxu0 %v11572
  %v11879 = vpop.f32.mrb[0].mxu0
  %v11880 = vadd.f32 0.0, %v11879
  %v11881 = vpop.f32.mrb[0].mxu0
  %11882 = vmatprep.mubr.f32.mxu0 0.0
  %11883 = vmatmul.mubr.f32.gmra.mrb[0].mxu0 %v11575
  %v11884 = vpop.f32.mrb[0].mxu0
  %v11885 = vadd.f32 0.0, %v11884
  %v11886 = vpop.f32.mrb[0].mxu0
  %11887 = vmatprep.mubr.f32.mxu0 0.0
  %11888 = vmatmul.mubr.f32.gmra.mrb[0].mxu0 %v11578
  %v11889 = vpop.f32.mrb[0].mxu0
  %v11890 = vadd.f32 0.0, %v11889
  %v11891 = vpop.f32.mrb[0].mxu0
  %11892 = vmatprep.mubr.f32.mxu0 0.0
  %11893 = vmatmul.mubr.f32.gmra.mrb[0].mxu0 %v11581
  %v11894 = vpop.f32.mrb[0].mxu0
  %v11895 = vadd.f32 0.0, %v11894
  %v11896 = vpop.f32.mrb[0].mxu0
  %11897 = vmatprep.mubr.f32.mxu0 0.0
  %11898 = vmatmul.mubr.f32.gmra.mrb[0].mxu0 %v11584
  %v11899 = vpop.f32.mrb[0].mxu0
  %v11900 = vadd.f32 0.0, %v11899
  %v11901 = vpop.f32.mrb[0].mxu0
  %11902 = vmatprep.mubr.f32.mxu0 0.0
  %11903 = vmatmul.mubr.f32.gmra.mrb[0].mxu0 %v11587
  %v11904 = vpop.f32.mrb[0].mxu0
  %v11905 = vadd.f32 0.0, %v11904
  %v11906 = vpop.f32.mrb[0].mxu0
  %11907 = vmatprep.mubr.f32.mxu0 0.0
  %11908 = vmatmul.mubr.f32.gmra.mrb[0].mxu0 %v11590
  %v11909 = vpop.f32.mrb[0].mxu0
  %v11910 = vadd.f32 0.0, %v11909
  %v11911 = vpop.f32.mrb[0].mxu0
  %11912 = vmatprep.mubr.f32.mxu0 0.0
  %11913 = vmatmul.mubr.f32.gmra.mrb[0].mxu0 %v11593
  %v11914 = vpop.f32.mrb[0].mxu0
  %v11915 = vadd.f32 0.0, %v11914
  %v11916 = vpop.f32.mrb[0].mxu0
  %11917 = vmatprep.mubr.f32.mxu0 0.0
  %11918 = vmatmul.mubr.f32.gmra.mrb[0].mxu0 %v11596
  %v11919 = vpop.f32.mrb[0].mxu0
  %v11920 = vadd.f32 0.0, %v11919
  %v11921 = vpop.f32.mrb[0].mxu0
  %11922 = vmatprep.mubr.f32.mxu0 0.0
  %11923 = vmatmul.mubr.f32.gmra.mrb[0].mxu0 %v11599
  %v11924 = vpop.f32.mrb[0].mxu0
  %v11925 = vadd.f32 0.0, %v11924
  %v11926 = vpop.f32.mrb[0].mxu0
  %11927 = vmatprep.mubr.f32.mxu0 0.0
  %11928 = vmatmul.mubr.f32.gmra.mrb[0].mxu0 %v11602
  %v11929 = vpop.f32.mrb[0].mxu0
  %v11930 = vadd.f32 0.0, %v11929
  %v11931 = vpop.f32.mrb[0].mxu0
  %11932 = vmatprep.mubr.f32.mxu0 0.0
  %11933 = vmatmul.mubr.f32.gmra.mrb[0].mxu0 %v11605
  %v11934 = vpop.f32.mrb[0].mxu0
  %v11935 = vadd.f32 0.0, %v11934
  %v11936 = vpop.f32.mrb[0].mxu0
  %11937 = vmatprep.mubr.f32.mxu0 0.0
  %11938 = vmatmul.mubr.f32.gmra.mrb[0].mxu0 %v11608
  %v11939 = vpop.f32.mrb[0].mxu0
  %v11940 = vadd.f32 0.0, %v11939
  %v11941 = vpop.f32.mrb[0].mxu0
  %11942 = vmatprep.mubr.f32.mxu0 0.0
  %11943 = vmatmul.mubr.f32.gmra.mrb[0].mxu0 %v11611
  %v11944 = vpop.f32.mrb[0].mxu0
  %v11945 = vadd.f32 0.0, %v11944
  %v11946 = vpop.f32.mrb[0].mxu0
  %11947 = vmatprep.mubr.f32.mxu0 0.0
  %11948 = vmatmul.mubr.f32.gmra.mrb[0].mxu0 %v11614
  %v11949 = vpop.f32.mrb[0].mxu0
  %v11950 = vadd.f32 0.0, %v11949
  %v11951 = vpop.f32.mrb[0].mxu0
  %11952 = vmatprep.mubr.f32.mxu0 0.0
  %11953 = vmatmul.mubr.f32.gmra.mrb[0].mxu0 %v11617
  %v11954 = vpop.f32.mrb[0].mxu0
  %v11955 = vadd.f32 0.0, %v11954
  %v11956 = vpop.f32.mrb[0].mxu0
  %11957 = vmatprep.mubr.f32.mxu0 0.0
  %11958 = vmatmul.mubr.f32.gmra.mrb[0].mxu0 %v11620
  %v11959 = vpop.f32.mrb[0].mxu0
  %v11960 = vadd.f32 0.0, %v11959
  %v11961 = vpop.f32.mrb[0].mxu0
  %11962 = vmatprep.mubr.f32.mxu0 0.0
  %11963 = vmatmul.mubr.f32.gmra.mrb[0].mxu0 %v11623
  %v11964 = vpop.f32.mrb[0].mxu0
  %v11965 = vadd.f32 0.0, %v11964
  %v11966 = vpop.f32.mrb[0].mxu0
  %11967 = vmatprep.mubr.f32.mxu0 0.0
  %11968 = vmatmul.mubr.f32.gmra.mrb[0].mxu0 %v11626
  %v11969 = vpop.f32.mrb[0].mxu0
  %v11970 = vadd.f32 0.0, %v11969
  %v11971 = vpop.f32.mrb[0].mxu0
  %11972 = vmatprep.mubr.f32.mxu0 0.0
  %11973 = vmatmul.mubr.f32.gmra.mrb[0].mxu0 %v11629
  %v11974 = vpop.f32.mrb[0].mxu0
  %v11975 = vadd.f32 0.0, %v11974
  %v11976 = vpop.f32.mrb[0].mxu0
  %11977 = vmatprep.mubr.f32.mxu0 0.0
  %11978 = vmatmul.mubr.f32.gmra.mrb[0].mxu0 %v11632
  %v11979 = vpop.f32.mrb[0].mxu0
  %v11980 = vadd.f32 0.0, %v11979
  %v11981 = vpop.f32.mrb[0].mxu0
  %11982 = vmatprep.mubr.f32.mxu0 0.0
  %11983 = vmatmul.mubr.f32.gmra.mrb[0].mxu0 %v11635
  %v11984 = vpop.f32.mrb[0].mxu0
  %v11985 = vadd.f32 0.0, %v11984
  %v11986 = vpop.f32.mrb[0].mxu0
  %11987 = vmatprep.mubr.f32.mxu0 0.0
  %11988 = vmatmul.mubr.f32.gmra.mrb[0].mxu0 %v11638
  %v11989 = vpop.f32.mrb[0].mxu0
  %v11990 = vadd.f32 0.0, %v11989
  %v11991 = vpop.f32.mrb[0].mxu0
  %11992 = vmatprep.mubr.f32.mxu0 0.0
  %11993 = vmatmul.mubr.f32.gmra.mrb[0].mxu0 %v11641
  %v11994 = vpop.f32.mrb[0].mxu0
  %v11995 = vadd.f32 0.0, %v11994
  %v11996 = vpop.f32.mrb[0].mxu0
  %11997 = vmatprep.mubr.f32.mxu0 0.0
  %11998 = vmatmul.mubr.f32.gmra.mrb[0].mxu0 %v11644
  %v11999 = vpop.f32.mrb[0].mxu0
  %v12000 = vadd.f32 0.0, %v11999
  %v12001 = vpop.f32.mrb[0].mxu0
  %12002 = vmatprep.mubr.f32.mxu0 0.0
  %12003 = vmatmul.mubr.f32.gmra.mrb[0].mxu0 %v11647
  %v12004 = vpop.f32.mrb[0].mxu0
  %v12005 = vadd.f32 0.0, %v12004
  %v12006 = vpop.f32.mrb[0].mxu0
  %12007 = vmatprep.mubr.f32.mxu0 0.0
  %12008 = vmatmul.mubr.f32.gmra.mrb[0].mxu0 %v11650
  %v12009 = vpop.f32.mrb[0].mxu0
  %v12010 = vadd.f32 0.0, %v12009
  %v12011 = vpop.f32.mrb[0].mxu0
  %12012 = vmatprep.mubr.f32.mxu0 0.0
  %12013 = vmatmul.mubr.f32.gmra.mrb[0].mxu0 %v11653
  %v12014 = vpop.f32.mrb[0].mxu0
  %v12015 = vadd.f32 0.0, %v12014
  %v12016 = vpop.f32.mrb[0].mxu0
  %12017 = vmatprep.mubr.f32.mxu0 0.0
  %12018 = vmatmul.mubr.f32.gmra.mrb[0].mxu0 %v11656
  %v12019 = vpop.f32.mrb[0].mxu0
  %v12020 = vadd.f32 0.0, %v12019
  %v12021 = vpop.f32.mrb[0].mxu0
  %12022 = vmatprep.mubr.f32.mxu0 0.0
  %12023 = vmatmul.mubr.f32.gmra.mrb[0].mxu0 %v11659
  %v12024 = vpop.f32.mrb[0].mxu0
  %v12025 = vadd.f32 0.0, %v12024
  %v12026 = vpop.f32.mrb[0].mxu0
  %12027 = vmatprep.mubr.f32.mxu0 0.0
  %12028 = vmatmul.mubr.f32.gmra.mrb[0].mxu0 %v11662
  %v12029 = vpop.f32.mrb[0].mxu0
  %v12030 = vadd.f32 0.0, %v12029
  %v12031 = vpop.f32.mrb[0].mxu0
  %12032 = vmatprep.mubr.f32.mxu0 0.0
  %12033 = vmatmul.mubr.f32.gmra.mrb[0].mxu0 %v11665
  %v12034 = vpop.f32.mrb[0].mxu0
  %v12035 = vadd.f32 0.0, %v12034
  %v12036 = vpop.f32.mrb[0].mxu0
  %12037 = vmatprep.mubr.f32.mxu0 0.0
  %12038 = vmatmul.mubr.f32.gmra.mrb[0].mxu0 %v11668
  %v12039 = vpop.f32.mrb[0].mxu0
  %v12040 = vadd.f32 0.0, %v12039
  %v12041 = vpop.f32.mrb[0].mxu0
  %12042 = vmatprep.mubr.f32.mxu0 0.0
  %12043 = vmatmul.mubr.f32.gmra.mrb[0].mxu0 %v11671
  %v12044 = vpop.f32.mrb[0].mxu0
  %v12045 = vadd.f32 0.0, %v12044
  %v12046 = vpop.f32.mrb[0].mxu0
  %12047 = vmatprep.mubr.f32.mxu0 0.0
  %12048 = vmatmul.mubr.f32.gmra.mrb[0].mxu0 %v11674
  %v12049 = vpop.f32.mrb[0].mxu0
  %v12050 = vadd.f32 0.0, %v12049
  %v12051 = vpop.f32.mrb[0].mxu0
  %12052 = vmatprep.mubr.f32.mxu0 0.0
  %12053 = vmatmul.mubr.f32.gmra.mrb[0].mxu0 %v11677
  %v12054 = vpop.f32.mrb[0].mxu0
  %v12055 = vadd.f32 0.0, %v12054
  %v12056 = vpop.f32.mrb[0].mxu0
  %12057 = vmatprep.mubr.f32.mxu0 0.0
  %12058 = vmatmul.mubr.f32.gmra.mrb[0].mxu0 %v11680
  %v12059 = vpop.f32.mrb[0].mxu0
  %v12060 = vadd.f32 0.0, %v12059
  %v12061 = vpop.f32.mrb[0].mxu0
  %12062 = vmatprep.mubr.f32.mxu0 0.0
  %12063 = vmatmul.mubr.f32.gmra.mrb[0].mxu0 %v11683
  %v12064 = vpop.f32.mrb[0].mxu0
  %v12065 = vadd.f32 0.0, %v12064
  %v12066 = vpop.f32.mrb[0].mxu0
  %12067 = vmatprep.mubr.f32.mxu0 0.0
  %12068 = vmatmul.mubr.f32.gmra.mrb[0].mxu0 %v11686
  %v12069 = vpop.f32.mrb[0].mxu0
  %v12070 = vadd.f32 0.0, %v12069
  %v12071 = vpop.f32.mrb[0].mxu0
  %12072 = vdwg.mxu0
  %v12073 = vadd.f32 %v11364, %v11755
  %v12074 = vadd.f32 %v11365, %v11760
  %v12075 = vadd.f32 %v11366, %v11765
  %v12076 = vadd.f32 %v11367, %v11770
  %v12077 = vadd.f32 %v11368, %v11775
  %v12078 = vadd.f32 %v11369, %v11780
  %v12079 = vadd.f32 %v11370, %v11785
  %v12080 = vadd.f32 %v11371, %v11790
  %v12081 = vadd.f32 %v11372, %v11795
  %v12082 = vadd.f32 %v11373, %v11800
  %v12083 = vadd.f32 %v11374, %v11805
  %v12084 = vadd.f32 %v11375, %v11810
  %v12085 = vadd.f32 %v11376, %v11815
  %v12086 = vadd.f32 %v11377, %v11820
  %v12087 = vadd.f32 %v11378, %v11825
  %v12088 = vadd.f32 %v11379, %v11830
  %v12089 = vadd.f32 %v11380, %v11835
  %v12090 = vadd.f32 %v11381, %v11840
  %v12091 = vadd.f32 %v11382, %v11845
  %v12092 = vadd.f32 %v11383, %v11850
  %v12093 = vadd.f32 %v11384, %v11855
  %v12094 = vadd.f32 %v11385, %v11860
  %v12095 = vadd.f32 %v11386, %v11865
  %v12096 = vadd.f32 %v11387, %v11870
  %v12097 = vadd.f32 %v11388, %v11875
  %v12098 = vadd.f32 %v11389, %v11880
  %v12099 = vadd.f32 %v11390, %v11885
  %v12100 = vadd.f32 %v11391, %v11890
  %v12101 = vadd.f32 %v11392, %v11895
  %v12102 = vadd.f32 %v11393, %v11900
  %v12103 = vadd.f32 %v11394, %v11905
  %v12104 = vadd.f32 %v11395, %v11910
  %v12105 = vadd.f32 %v11396, %v11915
  %v12106 = vadd.f32 %v11397, %v11920
  %v12107 = vadd.f32 %v11398, %v11925
  %v12108 = vadd.f32 %v11399, %v11930
  %v12109 = vadd.f32 %v11400, %v11935
  %v12110 = vadd.f32 %v11401, %v11940
  %v12111 = vadd.f32 %v11402, %v11945
  %v12112 = vadd.f32 %v11403, %v11950
  %v12113 = vadd.f32 %v11404, %v11955
  %v12114 = vadd.f32 %v11405, %v11960
  %v12115 = vadd.f32 %v11406, %v11965
  %v12116 = vadd.f32 %v11407, %v11970
  %v12117 = vadd.f32 %v11408, %v11975
  %v12118 = vadd.f32 %v11409, %v11980
  %v12119 = vadd.f32 %v11410, %v11985
  %v12120 = vadd.f32 %v11411, %v11990
  %v12121 = vadd.f32 %v11412, %v11995
  %v12122 = vadd.f32 %v11413, %v12000
  %v12123 = vadd.f32 %v11414, %v12005
  %v12124 = vadd.f32 %v11415, %v12010
  %v12125 = vadd.f32 %v11416, %v12015
  %v12126 = vadd.f32 %v11417, %v12020
  %v12127 = vadd.f32 %v11418, %v12025
  %v12128 = vadd.f32 %v11419, %v12030
  %v12129 = vadd.f32 %v11420, %v12035
  %v12130 = vadd.f32 %v11421, %v12040
  %v12131 = vadd.f32 %v11422, %v12045
  %v12132 = vadd.f32 %v11423, %v12050
  %v12133 = vadd.f32 %v11424, %v12055
  %v12134 = vadd.f32 %v11425, %v12060
  %v12135 = vadd.f32 %v11426, %v12065
  %v12136 = vadd.f32 %v11427, %v12070
  %v12137 = vld [vmem:[#allocation2 + $0x29] sm:$0xff]
  %v12138 = vld [vmem:[#allocation2 + $0x31] sm:$0xff]
  %v12139 = vld [vmem:[#allocation2 + $0x39] sm:$0xff]
  %v12140 = vld [vmem:[#allocation2 + $0x41] sm:$0xff]
  %v12141 = vld [vmem:[#allocation2 + $0x49] sm:$0xff]
  %v12142 = vld [vmem:[#allocation2 + $0x51] sm:$0xff]
  %v12143 = vld [vmem:[#allocation2 + $0x59] sm:$0xff]
  %v12144 = vld [vmem:[#allocation2 + $0x61] sm:$0xff]
  %v12145 = vld [vmem:[#allocation2 + $0x69] sm:$0xff]
  %v12146 = vld [vmem:[#allocation2 + $0x71] sm:$0xff]
  %v12147 = vld [vmem:[#allocation2 + $0x79] sm:$0xff]
  %v12148 = vld [vmem:[#allocation2 + $0x81] sm:$0xff]
  %v12149 = vld [vmem:[#allocation2 + $0x89] sm:$0xff]
  %v12150 = vld [vmem:[#allocation2 + $0x91] sm:$0xff]
  %v12151 = vld [vmem:[#allocation2 + $0x99] sm:$0xff]
  %v12152 = vld [vmem:[#allocation2 + $0xa1] sm:$0xff]
  %v12153 = vld [vmem:[#allocation2 + $0xa9] sm:$0xff]
  %v12154 = vld [vmem:[#allocation2 + $0xb1] sm:$0xff]
  %v12155 = vld [vmem:[#allocation2 + $0xb9] sm:$0xff]
  %v12156 = vld [vmem:[#allocation2 + $0xc1] sm:$0xff]
  %v12157 = vld [vmem:[#allocation2 + $0xc9] sm:$0xff]
  %v12158 = vld [vmem:[#allocation2 + $0xd1] sm:$0xff]
  %v12159 = vld [vmem:[#allocation2 + $0xd9] sm:$0xff]
  %v12160 = vld [vmem:[#allocation2 + $0xe1] sm:$0xff]
  %v12161 = vld [vmem:[#allocation2 + $0xe9] sm:$0xff]
  %v12162 = vld [vmem:[#allocation2 + $0xf1] sm:$0xff]
  %v12163 = vld [vmem:[#allocation2 + $0xf9] sm:$0xff]
  %v12164 = vld [vmem:[#allocation2 + $0x101] sm:$0xff]
  %v12165 = vld [vmem:[#allocation2 + $0x109] sm:$0xff]
  %v12166 = vld [vmem:[#allocation2 + $0x111] sm:$0xff]
  %v12167 = vld [vmem:[#allocation2 + $0x119] sm:$0xff]
  %v12168 = vld [vmem:[#allocation2 + $0x121] sm:$0xff]
  %v12169 = vld [vmem:[#allocation2 + $0x129] sm:$0xff]
  %v12170 = vld [vmem:[#allocation2 + $0x131] sm:$0xff]
  %v12171 = vld [vmem:[#allocation2 + $0x139] sm:$0xff]
  %v12172 = vld [vmem:[#allocation2 + $0x141] sm:$0xff]
  %v12173 = vld [vmem:[#allocation2 + $0x149] sm:$0xff]
  %v12174 = vld [vmem:[#allocation2 + $0x151] sm:$0xff]
  %v12175 = vld [vmem:[#allocation2 + $0x159] sm:$0xff]
  %v12176 = vld [vmem:[#allocation2 + $0x161] sm:$0xff]
  %v12177 = vld [vmem:[#allocation2 + $0x169] sm:$0xff]
  %v12178 = vld [vmem:[#allocation2 + $0x171] sm:$0xff]
  %v12179 = vld [vmem:[#allocation2 + $0x179] sm:$0xff]
  %v12180 = vld [vmem:[#allocation2 + $0x181] sm:$0xff]
  %v12181 = vld [vmem:[#allocation2 + $0x189] sm:$0xff]
  %v12182 = vld [vmem:[#allocation2 + $0x191] sm:$0xff]
  %v12183 = vld [vmem:[#allocation2 + $0x199] sm:$0xff]
  %v12184 = vld [vmem:[#allocation2 + $0x1a1] sm:$0xff]
  %v12185 = vld [vmem:[#allocation2 + $0x1a9] sm:$0xff]
  %v12186 = vld [vmem:[#allocation2 + $0x1b1] sm:$0xff]
  %v12187 = vld [vmem:[#allocation2 + $0x1b9] sm:$0xff]
  %v12188 = vld [vmem:[#allocation2 + $0x1c1] sm:$0xff]
  %v12189 = vld [vmem:[#allocation2 + $0x1c9] sm:$0xff]
  %v12190 = vld [vmem:[#allocation2 + $0x1d1] sm:$0xff]
  %v12191 = vld [vmem:[#allocation2 + $0x1d9] sm:$0xff]
  %v12192 = vld [vmem:[#allocation2 + $0x1e1] sm:$0xff]
  %v12193 = vld [vmem:[#allocation2 + $0x1e9] sm:$0xff]
  %v12194 = vld [vmem:[#allocation2 + $0x1f1] sm:$0xff]
  %v12195 = vld [vmem:[#allocation2 + $0x1f9] sm:$0xff]
  %v12196 = vld [vmem:[#allocation2 + $0x201] sm:$0xff]
  %v12197 = vld [vmem:[#allocation2 + $0x209] sm:$0xff]
  %v12198 = vld [vmem:[#allocation2 + $0x211] sm:$0xff]
  %v12199 = vld [vmem:[#allocation2 + $0x219] sm:$0xff]
  %v12200 = vld [vmem:[#allocation2 + $0x221] sm:$0xff]
  %v12201 = vld [vmem:[%s4 + $0x100] sm:$0xff]
  %v12202 = vld [vmem:[%s4 + $0x108] sm:$0xff]
  %v12203 = vld [vmem:[%s4 + $0x110] sm:$0xff]
  %v12204 = vld [vmem:[%s4 + $0x118] sm:$0xff]
  %v12206 = vsel %vm6522, %v12137, 0
  %v12209 = vsel %vm6522, %v12138, 0
  %v12212 = vsel %vm6522, %v12139, 0
  %v12215 = vsel %vm6522, %v12140, 0
  %v12218 = vsel %vm6522, %v12141, 0
  %v12221 = vsel %vm6522, %v12142, 0
  %v12224 = vsel %vm6522, %v12143, 0
  %v12227 = vsel %vm6522, %v12144, 0
  %v12230 = vsel %vm6522, %v12145, 0
  %v12233 = vsel %vm6522, %v12146, 0
  %v12236 = vsel %vm6522, %v12147, 0
  %v12239 = vsel %vm6522, %v12148, 0
  %v12242 = vsel %vm6522, %v12149, 0
  %v12245 = vsel %vm6522, %v12150, 0
  %v12248 = vsel %vm6522, %v12151, 0
  %v12251 = vsel %vm6522, %v12152, 0
  %v12254 = vsel %vm6522, %v12153, 0
  %v12257 = vsel %vm6522, %v12154, 0
  %v12260 = vsel %vm6522, %v12155, 0
  %v12263 = vsel %vm6522, %v12156, 0
  %v12266 = vsel %vm6522, %v12157, 0
  %v12269 = vsel %vm6522, %v12158, 0
  %v12272 = vsel %vm6522, %v12159, 0
  %v12275 = vsel %vm6522, %v12160, 0
  %v12278 = vsel %vm6522, %v12161, 0
  %v12281 = vsel %vm6522, %v12162, 0
  %v12284 = vsel %vm6522, %v12163, 0
  %v12287 = vsel %vm6522, %v12164, 0
  %v12290 = vsel %vm6522, %v12165, 0
  %v12293 = vsel %vm6522, %v12166, 0
  %v12296 = vsel %vm6522, %v12167, 0
  %v12299 = vsel %vm6522, %v12168, 0
  %v12302 = vsel %vm6522, %v12169, 0
  %v12305 = vsel %vm6522, %v12170, 0
  %v12308 = vsel %vm6522, %v12171, 0
  %v12311 = vsel %vm6522, %v12172, 0
  %v12314 = vsel %vm6522, %v12173, 0
  %v12317 = vsel %vm6522, %v12174, 0
  %v12320 = vsel %vm6522, %v12175, 0
  %v12323 = vsel %vm6522, %v12176, 0
  %v12326 = vsel %vm6522, %v12177, 0
  %v12329 = vsel %vm6522, %v12178, 0
  %v12332 = vsel %vm6522, %v12179, 0
  %v12335 = vsel %vm6522, %v12180, 0
  %v12338 = vsel %vm6522, %v12181, 0
  %v12341 = vsel %vm6522, %v12182, 0
  %v12344 = vsel %vm6522, %v12183, 0
  %v12347 = vsel %vm6522, %v12184, 0
  %v12350 = vsel %vm6522, %v12185, 0
  %v12353 = vsel %vm6522, %v12186, 0
  %v12356 = vsel %vm6522, %v12187, 0
  %v12359 = vsel %vm6522, %v12188, 0
  %v12362 = vsel %vm6522, %v12189, 0
  %v12365 = vsel %vm6522, %v12190, 0
  %v12368 = vsel %vm6522, %v12191, 0
  %v12371 = vsel %vm6522, %v12192, 0
  %v12374 = vsel %vm6522, %v12193, 0
  %v12377 = vsel %vm6522, %v12194, 0
  %v12380 = vsel %vm6522, %v12195, 0
  %v12383 = vsel %vm6522, %v12196, 0
  %v12386 = vsel %vm6522, %v12197, 0
  %v12389 = vsel %vm6522, %v12198, 0
  %v12392 = vsel %vm6522, %v12199, 0
  %v12395 = vsel %vm6522, %v12200, 0
  %12397 = vmatprep.subr.mxu0 0.0
  %12398 = vmatpush1.msra.mxu0 %v12201
  %12399 = vmatprep.subr.mxu0 0.0
  %12400 = vmatpush1.msra.mxu0 %v12202
  %12401 = vmatprep.subr.mxu0 0.0
  %12402 = vmatpush1.msra.mxu0 %v12203
  %12403 = vmatprep.subr.mxu0 0.0
  %12404 = vmatpush1.msra.mxu0 %v12204
  %12405 = vmatprep.subr.mxu0 0.0
  %12406 = vmatpush1.msra.mxu0 0.0
  %12407 = vmatprep.subr.mxu0 0.0
  %12408 = vmatpush1.msra.mxu0 0.0
  %12409 = vmatprep.subr.mxu0 0.0
  %12410 = vmatpush1.msra.mxu0 0.0
  %12411 = vmatprep.subr.mxu0 0.0
  %12412 = vmatpush1.msra.mxu0 0.0
  %12413 = vmatprep.subr.mxu0 0.0
  %12414 = vmatpush1.msra.mxu0 0.0
  %12415 = vmatprep.subr.mxu0 0.0
  %12416 = vmatpush1.msra.mxu0 0.0
  %12417 = vmatprep.subr.mxu0 0.0
  %12418 = vmatpush1.msra.mxu0 0.0
  %12419 = vmatprep.subr.mxu0 0.0
  %12420 = vmatpush1.msra.mxu0 0.0
  %12421 = vmatprep.subr.mxu0 0.0
  %12422 = vmatpush1.msra.mxu0 0.0
  %12423 = vmatprep.subr.mxu0 0.0
  %12424 = vmatpush1.msra.mxu0 0.0
  %12425 = vmatprep.subr.mxu0 0.0
  %12426 = vmatpush1.msra.mxu0 0.0
  %12427 = vmatprep.subr.mxu0 0.0
  %12428 = vmatpush1.msra.mxu0 0.0
  %12429 = vmatprep.subr.mxu0 0.0
  %12430 = vmatpush1.msra.mxu0 0.0
  %12431 = vmatprep.subr.mxu0 0.0
  %12432 = vmatpush1.msra.mxu0 0.0
  %12433 = vmatprep.subr.mxu0 0.0
  %12434 = vmatpush1.msra.mxu0 0.0
  %12435 = vmatprep.subr.mxu0 0.0
  %12436 = vmatpush1.msra.mxu0 0.0
  %12437 = vmatprep.subr.mxu0 0.0
  %12438 = vmatpush1.msra.mxu0 0.0
  %12439 = vmatprep.subr.mxu0 0.0
  %12440 = vmatpush1.msra.mxu0 0.0
  %12441 = vmatprep.subr.mxu0 0.0
  %12442 = vmatpush1.msra.mxu0 0.0
  %12443 = vmatprep.subr.mxu0 0.0
  %12444 = vmatpush1.msra.mxu0 0.0
  %12445 = vmatprep.subr.mxu0 0.0
  %12446 = vmatpush1.msra.mxu0 0.0
  %12447 = vmatprep.subr.mxu0 0.0
  %12448 = vmatpush1.msra.mxu0 0.0
  %12449 = vmatprep.subr.mxu0 0.0
  %12450 = vmatpush1.msra.mxu0 0.0
  %12451 = vmatprep.subr.mxu0 0.0
  %12452 = vmatpush1.msra.mxu0 0.0
  %12453 = vmatprep.subr.mxu0 0.0
  %12454 = vmatpush1.msra.mxu0 0.0
  %12455 = vmatprep.subr.mxu0 0.0
  %12456 = vmatpush1.msra.mxu0 0.0
  %12457 = vmatprep.subr.mxu0 0.0
  %12458 = vmatpush1.msra.mxu0 0.0
  %12459 = vmatprep.subr.mxu0 0.0
  %12460 = vmatpush1.msra.mxu0 0.0
  %12461 = vmatprep.mubr.f32.mxu0 0.0
  %12462 = vmatmul.mubr.f32.gmra.mrb[0].mxu0 %v12206
  %v12463 = vpop.f32.mrb[0].mxu0
  %v12464 = vadd.f32 0.0, %v12463
  %v12465 = vpop.f32.mrb[0].mxu0
  %12466 = vmatprep.mubr.f32.mxu0 0.0
  %12467 = vmatmul.mubr.f32.gmra.mrb[0].mxu0 %v12209
  %v12468 = vpop.f32.mrb[0].mxu0
  %v12469 = vadd.f32 0.0, %v12468
  %v12470 = vpop.f32.mrb[0].mxu0
  %12471 = vmatprep.mubr.f32.mxu0 0.0
  %12472 = vmatmul.mubr.f32.gmra.mrb[0].mxu0 %v12212
  %v12473 = vpop.f32.mrb[0].mxu0
  %v12474 = vadd.f32 0.0, %v12473
  %v12475 = vpop.f32.mrb[0].mxu0
  %12476 = vmatprep.mubr.f32.mxu0 0.0
  %12477 = vmatmul.mubr.f32.gmra.mrb[0].mxu0 %v12215
  %v12478 = vpop.f32.mrb[0].mxu0
  %v12479 = vadd.f32 0.0, %v12478
  %v12480 = vpop.f32.mrb[0].mxu0
  %12481 = vmatprep.mubr.f32.mxu0 0.0
  %12482 = vmatmul.mubr.f32.gmra.mrb[0].mxu0 %v12218
  %v12483 = vpop.f32.mrb[0].mxu0
  %v12484 = vadd.f32 0.0, %v12483
  %v12485 = vpop.f32.mrb[0].mxu0
  %12486 = vmatprep.mubr.f32.mxu0 0.0
  %12487 = vmatmul.mubr.f32.gmra.mrb[0].mxu0 %v12221
  %v12488 = vpop.f32.mrb[0].mxu0
  %v12489 = vadd.f32 0.0, %v12488
  %v12490 = vpop.f32.mrb[0].mxu0
  %12491 = vmatprep.mubr.f32.mxu0 0.0
  %12492 = vmatmul.mubr.f32.gmra.mrb[0].mxu0 %v12224
  %v12493 = vpop.f32.mrb[0].mxu0
  %v12494 = vadd.f32 0.0, %v12493
  %v12495 = vpop.f32.mrb[0].mxu0
  %12496 = vmatprep.mubr.f32.mxu0 0.0
  %12497 = vmatmul.mubr.f32.gmra.mrb[0].mxu0 %v12227
  %v12498 = vpop.f32.mrb[0].mxu0
  %v12499 = vadd.f32 0.0, %v12498
  %v12500 = vpop.f32.mrb[0].mxu0
  %12501 = vmatprep.mubr.f32.mxu0 0.0
  %12502 = vmatmul.mubr.f32.gmra.mrb[0].mxu0 %v12230
  %v12503 = vpop.f32.mrb[0].mxu0
  %v12504 = vadd.f32 0.0, %v12503
  %v12505 = vpop.f32.mrb[0].mxu0
  %12506 = vmatprep.mubr.f32.mxu0 0.0
  %12507 = vmatmul.mubr.f32.gmra.mrb[0].mxu0 %v12233
  %v12508 = vpop.f32.mrb[0].mxu0
  %v12509 = vadd.f32 0.0, %v12508
  %v12510 = vpop.f32.mrb[0].mxu0
  %12511 = vmatprep.mubr.f32.mxu0 0.0
  %12512 = vmatmul.mubr.f32.gmra.mrb[0].mxu0 %v12236
  %v12513 = vpop.f32.mrb[0].mxu0
  %v12514 = vadd.f32 0.0, %v12513
  %v12515 = vpop.f32.mrb[0].mxu0
  %12516 = vmatprep.mubr.f32.mxu0 0.0
  %12517 = vmatmul.mubr.f32.gmra.mrb[0].mxu0 %v12239
  %v12518 = vpop.f32.mrb[0].mxu0
  %v12519 = vadd.f32 0.0, %v12518
  %v12520 = vpop.f32.mrb[0].mxu0
  %12521 = vmatprep.mubr.f32.mxu0 0.0
  %12522 = vmatmul.mubr.f32.gmra.mrb[0].mxu0 %v12242
  %v12523 = vpop.f32.mrb[0].mxu0
  %v12524 = vadd.f32 0.0, %v12523
  %v12525 = vpop.f32.mrb[0].mxu0
  %12526 = vmatprep.mubr.f32.mxu0 0.0
  %12527 = vmatmul.mubr.f32.gmra.mrb[0].mxu0 %v12245
  %v12528 = vpop.f32.mrb[0].mxu0
  %v12529 = vadd.f32 0.0, %v12528
  %v12530 = vpop.f32.mrb[0].mxu0
  %12531 = vmatprep.mubr.f32.mxu0 0.0
  %12532 = vmatmul.mubr.f32.gmra.mrb[0].mxu0 %v12248
  %v12533 = vpop.f32.mrb[0].mxu0
  %v12534 = vadd.f32 0.0, %v12533
  %v12535 = vpop.f32.mrb[0].mxu0
  %12536 = vmatprep.mubr.f32.mxu0 0.0
  %12537 = vmatmul.mubr.f32.gmra.mrb[0].mxu0 %v12251
  %v12538 = vpop.f32.mrb[0].mxu0
  %v12539 = vadd.f32 0.0, %v12538
  %v12540 = vpop.f32.mrb[0].mxu0
  %12541 = vmatprep.mubr.f32.mxu0 0.0
  %12542 = vmatmul.mubr.f32.gmra.mrb[0].mxu0 %v12254
  %v12543 = vpop.f32.mrb[0].mxu0
  %v12544 = vadd.f32 0.0, %v12543
  %v12545 = vpop.f32.mrb[0].mxu0
  %12546 = vmatprep.mubr.f32.mxu0 0.0
  %12547 = vmatmul.mubr.f32.gmra.mrb[0].mxu0 %v12257
  %v12548 = vpop.f32.mrb[0].mxu0
  %v12549 = vadd.f32 0.0, %v12548
  %v12550 = vpop.f32.mrb[0].mxu0
  %12551 = vmatprep.mubr.f32.mxu0 0.0
  %12552 = vmatmul.mubr.f32.gmra.mrb[0].mxu0 %v12260
  %v12553 = vpop.f32.mrb[0].mxu0
  %v12554 = vadd.f32 0.0, %v12553
  %v12555 = vpop.f32.mrb[0].mxu0
  %12556 = vmatprep.mubr.f32.mxu0 0.0
  %12557 = vmatmul.mubr.f32.gmra.mrb[0].mxu0 %v12263
  %v12558 = vpop.f32.mrb[0].mxu0
  %v12559 = vadd.f32 0.0, %v12558
  %v12560 = vpop.f32.mrb[0].mxu0
  %12561 = vmatprep.mubr.f32.mxu0 0.0
  %12562 = vmatmul.mubr.f32.gmra.mrb[0].mxu0 %v12266
  %v12563 = vpop.f32.mrb[0].mxu0
  %v12564 = vadd.f32 0.0, %v12563
  %v12565 = vpop.f32.mrb[0].mxu0
  %12566 = vmatprep.mubr.f32.mxu0 0.0
  %12567 = vmatmul.mubr.f32.gmra.mrb[0].mxu0 %v12269
  %v12568 = vpop.f32.mrb[0].mxu0
  %v12569 = vadd.f32 0.0, %v12568
  %v12570 = vpop.f32.mrb[0].mxu0
  %12571 = vmatprep.mubr.f32.mxu0 0.0
  %12572 = vmatmul.mubr.f32.gmra.mrb[0].mxu0 %v12272
  %v12573 = vpop.f32.mrb[0].mxu0
  %v12574 = vadd.f32 0.0, %v12573
  %v12575 = vpop.f32.mrb[0].mxu0
  %12576 = vmatprep.mubr.f32.mxu0 0.0
  %12577 = vmatmul.mubr.f32.gmra.mrb[0].mxu0 %v12275
  %v12578 = vpop.f32.mrb[0].mxu0
  %v12579 = vadd.f32 0.0, %v12578
  %v12580 = vpop.f32.mrb[0].mxu0
  %12581 = vmatprep.mubr.f32.mxu0 0.0
  %12582 = vmatmul.mubr.f32.gmra.mrb[0].mxu0 %v12278
  %v12583 = vpop.f32.mrb[0].mxu0
  %v12584 = vadd.f32 0.0, %v12583
  %v12585 = vpop.f32.mrb[0].mxu0
  %12586 = vmatprep.mubr.f32.mxu0 0.0
  %12587 = vmatmul.mubr.f32.gmra.mrb[0].mxu0 %v12281
  %v12588 = vpop.f32.mrb[0].mxu0
  %v12589 = vadd.f32 0.0, %v12588
  %v12590 = vpop.f32.mrb[0].mxu0
  %12591 = vmatprep.mubr.f32.mxu0 0.0
  %12592 = vmatmul.mubr.f32.gmra.mrb[0].mxu0 %v12284
  %v12593 = vpop.f32.mrb[0].mxu0
  %v12594 = vadd.f32 0.0, %v12593
  %v12595 = vpop.f32.mrb[0].mxu0
  %12596 = vmatprep.mubr.f32.mxu0 0.0
  %12597 = vmatmul.mubr.f32.gmra.mrb[0].mxu0 %v12287
  %v12598 = vpop.f32.mrb[0].mxu0
  %v12599 = vadd.f32 0.0, %v12598
  %v12600 = vpop.f32.mrb[0].mxu0
  %12601 = vmatprep.mubr.f32.mxu0 0.0
  %12602 = vmatmul.mubr.f32.gmra.mrb[0].mxu0 %v12290
  %v12603 = vpop.f32.mrb[0].mxu0
  %v12604 = vadd.f32 0.0, %v12603
  %v12605 = vpop.f32.mrb[0].mxu0
  %12606 = vmatprep.mubr.f32.mxu0 0.0
  %12607 = vmatmul.mubr.f32.gmra.mrb[0].mxu0 %v12293
  %v12608 = vpop.f32.mrb[0].mxu0
  %v12609 = vadd.f32 0.0, %v12608
  %v12610 = vpop.f32.mrb[0].mxu0
  %12611 = vmatprep.mubr.f32.mxu0 0.0
  %12612 = vmatmul.mubr.f32.gmra.mrb[0].mxu0 %v12296
  %v12613 = vpop.f32.mrb[0].mxu0
  %v12614 = vadd.f32 0.0, %v12613
  %v12615 = vpop.f32.mrb[0].mxu0
  %12616 = vmatprep.mubr.f32.mxu0 0.0
  %12617 = vmatmul.mubr.f32.gmra.mrb[0].mxu0 %v12299
  %v12618 = vpop.f32.mrb[0].mxu0
  %v12619 = vadd.f32 0.0, %v12618
  %v12620 = vpop.f32.mrb[0].mxu0
  %12621 = vmatprep.mubr.f32.mxu0 0.0
  %12622 = vmatmul.mubr.f32.gmra.mrb[0].mxu0 %v12302
  %v12623 = vpop.f32.mrb[0].mxu0
  %v12624 = vadd.f32 0.0, %v12623
  %v12625 = vpop.f32.mrb[0].mxu0
  %12626 = vmatprep.mubr.f32.mxu0 0.0
  %12627 = vmatmul.mubr.f32.gmra.mrb[0].mxu0 %v12305
  %v12628 = vpop.f32.mrb[0].mxu0
  %v12629 = vadd.f32 0.0, %v12628
  %v12630 = vpop.f32.mrb[0].mxu0
  %12631 = vmatprep.mubr.f32.mxu0 0.0
  %12632 = vmatmul.mubr.f32.gmra.mrb[0].mxu0 %v12308
  %v12633 = vpop.f32.mrb[0].mxu0
  %v12634 = vadd.f32 0.0, %v12633
  %v12635 = vpop.f32.mrb[0].mxu0
  %12636 = vmatprep.mubr.f32.mxu0 0.0
  %12637 = vmatmul.mubr.f32.gmra.mrb[0].mxu0 %v12311
  %v12638 = vpop.f32.mrb[0].mxu0
  %v12639 = vadd.f32 0.0, %v12638
  %v12640 = vpop.f32.mrb[0].mxu0
  %12641 = vmatprep.mubr.f32.mxu0 0.0
  %12642 = vmatmul.mubr.f32.gmra.mrb[0].mxu0 %v12314
  %v12643 = vpop.f32.mrb[0].mxu0
  %v12644 = vadd.f32 0.0, %v12643
  %v12645 = vpop.f32.mrb[0].mxu0
  %12646 = vmatprep.mubr.f32.mxu0 0.0
  %12647 = vmatmul.mubr.f32.gmra.mrb[0].mxu0 %v12317
  %v12648 = vpop.f32.mrb[0].mxu0
  %v12649 = vadd.f32 0.0, %v12648
  %v12650 = vpop.f32.mrb[0].mxu0
  %12651 = vmatprep.mubr.f32.mxu0 0.0
  %12652 = vmatmul.mubr.f32.gmra.mrb[0].mxu0 %v12320
  %v12653 = vpop.f32.mrb[0].mxu0
  %v12654 = vadd.f32 0.0, %v12653
  %v12655 = vpop.f32.mrb[0].mxu0
  %12656 = vmatprep.mubr.f32.mxu0 0.0
  %12657 = vmatmul.mubr.f32.gmra.mrb[0].mxu0 %v12323
  %v12658 = vpop.f32.mrb[0].mxu0
  %v12659 = vadd.f32 0.0, %v12658
  %v12660 = vpop.f32.mrb[0].mxu0
  %12661 = vmatprep.mubr.f32.mxu0 0.0
  %12662 = vmatmul.mubr.f32.gmra.mrb[0].mxu0 %v12326
  %v12663 = vpop.f32.mrb[0].mxu0
  %v12664 = vadd.f32 0.0, %v12663
  %v12665 = vpop.f32.mrb[0].mxu0
  %12666 = vmatprep.mubr.f32.mxu0 0.0
  %12667 = vmatmul.mubr.f32.gmra.mrb[0].mxu0 %v12329
  %v12668 = vpop.f32.mrb[0].mxu0
  %v12669 = vadd.f32 0.0, %v12668
  %v12670 = vpop.f32.mrb[0].mxu0
  %12671 = vmatprep.mubr.f32.mxu0 0.0
  %12672 = vmatmul.mubr.f32.gmra.mrb[0].mxu0 %v12332
  %v12673 = vpop.f32.mrb[0].mxu0
  %v12674 = vadd.f32 0.0, %v12673
  %v12675 = vpop.f32.mrb[0].mxu0
  %12676 = vmatprep.mubr.f32.mxu0 0.0
  %12677 = vmatmul.mubr.f32.gmra.mrb[0].mxu0 %v12335
  %v12678 = vpop.f32.mrb[0].mxu0
  %v12679 = vadd.f32 0.0, %v12678
  %v12680 = vpop.f32.mrb[0].mxu0
  %12681 = vmatprep.mubr.f32.mxu0 0.0
  %12682 = vmatmul.mubr.f32.gmra.mrb[0].mxu0 %v12338
  %v12683 = vpop.f32.mrb[0].mxu0
  %v12684 = vadd.f32 0.0, %v12683
  %v12685 = vpop.f32.mrb[0].mxu0
  %12686 = vmatprep.mubr.f32.mxu0 0.0
  %12687 = vmatmul.mubr.f32.gmra.mrb[0].mxu0 %v12341
  %v12688 = vpop.f32.mrb[0].mxu0
  %v12689 = vadd.f32 0.0, %v12688
  %v12690 = vpop.f32.mrb[0].mxu0
  %12691 = vmatprep.mubr.f32.mxu0 0.0
  %12692 = vmatmul.mubr.f32.gmra.mrb[0].mxu0 %v12344
  %v12693 = vpop.f32.mrb[0].mxu0
  %v12694 = vadd.f32 0.0, %v12693
  %v12695 = vpop.f32.mrb[0].mxu0
  %12696 = vmatprep.mubr.f32.mxu0 0.0
  %12697 = vmatmul.mubr.f32.gmra.mrb[0].mxu0 %v12347
  %v12698 = vpop.f32.mrb[0].mxu0
  %v12699 = vadd.f32 0.0, %v12698
  %v12700 = vpop.f32.mrb[0].mxu0
  %12701 = vmatprep.mubr.f32.mxu0 0.0
  %12702 = vmatmul.mubr.f32.gmra.mrb[0].mxu0 %v12350
  %v12703 = vpop.f32.mrb[0].mxu0
  %v12704 = vadd.f32 0.0, %v12703
  %v12705 = vpop.f32.mrb[0].mxu0
  %12706 = vmatprep.mubr.f32.mxu0 0.0
  %12707 = vmatmul.mubr.f32.gmra.mrb[0].mxu0 %v12353
  %v12708 = vpop.f32.mrb[0].mxu0
  %v12709 = vadd.f32 0.0, %v12708
  %v12710 = vpop.f32.mrb[0].mxu0
  %12711 = vmatprep.mubr.f32.mxu0 0.0
  %12712 = vmatmul.mubr.f32.gmra.mrb[0].mxu0 %v12356
  %v12713 = vpop.f32.mrb[0].mxu0
  %v12714 = vadd.f32 0.0, %v12713
  %v12715 = vpop.f32.mrb[0].mxu0
  %12716 = vmatprep.mubr.f32.mxu0 0.0
  %12717 = vmatmul.mubr.f32.gmra.mrb[0].mxu0 %v12359
  %v12718 = vpop.f32.mrb[0].mxu0
  %v12719 = vadd.f32 0.0, %v12718
  %v12720 = vpop.f32.mrb[0].mxu0
  %12721 = vmatprep.mubr.f32.mxu0 0.0
  %12722 = vmatmul.mubr.f32.gmra.mrb[0].mxu0 %v12362
  %v12723 = vpop.f32.mrb[0].mxu0
  %v12724 = vadd.f32 0.0, %v12723
  %v12725 = vpop.f32.mrb[0].mxu0
  %12726 = vmatprep.mubr.f32.mxu0 0.0
  %12727 = vmatmul.mubr.f32.gmra.mrb[0].mxu0 %v12365
  %v12728 = vpop.f32.mrb[0].mxu0
  %v12729 = vadd.f32 0.0, %v12728
  %v12730 = vpop.f32.mrb[0].mxu0
  %12731 = vmatprep.mubr.f32.mxu0 0.0
  %12732 = vmatmul.mubr.f32.gmra.mrb[0].mxu0 %v12368
  %v12733 = vpop.f32.mrb[0].mxu0
  %v12734 = vadd.f32 0.0, %v12733
  %v12735 = vpop.f32.mrb[0].mxu0
  %12736 = vmatprep.mubr.f32.mxu0 0.0
  %12737 = vmatmul.mubr.f32.gmra.mrb[0].mxu0 %v12371
  %v12738 = vpop.f32.mrb[0].mxu0
  %v12739 = vadd.f32 0.0, %v12738
  %v12740 = vpop.f32.mrb[0].mxu0
  %12741 = vmatprep.mubr.f32.mxu0 0.0
  %12742 = vmatmul.mubr.f32.gmra.mrb[0].mxu0 %v12374
  %v12743 = vpop.f32.mrb[0].mxu0
  %v12744 = vadd.f32 0.0, %v12743
  %v12745 = vpop.f32.mrb[0].mxu0
  %12746 = vmatprep.mubr.f32.mxu0 0.0
  %12747 = vmatmul.mubr.f32.gmra.mrb[0].mxu0 %v12377
  %v12748 = vpop.f32.mrb[0].mxu0
  %v12749 = vadd.f32 0.0, %v12748
  %v12750 = vpop.f32.mrb[0].mxu0
  %12751 = vmatprep.mubr.f32.mxu0 0.0
  %12752 = vmatmul.mubr.f32.gmra.mrb[0].mxu0 %v12380
  %v12753 = vpop.f32.mrb[0].mxu0
  %v12754 = vadd.f32 0.0, %v12753
  %v12755 = vpop.f32.mrb[0].mxu0
  %12756 = vmatprep.mubr.f32.mxu0 0.0
  %12757 = vmatmul.mubr.f32.gmra.mrb[0].mxu0 %v12383
  %v12758 = vpop.f32.mrb[0].mxu0
  %v12759 = vadd.f32 0.0, %v12758
  %v12760 = vpop.f32.mrb[0].mxu0
  %12761 = vmatprep.mubr.f32.mxu0 0.0
  %12762 = vmatmul.mubr.f32.gmra.mrb[0].mxu0 %v12386
  %v12763 = vpop.f32.mrb[0].mxu0
  %v12764 = vadd.f32 0.0, %v12763
  %v12765 = vpop.f32.mrb[0].mxu0
  %12766 = vmatprep.mubr.f32.mxu0 0.0
  %12767 = vmatmul.mubr.f32.gmra.mrb[0].mxu0 %v12389
  %v12768 = vpop.f32.mrb[0].mxu0
  %v12769 = vadd.f32 0.0, %v12768
  %v12770 = vpop.f32.mrb[0].mxu0
  %12771 = vmatprep.mubr.f32.mxu0 0.0
  %12772 = vmatmul.mubr.f32.gmra.mrb[0].mxu0 %v12392
  %v12773 = vpop.f32.mrb[0].mxu0
  %v12774 = vadd.f32 0.0, %v12773
  %v12775 = vpop.f32.mrb[0].mxu0
  %12776 = vmatprep.mubr.f32.mxu0 0.0
  %12777 = vmatmul.mubr.f32.gmra.mrb[0].mxu0 %v12395
  %v12778 = vpop.f32.mrb[0].mxu0
  %v12779 = vadd.f32 0.0, %v12778
  %v12780 = vpop.f32.mrb[0].mxu0
  %12781 = vdwg.mxu0
  %v12782 = vadd.f32 %v12073, %v12464
  %v12783 = vadd.f32 %v12074, %v12469
  %v12784 = vadd.f32 %v12075, %v12474
  %v12785 = vadd.f32 %v12076, %v12479
  %v12786 = vadd.f32 %v12077, %v12484
  %v12787 = vadd.f32 %v12078, %v12489
  %v12788 = vadd.f32 %v12079, %v12494
  %v12789 = vadd.f32 %v12080, %v12499
  %v12790 = vadd.f32 %v12081, %v12504
  %v12791 = vadd.f32 %v12082, %v12509
  %v12792 = vadd.f32 %v12083, %v12514
  %v12793 = vadd.f32 %v12084, %v12519
  %v12794 = vadd.f32 %v12085, %v12524
  %v12795 = vadd.f32 %v12086, %v12529
  %v12796 = vadd.f32 %v12087, %v12534
  %v12797 = vadd.f32 %v12088, %v12539
  %v12798 = vadd.f32 %v12089, %v12544
  %v12799 = vadd.f32 %v12090, %v12549
  %v12800 = vadd.f32 %v12091, %v12554
  %v12801 = vadd.f32 %v12092, %v12559
  %v12802 = vadd.f32 %v12093, %v12564
  %v12803 = vadd.f32 %v12094, %v12569
  %v12804 = vadd.f32 %v12095, %v12574
  %v12805 = vadd.f32 %v12096, %v12579
  %v12806 = vadd.f32 %v12097, %v12584
  %v12807 = vadd.f32 %v12098, %v12589
  %v12808 = vadd.f32 %v12099, %v12594
  %v12809 = vadd.f32 %v12100, %v12599
  %v12810 = vadd.f32 %v12101, %v12604
  %v12811 = vadd.f32 %v12102, %v12609
  %v12812 = vadd.f32 %v12103, %v12614
  %v12813 = vadd.f32 %v12104, %v12619
  %v12814 = vadd.f32 %v12105, %v12624
  %v12815 = vadd.f32 %v12106, %v12629
  %v12816 = vadd.f32 %v12107, %v12634
  %v12817 = vadd.f32 %v12108, %v12639
  %v12818 = vadd.f32 %v12109, %v12644
  %v12819 = vadd.f32 %v12110, %v12649
  %v12820 = vadd.f32 %v12111, %v12654
  %v12821 = vadd.f32 %v12112, %v12659
  %v12822 = vadd.f32 %v12113, %v12664
  %v12823 = vadd.f32 %v12114, %v12669
  %v12824 = vadd.f32 %v12115, %v12674
  %v12825 = vadd.f32 %v12116, %v12679
  %v12826 = vadd.f32 %v12117, %v12684
  %v12827 = vadd.f32 %v12118, %v12689
  %v12828 = vadd.f32 %v12119, %v12694
  %v12829 = vadd.f32 %v12120, %v12699
  %v12830 = vadd.f32 %v12121, %v12704
  %v12831 = vadd.f32 %v12122, %v12709
  %v12832 = vadd.f32 %v12123, %v12714
  %v12833 = vadd.f32 %v12124, %v12719
  %v12834 = vadd.f32 %v12125, %v12724
  %v12835 = vadd.f32 %v12126, %v12729
  %v12836 = vadd.f32 %v12127, %v12734
  %v12837 = vadd.f32 %v12128, %v12739
  %v12838 = vadd.f32 %v12129, %v12744
  %v12839 = vadd.f32 %v12130, %v12749
  %v12840 = vadd.f32 %v12131, %v12754
  %v12841 = vadd.f32 %v12132, %v12759
  %v12842 = vadd.f32 %v12133, %v12764
  %v12843 = vadd.f32 %v12134, %v12769
  %v12844 = vadd.f32 %v12135, %v12774
  %v12845 = vadd.f32 %v12136, %v12779
  %v12846 = vld [vmem:[%s5] sm:$0x1]
  %v12848 = vlaneseq
  %v12849 = vshrl.u32 %v12848, 7
  %v12850 = vsub.s32 0, %v12849
  %v12851 = vrot.slane %v12846, %v12850
  %v12853 = vadd.f32 %v12782, %v12851
  %v12854 = vadd.f32 %v12783, %v12851
  %v12855 = vadd.f32 %v12784, %v12851
  %v12856 = vadd.f32 %v12785, %v12851
  %v12857 = vadd.f32 %v12786, %v12851
  %v12858 = vadd.f32 %v12787, %v12851
  %v12859 = vadd.f32 %v12788, %v12851
  %v12860 = vadd.f32 %v12789, %v12851
  %v12861 = vadd.f32 %v12790, %v12851
  %v12862 = vadd.f32 %v12791, %v12851
  %v12863 = vadd.f32 %v12792, %v12851
  %v12864 = vadd.f32 %v12793, %v12851
  %v12865 = vadd.f32 %v12794, %v12851
  %v12866 = vadd.f32 %v12795, %v12851
  %v12867 = vadd.f32 %v12796, %v12851
  %v12868 = vadd.f32 %v12797, %v12851
  %v12869 = vadd.f32 %v12798, %v12851
  %v12870 = vadd.f32 %v12799, %v12851
  %v12871 = vadd.f32 %v12800, %v12851
  %v12872 = vadd.f32 %v12801, %v12851
  %v12873 = vadd.f32 %v12802, %v12851
  %v12874 = vadd.f32 %v12803, %v12851
  %v12875 = vadd.f32 %v12804, %v12851
  %v12876 = vadd.f32 %v12805, %v12851
  %v12877 = vadd.f32 %v12806, %v12851
  %v12878 = vadd.f32 %v12807, %v12851
  %v12879 = vadd.f32 %v12808, %v12851
  %v12880 = vadd.f32 %v12809, %v12851
  %v12881 = vadd.f32 %v12810, %v12851
  %v12882 = vadd.f32 %v12811, %v12851
  %v12883 = vadd.f32 %v12812, %v12851
  %v12884 = vadd.f32 %v12813, %v12851
  %v12885 = vadd.f32 %v12814, %v12851
  %v12886 = vadd.f32 %v12815, %v12851
  %v12887 = vadd.f32 %v12816, %v12851
  %v12888 = vadd.f32 %v12817, %v12851
  %v12889 = vadd.f32 %v12818, %v12851
  %v12890 = vadd.f32 %v12819, %v12851
  %v12891 = vadd.f32 %v12820, %v12851
  %v12892 = vadd.f32 %v12821, %v12851
  %v12893 = vadd.f32 %v12822, %v12851
  %v12894 = vadd.f32 %v12823, %v12851
  %v12895 = vadd.f32 %v12824, %v12851
  %v12896 = vadd.f32 %v12825, %v12851
  %v12897 = vadd.f32 %v12826, %v12851
  %v12898 = vadd.f32 %v12827, %v12851
  %v12899 = vadd.f32 %v12828, %v12851
  %v12900 = vadd.f32 %v12829, %v12851
  %v12901 = vadd.f32 %v12830, %v12851
  %v12902 = vadd.f32 %v12831, %v12851
  %v12903 = vadd.f32 %v12832, %v12851
  %v12904 = vadd.f32 %v12833, %v12851
  %v12905 = vadd.f32 %v12834, %v12851
  %v12906 = vadd.f32 %v12835, %v12851
  %v12907 = vadd.f32 %v12836, %v12851
  %v12908 = vadd.f32 %v12837, %v12851
  %v12909 = vadd.f32 %v12838, %v12851
  %v12910 = vadd.f32 %v12839, %v12851
  %v12911 = vadd.f32 %v12840, %v12851
  %v12912 = vadd.f32 %v12841, %v12851
  %v12913 = vadd.f32 %v12842, %v12851
  %v12914 = vadd.f32 %v12843, %v12851
  %v12915 = vadd.f32 %v12844, %v12851
  %v12916 = vadd.f32 %v12845, %v12851
  %v12917 = vmax.f32 %v12853, 0.0
  %v12918 = vmax.f32 %v12854, 0.0
  %v12919 = vmax.f32 %v12855, 0.0
  %v12920 = vmax.f32 %v12856, 0.0
  %v12921 = vmax.f32 %v12857, 0.0
  %v12922 = vmax.f32 %v12858, 0.0
  %v12923 = vmax.f32 %v12859, 0.0
  %v12924 = vmax.f32 %v12860, 0.0
  %v12925 = vmax.f32 %v12861, 0.0
  %v12926 = vmax.f32 %v12862, 0.0
  %v12927 = vmax.f32 %v12863, 0.0
  %v12928 = vmax.f32 %v12864, 0.0
  %v12929 = vmax.f32 %v12865, 0.0
  %v12930 = vmax.f32 %v12866, 0.0
  %v12931 = vmax.f32 %v12867, 0.0
  %v12932 = vmax.f32 %v12868, 0.0
  %v12933 = vmax.f32 %v12869, 0.0
  %v12934 = vmax.f32 %v12870, 0.0
  %v12935 = vmax.f32 %v12871, 0.0
  %v12936 = vmax.f32 %v12872, 0.0
  %v12937 = vmax.f32 %v12873, 0.0
  %v12938 = vmax.f32 %v12874, 0.0
  %v12939 = vmax.f32 %v12875, 0.0
  %v12940 = vmax.f32 %v12876, 0.0
  %v12941 = vmax.f32 %v12877, 0.0
  %v12942 = vmax.f32 %v12878, 0.0
  %v12943 = vmax.f32 %v12879, 0.0
  %v12944 = vmax.f32 %v12880, 0.0
  %v12945 = vmax.f32 %v12881, 0.0
  %v12946 = vmax.f32 %v12882, 0.0
  %v12947 = vmax.f32 %v12883, 0.0
  %v12948 = vmax.f32 %v12884, 0.0
  %v12949 = vmax.f32 %v12885, 0.0
  %v12950 = vmax.f32 %v12886, 0.0
  %v12951 = vmax.f32 %v12887, 0.0
  %v12952 = vmax.f32 %v12888, 0.0
  %v12953 = vmax.f32 %v12889, 0.0
  %v12954 = vmax.f32 %v12890, 0.0
  %v12955 = vmax.f32 %v12891, 0.0
  %v12956 = vmax.f32 %v12892, 0.0
  %v12957 = vmax.f32 %v12893, 0.0
  %v12958 = vmax.f32 %v12894, 0.0
  %v12959 = vmax.f32 %v12895, 0.0
  %v12960 = vmax.f32 %v12896, 0.0
  %v12961 = vmax.f32 %v12897, 0.0
  %v12962 = vmax.f32 %v12898, 0.0
  %v12963 = vmax.f32 %v12899, 0.0
  %v12964 = vmax.f32 %v12900, 0.0
  %v12965 = vmax.f32 %v12901, 0.0
  %v12966 = vmax.f32 %v12902, 0.0
  %v12967 = vmax.f32 %v12903, 0.0
  %v12968 = vmax.f32 %v12904, 0.0
  %v12969 = vmax.f32 %v12905, 0.0
  %v12970 = vmax.f32 %v12906, 0.0
  %v12971 = vmax.f32 %v12907, 0.0
  %v12972 = vmax.f32 %v12908, 0.0
  %v12973 = vmax.f32 %v12909, 0.0
  %v12974 = vmax.f32 %v12910, 0.0
  %v12975 = vmax.f32 %v12911, 0.0
  %v12976 = vmax.f32 %v12912, 0.0
  %v12977 = vmax.f32 %v12913, 0.0
  %v12978 = vmax.f32 %v12914, 0.0
  %v12979 = vmax.f32 %v12915, 0.0
  %v12980 = vmax.f32 %v12916, 0.0
  %12981 = vst.msk [vmem:[#allocation2 + $0x18] sm:$0xff] %vm6522, %v12917
  %12982 = vst.msk [vmem:[#allocation2 + $0x20] sm:$0xff] %vm6522, %v12918
  %12983 = vst.msk [vmem:[#allocation2 + $0x28] sm:$0xff] %vm6522, %v12919
  %12984 = vst.msk [vmem:[#allocation2 + $0x30] sm:$0xff] %vm6522, %v12920
  %12985 = vst.msk [vmem:[#allocation2 + $0x38] sm:$0xff] %vm6522, %v12921
  %12986 = vst.msk [vmem:[#allocation2 + $0x40] sm:$0xff] %vm6522, %v12922
  %12987 = vst.msk [vmem:[#allocation2 + $0x48] sm:$0xff] %vm6522, %v12923
  %12988 = vst.msk [vmem:[#allocation2 + $0x50] sm:$0xff] %vm6522, %v12924
  %12989 = vst.msk [vmem:[#allocation2 + $0x58] sm:$0xff] %vm6522, %v12925
  %12990 = vst.msk [vmem:[#allocation2 + $0x60] sm:$0xff] %vm6522, %v12926
  %12991 = vst.msk [vmem:[#allocation2 + $0x68] sm:$0xff] %vm6522, %v12927
  %12992 = vst.msk [vmem:[#allocation2 + $0x70] sm:$0xff] %vm6522, %v12928
  %12993 = vst.msk [vmem:[#allocation2 + $0x78] sm:$0xff] %vm6522, %v12929
  %12994 = vst.msk [vmem:[#allocation2 + $0x80] sm:$0xff] %vm6522, %v12930
  %12995 = vst.msk [vmem:[#allocation2 + $0x88] sm:$0xff] %vm6522, %v12931
  %12996 = vst.msk [vmem:[#allocation2 + $0x90] sm:$0xff] %vm6522, %v12932
  %12997 = vst.msk [vmem:[#allocation2 + $0x98] sm:$0xff] %vm6522, %v12933
  %12998 = vst.msk [vmem:[#allocation2 + $0xa0] sm:$0xff] %vm6522, %v12934
  %12999 = vst.msk [vmem:[#allocation2 + $0xa8] sm:$0xff] %vm6522, %v12935
  %13000 = vst.msk [vmem:[#allocation2 + $0xb0] sm:$0xff] %vm6522, %v12936
  %13001 = vst.msk [vmem:[#allocation2 + $0xb8] sm:$0xff] %vm6522, %v12937
  %13002 = vst.msk [vmem:[#allocation2 + $0xc0] sm:$0xff] %vm6522, %v12938
  %13003 = vst.msk [vmem:[#allocation2 + $0xc8] sm:$0xff] %vm6522, %v12939
  %13004 = vst.msk [vmem:[#allocation2 + $0xd0] sm:$0xff] %vm6522, %v12940
  %13005 = vst.msk [vmem:[#allocation2 + $0xd8] sm:$0xff] %vm6522, %v12941
  %13006 = vst.msk [vmem:[#allocation2 + $0xe0] sm:$0xff] %vm6522, %v12942
  %13007 = vst.msk [vmem:[#allocation2 + $0xe8] sm:$0xff] %vm6522, %v12943
  %13008 = vst.msk [vmem:[#allocation2 + $0xf0] sm:$0xff] %vm6522, %v12944
  %13009 = vst.msk [vmem:[#allocation2 + $0xf8] sm:$0xff] %vm6522, %v12945
  %13010 = vst.msk [vmem:[#allocation2 + $0x100] sm:$0xff] %vm6522, %v12946
  %13011 = vst.msk [vmem:[#allocation2 + $0x108] sm:$0xff] %vm6522, %v12947
  %13012 = vst.msk [vmem:[#allocation2 + $0x110] sm:$0xff] %vm6522, %v12948
  %13013 = vst.msk [vmem:[#allocation2 + $0x118] sm:$0xff] %vm6522, %v12949
  %13014 = vst.msk [vmem:[#allocation2 + $0x120] sm:$0xff] %vm6522, %v12950
  %13015 = vst.msk [vmem:[#allocation2 + $0x128] sm:$0xff] %vm6522, %v12951
  %13016 = vst.msk [vmem:[#allocation2 + $0x130] sm:$0xff] %vm6522, %v12952
  %13017 = vst.msk [vmem:[#allocation2 + $0x138] sm:$0xff] %vm6522, %v12953
  %13018 = vst.msk [vmem:[#allocation2 + $0x140] sm:$0xff] %vm6522, %v12954
  %13019 = vst.msk [vmem:[#allocation2 + $0x148] sm:$0xff] %vm6522, %v12955
  %13020 = vst.msk [vmem:[#allocation2 + $0x150] sm:$0xff] %vm6522, %v12956
  %13021 = vst.msk [vmem:[#allocation2 + $0x158] sm:$0xff] %vm6522, %v12957
  %13022 = vst.msk [vmem:[#allocation2 + $0x160] sm:$0xff] %vm6522, %v12958
  %13023 = vst.msk [vmem:[#allocation2 + $0x168] sm:$0xff] %vm6522, %v12959
  %13024 = vst.msk [vmem:[#allocation2 + $0x170] sm:$0xff] %vm6522, %v12960
  %13025 = vst.msk [vmem:[#allocation2 + $0x178] sm:$0xff] %vm6522, %v12961
  %13026 = vst.msk [vmem:[#allocation2 + $0x180] sm:$0xff] %vm6522, %v12962
  %13027 = vst.msk [vmem:[#allocation2 + $0x188] sm:$0xff] %vm6522, %v12963
  %13028 = vst.msk [vmem:[#allocation2 + $0x190] sm:$0xff] %vm6522, %v12964
  %13029 = vst.msk [vmem:[#allocation2 + $0x198] sm:$0xff] %vm6522, %v12965
  %13030 = vst.msk [vmem:[#allocation2 + $0x1a0] sm:$0xff] %vm6522, %v12966
  %13031 = vst.msk [vmem:[#allocation2 + $0x1a8] sm:$0xff] %vm6522, %v12967
  %13032 = vst.msk [vmem:[#allocation2 + $0x1b0] sm:$0xff] %vm6522, %v12968
  %13033 = vst.msk [vmem:[#allocation2 + $0x1b8] sm:$0xff] %vm6522, %v12969
  %13034 = vst.msk [vmem:[#allocation2 + $0x1c0] sm:$0xff] %vm6522, %v12970
  %13035 = vst.msk [vmem:[#allocation2 + $0x1c8] sm:$0xff] %vm6522, %v12971
  %13036 = vst.msk [vmem:[#allocation2 + $0x1d0] sm:$0xff] %vm6522, %v12972
  %13037 = vst.msk [vmem:[#allocation2 + $0x1d8] sm:$0xff] %vm6522, %v12973
  %13038 = vst.msk [vmem:[#allocation2 + $0x1e0] sm:$0xff] %vm6522, %v12974
  %13039 = vst.msk [vmem:[#allocation2 + $0x1e8] sm:$0xff] %vm6522, %v12975
  %13040 = vst.msk [vmem:[#allocation2 + $0x1f0] sm:$0xff] %vm6522, %v12976
  %13041 = vst.msk [vmem:[#allocation2 + $0x1f8] sm:$0xff] %vm6522, %v12977
  %13042 = vst.msk [vmem:[#allocation2 + $0x200] sm:$0xff] %vm6522, %v12978
  %13043 = vst.msk [vmem:[#allocation2 + $0x208] sm:$0xff] %vm6522, %v12979
  %13044 = vst.msk [vmem:[#allocation2 + $0x210] sm:$0xff] %vm6522, %v12980
  %v13045 = vld [vmem:[#allocation2 + $0x19] sm:$0xff]
  %v13046 = vld [vmem:[#allocation2 + $0x21] sm:$0xff]
  %v13047 = vld [vmem:[#allocation2 + $0x29] sm:$0xff]
  %v13048 = vld [vmem:[#allocation2 + $0x31] sm:$0xff]
  %v13049 = vld [vmem:[#allocation2 + $0x39] sm:$0xff]
  %v13050 = vld [vmem:[#allocation2 + $0x41] sm:$0xff]
  %v13051 = vld [vmem:[#allocation2 + $0x49] sm:$0xff]
  %v13052 = vld [vmem:[#allocation2 + $0x51] sm:$0xff]
  %v13053 = vld [vmem:[#allocation2 + $0x59] sm:$0xff]
  %v13054 = vld [vmem:[#allocation2 + $0x61] sm:$0xff]
  %v13055 = vld [vmem:[#allocation2 + $0x69] sm:$0xff]
  %v13056 = vld [vmem:[#allocation2 + $0x71] sm:$0xff]
  %v13057 = vld [vmem:[#allocation2 + $0x79] sm:$0xff]
  %v13058 = vld [vmem:[#allocation2 + $0x81] sm:$0xff]
  %v13059 = vld [vmem:[#allocation2 + $0x89] sm:$0xff]
  %v13060 = vld [vmem:[#allocation2 + $0x91] sm:$0xff]
  %v13061 = vld [vmem:[#allocation2 + $0x99] sm:$0xff]
  %v13062 = vld [vmem:[#allocation2 + $0xa1] sm:$0xff]
  %v13063 = vld [vmem:[#allocation2 + $0xa9] sm:$0xff]
  %v13064 = vld [vmem:[#allocation2 + $0xb1] sm:$0xff]
  %v13065 = vld [vmem:[#allocation2 + $0xb9] sm:$0xff]
  %v13066 = vld [vmem:[#allocation2 + $0xc1] sm:$0xff]
  %v13067 = vld [vmem:[#allocation2 + $0xc9] sm:$0xff]
  %v13068 = vld [vmem:[#allocation2 + $0xd1] sm:$0xff]
  %v13069 = vld [vmem:[#allocation2 + $0xd9] sm:$0xff]
  %v13070 = vld [vmem:[#allocation2 + $0xe1] sm:$0xff]
  %v13071 = vld [vmem:[#allocation2 + $0xe9] sm:$0xff]
  %v13072 = vld [vmem:[#allocation2 + $0xf1] sm:$0xff]
  %v13073 = vld [vmem:[#allocation2 + $0xf9] sm:$0xff]
  %v13074 = vld [vmem:[#allocation2 + $0x101] sm:$0xff]
  %v13075 = vld [vmem:[#allocation2 + $0x109] sm:$0xff]
  %v13076 = vld [vmem:[#allocation2 + $0x111] sm:$0xff]
  %v13077 = vld [vmem:[#allocation2 + $0x119] sm:$0xff]
  %v13078 = vld [vmem:[#allocation2 + $0x121] sm:$0xff]
  %v13079 = vld [vmem:[#allocation2 + $0x129] sm:$0xff]
  %v13080 = vld [vmem:[#allocation2 + $0x131] sm:$0xff]
  %v13081 = vld [vmem:[#allocation2 + $0x139] sm:$0xff]
  %v13082 = vld [vmem:[#allocation2 + $0x141] sm:$0xff]
  %v13083 = vld [vmem:[#allocation2 + $0x149] sm:$0xff]
  %v13084 = vld [vmem:[#allocation2 + $0x151] sm:$0xff]
  %v13085 = vld [vmem:[#allocation2 + $0x159] sm:$0xff]
  %v13086 = vld [vmem:[#allocation2 + $0x161] sm:$0xff]
  %v13087 = vld [vmem:[#allocation2 + $0x169] sm:$0xff]
  %v13088 = vld [vmem:[#allocation2 + $0x171] sm:$0xff]
  %v13089 = vld [vmem:[#allocation2 + $0x179] sm:$0xff]
  %v13090 = vld [vmem:[#allocation2 + $0x181] sm:$0xff]
  %v13091 = vld [vmem:[#allocation2 + $0x189] sm:$0xff]
  %v13092 = vld [vmem:[#allocation2 + $0x191] sm:$0xff]
  %v13093 = vld [vmem:[#allocation2 + $0x199] sm:$0xff]
  %v13094 = vld [vmem:[#allocation2 + $0x1a1] sm:$0xff]
  %v13095 = vld [vmem:[#allocation2 + $0x1a9] sm:$0xff]
  %v13096 = vld [vmem:[#allocation2 + $0x1b1] sm:$0xff]
  %v13097 = vld [vmem:[#allocation2 + $0x1b9] sm:$0xff]
  %v13098 = vld [vmem:[#allocation2 + $0x1c1] sm:$0xff]
  %v13099 = vld [vmem:[#allocation2 + $0x1c9] sm:$0xff]
  %v13100 = vld [vmem:[#allocation2 + $0x1d1] sm:$0xff]
  %v13101 = vld [vmem:[#allocation2 + $0x1d9] sm:$0xff]
  %v13102 = vld [vmem:[#allocation2 + $0x1e1] sm:$0xff]
  %v13103 = vld [vmem:[#allocation2 + $0x1e9] sm:$0xff]
  %v13104 = vld [vmem:[#allocation2 + $0x1f1] sm:$0xff]
  %v13105 = vld [vmem:[#allocation2 + $0x1f9] sm:$0xff]
  %v13106 = vld [vmem:[#allocation2 + $0x201] sm:$0xff]
  %v13107 = vld [vmem:[#allocation2 + $0x209] sm:$0xff]
  %v13108 = vld [vmem:[#allocation2 + $0x211] sm:$0xff]
  %v13109 = vld [vmem:[#allocation2 + $0x28] sm:$0xff]
  %v13110 = vld [vmem:[#allocation2 + $0x30] sm:$0xff]
  %v13111 = vld [vmem:[#allocation2 + $0x38] sm:$0xff]
  %v13112 = vld [vmem:[#allocation2 + $0x40] sm:$0xff]
  %v13113 = vld [vmem:[#allocation2 + $0x48] sm:$0xff]
  %v13114 = vld [vmem:[#allocation2 + $0x50] sm:$0xff]
  %v13115 = vld [vmem:[#allocation2 + $0x58] sm:$0xff]
  %v13116 = vld [vmem:[#allocation2 + $0x60] sm:$0xff]
  %v13117 = vld [vmem:[#allocation2 + $0x68] sm:$0xff]
  %v13118 = vld [vmem:[#allocation2 + $0x70] sm:$0xff]
  %v13119 = vld [vmem:[#allocation2 + $0x78] sm:$0xff]
  %v13120 = vld [vmem:[#allocation2 + $0x80] sm:$0xff]
  %v13121 = vld [vmem:[#allocation2 + $0x88] sm:$0xff]
  %v13122 = vld [vmem:[#allocation2 + $0x90] sm:$0xff]
  %v13123 = vld [vmem:[#allocation2 + $0x98] sm:$0xff]
  %v13124 = vld [vmem:[#allocation2 + $0xa0] sm:$0xff]
  %v13125 = vld [vmem:[#allocation2 + $0xa8] sm:$0xff]
  %v13126 = vld [vmem:[#allocation2 + $0xb0] sm:$0xff]
  %v13127 = vld [vmem:[#allocation2 + $0xb8] sm:$0xff]
  %v13128 = vld [vmem:[#allocation2 + $0xc0] sm:$0xff]
  %v13129 = vld [vmem:[#allocation2 + $0xc8] sm:$0xff]
  %v13130 = vld [vmem:[#allocation2 + $0xd0] sm:$0xff]
  %v13131 = vld [vmem:[#allocation2 + $0xd8] sm:$0xff]
  %v13132 = vld [vmem:[#allocation2 + $0xe0] sm:$0xff]
  %v13133 = vld [vmem:[#allocation2 + $0xe8] sm:$0xff]
  %v13134 = vld [vmem:[#allocation2 + $0xf0] sm:$0xff]
  %v13135 = vld [vmem:[#allocation2 + $0xf8] sm:$0xff]
  %v13136 = vld [vmem:[#allocation2 + $0x100] sm:$0xff]
  %v13137 = vld [vmem:[#allocation2 + $0x108] sm:$0xff]
  %v13138 = vld [vmem:[#allocation2 + $0x110] sm:$0xff]
  %v13139 = vld [vmem:[#allocation2 + $0x118] sm:$0xff]
  %v13140 = vld [vmem:[#allocation2 + $0x120] sm:$0xff]
  %v13141 = vld [vmem:[#allocation2 + $0x128] sm:$0xff]
  %v13142 = vld [vmem:[#allocation2 + $0x130] sm:$0xff]
  %v13143 = vld [vmem:[#allocation2 + $0x138] sm:$0xff]
  %v13144 = vld [vmem:[#allocation2 + $0x140] sm:$0xff]
  %v13145 = vld [vmem:[#allocation2 + $0x148] sm:$0xff]
  %v13146 = vld [vmem:[#allocation2 + $0x150] sm:$0xff]
  %v13147 = vld [vmem:[#allocation2 + $0x158] sm:$0xff]
  %v13148 = vld [vmem:[#allocation2 + $0x160] sm:$0xff]
  %v13149 = vld [vmem:[#allocation2 + $0x168] sm:$0xff]
  %v13150 = vld [vmem:[#allocation2 + $0x170] sm:$0xff]
  %v13151 = vld [vmem:[#allocation2 + $0x178] sm:$0xff]
  %v13152 = vld [vmem:[#allocation2 + $0x180] sm:$0xff]
  %v13153 = vld [vmem:[#allocation2 + $0x188] sm:$0xff]
  %v13154 = vld [vmem:[#allocation2 + $0x190] sm:$0xff]
  %v13155 = vld [vmem:[#allocation2 + $0x198] sm:$0xff]
  %v13156 = vld [vmem:[#allocation2 + $0x1a0] sm:$0xff]
  %v13157 = vld [vmem:[#allocation2 + $0x1a8] sm:$0xff]
  %v13158 = vld [vmem:[#allocation2 + $0x1b0] sm:$0xff]
  %v13159 = vld [vmem:[#allocation2 + $0x1b8] sm:$0xff]
  %v13160 = vld [vmem:[#allocation2 + $0x1c0] sm:$0xff]
  %v13161 = vld [vmem:[#allocation2 + $0x1c8] sm:$0xff]
  %v13162 = vld [vmem:[#allocation2 + $0x1d0] sm:$0xff]
  %v13163 = vld [vmem:[#allocation2 + $0x1d8] sm:$0xff]
  %v13164 = vld [vmem:[#allocation2 + $0x1e0] sm:$0xff]
  %v13165 = vld [vmem:[#allocation2 + $0x1e8] sm:$0xff]
  %v13166 = vld [vmem:[#allocation2 + $0x1f0] sm:$0xff]
  %v13167 = vld [vmem:[#allocation2 + $0x1f8] sm:$0xff]
  %v13168 = vld [vmem:[#allocation2 + $0x200] sm:$0xff]
  %v13169 = vld [vmem:[#allocation2 + $0x208] sm:$0xff]
  %v13170 = vld [vmem:[#allocation2 + $0x210] sm:$0xff]
  %v13171 = vld [vmem:[#allocation2 + $0x218] sm:$0xff]
  %v13172 = vld [vmem:[#allocation2 + $0x220] sm:$0xff]
  %v13173 = vld [vmem:[#allocation2 + $0x219] sm:$0xff]
  %v13174 = vld [vmem:[#allocation2 + $0x221] sm:$0xff]
  %v13175 = vmax.f32 %v12917, %v13045
  %v13176 = vmax.f32 %v12918, %v13046
  %v13177 = vmax.f32 %v12919, %v13047
  %v13178 = vmax.f32 %v12920, %v13048
  %v13179 = vmax.f32 %v12921, %v13049
  %v13180 = vmax.f32 %v12922, %v13050
  %v13181 = vmax.f32 %v12923, %v13051
  %v13182 = vmax.f32 %v12924, %v13052
  %v13183 = vmax.f32 %v12925, %v13053
  %v13184 = vmax.f32 %v12926, %v13054
  %v13185 = vmax.f32 %v12927, %v13055
  %v13186 = vmax.f32 %v12928, %v13056
  %v13187 = vmax.f32 %v12929, %v13057
  %v13188 = vmax.f32 %v12930, %v13058
  %v13189 = vmax.f32 %v12931, %v13059
  %v13190 = vmax.f32 %v12932, %v13060
  %v13191 = vmax.f32 %v12933, %v13061
  %v13192 = vmax.f32 %v12934, %v13062
  %v13193 = vmax.f32 %v12935, %v13063
  %v13194 = vmax.f32 %v12936, %v13064
  %v13195 = vmax.f32 %v12937, %v13065
  %v13196 = vmax.f32 %v12938, %v13066
  %v13197 = vmax.f32 %v12939, %v13067
  %v13198 = vmax.f32 %v12940, %v13068
  %v13199 = vmax.f32 %v12941, %v13069
  %v13200 = vmax.f32 %v12942, %v13070
  %v13201 = vmax.f32 %v12943, %v13071
  %v13202 = vmax.f32 %v12944, %v13072
  %v13203 = vmax.f32 %v12945, %v13073
  %v13204 = vmax.f32 %v12946, %v13074
  %v13205 = vmax.f32 %v12947, %v13075
  %v13206 = vmax.f32 %v12948, %v13076
  %v13207 = vmax.f32 %v12949, %v13077
  %v13208 = vmax.f32 %v12950, %v13078
  %v13209 = vmax.f32 %v12951, %v13079
  %v13210 = vmax.f32 %v12952, %v13080
  %v13211 = vmax.f32 %v12953, %v13081
  %v13212 = vmax.f32 %v12954, %v13082
  %v13213 = vmax.f32 %v12955, %v13083
  %v13214 = vmax.f32 %v12956, %v13084
  %v13215 = vmax.f32 %v12957, %v13085
  %v13216 = vmax.f32 %v12958, %v13086
  %v13217 = vmax.f32 %v12959, %v13087
  %v13218 = vmax.f32 %v12960, %v13088
  %v13219 = vmax.f32 %v12961, %v13089
  %v13220 = vmax.f32 %v12962, %v13090
  %v13221 = vmax.f32 %v12963, %v13091
  %v13222 = vmax.f32 %v12964, %v13092
  %v13223 = vmax.f32 %v12965, %v13093
  %v13224 = vmax.f32 %v12966, %v13094
  %v13225 = vmax.f32 %v12967, %v13095
  %v13226 = vmax.f32 %v12968, %v13096
  %v13227 = vmax.f32 %v12969, %v13097
  %v13228 = vmax.f32 %v12970, %v13098
  %v13229 = vmax.f32 %v12971, %v13099
  %v13230 = vmax.f32 %v12972, %v13100
  %v13231 = vmax.f32 %v12973, %v13101
  %v13232 = vmax.f32 %v12974, %v13102
  %v13233 = vmax.f32 %v12975, %v13103
  %v13234 = vmax.f32 %v12976, %v13104
  %v13235 = vmax.f32 %v12977, %v13105
  %v13236 = vmax.f32 %v12978, %v13106
  %v13237 = vmax.f32 %v12979, %v13107
  %v13238 = vmax.f32 %v12980, %v13108
  %v13239 = vmax.f32 %v13109, %v13047
  %v13240 = vmax.f32 %v13110, %v13048
  %v13241 = vmax.f32 %v13111, %v13049
  %v13242 = vmax.f32 %v13112, %v13050
  %v13243 = vmax.f32 %v13113, %v13051
  %v13244 = vmax.f32 %v13114, %v13052
  %v13245 = vmax.f32 %v13115, %v13053
  %v13246 = vmax.f32 %v13116, %v13054
  %v13247 = vmax.f32 %v13117, %v13055
  %v13248 = vmax.f32 %v13118, %v13056
  %v13249 = vmax.f32 %v13119, %v13057
  %v13250 = vmax.f32 %v13120, %v13058
  %v13251 = vmax.f32 %v13121, %v13059
  %v13252 = vmax.f32 %v13122, %v13060
  %v13253 = vmax.f32 %v13123, %v13061
  %v13254 = vmax.f32 %v13124, %v13062
  %v13255 = vmax.f32 %v13125, %v13063
  %v13256 = vmax.f32 %v13126, %v13064
  %v13257 = vmax.f32 %v13127, %v13065
  %v13258 = vmax.f32 %v13128, %v13066
  %v13259 = vmax.f32 %v13129, %v13067
  %v13260 = vmax.f32 %v13130, %v13068
  %v13261 = vmax.f32 %v13131, %v13069
  %v13262 = vmax.f32 %v13132, %v13070
  %v13263 = vmax.f32 %v13133, %v13071
  %v13264 = vmax.f32 %v13134, %v13072
  %v13265 = vmax.f32 %v13135, %v13073
  %v13266 = vmax.f32 %v13136, %v13074
  %v13267 = vmax.f32 %v13137, %v13075
  %v13268 = vmax.f32 %v13138, %v13076
  %v13269 = vmax.f32 %v13139, %v13077
  %v13270 = vmax.f32 %v13140, %v13078
  %v13271 = vmax.f32 %v13141, %v13079
  %v13272 = vmax.f32 %v13142, %v13080
  %v13273 = vmax.f32 %v13143, %v13081
  %v13274 = vmax.f32 %v13144, %v13082
  %v13275 = vmax.f32 %v13145, %v13083
  %v13276 = vmax.f32 %v13146, %v13084
  %v13277 = vmax.f32 %v13147, %v13085
  %v13278 = vmax.f32 %v13148, %v13086
  %v13279 = vmax.f32 %v13149, %v13087
  %v13280 = vmax.f32 %v13150, %v13088
  %v13281 = vmax.f32 %v13151, %v13089
  %v13282 = vmax.f32 %v13152, %v13090
  %v13283 = vmax.f32 %v13153, %v13091
  %v13284 = vmax.f32 %v13154, %v13092
  %v13285 = vmax.f32 %v13155, %v13093
  %v13286 = vmax.f32 %v13156, %v13094
  %v13287 = vmax.f32 %v13157, %v13095
  %v13288 = vmax.f32 %v13158, %v13096
  %v13289 = vmax.f32 %v13159, %v13097
  %v13290 = vmax.f32 %v13160, %v13098
  %v13291 = vmax.f32 %v13161, %v13099
  %v13292 = vmax.f32 %v13162, %v13100
  %v13293 = vmax.f32 %v13163, %v13101
  %v13294 = vmax.f32 %v13164, %v13102
  %v13295 = vmax.f32 %v13165, %v13103
  %v13296 = vmax.f32 %v13166, %v13104
  %v13297 = vmax.f32 %v13167, %v13105
  %v13298 = vmax.f32 %v13168, %v13106
  %v13299 = vmax.f32 %v13169, %v13107
  %v13300 = vmax.f32 %v13170, %v13108
  %v13301 = vmax.f32 %v13171, %v13173
  %v13302 = vmax.f32 %v13172, %v13174
  %v13303 = vmax.f32 %v13175, %v13239
  %v13304 = vmax.f32 %v13176, %v13240
  %v13305 = vmax.f32 %v13177, %v13241
  %v13306 = vmax.f32 %v13178, %v13242
  %v13307 = vmax.f32 %v13179, %v13243
  %v13308 = vmax.f32 %v13180, %v13244
  %v13309 = vmax.f32 %v13181, %v13245
  %v13310 = vmax.f32 %v13182, %v13246
  %v13311 = vmax.f32 %v13183, %v13247
  %v13312 = vmax.f32 %v13184, %v13248
  %v13313 = vmax.f32 %v13185, %v13249
  %v13314 = vmax.f32 %v13186, %v13250
  %v13315 = vmax.f32 %v13187, %v13251
  %v13316 = vmax.f32 %v13188, %v13252
  %v13317 = vmax.f32 %v13189, %v13253
  %v13318 = vmax.f32 %v13190, %v13254
  %v13319 = vmax.f32 %v13191, %v13255
  %v13320 = vmax.f32 %v13192, %v13256
  %v13321 = vmax.f32 %v13193, %v13257
  %v13322 = vmax.f32 %v13194, %v13258
  %v13323 = vmax.f32 %v13195, %v13259
  %v13324 = vmax.f32 %v13196, %v13260
  %v13325 = vmax.f32 %v13197, %v13261
  %v13326 = vmax.f32 %v13198, %v13262
  %v13327 = vmax.f32 %v13199, %v13263
  %v13328 = vmax.f32 %v13200, %v13264
  %v13329 = vmax.f32 %v13201, %v13265
  %v13330 = vmax.f32 %v13202, %v13266
  %v13331 = vmax.f32 %v13203, %v13267
  %v13332 = vmax.f32 %v13204, %v13268
  %v13333 = vmax.f32 %v13205, %v13269
  %v13334 = vmax.f32 %v13206, %v13270
  %v13335 = vmax.f32 %v13207, %v13271
  %v13336 = vmax.f32 %v13208, %v13272
  %v13337 = vmax.f32 %v13209, %v13273
  %v13338 = vmax.f32 %v13210, %v13274
  %v13339 = vmax.f32 %v13211, %v13275
  %v13340 = vmax.f32 %v13212, %v13276
  %v13341 = vmax.f32 %v13213, %v13277
  %v13342 = vmax.f32 %v13214, %v13278
  %v13343 = vmax.f32 %v13215, %v13279
  %v13344 = vmax.f32 %v13216, %v13280
  %v13345 = vmax.f32 %v13217, %v13281
  %v13346 = vmax.f32 %v13218, %v13282
  %v13347 = vmax.f32 %v13219, %v13283
  %v13348 = vmax.f32 %v13220, %v13284
  %v13349 = vmax.f32 %v13221, %v13285
  %v13350 = vmax.f32 %v13222, %v13286
  %v13351 = vmax.f32 %v13223, %v13287
  %v13352 = vmax.f32 %v13224, %v13288
  %v13353 = vmax.f32 %v13225, %v13289
  %v13354 = vmax.f32 %v13226, %v13290
  %v13355 = vmax.f32 %v13227, %v13291
  %v13356 = vmax.f32 %v13228, %v13292
  %v13357 = vmax.f32 %v13229, %v13293
  %v13358 = vmax.f32 %v13230, %v13294
  %v13359 = vmax.f32 %v13231, %v13295
  %v13360 = vmax.f32 %v13232, %v13296
  %v13361 = vmax.f32 %v13233, %v13297
  %v13362 = vmax.f32 %v13234, %v13298
  %v13363 = vmax.f32 %v13235, %v13299
  %v13364 = vmax.f32 %v13236, %v13300
  %v13365 = vmax.f32 %v13237, %v13301
  %v13366 = vmax.f32 %v13238, %v13302
  %13367 = vst.msk [vmem:[%s6] sm:$0xff] %vm6522, %v13303
  %13368 = vst.msk [vmem:[%s6 + $0x8] sm:$0xff] %vm6522, %v13304
  %13369 = vst.msk [vmem:[%s6 + $0x10] sm:$0xff] %vm6522, %v13305
  %13370 = vst.msk [vmem:[%s6 + $0x18] sm:$0xff] %vm6522, %v13306
  %13371 = vst.msk [vmem:[%s6 + $0x20] sm:$0xff] %vm6522, %v13307
  %13372 = vst.msk [vmem:[%s6 + $0x28] sm:$0xff] %vm6522, %v13308
  %13373 = vst.msk [vmem:[%s6 + $0x30] sm:$0xff] %vm6522, %v13309
  %13374 = vst.msk [vmem:[%s6 + $0x38] sm:$0xff] %vm6522, %v13310
  %13375 = vst.msk [vmem:[%s6 + $0x40] sm:$0xff] %vm6522, %v13311
  %13376 = vst.msk [vmem:[%s6 + $0x48] sm:$0xff] %vm6522, %v13312
  %13377 = vst.msk [vmem:[%s6 + $0x50] sm:$0xff] %vm6522, %v13313
  %13378 = vst.msk [vmem:[%s6 + $0x58] sm:$0xff] %vm6522, %v13314
  %13379 = vst.msk [vmem:[%s6 + $0x60] sm:$0xff] %vm6522, %v13315
  %13380 = vst.msk [vmem:[%s6 + $0x68] sm:$0xff] %vm6522, %v13316
  %13381 = vst.msk [vmem:[%s6 + $0x70] sm:$0xff] %vm6522, %v13317
  %13382 = vst.msk [vmem:[%s6 + $0x78] sm:$0xff] %vm6522, %v13318
  %13383 = vst.msk [vmem:[%s6 + $0x80] sm:$0xff] %vm6522, %v13319
  %13384 = vst.msk [vmem:[%s6 + $0x88] sm:$0xff] %vm6522, %v13320
  %13385 = vst.msk [vmem:[%s6 + $0x90] sm:$0xff] %vm6522, %v13321
  %13386 = vst.msk [vmem:[%s6 + $0x98] sm:$0xff] %vm6522, %v13322
  %13387 = vst.msk [vmem:[%s6 + $0xa0] sm:$0xff] %vm6522, %v13323
  %13388 = vst.msk [vmem:[%s6 + $0xa8] sm:$0xff] %vm6522, %v13324
  %13389 = vst.msk [vmem:[%s6 + $0xb0] sm:$0xff] %vm6522, %v13325
  %13390 = vst.msk [vmem:[%s6 + $0xb8] sm:$0xff] %vm6522, %v13326
  %13391 = vst.msk [vmem:[%s6 + $0xc0] sm:$0xff] %vm6522, %v13327
  %13392 = vst.msk [vmem:[%s6 + $0xc8] sm:$0xff] %vm6522, %v13328
  %13393 = vst.msk [vmem:[%s6 + $0xd0] sm:$0xff] %vm6522, %v13329
  %13394 = vst.msk [vmem:[%s6 + $0xd8] sm:$0xff] %vm6522, %v13330
  %13395 = vst.msk [vmem:[%s6 + $0xe0] sm:$0xff] %vm6522, %v13331
  %13396 = vst.msk [vmem:[%s6 + $0xe8] sm:$0xff] %vm6522, %v13332
  %13397 = vst.msk [vmem:[%s6 + $0xf0] sm:$0xff] %vm6522, %v13333
  %13398 = vst.msk [vmem:[%s6 + $0xf8] sm:$0xff] %vm6522, %v13334
  %13399 = vst.msk [vmem:[%s6 + $0x100] sm:$0xff] %vm6522, %v13335
  %13400 = vst.msk [vmem:[%s6 + $0x108] sm:$0xff] %vm6522, %v13336
  %13401 = vst.msk [vmem:[%s6 + $0x110] sm:$0xff] %vm6522, %v13337
  %13402 = vst.msk [vmem:[%s6 + $0x118] sm:$0xff] %vm6522, %v13338
  %13403 = vst.msk [vmem:[%s6 + $0x120] sm:$0xff] %vm6522, %v13339
  %13404 = vst.msk [vmem:[%s6 + $0x128] sm:$0xff] %vm6522, %v13340
  %13405 = vst.msk [vmem:[%s6 + $0x130] sm:$0xff] %vm6522, %v13341
  %13406 = vst.msk [vmem:[%s6 + $0x138] sm:$0xff] %vm6522, %v13342
  %13407 = vst.msk [vmem:[%s6 + $0x140] sm:$0xff] %vm6522, %v13343
  %13408 = vst.msk [vmem:[%s6 + $0x148] sm:$0xff] %vm6522, %v13344
  %13409 = vst.msk [vmem:[%s6 + $0x150] sm:$0xff] %vm6522, %v13345
  %13410 = vst.msk [vmem:[%s6 + $0x158] sm:$0xff] %vm6522, %v13346
  %13411 = vst.msk [vmem:[%s6 + $0x160] sm:$0xff] %vm6522, %v13347
  %13412 = vst.msk [vmem:[%s6 + $0x168] sm:$0xff] %vm6522, %v13348
  %13413 = vst.msk [vmem:[%s6 + $0x170] sm:$0xff] %vm6522, %v13349
  %13414 = vst.msk [vmem:[%s6 + $0x178] sm:$0xff] %vm6522, %v13350
  %13415 = vst.msk [vmem:[%s6 + $0x180] sm:$0xff] %vm6522, %v13351
  %13416 = vst.msk [vmem:[%s6 + $0x188] sm:$0xff] %vm6522, %v13352
  %13417 = vst.msk [vmem:[%s6 + $0x190] sm:$0xff] %vm6522, %v13353
  %13418 = vst.msk [vmem:[%s6 + $0x198] sm:$0xff] %vm6522, %v13354
  %13419 = vst.msk [vmem:[%s6 + $0x1a0] sm:$0xff] %vm6522, %v13355
  %13420 = vst.msk [vmem:[%s6 + $0x1a8] sm:$0xff] %vm6522, %v13356
  %13421 = vst.msk [vmem:[%s6 + $0x1b0] sm:$0xff] %vm6522, %v13357
  %13422 = vst.msk [vmem:[%s6 + $0x1b8] sm:$0xff] %vm6522, %v13358
  %13423 = vst.msk [vmem:[%s6 + $0x1c0] sm:$0xff] %vm6522, %v13359
  %13424 = vst.msk [vmem:[%s6 + $0x1c8] sm:$0xff] %vm6522, %v13360
  %13425 = vst.msk [vmem:[%s6 + $0x1d0] sm:$0xff] %vm6522, %v13361
  %13426 = vst.msk [vmem:[%s6 + $0x1d8] sm:$0xff] %vm6522, %v13362
  %13427 = vst.msk [vmem:[%s6 + $0x1e0] sm:$0xff] %vm6522, %v13363
  %13428 = vst.msk [vmem:[%s6 + $0x1e8] sm:$0xff] %vm6522, %v13364
  %13429 = vst.msk [vmem:[%s6 + $0x1f0] sm:$0xff] %vm6522, %v13365
  %13430 = vst.msk [vmem:[%s6 + $0x1f8] sm:$0xff] %vm6522, %v13366
  // Predicated region
  $region26: #{mod_eight_forward.1} parent=0 // pred_check
    _
  $region27: #{mod_eight_forward.1} parent=0 // pred_check_branch
    %13432 = sbr.rel (0) target = $region29
  $region28: #{mod_eight_forward.1} parent=0 // pred_region
    _
  $region29: #{mod_eight_forward.1} parent=0 // pred_fallthru
    _
  // Predicated region
  $region30: #{mod_eight_forward.1} parent=0 // pred_check
    _
  $region31: #{mod_eight_forward.1} parent=0 // pred_check_branch
    %13434 = sbr.rel (0) target = $region33
  $region32: #{mod_eight_forward.1} parent=0 // pred_region
    _
  $region33: #{mod_eight_forward.1} parent=0 // pred_fallthru
    _

</llo_original>
